<compile_context>
chip_gen: v5e
topology: v5e:2x2
jax: 0.10.0
libtpu: 0.0.40
codegen_flags: <defaults>
</compile_context>

<pallas_src>
import functools

import jax
import jax.numpy as jnp
from jax.experimental import pallas as pl
from jax.experimental.pallas import tpu as pltpu


def _round_up(v, m):
    return (v + m - 1) // m * m


def _chunks(total, tile):
    s, out = 0, []
    while s < total:
        out.append((s, min(tile, total - s)))
        s += tile
    return out


def _leaky(x):
    return jnp.where(x > 0, x, 0.2 * x)


def _make_fused_kernel(H2, W2, Wp, C0, C1, C2, C3, L_pad, TM):
    ph_h = H2 + 1                      # stride-2 phase-block height
    R0p = ph_h * Wp                    # rows of the lane-dense layer-0 act
    p0 = Wp + 1                        # interior offset of padded-flat buffers
    L = (H2 - 1) * Wp + W2             # flat length of one conv-output slab
    P = (H2 + 2) * Wp                  # rows of padded-flat activation buffers
    tail = P - p0 - L
    inv_n = 1.0 / float(H2 * W2)
    eps = 1e-5
    act_dtype = jnp.bfloat16

    cks_a0 = _chunks(R0p, TM)
    cks = _chunks(L, TM)

    def col_mask(cs, cl):
        # valid-column mask for the contiguous-slab trick (zeros wrap columns)
        idx = jax.lax.broadcasted_iota(jnp.int32, (cl, 1), 0) + cs
        return ((idx % Wp) < W2).astype(jnp.float32)

    def kernel(xcol_ref, w0_ref, w1_ref, w2_ref, w3_ref, w4_ref,
               out_ref, a0_ref, a1_ref, a2_ref, a3_ref):
        # ---- zero only the halo rows (never touched by interior stores) ----
        for ref, c in ((a1_ref, C1), (a2_ref, C2), (a3_ref, C3)):
            ref[pl.ds(0, p0), :] = jnp.zeros((p0, c), act_dtype)
            ref[pl.ds(p0 + L, tail), :] = jnp.zeros((tail, c), act_dtype)

        # ---- layer 0: Conv(3->C0) + LeakyReLU ------------------------------
        # Block-diagonal weight -> one matmul per chunk produces a lane-dense
        # a0 with the 4 stride-2 phases packed into the 128-lane minor dim.
        for cs, cl in cks_a0:
            y = jnp.dot(xcol_ref[pl.ds(cs, cl), :], w0_ref[...],
                        preferred_element_type=jnp.float32)
            a0_ref[pl.ds(cs, cl), :] = _leaky(y).astype(act_dtype)

        # ---- layer 1: Conv(C0->C1, stride 2) + LeakyReLU -------------------
        # 9 taps merged into 4 phase-packed K=128 matmuls per chunk.
        for cs, cl in cks:
            m = col_mask(cs, cl)
            acc = None
            for g in range(4):
                gy, gx = g // 2, g % 2
                part = jnp.dot(a0_ref[pl.ds(gy * Wp + gx + cs, cl), :],
                               w1_ref[g], preferred_element_type=jnp.float32)
                acc = part if acc is None else acc + part
            a1_ref[pl.ds(p0 + cs, cl), :] = (_leaky(acc) * m).astype(act_dtype)

        # ---- layers 2/3: Conv + InstanceNorm + LeakyReLU (two chunk passes)
        def conv_in_lrelu(src_ref, w_ref, dst_ref, cin, cout):
            s1 = jnp.zeros((1, cout), jnp.float32)
            s2 = jnp.zeros((1, cout), jnp.float32)
            # pass 1: conv, accumulate IN stats from the f32 acc, store raw
            for cs, cl in cks:
                m = col_mask(cs, cl)
                acc = None
                for tap in range(9):
                    dy, dx = tap // 3, tap % 3
                    part = jnp.dot(src_ref[pl.ds(dy * Wp + dx + cs, cl), :],
                                   w_ref[pl.ds(tap * cin, cin), :],
                                   preferred_element_type=jnp.float32)
                    acc = part if acc is None else acc + part
                macc = acc * m
                s1 = s1 + jnp.sum(macc, axis=0, keepdims=True)
                s2 = s2 + jnp.sum(macc * acc, axis=0, keepdims=True)
                dst_ref[pl.ds(p0 + cs, cl), :] = acc.astype(act_dtype)
            mean = s1 * inv_n
            var = jnp.maximum(s2 * inv_n - mean * mean, 0.0)
            scale = jax.lax.rsqrt(var + eps)
            # pass 2: normalize + LeakyReLU + mask, in place
            for cs, cl in cks:
                m = col_mask(cs, cl)
                raw = dst_ref[pl.ds(p0 + cs, cl), :].astype(jnp.float32)
                y = (raw - mean) * scale
                dst_ref[pl.ds(p0 + cs, cl), :] = (_leaky(y) * m).astype(act_dtype)

        conv_in_lrelu(a1_ref, w2_ref, a2_ref, C1, C2)
        conv_in_lrelu(a2_ref, w3_ref, a3_ref, C2, C3)

        # ---- layer 4: Conv(C3->1): VPU multiply + cross-lane reduce --------
        w4v = w4_ref[...]                                     # (9, C3) f32
        for cs, cl in cks:
            acc = None
            for tap in range(9):
                dy, dx = tap // 3, tap % 3
                part = (a3_ref[pl.ds(dy * Wp + dx + cs, cl), :]
                        .astype(jnp.float32) * w4v[tap:tap + 1, :])
                acc = part if acc is None else acc + part
            vec = jnp.sum(acc, axis=1)                        # (cl,)
            out_ref[:, pl.ds(cs, cl)] = vec.reshape(1, cl)
        if L_pad > L:
            out_ref[:, pl.ds(L, L_pad - L)] = jnp.zeros((1, L_pad - L),
                                                        jnp.float32)

    return kernel


def _fused_forward_nhwc(x_nhwc, params, tm=256):
    """x_nhwc: (N, H, W, 3) f32 -> (N, 1, H//2, W//2) f32 (d_layers == 1)."""
    N, H, W, Cin = x_nhwc.shape
    assert Cin == 3 and H % 2 == 0 and W % 2 == 0
    H2, W2 = H // 2, W // 2
    Wp = _round_up(W2 + 2, 8)          # row pitch (dy*Wp offsets sublane-aligned)
    ph_h = H2 + 1
    R0p = ph_h * Wp
    P = (H2 + 2) * Wp
    L_pad = _round_up(H2 * Wp, 128)
    K0 = 27
    KC = 4 * K0                        # 108 lanes of phase-packed im2col input

    w0, w1, w2, w3, w4 = params
    C0, C1, C2, C3 = w0.shape[-1], w1.shape[-1], w2.shape[-1], w3.shape[-1]

    # ---- layer-0 im2col, bf16, the 4 stride-2 phases packed into lanes ------
    xb = x_nhwc.astype(jnp.bfloat16)             # bf16 before any copies
    xp = jnp.pad(xb, ((0, 0), (1, 1), (1, 1), (0, 0)))
    phase_blocks = []
    for py in (0, 1):
        for px in (0, 1):
            taps = []
            for ky in range(3):
                for kx in range(3):
                    sy = (1 - py) + ky
                    sx = (1 - px) + kx
                    taps.append(xp[:, sy:sy + 2 * H2:2, sx:sx + 2 * W2:2, :])
            blk = jnp.concatenate(taps, axis=-1)                 # (N,H2,W2,27)
            blk = jnp.pad(blk, ((0, 0),
                                (1 - py, ph_h - H2 - (1 - py)),
                                (1 - px, Wp - W2 - (1 - px)),
                                (0, 0)))                         # (N,ph_h,Wp,27)
            phase_blocks.append(blk)
    xcol = jnp.concatenate(phase_blocks, axis=-1).reshape(N, R0p, KC)

    # ---- weights as matmul operands -----------------------------------------
    # layer 0: block-diagonal (4*27, 4*C0) so one matmul does all 4 phases
    w0f = w0.reshape(K0, C0)
    w0_bd = jnp.zeros((KC, 4 * C0), jnp.float32)
    for p in range(4):
        w0_bd = w0_bd.at[p * K0:(p + 1) * K0, p * C0:(p + 1) * C0].set(w0f)
    w0_bd = w0_bd.astype(jnp.bfloat16)

    # layer 1: phase-merged zero-padded group weights (4 groups, K=4*C0=128)
    w1g = jnp.zeros((4, 4 * C0, C1), jnp.float32)
    for dy in range(3):
        for dx in range(3):
            g = (dy // 2) * 2 + (dx // 2)
            p = (dy % 2) * 2 + (dx % 2)
            w1g = w1g.at[g, p * C0:(p + 1) * C0, :].set(w1[dy, dx])
    w1g = w1g.astype(jnp.bfloat16)

    w2m = w2.reshape(9 * C1, C2).astype(jnp.bfloat16)
    w3m = w3.reshape(9 * C2, C3).astype(jnp.bfloat16)
    w4m = w4.reshape(9, C3).astype(jnp.float32)      # Cout == 1 -> used on VPU

    kernel = _make_fused_kernel(H2, W2, Wp, C0, C1, C2, C3, L_pad, tm)

    # ---- rough VMEM footprint (lane-padded) -> scoped limit with headroom ---
    def buf(rows, cols, itemsize):
        return rows * _round_up(cols, 128) * itemsize
    est = (2 * buf(R0p, KC, 2) + 2 * buf(1, L_pad, 4)
           + buf(R0p, 4 * C0, 2) + buf(P, C1, 2) + buf(P, C2, 2) + buf(P, C3, 2)
           + 2 * (buf(KC, 4 * C0, 2) + buf(4 * 4 * C0, C1, 2)
                  + buf(9 * C1, C2, 2) + buf(9 * C2, C3, 2) + buf(9, C3, 4)))
    vmem_limit = int(min(96 * 2**20, max(32 * 2**20, 2 * est)))

    out_flat = pl.pallas_call(
        kernel,
        out_shape=jax.ShapeDtypeStruct((N, 1, L_pad), jnp.float32),
        grid=(N,),
        in_specs=[
            pl.BlockSpec((None, R0p, KC), lambda n: (n, 0, 0)),
            pl.BlockSpec((KC, 4 * C0), lambda n: (0, 0)),
            pl.BlockSpec((4, 4 * C0, C1), lambda n: (0, 0, 0)),
            pl.BlockSpec((9 * C1, C2), lambda n: (0, 0)),
            pl.BlockSpec((9 * C2, C3), lambda n: (0, 0)),
            pl.BlockSpec((9, C3), lambda n: (0, 0)),
        ],
        out_specs=pl.BlockSpec((None, 1, L_pad), lambda n: (n, 0, 0)),
        scratch_shapes=[
            pltpu.VMEM((R0p, 4 * C0), jnp.bfloat16),  # a0: phases lane-packed
            pltpu.VMEM((P, C1), jnp.bfloat16),        # a1 (padded flat)
            pltpu.VMEM((P, C2), jnp.bfloat16),        # a2 (padded flat)
            pltpu.VMEM((P, C3), jnp.bfloat16),        # a3 (padded flat)
        ],
        compiler_params=pltpu.CompilerParams(
            dimension_semantics=("parallel",),
            vmem_limit_bytes=vmem_limit),
    )(xcol, w0_bd, w1g, w2m, w3m, w4m)

    out = out_flat[:, 0, :H2 * Wp].reshape(N, H2, Wp)[:, :, :W2]
    return out[:, None, :, :]


def init_discriminator_params(key, d_layers=1):
    """Deterministic synthetic weights (normal, std=0.02), stored (kh,kw,Cin,Cout)."""
    shapes = []
    channels = 32
    shapes.append((3, 3, 3, channels))                       # Conv(3 -> 32)
    for _ in range(d_layers):
        shapes.append((3, 3, channels, channels * 2))        # stride-2 conv
        shapes.append((3, 3, channels * 2, channels * 4))    # stride-1 conv
        channels *= 4
    shapes.append((3, 3, channels, channels))                # stride-1 conv
    shapes.append((3, 3, channels, 1))                       # final conv -> 1
    keys = jax.random.split(key, len(shapes))
    return [0.02 * jax.random.normal(k, s, jnp.float32)
            for k, s in zip(keys, shapes)]


@functools.partial(jax.jit, static_argnames=("d_layers",))
def discriminator_forward(img_nchw, params, d_layers=1):
    """img_nchw: (N, 3, H, W) f32 -> (N, 1, H//2**d_layers, W//2**d_layers)."""
    if d_layers != 1:
        # TODO(synk): the fused single-kernel path is specialized to d_layers=1.
        raise NotImplementedError("fused discriminator kernel supports d_layers=1")
    x = jnp.transpose(img_nchw, (0, 2, 3, 1))  # NCHW -> NHWC
    return _fused_forward_nhwc(x, params)


def _reference_forward(img_nchw, params):
    """Plain-JAX f32 reference (for a loose numerical sanity check)."""
    def conv(x, w, stride):
        return jax.lax.conv_general_dilated(
            x, jnp.transpose(w, (3, 2, 0, 1)),
            window_strides=(stride, stride), padding=((1, 1), (1, 1)),
            dimension_numbers=("NCHW", "OIHW", "NCHW"))

    def lrelu(x):
        return jnp.where(x > 0, x, 0.2 * x)

    def inorm(x):
        mean = jnp.mean(x, axis=(2, 3), keepdims=True)
        var = jnp.mean((x - mean) ** 2, axis=(2, 3), keepdims=True)
        return (x - mean) * jax.lax.rsqrt(var + 1e-5)

    x = img_nchw
    x = lrelu(conv(x, params[0], 1))
    x = lrelu(conv(x, params[1], 2))
    x = lrelu(inorm(conv(x, params[2], 1)))
    x = lrelu(inorm(conv(x, params[3], 1)))
    return conv(x, params[4], 1)


if __name__ == "__main__":
    key = jax.random.PRNGKey(0)
    k_img, k_params = jax.random.split(key)

    N, C, H, W = 2, 3, 16, 16
    img = jax.random.normal(k_img, (N, C, H, W), jnp.float32)
    params = init_discriminator_params(k_params, d_layers=1)

    out = discriminator_forward(img, params, d_layers=1)
    out = jax.block_until_ready(out)

    assert out.shape == (N, 1, H // 2, W // 2), out.shape
    assert out.dtype == jnp.float32
    assert bool(jnp.all(jnp.isfinite(out)))

    # Loose sanity check vs a plain-JAX f32 reference (kernel uses bf16
    # matmul operands and bf16 activation scratch).
    ref = _reference_forward(img, params)
    err = float(jnp.max(jnp.abs(out - ref)) / (jnp.std(ref) + 1e-6))
    assert err < 0.3, f"normalized max error too large: {err}"

    print("KERNEL_OK")
</pallas_src>

<mosaic_0001>
module attributes {stable_mosaic.version = 11 : i64} {
  func.func @kernel(%arg0: i32, %arg1: memref<1x144x108xbf16, #tpu.memory_space<vmem>>, %arg2: memref<108x128xbf16, #tpu.memory_space<vmem>>, %arg3: memref<4x128x64xbf16, #tpu.memory_space<vmem>>, %arg4: memref<576x128xbf16, #tpu.memory_space<vmem>>, %arg5: memref<1152x128xbf16, #tpu.memory_space<vmem>>, %arg6: memref<9x128xf32, #tpu.memory_space<vmem>>, %arg7: memref<1x1x128xf32, #tpu.memory_space<vmem>>, %arg8: memref<144x128xbf16, #tpu.memory_space<vmem>>, %arg9: memref<160x64xbf16, #tpu.memory_space<vmem>>, %arg10: memref<160x128xbf16, #tpu.memory_space<vmem>>, %arg11: memref<160x128xbf16, #tpu.memory_space<vmem>>) attributes {dimension_semantics = [#tpu.dimension_semantics<parallel>], iteration_bounds = array<i64: 2>, scalar_prefetch = 0 : i64, scratch_operands = 4 : i64, tpu.core_type = #tpu.core_type<tc>, window_params = [{transform_indices = @transform_0, window_bounds = array<i64: 1, 144, 108>}, {pipeline_mode = #tpu.pipeline_mode<synchronous>, transform_indices = @transform_1, window_bounds = array<i64: 108, 128>}, {pipeline_mode = #tpu.pipeline_mode<synchronous>, transform_indices = @transform_2, window_bounds = array<i64: 4, 128, 64>}, {pipeline_mode = #tpu.pipeline_mode<synchronous>, transform_indices = @transform_3, window_bounds = array<i64: 576, 128>}, {pipeline_mode = #tpu.pipeline_mode<synchronous>, transform_indices = @transform_4, window_bounds = array<i64: 1152, 128>}, {pipeline_mode = #tpu.pipeline_mode<synchronous>, transform_indices = @transform_5, window_bounds = array<i64: 9, 128>}, {transform_indices = @transform_6, window_bounds = array<i64: 1, 1, 128>}]} {
    %cst = arith.constant 0.000000e+00 : bf16
    %0 = vector.broadcast %cst : bf16 to vector<17x64xbf16>
    %c0 = arith.constant 0 : index
    %c0_0 = arith.constant 0 : index
    %1 = vector.load %arg9[%c0, %c0_0] : memref<160x64xbf16, #tpu.memory_space<vmem>>, vector<17x64xbf16>
    tpu.vector_store %arg9[%c0, %c0_0], %0 {strides = array<i32>} : memref<160x64xbf16, #tpu.memory_space<vmem>>, vector<17x64xbf16>,
    %cst_1 = arith.constant 0.000000e+00 : bf16
    %2 = vector.broadcast %cst_1 : bf16 to vector<23x64xbf16>
    %c137 = arith.constant 137 : index
    %c0_2 = arith.constant 0 : index
    %3 = vector.load %arg9[%c137, %c0_2] : memref<160x64xbf16, #tpu.memory_space<vmem>>, vector<23x64xbf16>
    tpu.vector_store %arg9[%c137, %c0_2], %2 {strides = array<i32>} : memref<160x64xbf16, #tpu.memory_space<vmem>>, vector<23x64xbf16>,
    %cst_3 = arith.constant 0.000000e+00 : bf16
    %4 = vector.broadcast %cst_3 : bf16 to vector<17x128xbf16>
    %c0_4 = arith.constant 0 : index
    %c0_5 = arith.constant 0 : index
    %5 = vector.load %arg10[%c0_4, %c0_5] : memref<160x128xbf16, #tpu.memory_space<vmem>>, vector<17x128xbf16>
    tpu.vector_store %arg10[%c0_4, %c0_5], %4 {strides = array<i32>} : memref<160x128xbf16, #tpu.memory_space<vmem>>, vector<17x128xbf16>,
    %cst_6 = arith.constant 0.000000e+00 : bf16
    %6 = vector.broadcast %cst_6 : bf16 to vector<23x128xbf16>
    %c137_7 = arith.constant 137 : index
    %c0_8 = arith.constant 0 : index
    %7 = vector.load %arg10[%c137_7, %c0_8] : memref<160x128xbf16, #tpu.memory_space<vmem>>, vector<23x128xbf16>
    tpu.vector_store %arg10[%c137_7, %c0_8], %6 {strides = array<i32>} : memref<160x128xbf16, #tpu.memory_space<vmem>>, vector<23x128xbf16>,
    %cst_9 = arith.constant 0.000000e+00 : bf16
    %8 = vector.broadcast %cst_9 : bf16 to vector<17x128xbf16>
    %c0_10 = arith.constant 0 : index
    %c0_11 = arith.constant 0 : index
    %9 = vector.load %arg11[%c0_10, %c0_11] : memref<160x128xbf16, #tpu.memory_space<vmem>>, vector<17x128xbf16>
    tpu.vector_store %arg11[%c0_10, %c0_11], %8 {strides = array<i32>} : memref<160x128xbf16, #tpu.memory_space<vmem>>, vector<17x128xbf16>,
    %cst_12 = arith.constant 0.000000e+00 : bf16
    %10 = vector.broadcast %cst_12 : bf16 to vector<23x128xbf16>
    %c137_13 = arith.constant 137 : index
    %c0_14 = arith.constant 0 : index
    %11 = vector.load %arg11[%c137_13, %c0_14] : memref<160x128xbf16, #tpu.memory_space<vmem>>, vector<23x128xbf16>
    tpu.vector_store %arg11[%c137_13, %c0_14], %10 {strides = array<i32>} : memref<160x128xbf16, #tpu.memory_space<vmem>>, vector<23x128xbf16>,
    %c0_15 = arith.constant 0 : index
    %c0_16 = arith.constant 0 : index
    %c0_17 = arith.constant 0 : index
    %12 = vector.load %arg1[%c0_15, %c0_16, %c0_17] : memref<1x144x108xbf16, #tpu.memory_space<vmem>>, vector<1x144x108xbf16>
    %13 = vector.shape_cast %12 : vector<1x144x108xbf16> to vector<144x108xbf16>
    %c0_18 = arith.constant 0 : index
    %c0_19 = arith.constant 0 : index
    %14 = vector.load %arg2[%c0_18, %c0_19] : memref<108x128xbf16, #tpu.memory_space<vmem>>, vector<108x128xbf16>
    %cst_20 = arith.constant dense<0.000000e+00> : vector<144x128xf32>
    %15 = tpu.matmul %13, %14, %cst_20 {dimension_numbers = #tpu.dot_dimension_numbers<[1], [0], [0], [1], [0, 0, 1, 1], [], []>} : vector<144x108xbf16>, vector<108x128xbf16>, vector<144x128xf32> -> vector<144x128xf32>
    %cst_21 = arith.constant 0.000000e+00 : f32
    %16 = vector.broadcast %cst_21 : f32 to vector<144x128xf32>
    %17 = arith.cmpf ogt, %15, %16 : vector<144x128xf32>
    %cst_22 = arith.constant 2.000000e-01 : f32
    %18 = vector.broadcast %cst_22 : f32 to vector<144x128xf32>
    %19 = arith.mulf %18, %15 : vector<144x128xf32>
    %20 = arith.select %17, %15, %19 : vector<144x128xi1>, vector<144x128xf32>
    %21 = arith.truncf %20 : vector<144x128xf32> to vector<144x128xbf16>
    %c0_23 = arith.constant 0 : index
    %c0_24 = arith.constant 0 : index
    %22 = vector.load %arg8[%c0_23, %c0_24] : memref<144x128xbf16, #tpu.memory_space<vmem>>, vector<144x128xbf16>
    tpu.vector_store %arg8[%c0_23, %c0_24], %21 {strides = array<i32>} : memref<144x128xbf16, #tpu.memory_space<vmem>>, vector<144x128xbf16>,
    %23 = tpu.iota {dimensions = array<i32: 0>} : vector<120x1xi32>
    %c0_i32 = arith.constant 0 : i32
    %24 = vector.broadcast %c0_i32 : i32 to vector<120x1xi32>
    %25 = arith.addi %23, %24 : vector<120x1xi32>
    %c16_i32 = arith.constant 16 : i32
    %c0_i32_25 = arith.constant 0 : i32
    %26 = arith.cmpi eq, %c16_i32, %c0_i32_25 : i32
    %c1_i32 = arith.constant 1 : i32
    %27 = arith.select %26, %c1_i32, %c16_i32 : i32
    %28 = vector.broadcast %27 : i32 to vector<120x1xi32>
    %29 = arith.remsi %25, %28 : vector<120x1xi32>
    %c0_i32_26 = arith.constant 0 : i32
    %30 = vector.broadcast %c0_i32_26 : i32 to vector<120x1xi32>
    %31 = arith.cmpi ne, %29, %30 : vector<120x1xi32>
    %c0_i32_27 = arith.constant 0 : i32
    %32 = vector.broadcast %c0_i32_27 : i32 to vector<120x1xi32>
    %33 = arith.cmpi slt, %29, %32 : vector<120x1xi32>
    %c0_i32_28 = arith.constant 0 : i32
    %34 = arith.cmpi slt, %27, %c0_i32_28 : i32
    %35 = vector.broadcast %34 : i1 to vector<120x1xi1>
    %36 = vector.broadcast %35 : vector<120x1xi1> to vector<120x1xi1>
    %37 = arith.xori %33, %36 : vector<120x1xi1>
    %38 = arith.andi %37, %31 : vector<120x1xi1>
    %39 = vector.broadcast %27 : i32 to vector<120x1xi32>
    %40 = arith.addi %29, %39 : vector<120x1xi32>
    %41 = arith.select %38, %40, %29 : vector<120x1xi1>, vector<120x1xi32>
    %c8_i32 = arith.constant 8 : i32
    %42 = vector.broadcast %c8_i32 : i32 to vector<120x1xi32>
    %43 = arith.cmpi slt, %41, %42 : vector<120x1xi32>
    %44 = arith.extui %43 : vector<120x1xi1> to vector<120x1xi32>
    %45 = arith.sitofp %44 : vector<120x1xi32> to vector<120x1xf32>
    %c0_29 = arith.constant 0 : index
    %c0_30 = arith.constant 0 : index
    %46 = vector.load %arg8[%c0_29, %c0_30] : memref<144x128xbf16, #tpu.memory_space<vmem>>, vector<120x128xbf16>
    %c0_31 = arith.constant 0 : index
    %c0_32 = arith.constant 0 : index
    %c0_33 = arith.constant 0 : index
    %47 = vector.load %arg3[%c0_31, %c0_32, %c0_33] : memref<4x128x64xbf16, #tpu.memory_space<vmem>>, vector<1x128x64xbf16>
    %48 = vector.shape_cast %47 : vector<1x128x64xbf16> to vector<128x64xbf16>
    %cst_34 = arith.constant dense<0.000000e+00> : vector<120x64xf32>
    %49 = tpu.matmul %46, %48, %cst_34 {dimension_numbers = #tpu.dot_dimension_numbers<[1], [0], [0], [1], [0, 0, 1, 1], [], []>} : vector<120x128xbf16>, vector<128x64xbf16>, vector<120x64xf32> -> vector<120x64xf32>
    %c1 = arith.constant 1 : index
    %c0_35 = arith.constant 0 : index
    %50 = vector.load %arg8[%c1, %c0_35] : memref<144x128xbf16, #tpu.memory_space<vmem>>, vector<120x128xbf16>
    %c1_36 = arith.constant 1 : index
    %c0_37 = arith.constant 0 : index
    %c0_38 = arith.constant 0 : index
    %51 = vector.load %arg3[%c1_36, %c0_37, %c0_38] : memref<4x128x64xbf16, #tpu.memory_space<vmem>>, vector<1x128x64xbf16>
    %52 = vector.shape_cast %51 : vector<1x128x64xbf16> to vector<128x64xbf16>
    %cst_39 = arith.constant dense<0.000000e+00> : vector<120x64xf32>
    %53 = tpu.matmul %50, %52, %cst_39 {dimension_numbers = #tpu.dot_dimension_numbers<[1], [0], [0], [1], [0, 0, 1, 1], [], []>} : vector<120x128xbf16>, vector<128x64xbf16>, vector<120x64xf32> -> vector<120x64xf32>
    %54 = arith.addf %49, %53 : vector<120x64xf32>
    %c16 = arith.constant 16 : index
    %c0_40 = arith.constant 0 : index
    %55 = vector.load %arg8[%c16, %c0_40] : memref<144x128xbf16, #tpu.memory_space<vmem>>, vector<120x128xbf16>
    %c2 = arith.constant 2 : index
    %c0_41 = arith.constant 0 : index
    %c0_42 = arith.constant 0 : index
    %56 = vector.load %arg3[%c2, %c0_41, %c0_42] : memref<4x128x64xbf16, #tpu.memory_space<vmem>>, vector<1x128x64xbf16>
    %57 = vector.shape_cast %56 : vector<1x128x64xbf16> to vector<128x64xbf16>
    %cst_43 = arith.constant dense<0.000000e+00> : vector<120x64xf32>
    %58 = tpu.matmul %55, %57, %cst_43 {dimension_numbers = #tpu.dot_dimension_numbers<[1], [0], [0], [1], [0, 0, 1, 1], [], []>} : vector<120x128xbf16>, vector<128x64xbf16>, vector<120x64xf32> -> vector<120x64xf32>
    %59 = arith.addf %54, %58 : vector<120x64xf32>
    %c17 = arith.constant 17 : index
    %c0_44 = arith.constant 0 : index
    %60 = vector.load %arg8[%c17, %c0_44] : memref<144x128xbf16, #tpu.memory_space<vmem>>, vector<120x128xbf16>
    %c3 = arith.constant 3 : index
    %c0_45 = arith.constant 0 : index
    %c0_46 = arith.constant 0 : index
    %61 = vector.load %arg3[%c3, %c0_45, %c0_46] : memref<4x128x64xbf16, #tpu.memory_space<vmem>>, vector<1x128x64xbf16>
    %62 = vector.shape_cast %61 : vector<1x128x64xbf16> to vector<128x64xbf16>
    %cst_47 = arith.constant dense<0.000000e+00> : vector<120x64xf32>
    %63 = tpu.matmul %60, %62, %cst_47 {dimension_numbers = #tpu.dot_dimension_numbers<[1], [0], [0], [1], [0, 0, 1, 1], [], []>} : vector<120x128xbf16>, vector<128x64xbf16>, vector<120x64xf32> -> vector<120x64xf32>
    %64 = arith.addf %59, %63 : vector<120x64xf32>
    %cst_48 = arith.constant 0.000000e+00 : f32
    %65 = vector.broadcast %cst_48 : f32 to vector<120x64xf32>
    %66 = arith.cmpf ogt, %64, %65 : vector<120x64xf32>
    %cst_49 = arith.constant 2.000000e-01 : f32
    %67 = vector.broadcast %cst_49 : f32 to vector<120x64xf32>
    %68 = arith.mulf %67, %64 : vector<120x64xf32>
    %69 = arith.select %66, %64, %68 : vector<120x64xi1>, vector<120x64xf32>
    %70 = vector.broadcast %45 : vector<120x1xf32> to vector<120x64xf32>
    %71 = arith.mulf %69, %70 : vector<120x64xf32>
    %72 = arith.truncf %71 : vector<120x64xf32> to vector<120x64xbf16>
    %c17_50 = arith.constant 17 : index
    %c0_51 = arith.constant 0 : index
    %73 = vector.load %arg9[%c17_50, %c0_51] : memref<160x64xbf16, #tpu.memory_space<vmem>>, vector<120x64xbf16>
    tpu.vector_store %arg9[%c17_50, %c0_51], %72 {strides = array<i32>} : memref<160x64xbf16, #tpu.memory_space<vmem>>, vector<120x64xbf16>,
    %cst_52 = arith.constant 0.000000e+00 : f32
    %74 = vector.broadcast %cst_52 : f32 to vector<1x128xf32>
    %cst_53 = arith.constant 0.000000e+00 : f32
    %75 = vector.broadcast %cst_53 : f32 to vector<1x128xf32>
    %76 = tpu.iota {dimensions = array<i32: 0>} : vector<120x1xi32>
    %c0_i32_54 = arith.constant 0 : i32
    %77 = vector.broadcast %c0_i32_54 : i32 to vector<120x1xi32>
    %78 = arith.addi %76, %77 : vector<120x1xi32>
    %c16_i32_55 = arith.constant 16 : i32
    %c0_i32_56 = arith.constant 0 : i32
    %79 = arith.cmpi eq, %c16_i32_55, %c0_i32_56 : i32
    %c1_i32_57 = arith.constant 1 : i32
    %80 = arith.select %79, %c1_i32_57, %c16_i32_55 : i32
    %81 = vector.broadcast %80 : i32 to vector<120x1xi32>
    %82 = arith.remsi %78, %81 : vector<120x1xi32>
    %c0_i32_58 = arith.constant 0 : i32
    %83 = vector.broadcast %c0_i32_58 : i32 to vector<120x1xi32>
    %84 = arith.cmpi ne, %82, %83 : vector<120x1xi32>
    %c0_i32_59 = arith.constant 0 : i32
    %85 = vector.broadcast %c0_i32_59 : i32 to vector<120x1xi32>
    %86 = arith.cmpi slt, %82, %85 : vector<120x1xi32>
    %c0_i32_60 = arith.constant 0 : i32
    %87 = arith.cmpi slt, %80, %c0_i32_60 : i32
    %88 = vector.broadcast %87 : i1 to vector<120x1xi1>
    %89 = vector.broadcast %88 : vector<120x1xi1> to vector<120x1xi1>
    %90 = arith.xori %86, %89 : vector<120x1xi1>
    %91 = arith.andi %90, %84 : vector<120x1xi1>
    %92 = vector.broadcast %80 : i32 to vector<120x1xi32>
    %93 = arith.addi %82, %92 : vector<120x1xi32>
    %94 = arith.select %91, %93, %82 : vector<120x1xi1>, vector<120x1xi32>
    %c8_i32_61 = arith.constant 8 : i32
    %95 = vector.broadcast %c8_i32_61 : i32 to vector<120x1xi32>
    %96 = arith.cmpi slt, %94, %95 : vector<120x1xi32>
    %97 = arith.extui %96 : vector<120x1xi1> to vector<120x1xi32>
    %98 = arith.sitofp %97 : vector<120x1xi32> to vector<120x1xf32>
    %c0_62 = arith.constant 0 : index
    %c0_63 = arith.constant 0 : index
    %99 = vector.load %arg9[%c0_62, %c0_63] : memref<160x64xbf16, #tpu.memory_space<vmem>>, vector<120x64xbf16>
    %c0_64 = arith.constant 0 : index
    %c0_65 = arith.constant 0 : index
    %100 = vector.load %arg4[%c0_64, %c0_65] : memref<576x128xbf16, #tpu.memory_space<vmem>>, vector<64x128xbf16>
    %cst_66 = arith.constant dense<0.000000e+00> : vector<120x128xf32>
    %101 = tpu.matmul %99, %100, %cst_66 {dimension_numbers = #tpu.dot_dimension_numbers<[1], [0], [0], [1], [0, 0, 1, 1], [], []>} : vector<120x64xbf16>, vector<64x128xbf16>, vector<120x128xf32> -> vector<120x128xf32>
    %c1_67 = arith.constant 1 : index
    %c0_68 = arith.constant 0 : index
    %102 = vector.load %arg9[%c1_67, %c0_68] : memref<160x64xbf16, #tpu.memory_space<vmem>>, vector<120x64xbf16>
    %c64 = arith.constant 64 : index
    %c0_69 = arith.constant 0 : index
    %103 = vector.load %arg4[%c64, %c0_69] : memref<576x128xbf16, #tpu.memory_space<vmem>>, vector<64x128xbf16>
    %cst_70 = arith.constant dense<0.000000e+00> : vector<120x128xf32>
    %104 = tpu.matmul %102, %103, %cst_70 {dimension_numbers = #tpu.dot_dimension_numbers<[1], [0], [0], [1], [0, 0, 1, 1], [], []>} : vector<120x64xbf16>, vector<64x128xbf16>, vector<120x128xf32> -> vector<120x128xf32>
    %105 = arith.addf %101, %104 : vector<120x128xf32>
    %c2_71 = arith.constant 2 : index
    %c0_72 = arith.constant 0 : index
    %106 = vector.load %arg9[%c2_71, %c0_72] : memref<160x64xbf16, #tpu.memory_space<vmem>>, vector<120x64xbf16>
    %c128 = arith.constant 128 : index
    %c0_73 = arith.constant 0 : index
    %107 = vector.load %arg4[%c128, %c0_73] : memref<576x128xbf16, #tpu.memory_space<vmem>>, vector<64x128xbf16>
    %cst_74 = arith.constant dense<0.000000e+00> : vector<120x128xf32>
    %108 = tpu.matmul %106, %107, %cst_74 {dimension_numbers = #tpu.dot_dimension_numbers<[1], [0], [0], [1], [0, 0, 1, 1], [], []>} : vector<120x64xbf16>, vector<64x128xbf16>, vector<120x128xf32> -> vector<120x128xf32>
    %109 = arith.addf %105, %108 : vector<120x128xf32>
    %c16_75 = arith.constant 16 : index
    %c0_76 = arith.constant 0 : index
    %110 = vector.load %arg9[%c16_75, %c0_76] : memref<160x64xbf16, #tpu.memory_space<vmem>>, vector<120x64xbf16>
    %c192 = arith.constant 192 : index
    %c0_77 = arith.constant 0 : index
    %111 = vector.load %arg4[%c192, %c0_77] : memref<576x128xbf16, #tpu.memory_space<vmem>>, vector<64x128xbf16>
    %cst_78 = arith.constant dense<0.000000e+00> : vector<120x128xf32>
    %112 = tpu.matmul %110, %111, %cst_78 {dimension_numbers = #tpu.dot_dimension_numbers<[1], [0], [0], [1], [0, 0, 1, 1], [], []>} : vector<120x64xbf16>, vector<64x128xbf16>, vector<120x128xf32> -> vector<120x128xf32>
    %113 = arith.addf %109, %112 : vector<120x128xf32>
    %c17_79 = arith.constant 17 : index
    %c0_80 = arith.constant 0 : index
    %114 = vector.load %arg9[%c17_79, %c0_80] : memref<160x64xbf16, #tpu.memory_space<vmem>>, vector<120x64xbf16>
    %c256 = arith.constant 256 : index
    %c0_81 = arith.constant 0 : index
    %115 = vector.load %arg4[%c256, %c0_81] : memref<576x128xbf16, #tpu.memory_space<vmem>>, vector<64x128xbf16>
    %cst_82 = arith.constant dense<0.000000e+00> : vector<120x128xf32>
    %116 = tpu.matmul %114, %115, %cst_82 {dimension_numbers = #tpu.dot_dimension_numbers<[1], [0], [0], [1], [0, 0, 1, 1], [], []>} : vector<120x64xbf16>, vector<64x128xbf16>, vector<120x128xf32> -> vector<120x128xf32>
    %117 = arith.addf %113, %116 : vector<120x128xf32>
    %c18 = arith.constant 18 : index
    %c0_83 = arith.constant 0 : index
    %118 = vector.load %arg9[%c18, %c0_83] : memref<160x64xbf16, #tpu.memory_space<vmem>>, vector<120x64xbf16>
    %c320 = arith.constant 320 : index
    %c0_84 = arith.constant 0 : index
    %119 = vector.load %arg4[%c320, %c0_84] : memref<576x128xbf16, #tpu.memory_space<vmem>>, vector<64x128xbf16>
    %cst_85 = arith.constant dense<0.000000e+00> : vector<120x128xf32>
    %120 = tpu.matmul %118, %119, %cst_85 {dimension_numbers = #tpu.dot_dimension_numbers<[1], [0], [0], [1], [0, 0, 1, 1], [], []>} : vector<120x64xbf16>, vector<64x128xbf16>, vector<120x128xf32> -> vector<120x128xf32>
    %121 = arith.addf %117, %120 : vector<120x128xf32>
    %c32 = arith.constant 32 : index
    %c0_86 = arith.constant 0 : index
    %122 = vector.load %arg9[%c32, %c0_86] : memref<160x64xbf16, #tpu.memory_space<vmem>>, vector<120x64xbf16>
    %c384 = arith.constant 384 : index
    %c0_87 = arith.constant 0 : index
    %123 = vector.load %arg4[%c384, %c0_87] : memref<576x128xbf16, #tpu.memory_space<vmem>>, vector<64x128xbf16>
    %cst_88 = arith.constant dense<0.000000e+00> : vector<120x128xf32>
    %124 = tpu.matmul %122, %123, %cst_88 {dimension_numbers = #tpu.dot_dimension_numbers<[1], [0], [0], [1], [0, 0, 1, 1], [], []>} : vector<120x64xbf16>, vector<64x128xbf16>, vector<120x128xf32> -> vector<120x128xf32>
    %125 = arith.addf %121, %124 : vector<120x128xf32>
    %c33 = arith.constant 33 : index
    %c0_89 = arith.constant 0 : index
    %126 = vector.load %arg9[%c33, %c0_89] : memref<160x64xbf16, #tpu.memory_space<vmem>>, vector<120x64xbf16>
    %c448 = arith.constant 448 : index
    %c0_90 = arith.constant 0 : index
    %127 = vector.load %arg4[%c448, %c0_90] : memref<576x128xbf16, #tpu.memory_space<vmem>>, vector<64x128xbf16>
    %cst_91 = arith.constant dense<0.000000e+00> : vector<120x128xf32>
    %128 = tpu.matmul %126, %127, %cst_91 {dimension_numbers = #tpu.dot_dimension_numbers<[1], [0], [0], [1], [0, 0, 1, 1], [], []>} : vector<120x64xbf16>, vector<64x128xbf16>, vector<120x128xf32> -> vector<120x128xf32>
    %129 = arith.addf %125, %128 : vector<120x128xf32>
    %c34 = arith.constant 34 : index
    %c0_92 = arith.constant 0 : index
    %130 = vector.load %arg9[%c34, %c0_92] : memref<160x64xbf16, #tpu.memory_space<vmem>>, vector<120x64xbf16>
    %c512 = arith.constant 512 : index
    %c0_93 = arith.constant 0 : index
    %131 = vector.load %arg4[%c512, %c0_93] : memref<576x128xbf16, #tpu.memory_space<vmem>>, vector<64x128xbf16>
    %cst_94 = arith.constant dense<0.000000e+00> : vector<120x128xf32>
    %132 = tpu.matmul %130, %131, %cst_94 {dimension_numbers = #tpu.dot_dimension_numbers<[1], [0], [0], [1], [0, 0, 1, 1], [], []>} : vector<120x64xbf16>, vector<64x128xbf16>, vector<120x128xf32> -> vector<120x128xf32>
    %133 = arith.addf %129, %132 : vector<120x128xf32>
    %134 = vector.broadcast %98 : vector<120x1xf32> to vector<120x128xf32>
    %135 = arith.mulf %133, %134 : vector<120x128xf32>
    %cst_95 = arith.constant dense<0.000000e+00> : vector<128xf32>
    %136 = vector.multi_reduction <add>, %135, %cst_95 [0] : vector<120x128xf32> to vector<128xf32>
    %137 = vector.shape_cast %136 : vector<128xf32> to vector<1x128xf32>
    %138 = arith.addf %74, %137 : vector<1x128xf32>
    %139 = arith.mulf %135, %133 : vector<120x128xf32>
    %cst_96 = arith.constant dense<0.000000e+00> : vector<128xf32>
    %140 = vector.multi_reduction <add>, %139, %cst_96 [0] : vector<120x128xf32> to vector<128xf32>
    %141 = vector.shape_cast %140 : vector<128xf32> to vector<1x128xf32>
    %142 = arith.addf %75, %141 : vector<1x128xf32>
    %143 = arith.truncf %133 : vector<120x128xf32> to vector<120x128xbf16>
    %c17_97 = arith.constant 17 : index
    %c0_98 = arith.constant 0 : index
    %144 = vector.load %arg10[%c17_97, %c0_98] : memref<160x128xbf16, #tpu.memory_space<vmem>>, vector<120x128xbf16>
    tpu.vector_store %arg10[%c17_97, %c0_98], %143 {strides = array<i32>} : memref<160x128xbf16, #tpu.memory_space<vmem>>, vector<120x128xbf16>,
    %cst_99 = arith.constant 1.562500e-02 : f32
    %145 = vector.broadcast %cst_99 : f32 to vector<1x128xf32>
    %146 = arith.mulf %138, %145 : vector<1x128xf32>
    %cst_100 = arith.constant 1.562500e-02 : f32
    %147 = vector.broadcast %cst_100 : f32 to vector<1x128xf32>
    %148 = arith.mulf %142, %147 : vector<1x128xf32>
    %149 = arith.mulf %146, %146 : vector<1x128xf32>
    %150 = arith.subf %148, %149 : vector<1x128xf32>
    %cst_101 = arith.constant 0.000000e+00 : f32
    %151 = vector.broadcast %cst_101 : f32 to vector<1x128xf32>
    %152 = arith.maximumf %150, %151 : vector<1x128xf32>
    %cst_102 = arith.constant 9.99999974E-6 : f32
    %153 = vector.broadcast %cst_102 : f32 to vector<1x128xf32>
    %154 = arith.addf %152, %153 : vector<1x128xf32>
    %155 = math.rsqrt %154 : vector<1x128xf32>
    %156 = tpu.iota {dimensions = array<i32: 0>} : vector<120x1xi32>
    %c0_i32_103 = arith.constant 0 : i32
    %157 = vector.broadcast %c0_i32_103 : i32 to vector<120x1xi32>
    %158 = arith.addi %156, %157 : vector<120x1xi32>
    %c16_i32_104 = arith.constant 16 : i32
    %c0_i32_105 = arith.constant 0 : i32
    %159 = arith.cmpi eq, %c16_i32_104, %c0_i32_105 : i32
    %c1_i32_106 = arith.constant 1 : i32
    %160 = arith.select %159, %c1_i32_106, %c16_i32_104 : i32
    %161 = vector.broadcast %160 : i32 to vector<120x1xi32>
    %162 = arith.remsi %158, %161 : vector<120x1xi32>
    %c0_i32_107 = arith.constant 0 : i32
    %163 = vector.broadcast %c0_i32_107 : i32 to vector<120x1xi32>
    %164 = arith.cmpi ne, %162, %163 : vector<120x1xi32>
    %c0_i32_108 = arith.constant 0 : i32
    %165 = vector.broadcast %c0_i32_108 : i32 to vector<120x1xi32>
    %166 = arith.cmpi slt, %162, %165 : vector<120x1xi32>
    %c0_i32_109 = arith.constant 0 : i32
    %167 = arith.cmpi slt, %160, %c0_i32_109 : i32
    %168 = vector.broadcast %167 : i1 to vector<120x1xi1>
    %169 = vector.broadcast %168 : vector<120x1xi1> to vector<120x1xi1>
    %170 = arith.xori %166, %169 : vector<120x1xi1>
    %171 = arith.andi %170, %164 : vector<120x1xi1>
    %172 = vector.broadcast %160 : i32 to vector<120x1xi32>
    %173 = arith.addi %162, %172 : vector<120x1xi32>
    %174 = arith.select %171, %173, %162 : vector<120x1xi1>, vector<120x1xi32>
    %c8_i32_110 = arith.constant 8 : i32
    %175 = vector.broadcast %c8_i32_110 : i32 to vector<120x1xi32>
    %176 = arith.cmpi slt, %174, %175 : vector<120x1xi32>
    %177 = arith.extui %176 : vector<120x1xi1> to vector<120x1xi32>
    %178 = arith.sitofp %177 : vector<120x1xi32> to vector<120x1xf32>
    %c17_111 = arith.constant 17 : index
    %c0_112 = arith.constant 0 : index
    %179 = vector.load %arg10[%c17_111, %c0_112] : memref<160x128xbf16, #tpu.memory_space<vmem>>, vector<120x128xbf16>
    %180 = arith.extf %179 : vector<120x128xbf16> to vector<120x128xf32>
    %181 = vector.broadcast %146 : vector<1x128xf32> to vector<120x128xf32>
    %182 = arith.subf %180, %181 : vector<120x128xf32>
    %183 = vector.broadcast %155 : vector<1x128xf32> to vector<120x128xf32>
    %184 = arith.mulf %182, %183 : vector<120x128xf32>
    %cst_113 = arith.constant 0.000000e+00 : f32
    %185 = vector.broadcast %cst_113 : f32 to vector<120x128xf32>
    %186 = arith.cmpf ogt, %184, %185 : vector<120x128xf32>
    %cst_114 = arith.constant 2.000000e-01 : f32
    %187 = vector.broadcast %cst_114 : f32 to vector<120x128xf32>
    %188 = arith.mulf %187, %184 : vector<120x128xf32>
    %189 = arith.select %186, %184, %188 : vector<120x128xi1>, vector<120x128xf32>
    %190 = vector.broadcast %178 : vector<120x1xf32> to vector<120x128xf32>
    %191 = arith.mulf %189, %190 : vector<120x128xf32>
    %192 = arith.truncf %191 : vector<120x128xf32> to vector<120x128xbf16>
    %c17_115 = arith.constant 17 : index
    %c0_116 = arith.constant 0 : index
    %193 = vector.load %arg10[%c17_115, %c0_116] : memref<160x128xbf16, #tpu.memory_space<vmem>>, vector<120x128xbf16>
    tpu.vector_store %arg10[%c17_115, %c0_116], %192 {strides = array<i32>} : memref<160x128xbf16, #tpu.memory_space<vmem>>, vector<120x128xbf16>,
    %cst_117 = arith.constant 0.000000e+00 : f32
    %194 = vector.broadcast %cst_117 : f32 to vector<1x128xf32>
    %cst_118 = arith.constant 0.000000e+00 : f32
    %195 = vector.broadcast %cst_118 : f32 to vector<1x128xf32>
    %196 = tpu.iota {dimensions = array<i32: 0>} : vector<120x1xi32>
    %c0_i32_119 = arith.constant 0 : i32
    %197 = vector.broadcast %c0_i32_119 : i32 to vector<120x1xi32>
    %198 = arith.addi %196, %197 : vector<120x1xi32>
    %c16_i32_120 = arith.constant 16 : i32
    %c0_i32_121 = arith.constant 0 : i32
    %199 = arith.cmpi eq, %c16_i32_120, %c0_i32_121 : i32
    %c1_i32_122 = arith.constant 1 : i32
    %200 = arith.select %199, %c1_i32_122, %c16_i32_120 : i32
    %201 = vector.broadcast %200 : i32 to vector<120x1xi32>
    %202 = arith.remsi %198, %201 : vector<120x1xi32>
    %c0_i32_123 = arith.constant 0 : i32
    %203 = vector.broadcast %c0_i32_123 : i32 to vector<120x1xi32>
    %204 = arith.cmpi ne, %202, %203 : vector<120x1xi32>
    %c0_i32_124 = arith.constant 0 : i32
    %205 = vector.broadcast %c0_i32_124 : i32 to vector<120x1xi32>
    %206 = arith.cmpi slt, %202, %205 : vector<120x1xi32>
    %c0_i32_125 = arith.constant 0 : i32
    %207 = arith.cmpi slt, %200, %c0_i32_125 : i32
    %208 = vector.broadcast %207 : i1 to vector<120x1xi1>
    %209 = vector.broadcast %208 : vector<120x1xi1> to vector<120x1xi1>
    %210 = arith.xori %206, %209 : vector<120x1xi1>
    %211 = arith.andi %210, %204 : vector<120x1xi1>
    %212 = vector.broadcast %200 : i32 to vector<120x1xi32>
    %213 = arith.addi %202, %212 : vector<120x1xi32>
    %214 = arith.select %211, %213, %202 : vector<120x1xi1>, vector<120x1xi32>
    %c8_i32_126 = arith.constant 8 : i32
    %215 = vector.broadcast %c8_i32_126 : i32 to vector<120x1xi32>
    %216 = arith.cmpi slt, %214, %215 : vector<120x1xi32>
    %217 = arith.extui %216 : vector<120x1xi1> to vector<120x1xi32>
    %218 = arith.sitofp %217 : vector<120x1xi32> to vector<120x1xf32>
    %c0_127 = arith.constant 0 : index
    %c0_128 = arith.constant 0 : index
    %219 = vector.load %arg10[%c0_127, %c0_128] : memref<160x128xbf16, #tpu.memory_space<vmem>>, vector<120x128xbf16>
    %c0_129 = arith.constant 0 : index
    %c0_130 = arith.constant 0 : index
    %220 = vector.load %arg5[%c0_129, %c0_130] : memref<1152x128xbf16, #tpu.memory_space<vmem>>, vector<128x128xbf16>
    %cst_131 = arith.constant dense<0.000000e+00> : vector<120x128xf32>
    %221 = tpu.matmul %219, %220, %cst_131 {dimension_numbers = #tpu.dot_dimension_numbers<[1], [0], [0], [1], [0, 0, 1, 1], [], []>} : vector<120x128xbf16>, vector<128x128xbf16>, vector<120x128xf32> -> vector<120x128xf32>
    %c1_132 = arith.constant 1 : index
    %c0_133 = arith.constant 0 : index
    %222 = vector.load %arg10[%c1_132, %c0_133] : memref<160x128xbf16, #tpu.memory_space<vmem>>, vector<120x128xbf16>
    %c128_134 = arith.constant 128 : index
    %c0_135 = arith.constant 0 : index
    %223 = vector.load %arg5[%c128_134, %c0_135] : memref<1152x128xbf16, #tpu.memory_space<vmem>>, vector<128x128xbf16>
    %cst_136 = arith.constant dense<0.000000e+00> : vector<120x128xf32>
    %224 = tpu.matmul %222, %223, %cst_136 {dimension_numbers = #tpu.dot_dimension_numbers<[1], [0], [0], [1], [0, 0, 1, 1], [], []>} : vector<120x128xbf16>, vector<128x128xbf16>, vector<120x128xf32> -> vector<120x128xf32>
    %225 = arith.addf %221, %224 : vector<120x128xf32>
    %c2_137 = arith.constant 2 : index
    %c0_138 = arith.constant 0 : index
    %226 = vector.load %arg10[%c2_137, %c0_138] : memref<160x128xbf16, #tpu.memory_space<vmem>>, vector<120x128xbf16>
    %c256_139 = arith.constant 256 : index
    %c0_140 = arith.constant 0 : index
    %227 = vector.load %arg5[%c256_139, %c0_140] : memref<1152x128xbf16, #tpu.memory_space<vmem>>, vector<128x128xbf16>
    %cst_141 = arith.constant dense<0.000000e+00> : vector<120x128xf32>
    %228 = tpu.matmul %226, %227, %cst_141 {dimension_numbers = #tpu.dot_dimension_numbers<[1], [0], [0], [1], [0, 0, 1, 1], [], []>} : vector<120x128xbf16>, vector<128x128xbf16>, vector<120x128xf32> -> vector<120x128xf32>
    %229 = arith.addf %225, %228 : vector<120x128xf32>
    %c16_142 = arith.constant 16 : index
    %c0_143 = arith.constant 0 : index
    %230 = vector.load %arg10[%c16_142, %c0_143] : memref<160x128xbf16, #tpu.memory_space<vmem>>, vector<120x128xbf16>
    %c384_144 = arith.constant 384 : index
    %c0_145 = arith.constant 0 : index
    %231 = vector.load %arg5[%c384_144, %c0_145] : memref<1152x128xbf16, #tpu.memory_space<vmem>>, vector<128x128xbf16>
    %cst_146 = arith.constant dense<0.000000e+00> : vector<120x128xf32>
    %232 = tpu.matmul %230, %231, %cst_146 {dimension_numbers = #tpu.dot_dimension_numbers<[1], [0], [0], [1], [0, 0, 1, 1], [], []>} : vector<120x128xbf16>, vector<128x128xbf16>, vector<120x128xf32> -> vector<120x128xf32>
    %233 = arith.addf %229, %232 : vector<120x128xf32>
    %c17_147 = arith.constant 17 : index
    %c0_148 = arith.constant 0 : index
    %234 = vector.load %arg10[%c17_147, %c0_148] : memref<160x128xbf16, #tpu.memory_space<vmem>>, vector<120x128xbf16>
    %c512_149 = arith.constant 512 : index
    %c0_150 = arith.constant 0 : index
    %235 = vector.load %arg5[%c512_149, %c0_150] : memref<1152x128xbf16, #tpu.memory_space<vmem>>, vector<128x128xbf16>
    %cst_151 = arith.constant dense<0.000000e+00> : vector<120x128xf32>
    %236 = tpu.matmul %234, %235, %cst_151 {dimension_numbers = #tpu.dot_dimension_numbers<[1], [0], [0], [1], [0, 0, 1, 1], [], []>} : vector<120x128xbf16>, vector<128x128xbf16>, vector<120x128xf32> -> vector<120x128xf32>
    %237 = arith.addf %233, %236 : vector<120x128xf32>
    %c18_152 = arith.constant 18 : index
    %c0_153 = arith.constant 0 : index
    %238 = vector.load %arg10[%c18_152, %c0_153] : memref<160x128xbf16, #tpu.memory_space<vmem>>, vector<120x128xbf16>
    %c640 = arith.constant 640 : index
    %c0_154 = arith.constant 0 : index
    %239 = vector.load %arg5[%c640, %c0_154] : memref<1152x128xbf16, #tpu.memory_space<vmem>>, vector<128x128xbf16>
    %cst_155 = arith.constant dense<0.000000e+00> : vector<120x128xf32>
    %240 = tpu.matmul %238, %239, %cst_155 {dimension_numbers = #tpu.dot_dimension_numbers<[1], [0], [0], [1], [0, 0, 1, 1], [], []>} : vector<120x128xbf16>, vector<128x128xbf16>, vector<120x128xf32> -> vector<120x128xf32>
    %241 = arith.addf %237, %240 : vector<120x128xf32>
    %c32_156 = arith.constant 32 : index
    %c0_157 = arith.constant 0 : index
    %242 = vector.load %arg10[%c32_156, %c0_157] : memref<160x128xbf16, #tpu.memory_space<vmem>>, vector<120x128xbf16>
    %c768 = arith.constant 768 : index
    %c0_158 = arith.constant 0 : index
    %243 = vector.load %arg5[%c768, %c0_158] : memref<1152x128xbf16, #tpu.memory_space<vmem>>, vector<128x128xbf16>
    %cst_159 = arith.constant dense<0.000000e+00> : vector<120x128xf32>
    %244 = tpu.matmul %242, %243, %cst_159 {dimension_numbers = #tpu.dot_dimension_numbers<[1], [0], [0], [1], [0, 0, 1, 1], [], []>} : vector<120x128xbf16>, vector<128x128xbf16>, vector<120x128xf32> -> vector<120x128xf32>
    %245 = arith.addf %241, %244 : vector<120x128xf32>
    %c33_160 = arith.constant 33 : index
    %c0_161 = arith.constant 0 : index
    %246 = vector.load %arg10[%c33_160, %c0_161] : memref<160x128xbf16, #tpu.memory_space<vmem>>, vector<120x128xbf16>
    %c896 = arith.constant 896 : index
    %c0_162 = arith.constant 0 : index
    %247 = vector.load %arg5[%c896, %c0_162] : memref<1152x128xbf16, #tpu.memory_space<vmem>>, vector<128x128xbf16>
    %cst_163 = arith.constant dense<0.000000e+00> : vector<120x128xf32>
    %248 = tpu.matmul %246, %247, %cst_163 {dimension_numbers = #tpu.dot_dimension_numbers<[1], [0], [0], [1], [0, 0, 1, 1], [], []>} : vector<120x128xbf16>, vector<128x128xbf16>, vector<120x128xf32> -> vector<120x128xf32>
    %249 = arith.addf %245, %248 : vector<120x128xf32>
    %c34_164 = arith.constant 34 : index
    %c0_165 = arith.constant 0 : index
    %250 = vector.load %arg10[%c34_164, %c0_165] : memref<160x128xbf16, #tpu.memory_space<vmem>>, vector<120x128xbf16>
    %c1024 = arith.constant 1024 : index
    %c0_166 = arith.constant 0 : index
    %251 = vector.load %arg5[%c1024, %c0_166] : memref<1152x128xbf16, #tpu.memory_space<vmem>>, vector<128x128xbf16>
    %cst_167 = arith.constant dense<0.000000e+00> : vector<120x128xf32>
    %252 = tpu.matmul %250, %251, %cst_167 {dimension_numbers = #tpu.dot_dimension_numbers<[1], [0], [0], [1], [0, 0, 1, 1], [], []>} : vector<120x128xbf16>, vector<128x128xbf16>, vector<120x128xf32> -> vector<120x128xf32>
    %253 = arith.addf %249, %252 : vector<120x128xf32>
    %254 = vector.broadcast %218 : vector<120x1xf32> to vector<120x128xf32>
    %255 = arith.mulf %253, %254 : vector<120x128xf32>
    %cst_168 = arith.constant dense<0.000000e+00> : vector<128xf32>
    %256 = vector.multi_reduction <add>, %255, %cst_168 [0] : vector<120x128xf32> to vector<128xf32>
    %257 = vector.shape_cast %256 : vector<128xf32> to vector<1x128xf32>
    %258 = arith.addf %194, %257 : vector<1x128xf32>
    %259 = arith.mulf %255, %253 : vector<120x128xf32>
    %cst_169 = arith.constant dense<0.000000e+00> : vector<128xf32>
    %260 = vector.multi_reduction <add>, %259, %cst_169 [0] : vector<120x128xf32> to vector<128xf32>
    %261 = vector.shape_cast %260 : vector<128xf32> to vector<1x128xf32>
    %262 = arith.addf %195, %261 : vector<1x128xf32>
    %263 = arith.truncf %253 : vector<120x128xf32> to vector<120x128xbf16>
    %c17_170 = arith.constant 17 : index
    %c0_171 = arith.constant 0 : index
    %264 = vector.load %arg11[%c17_170, %c0_171] : memref<160x128xbf16, #tpu.memory_space<vmem>>, vector<120x128xbf16>
    tpu.vector_store %arg11[%c17_170, %c0_171], %263 {strides = array<i32>} : memref<160x128xbf16, #tpu.memory_space<vmem>>, vector<120x128xbf16>,
    %cst_172 = arith.constant 1.562500e-02 : f32
    %265 = vector.broadcast %cst_172 : f32 to vector<1x128xf32>
    %266 = arith.mulf %258, %265 : vector<1x128xf32>
    %cst_173 = arith.constant 1.562500e-02 : f32
    %267 = vector.broadcast %cst_173 : f32 to vector<1x128xf32>
    %268 = arith.mulf %262, %267 : vector<1x128xf32>
    %269 = arith.mulf %266, %266 : vector<1x128xf32>
    %270 = arith.subf %268, %269 : vector<1x128xf32>
    %cst_174 = arith.constant 0.000000e+00 : f32
    %271 = vector.broadcast %cst_174 : f32 to vector<1x128xf32>
    %272 = arith.maximumf %270, %271 : vector<1x128xf32>
    %cst_175 = arith.constant 9.99999974E-6 : f32
    %273 = vector.broadcast %cst_175 : f32 to vector<1x128xf32>
    %274 = arith.addf %272, %273 : vector<1x128xf32>
    %275 = math.rsqrt %274 : vector<1x128xf32>
    %276 = tpu.iota {dimensions = array<i32: 0>} : vector<120x1xi32>
    %c0_i32_176 = arith.constant 0 : i32
    %277 = vector.broadcast %c0_i32_176 : i32 to vector<120x1xi32>
    %278 = arith.addi %276, %277 : vector<120x1xi32>
    %c16_i32_177 = arith.constant 16 : i32
    %c0_i32_178 = arith.constant 0 : i32
    %279 = arith.cmpi eq, %c16_i32_177, %c0_i32_178 : i32
    %c1_i32_179 = arith.constant 1 : i32
    %280 = arith.select %279, %c1_i32_179, %c16_i32_177 : i32
    %281 = vector.broadcast %280 : i32 to vector<120x1xi32>
    %282 = arith.remsi %278, %281 : vector<120x1xi32>
    %c0_i32_180 = arith.constant 0 : i32
    %283 = vector.broadcast %c0_i32_180 : i32 to vector<120x1xi32>
    %284 = arith.cmpi ne, %282, %283 : vector<120x1xi32>
    %c0_i32_181 = arith.constant 0 : i32
    %285 = vector.broadcast %c0_i32_181 : i32 to vector<120x1xi32>
    %286 = arith.cmpi slt, %282, %285 : vector<120x1xi32>
    %c0_i32_182 = arith.constant 0 : i32
    %287 = arith.cmpi slt, %280, %c0_i32_182 : i32
    %288 = vector.broadcast %287 : i1 to vector<120x1xi1>
    %289 = vector.broadcast %288 : vector<120x1xi1> to vector<120x1xi1>
    %290 = arith.xori %286, %289 : vector<120x1xi1>
    %291 = arith.andi %290, %284 : vector<120x1xi1>
    %292 = vector.broadcast %280 : i32 to vector<120x1xi32>
    %293 = arith.addi %282, %292 : vector<120x1xi32>
    %294 = arith.select %291, %293, %282 : vector<120x1xi1>, vector<120x1xi32>
    %c8_i32_183 = arith.constant 8 : i32
    %295 = vector.broadcast %c8_i32_183 : i32 to vector<120x1xi32>
    %296 = arith.cmpi slt, %294, %295 : vector<120x1xi32>
    %297 = arith.extui %296 : vector<120x1xi1> to vector<120x1xi32>
    %298 = arith.sitofp %297 : vector<120x1xi32> to vector<120x1xf32>
    %c17_184 = arith.constant 17 : index
    %c0_185 = arith.constant 0 : index
    %299 = vector.load %arg11[%c17_184, %c0_185] : memref<160x128xbf16, #tpu.memory_space<vmem>>, vector<120x128xbf16>
    %300 = arith.extf %299 : vector<120x128xbf16> to vector<120x128xf32>
    %301 = vector.broadcast %266 : vector<1x128xf32> to vector<120x128xf32>
    %302 = arith.subf %300, %301 : vector<120x128xf32>
    %303 = vector.broadcast %275 : vector<1x128xf32> to vector<120x128xf32>
    %304 = arith.mulf %302, %303 : vector<120x128xf32>
    %cst_186 = arith.constant 0.000000e+00 : f32
    %305 = vector.broadcast %cst_186 : f32 to vector<120x128xf32>
    %306 = arith.cmpf ogt, %304, %305 : vector<120x128xf32>
    %cst_187 = arith.constant 2.000000e-01 : f32
    %307 = vector.broadcast %cst_187 : f32 to vector<120x128xf32>
    %308 = arith.mulf %307, %304 : vector<120x128xf32>
    %309 = arith.select %306, %304, %308 : vector<120x128xi1>, vector<120x128xf32>
    %310 = vector.broadcast %298 : vector<120x1xf32> to vector<120x128xf32>
    %311 = arith.mulf %309, %310 : vector<120x128xf32>
    %312 = arith.truncf %311 : vector<120x128xf32> to vector<120x128xbf16>
    %c17_188 = arith.constant 17 : index
    %c0_189 = arith.constant 0 : index
    %313 = vector.load %arg11[%c17_188, %c0_189] : memref<160x128xbf16, #tpu.memory_space<vmem>>, vector<120x128xbf16>
    tpu.vector_store %arg11[%c17_188, %c0_189], %312 {strides = array<i32>} : memref<160x128xbf16, #tpu.memory_space<vmem>>, vector<120x128xbf16>,
    %c0_190 = arith.constant 0 : index
    %c0_191 = arith.constant 0 : index
    %314 = vector.load %arg6[%c0_190, %c0_191] : memref<9x128xf32, #tpu.memory_space<vmem>>, vector<9x128xf32>
    %c0_192 = arith.constant 0 : index
    %c0_193 = arith.constant 0 : index
    %315 = vector.load %arg11[%c0_192, %c0_193] : memref<160x128xbf16, #tpu.memory_space<vmem>>, vector<120x128xbf16>
    %316 = arith.extf %315 : vector<120x128xbf16> to vector<120x128xf32>
    %317 = vector.extract_strided_slice %314 {offsets = [0, 0], sizes = [1, 128], strides = [1, 1]} : vector<9x128xf32> to vector<1x128xf32>
    %318 = vector.broadcast %317 : vector<1x128xf32> to vector<120x128xf32>
    %319 = arith.mulf %316, %318 : vector<120x128xf32>
    %c1_194 = arith.constant 1 : index
    %c0_195 = arith.constant 0 : index
    %320 = vector.load %arg11[%c1_194, %c0_195] : memref<160x128xbf16, #tpu.memory_space<vmem>>, vector<120x128xbf16>
    %321 = arith.extf %320 : vector<120x128xbf16> to vector<120x128xf32>
    %322 = vector.extract_strided_slice %314 {offsets = [1, 0], sizes = [1, 128], strides = [1, 1]} : vector<9x128xf32> to vector<1x128xf32>
    %323 = vector.broadcast %322 : vector<1x128xf32> to vector<120x128xf32>
    %324 = arith.mulf %321, %323 : vector<120x128xf32>
    %325 = arith.addf %319, %324 : vector<120x128xf32>
    %c2_196 = arith.constant 2 : index
    %c0_197 = arith.constant 0 : index
    %326 = vector.load %arg11[%c2_196, %c0_197] : memref<160x128xbf16, #tpu.memory_space<vmem>>, vector<120x128xbf16>
    %327 = arith.extf %326 : vector<120x128xbf16> to vector<120x128xf32>
    %328 = vector.extract_strided_slice %314 {offsets = [2, 0], sizes = [1, 128], strides = [1, 1]} : vector<9x128xf32> to vector<1x128xf32>
    %329 = vector.broadcast %328 : vector<1x128xf32> to vector<120x128xf32>
    %330 = arith.mulf %327, %329 : vector<120x128xf32>
    %331 = arith.addf %325, %330 : vector<120x128xf32>
    %c16_198 = arith.constant 16 : index
    %c0_199 = arith.constant 0 : index
    %332 = vector.load %arg11[%c16_198, %c0_199] : memref<160x128xbf16, #tpu.memory_space<vmem>>, vector<120x128xbf16>
    %333 = arith.extf %332 : vector<120x128xbf16> to vector<120x128xf32>
    %334 = vector.extract_strided_slice %314 {offsets = [3, 0], sizes = [1, 128], strides = [1, 1]} : vector<9x128xf32> to vector<1x128xf32>
    %335 = vector.broadcast %334 : vector<1x128xf32> to vector<120x128xf32>
    %336 = arith.mulf %333, %335 : vector<120x128xf32>
    %337 = arith.addf %331, %336 : vector<120x128xf32>
    %c17_200 = arith.constant 17 : index
    %c0_201 = arith.constant 0 : index
    %338 = vector.load %arg11[%c17_200, %c0_201] : memref<160x128xbf16, #tpu.memory_space<vmem>>, vector<120x128xbf16>
    %339 = arith.extf %338 : vector<120x128xbf16> to vector<120x128xf32>
    %340 = vector.extract_strided_slice %314 {offsets = [4, 0], sizes = [1, 128], strides = [1, 1]} : vector<9x128xf32> to vector<1x128xf32>
    %341 = vector.broadcast %340 : vector<1x128xf32> to vector<120x128xf32>
    %342 = arith.mulf %339, %341 : vector<120x128xf32>
    %343 = arith.addf %337, %342 : vector<120x128xf32>
    %c18_202 = arith.constant 18 : index
    %c0_203 = arith.constant 0 : index
    %344 = vector.load %arg11[%c18_202, %c0_203] : memref<160x128xbf16, #tpu.memory_space<vmem>>, vector<120x128xbf16>
    %345 = arith.extf %344 : vector<120x128xbf16> to vector<120x128xf32>
    %346 = vector.extract_strided_slice %314 {offsets = [5, 0], sizes = [1, 128], strides = [1, 1]} : vector<9x128xf32> to vector<1x128xf32>
    %347 = vector.broadcast %346 : vector<1x128xf32> to vector<120x128xf32>
    %348 = arith.mulf %345, %347 : vector<120x128xf32>
    %349 = arith.addf %343, %348 : vector<120x128xf32>
    %c32_204 = arith.constant 32 : index
    %c0_205 = arith.constant 0 : index
    %350 = vector.load %arg11[%c32_204, %c0_205] : memref<160x128xbf16, #tpu.memory_space<vmem>>, vector<120x128xbf16>
    %351 = arith.extf %350 : vector<120x128xbf16> to vector<120x128xf32>
    %352 = vector.extract_strided_slice %314 {offsets = [6, 0], sizes = [1, 128], strides = [1, 1]} : vector<9x128xf32> to vector<1x128xf32>
    %353 = vector.broadcast %352 : vector<1x128xf32> to vector<120x128xf32>
    %354 = arith.mulf %351, %353 : vector<120x128xf32>
    %355 = arith.addf %349, %354 : vector<120x128xf32>
    %c33_206 = arith.constant 33 : index
    %c0_207 = arith.constant 0 : index
    %356 = vector.load %arg11[%c33_206, %c0_207] : memref<160x128xbf16, #tpu.memory_space<vmem>>, vector<120x128xbf16>
    %357 = arith.extf %356 : vector<120x128xbf16> to vector<120x128xf32>
    %358 = vector.extract_strided_slice %314 {offsets = [7, 0], sizes = [1, 128], strides = [1, 1]} : vector<9x128xf32> to vector<1x128xf32>
    %359 = vector.broadcast %358 : vector<1x128xf32> to vector<120x128xf32>
    %360 = arith.mulf %357, %359 : vector<120x128xf32>
    %361 = arith.addf %355, %360 : vector<120x128xf32>
    %c34_208 = arith.constant 34 : index
    %c0_209 = arith.constant 0 : index
    %362 = vector.load %arg11[%c34_208, %c0_209] : memref<160x128xbf16, #tpu.memory_space<vmem>>, vector<120x128xbf16>
    %363 = arith.extf %362 : vector<120x128xbf16> to vector<120x128xf32>
    %364 = vector.extract_strided_slice %314 {offsets = [8, 0], sizes = [1, 128], strides = [1, 1]} : vector<9x128xf32> to vector<1x128xf32>
    %365 = vector.broadcast %364 : vector<1x128xf32> to vector<120x128xf32>
    %366 = arith.mulf %363, %365 : vector<120x128xf32>
    %367 = arith.addf %361, %366 : vector<120x128xf32>
    %cst_210 = arith.constant dense<0.000000e+00> : vector<120xf32>
    %368 = vector.multi_reduction <add>, %367, %cst_210 [1] : vector<120x128xf32> to vector<120xf32>
    %369 = vector.shape_cast %368 : vector<120xf32> to vector<1x120xf32>
    %c0_211 = arith.constant 0 : index
    %c0_212 = arith.constant 0 : index
    %c0_213 = arith.constant 0 : index
    %370 = vector.load %arg7[%c0_211, %c0_212, %c0_213] : memref<1x1x128xf32, #tpu.memory_space<vmem>>, vector<1x1x120xf32>
    %371 = vector.shape_cast %370 : vector<1x1x120xf32> to vector<1x120xf32>
    %372 = vector.shape_cast %369 : vector<1x120xf32> to vector<1x1x120xf32>
    tpu.vector_store %arg7[%c0_211, %c0_212, %c0_213], %372 {strides = array<i32>} : memref<1x1x128xf32, #tpu.memory_space<vmem>>, vector<1x1x120xf32>,
    %cst_214 = arith.constant 0.000000e+00 : f32
    %373 = vector.broadcast %cst_214 : f32 to vector<1x8xf32>
    %c0_215 = arith.constant 0 : index
    %c0_216 = arith.constant 0 : index
    %c120 = arith.constant 120 : index
    %374 = vector.load %arg7[%c0_215, %c0_216, %c120] : memref<1x1x128xf32, #tpu.memory_space<vmem>>, vector<1x1x8xf32>
    %375 = vector.shape_cast %374 : vector<1x1x8xf32> to vector<1x8xf32>
    %376 = vector.shape_cast %373 : vector<1x8xf32> to vector<1x1x8xf32>
    tpu.vector_store %arg7[%c0_215, %c0_216, %c120], %376 {strides = array<i32>} : memref<1x1x128xf32, #tpu.memory_space<vmem>>, vector<1x1x8xf32>,
    return
  }
  func.func @transform_0(%arg0: i32) -> (i32, i32, i32) {
    %c0_i32 = arith.constant 0 : i32
    %c0_i32_0 = arith.constant 0 : i32
    %c0_i32_1 = arith.constant 0 : i32
    return %arg0, %c0_i32, %c0_i32_0 : i32, i32, i32
  }
  func.func @transform_1(%arg0: i32) -> (i32, i32) {
    %c0_i32 = arith.constant 0 : i32
    %c0_i32_0 = arith.constant 0 : i32
    %c0_i32_1 = arith.constant 0 : i32
    return %c0_i32, %c0_i32_0 : i32, i32
  }
  func.func @transform_2(%arg0: i32) -> (i32, i32, i32) {
    %c0_i32 = arith.constant 0 : i32
    %c0_i32_0 = arith.constant 0 : i32
    %c0_i32_1 = arith.constant 0 : i32
    %c0_i32_2 = arith.constant 0 : i32
    return %c0_i32, %c0_i32_0, %c0_i32_1 : i32, i32, i32
  }
  func.func @transform_3(%arg0: i32) -> (i32, i32) {
    %c0_i32 = arith.constant 0 : i32
    %c0_i32_0 = arith.constant 0 : i32
    %c0_i32_1 = arith.constant 0 : i32
    return %c0_i32, %c0_i32_0 : i32, i32
  }
  func.func @transform_4(%arg0: i32) -> (i32, i32) {
    %c0_i32 = arith.constant 0 : i32
    %c0_i32_0 = arith.constant 0 : i32
    %c0_i32_1 = arith.constant 0 : i32
    return %c0_i32, %c0_i32_0 : i32, i32
  }
  func.func @transform_5(%arg0: i32) -> (i32, i32) {
    %c0_i32 = arith.constant 0 : i32
    %c0_i32_0 = arith.constant 0 : i32
    %c0_i32_1 = arith.constant 0 : i32
    return %c0_i32, %c0_i32_0 : i32, i32
  }
  func.func @transform_6(%arg0: i32) -> (i32, i32, i32) {
    %c0_i32 = arith.constant 0 : i32
    %c0_i32_0 = arith.constant 0 : i32
    %c0_i32_1 = arith.constant 0 : i32
    return %arg0, %c0_i32, %c0_i32_0 : i32, i32, i32
  }
}

</mosaic_0001>

<llo_original>
// kernel: squeeze.19
$region0: #{squeeze.19}
  %s0 = inlined_call_operand.vmem [shape: f32[2,128], index: 0, kind: input, shape index: {}]
  %s1 = inlined_call_operand.vmem [shape: f32[2,8,16], index: 1, kind: output, shape index: {}]
  $region1: #{squeeze.19} parent=0
    #allocation0 [shape = 'u8[4096]{0}', space=vmem, size = 0x1000, scoped, tag = 'scoped mem for input reshape']
    %s3 = ssub.s32 4, 1
    %v4 = vld [vmem:[%s0] sm:%s3]
    %5 = vst [vmem:[#allocation0] sm:%s3] %v4
    %v6 = vld [vmem:[#allocation0] sm:$0x3]
    %vm7 = vcmask 130048
    %8 = vst.msk [vmem:[%s1] ss:$8 sm:$0x3] %vm7, %v6
    %v9 = vld [vmem:[#allocation0] sm:$0x3]
    %10 = vrot.lane.b32.xlu0 %v9, 112
    %v11 = vpop.permute.xlu0 %10
    %vm12 = vcmask 130048
    %s13 = scalar_lea.vmem %s1, 1
    %14 = vst.msk [vmem:[%s13] ss:$8 sm:$0x3] %vm12, %v11
    %v15 = vld [vmem:[#allocation0] sm:$0x3]
    %16 = vrot.lane.b32.xlu0 %v15, 96
    %v17 = vpop.permute.xlu0 %16
    %vm18 = vcmask 130048
    %s19 = scalar_lea.vmem %s1, 2
    %20 = vst.msk [vmem:[%s19] ss:$8 sm:$0x3] %vm18, %v17
    %v21 = vld [vmem:[#allocation0] sm:$0x3]
    %22 = vrot.lane.b32.xlu0 %v21, 80
    %v23 = vpop.permute.xlu0 %22
    %vm24 = vcmask 130048
    %s25 = scalar_lea.vmem %s1, 3
    %26 = vst.msk [vmem:[%s25] ss:$8 sm:$0x3] %vm24, %v23
    %v27 = vld [vmem:[#allocation0] sm:$0x3]
    %28 = vrot.lane.b32.xlu0 %v27, 64
    %v29 = vpop.permute.xlu0 %28
    %vm30 = vcmask 130048
    %s31 = scalar_lea.vmem %s1, 4
    %32 = vst.msk [vmem:[%s31] ss:$8 sm:$0x3] %vm30, %v29
    %v33 = vld [vmem:[#allocation0] sm:$0x3]
    %34 = vrot.lane.b32.xlu0 %v33, 48
    %v35 = vpop.permute.xlu0 %34
    %vm36 = vcmask 130048
    %s37 = scalar_lea.vmem %s1, 5
    %38 = vst.msk [vmem:[%s37] ss:$8 sm:$0x3] %vm36, %v35
    %v39 = vld [vmem:[#allocation0] sm:$0x3]
    %40 = vrot.lane.b32.xlu0 %v39, 32
    %v41 = vpop.permute.xlu0 %40
    %vm42 = vcmask 130048
    %s43 = scalar_lea.vmem %s1, 6
    %44 = vst.msk [vmem:[%s43] ss:$8 sm:$0x3] %vm42, %v41
    %v45 = vld [vmem:[#allocation0] sm:$0x3]
    %46 = vrot.lane.b32.xlu0 %v45, 16
    %v47 = vpop.permute.xlu0 %46
    %vm48 = vcmask 130048
    %s49 = scalar_lea.vmem %s1, 7
    %50 = vst.msk [vmem:[%s49] ss:$8 sm:$0x3] %vm48, %v47

// kernel: discriminator_forward.1
$region0: #{discriminator_forward.1}
  #allocation0 [shape = 'u32[]', space=smem, size = 0x4, offset = 0x4, fixed_abs, tag = 'smem constant byte address 0x4 - core index']
  #allocation1 [shape = 'u32[72,128]{1,0:T(1,128)}', space=vmem, size = 0x9000, scoped, tag = 'internal scratch']
  #allocation2 [shape = 'bf16[144,128]{1,0:T(8,128)(2,1)}', space=vmem, size = 0x9000, scoped, tag = 'scratch operand']
  #allocation3 [shape = 'bf16[160,64]{1,0:T(8,128)(2,1)}', space=vmem, size = 0xa000, scoped, tag = 'scratch operand']
  #allocation4 [shape = 'bf16[160,128]{1,0:T(8,128)(2,1)}', space=vmem, size = 0xa000, scoped, tag = 'scratch operand']
  #allocation5 [shape = 'bf16[160,128]{1,0:T(8,128)(2,1)}', space=vmem, size = 0xa000, scoped, tag = 'scratch operand']
  %s0 = inlined_call_operand.vmem [shape: bf16[2,144,108], index: 0, kind: input, shape index: {}]
  %s1 = inlined_call_operand.vmem [shape: bf16[108,128], index: 1, kind: input, shape index: {}]
  %s2 = inlined_call_operand.vmem [shape: bf16[4,128,64], index: 2, kind: input, shape index: {}]
  %s3 = inlined_call_operand.vmem [shape: bf16[576,128], index: 3, kind: input, shape index: {}]
  %s4 = inlined_call_operand.vmem [shape: bf16[1152,128], index: 4, kind: input, shape index: {}]
  %s5 = inlined_call_operand.vmem [shape: f32[9,128], index: 5, kind: input, shape index: {}]
  %s6 = inlined_call_operand.vmem [shape: f32[2,1,128], index: 6, kind: output, shape index: {}]
  %s7 = sld [smem:[#allocation0]]
  $region57: #{discriminator_forward.1} parent=0
    _
  %s9 = ssub.s32 1, %s7
  %s10 = scalar_select 0, %s9, %s7
  loop: start=0, step=1, limit=4
  $region2: #{discriminator_forward.1} parent=0 // loop_pre_header
    _
  $region3: #{discriminator_forward.1} parent=0 // loop_header
    %s12 = sphi 0, %s16
    %p13 = scmp.ge.s32.totalorder %s12, 4
    %s22 = sphi 0, %s24
    %s25 = sphi 0, %s22
    %s26 = sphi 0, %s25
    %s42 = sphi 0, %s26
    %s46 = sphi 0, %s46
    %s48 = sphi 0, %s46
    %s49 = sphi 0, %s48
    %s63 = sphi 0, %s49
    %s67 = sphi 0, %s67
    %s69 = sphi 0, %s67
    %s70 = sphi 0, %s69
    %s84 = sphi 0, %s70
    %s88 = sphi 0, %s88
    %s90 = sphi 0, %s88
    %s91 = sphi 0, %s90
    %s105 = sphi 0, %s91
    %s109 = sphi 0, %s109
    %s111 = sphi 0, %s109
    %s112 = sphi 0, %s111
    %s126 = sphi 0, %s112
    %s130 = sphi 0, %s130
    %s132 = sphi 0, %s130
    %s133 = sphi 0, %s132
    %s147 = sphi 0, %s133
    %s153 = sphi 0, %s155
    %s156 = sphi 0, %s153
    %s157 = sphi 0, %s156
    %s173 = sphi 0, %s157
  $region4: #{discriminator_forward.1} parent=0 // loop_header_branch
    %15 = sbr.rel (%p13) target = $region8
  $region5: #{discriminator_forward.1} parent=0 // loop_body
    %s17 = ssub.s32 %s12, 1
    %s18 = ssub.s32 %s12, 2
    %s19 = sadd.s32 %s12, 1
    %s20 = ssub.s32 %s12, %s19
    %p21 = scmp.eq.s32.totalorder %s20, 0
    %s23 = sadd.s32 %s22, 1
    %s24 = scalar_select %p21, %s22, %s23
    %p27 = pneg %p21
    %p28 = scmp.eq.s32.totalorder %s12, 1
    %p29 = por %p27, %p28
    %p30 = scmp.ne.s32.totalorder %s22, %s25
    %p31 = scmp.eq.s32.totalorder %s12, 0
    %p32 = por %p30, %p31
    %p33 = scmp.ne.s32.totalorder %s22, %s25
    %p34 = scmp.eq.s32.totalorder %s17, 1
    %p35 = por %p33, %p34
    %p36 = scmp.ne.s32.totalorder %s25, %s26
    %p37 = scmp.eq.s32.totalorder %s17, 0
    %p38 = por %p36, %p37
    %p39 = scmp.ne.s32.totalorder %s25, %s26
    %p40 = scmp.eq.s32.totalorder %s18, 1
    %p41 = por %p39, %p40
    %p43 = scmp.ne.s32.totalorder %s26, %s42
    %p44 = scmp.eq.s32.totalorder %s18, 0
    %p45 = por %p43, %p44
    %s47 = sadd.s32 %s46, 1
    %p50 = scmp.eq.s32.totalorder %s12, 1
    %p51 = scmp.ne.s32.totalorder %s46, %s48
    %p52 = scmp.eq.s32.totalorder %s12, 0
    %p53 = por %p51, %p52
    %p54 = scmp.ne.s32.totalorder %s46, %s48
    %p55 = scmp.eq.s32.totalorder %s17, 1
    %p56 = por %p54, %p55
    %p57 = scmp.ne.s32.totalorder %s48, %s49
    %p58 = scmp.eq.s32.totalorder %s17, 0
    %p59 = por %p57, %p58
    %p60 = scmp.ne.s32.totalorder %s48, %s49
    %p61 = scmp.eq.s32.totalorder %s18, 1
    %p62 = por %p60, %p61
    %p64 = scmp.ne.s32.totalorder %s49, %s63
    %p65 = scmp.eq.s32.totalorder %s18, 0
    %p66 = por %p64, %p65
    %s68 = sadd.s32 %s67, 1
    %p71 = scmp.eq.s32.totalorder %s12, 1
    %p72 = scmp.ne.s32.totalorder %s67, %s69
    %p73 = scmp.eq.s32.totalorder %s12, 0
    %p74 = por %p72, %p73
    %p75 = scmp.ne.s32.totalorder %s67, %s69
    %p76 = scmp.eq.s32.totalorder %s17, 1
    %p77 = por %p75, %p76
    %p78 = scmp.ne.s32.totalorder %s69, %s70
    %p79 = scmp.eq.s32.totalorder %s17, 0
    %p80 = por %p78, %p79
    %p81 = scmp.ne.s32.totalorder %s69, %s70
    %p82 = scmp.eq.s32.totalorder %s18, 1
    %p83 = por %p81, %p82
    %p85 = scmp.ne.s32.totalorder %s70, %s84
    %p86 = scmp.eq.s32.totalorder %s18, 0
    %p87 = por %p85, %p86
    %s89 = sadd.s32 %s88, 1
    %p92 = scmp.eq.s32.totalorder %s12, 1
    %p93 = scmp.ne.s32.totalorder %s88, %s90
    %p94 = scmp.eq.s32.totalorder %s12, 0
    %p95 = por %p93, %p94
    %p96 = scmp.ne.s32.totalorder %s88, %s90
    %p97 = scmp.eq.s32.totalorder %s17, 1
    %p98 = por %p96, %p97
    %p99 = scmp.ne.s32.totalorder %s90, %s91
    %p100 = scmp.eq.s32.totalorder %s17, 0
    %p101 = por %p99, %p100
    %p102 = scmp.ne.s32.totalorder %s90, %s91
    %p103 = scmp.eq.s32.totalorder %s18, 1
    %p104 = por %p102, %p103
    %p106 = scmp.ne.s32.totalorder %s91, %s105
    %p107 = scmp.eq.s32.totalorder %s18, 0
    %p108 = por %p106, %p107
    %s110 = sadd.s32 %s109, 1
    %p113 = scmp.eq.s32.totalorder %s12, 1
    %p114 = scmp.ne.s32.totalorder %s109, %s111
    %p115 = scmp.eq.s32.totalorder %s12, 0
    %p116 = por %p114, %p115
    %p117 = scmp.ne.s32.totalorder %s109, %s111
    %p118 = scmp.eq.s32.totalorder %s17, 1
    %p119 = por %p117, %p118
    %p120 = scmp.ne.s32.totalorder %s111, %s112
    %p121 = scmp.eq.s32.totalorder %s17, 0
    %p122 = por %p120, %p121
    %p123 = scmp.ne.s32.totalorder %s111, %s112
    %p124 = scmp.eq.s32.totalorder %s18, 1
    %p125 = por %p123, %p124
    %p127 = scmp.ne.s32.totalorder %s112, %s126
    %p128 = scmp.eq.s32.totalorder %s18, 0
    %p129 = por %p127, %p128
    %s131 = sadd.s32 %s130, 1
    %p134 = scmp.eq.s32.totalorder %s12, 1
    %p135 = scmp.ne.s32.totalorder %s130, %s132
    %p136 = scmp.eq.s32.totalorder %s12, 0
    %p137 = por %p135, %p136
    %p138 = scmp.ne.s32.totalorder %s130, %s132
    %p139 = scmp.eq.s32.totalorder %s17, 1
    %p140 = por %p138, %p139
    %p141 = scmp.ne.s32.totalorder %s132, %s133
    %p142 = scmp.eq.s32.totalorder %s17, 0
    %p143 = por %p141, %p142
    %p144 = scmp.ne.s32.totalorder %s132, %s133
    %p145 = scmp.eq.s32.totalorder %s18, 1
    %p146 = por %p144, %p145
    %p148 = scmp.ne.s32.totalorder %s133, %s147
    %p149 = scmp.eq.s32.totalorder %s18, 0
    %p150 = por %p148, %p149
    %s151 = ssub.s32 %s12, %s19
    %p152 = scmp.eq.s32.totalorder %s151, 0
    %s154 = sadd.s32 %s153, 1
    %s155 = scalar_select %p152, %s153, %s154
    %p158 = pneg %p152
    %p159 = scmp.eq.s32.totalorder %s12, 1
    %p160 = por %p158, %p159
    %p161 = scmp.ne.s32.totalorder %s153, %s156
    %p162 = scmp.eq.s32.totalorder %s12, 0
    %p163 = por %p161, %p162
    %p164 = scmp.ne.s32.totalorder %s153, %s156
    %p165 = scmp.eq.s32.totalorder %s17, 1
    %p166 = por %p164, %p165
    %p167 = scmp.ne.s32.totalorder %s156, %s157
    %p168 = scmp.eq.s32.totalorder %s17, 0
    %p169 = por %p167, %p168
    %p170 = scmp.ne.s32.totalorder %s156, %s157
    %p171 = scmp.eq.s32.totalorder %s18, 1
    %p172 = por %p170, %p171
    %p174 = scmp.ne.s32.totalorder %s157, %s173
    %p175 = scmp.eq.s32.totalorder %s18, 0
    %p176 = por %p174, %p175
    %p177 = scmp.le.s32.totalorder 1, %s12
    %p178 = scmp.lt.s32.totalorder %s12, 3
    %p179 = pnand %p177, %p178
    %p180 = pneg %p179
    // Predicated region
    $region9: #{discriminator_forward.1} parent=5 // pred_check
      _
    $region10: #{discriminator_forward.1} parent=5 // pred_check_branch
      %182 = sbr.rel (%p179) target = $region12
    $region11: #{discriminator_forward.1} parent=5 // pred_region
      %s183 = ssub.s32 %s12, 1
      // Predicated region
      $region13: #{discriminator_forward.1} parent=11 // pred_check
        %p184 = pneg %p59
      $region14: #{discriminator_forward.1} parent=11 // pred_check_branch
        %186 = sbr.rel (%p184) target = $region16
      $region15: #{discriminator_forward.1} parent=11 // pred_region
        _
      $region16: #{discriminator_forward.1} parent=11 // pred_fallthru
        _
      // Predicated region
      $region17: #{discriminator_forward.1} parent=11 // pred_check
        %p187 = pneg %p80
      $region18: #{discriminator_forward.1} parent=11 // pred_check_branch
        %189 = sbr.rel (%p187) target = $region20
      $region19: #{discriminator_forward.1} parent=11 // pred_region
        _
      $region20: #{discriminator_forward.1} parent=11 // pred_fallthru
        _
      // Predicated region
      $region21: #{discriminator_forward.1} parent=11 // pred_check
        %p190 = pneg %p101
      $region22: #{discriminator_forward.1} parent=11 // pred_check_branch
        %192 = sbr.rel (%p190) target = $region24
      $region23: #{discriminator_forward.1} parent=11 // pred_region
        _
      $region24: #{discriminator_forward.1} parent=11 // pred_fallthru
        _
      // Predicated region
      $region25: #{discriminator_forward.1} parent=11 // pred_check
        %p193 = pneg %p122
      $region26: #{discriminator_forward.1} parent=11 // pred_check_branch
        %195 = sbr.rel (%p193) target = $region28
      $region27: #{discriminator_forward.1} parent=11 // pred_region
        _
      $region28: #{discriminator_forward.1} parent=11 // pred_fallthru
        _
      // Predicated region
      $region29: #{discriminator_forward.1} parent=11 // pred_check
        %p196 = pneg %p143
      $region30: #{discriminator_forward.1} parent=11 // pred_check_branch
        %198 = sbr.rel (%p196) target = $region32
      $region31: #{discriminator_forward.1} parent=11 // pred_region
        _
      $region32: #{discriminator_forward.1} parent=11 // pred_fallthru
        _
    $region12: #{discriminator_forward.1} parent=5 // pred_fallthru
      _
    %p199 = scmp.lt.s32.totalorder %s12, 2
    // Predicated region
    $region33: #{discriminator_forward.1} parent=5 // pred_check
      %p200 = pneg %p199
    $region34: #{discriminator_forward.1} parent=5 // pred_check_branch
      %202 = sbr.rel (%p200) target = $region36
    $region35: #{discriminator_forward.1} parent=5 // pred_region
      // Predicated region
      $region37: #{discriminator_forward.1} parent=35 // pred_check
        %p203 = pneg %p32
      $region38: #{discriminator_forward.1} parent=35 // pred_check_branch
        %205 = sbr.rel (%p203) target = $region40
      $region39: #{discriminator_forward.1} parent=35 // pred_region
        %p206 = scmp.lt.s32.totalorder %s12, 1
        %s207 = scalar_select %p206, %s12, 1
        %s208 = smul.addr %s207, 18
        %s209 = smul.addr %s208, 4
        %s210 = scalar_lea.vmem %s0, %s209
      $region40: #{discriminator_forward.1} parent=35 // pred_fallthru
        _
    $region36: #{discriminator_forward.1} parent=5 // pred_fallthru
      _
    %p211 = scmp.le.s32.totalorder 1, %s12
    %p212 = scmp.lt.s32.totalorder %s12, 3
    %p213 = pnand %p211, %p212
    %p214 = pneg %p213
    // Predicated region
    $region41: #{discriminator_forward.1} parent=5 // pred_check
      _
    $region42: #{discriminator_forward.1} parent=5 // pred_check_branch
      %216 = sbr.rel (%p213) target = $region44
    $region43: #{discriminator_forward.1} parent=5 // pred_region
      %s217 = ssub.s32 %s12, 1
      %p218 = scmp.lt.s32.totalorder %s17, 1
      %s219 = scalar_select %p218, %s17, 1
      %s220 = smul.addr %s219, 18
      %s221 = smul.addr %s220, 4
      %s222 = scalar_lea.vmem %s0, %s221
      %p223 = pneg %p38
      %p224 = pneg %p35
      %p225 = pneg %p59
      %p226 = pneg %p56
      %p227 = pneg %p80
      %p228 = pneg %p77
      %p229 = pneg %p101
      %p230 = pneg %p98
      %p231 = pneg %p122
      %p232 = pneg %p119
      %p233 = pneg %p143
      %p234 = pneg %p140
      %p235 = pneg %p169
      %p236 = pneg %p166
      %p237 = scmp.lt.s32.totalorder %s17, 1
      %s238 = scalar_select %p237, %s17, 1
      %s239 = scalar_lea.vmem %s6, %s238
      %p240 = scmp.lt.s32.totalorder %s17, 1
      %s241 = scalar_select %p240, %s17, 1
      %s242 = smul.addr %s241, 18
      %s243 = smul.addr %s242, 4
      %s244 = scalar_lea.vmem %s0, %s243
      %p245 = scmp.lt.s32.totalorder %s17, 1
      %s246 = scalar_select %p245, %s17, 1
      %s247 = scalar_lea.vmem %s6, %s246
      %vm249 = vcmask 519168
      %250 = vst.msk [vmem:[#allocation3] sm:$0xf] %vm249, 0
      %251 = vst.msk [vmem:[#allocation3 + $0x4] sm:$0xf] %vm249, 0
      %vm252 = vcmask 516096
      %vm253 = vsmask.f32 256
      %vm254 = vmand %vm252, %vm253
      %v255 = vld [vmem:[#allocation3 + $0x8] sm:$0x1]
      %v256 = vsel %vm254, 0, %v255
      %257 = vst [vmem:[#allocation3 + $0x8] sm:$0x1] %v256
      %vm258 = vcmask 519168
      %vm259 = vsmask.f32 7938
      %vm260 = vmand %vm258, %vm259
      %v261 = vld [vmem:[#allocation3 + $0x44] sm:$0xf]
      %v262 = vsel %vm260, 0, %v261
      %263 = vst [vmem:[#allocation3 + $0x44] sm:$0xf] %v262
      %264 = vst.msk [vmem:[#allocation3 + $0x48] sm:$0xf] %vm249, 0
      %265 = vst.msk [vmem:[#allocation3 + $0x4c] sm:$0xf] %vm249, 0
      %266 = vst [vmem:[#allocation4] sm:$0xf] 0
      %267 = vst [vmem:[#allocation4 + $0x4] sm:$0xf] 0
      %vm268 = vcmask 1040384
      %vm269 = vmand %vm268, %vm253
      %v270 = vld [vmem:[#allocation4 + $0x8] sm:$0x1]
      %v271 = vsel %vm269, 0, %v270
      %272 = vst [vmem:[#allocation4 + $0x8] sm:$0x1] %v271
      %vm273 = vcmask 1043456
      %vm274 = vmand %vm273, %vm259
      %v275 = vld [vmem:[#allocation4 + $0x44] sm:$0xf]
      %v276 = vsel %vm274, 0, %v275
      %277 = vst [vmem:[#allocation4 + $0x44] sm:$0xf] %v276
      %278 = vst [vmem:[#allocation4 + $0x48] sm:$0xf] 0
      %279 = vst [vmem:[#allocation4 + $0x4c] sm:$0xf] 0
      %280 = vst [vmem:[#allocation5] sm:$0xf] 0
      %281 = vst [vmem:[#allocation5 + $0x4] sm:$0xf] 0
      %v282 = vld [vmem:[#allocation5 + $0x8] sm:$0x1]
      %v283 = vsel %vm269, 0, %v282
      %284 = vst [vmem:[#allocation5 + $0x8] sm:$0x1] %v283
      %v285 = vld [vmem:[#allocation5 + $0x44] sm:$0xf]
      %v286 = vsel %vm274, 0, %v285
      %287 = vst [vmem:[#allocation5 + $0x44] sm:$0xf] %v286
      %288 = vst [vmem:[#allocation5 + $0x48] sm:$0xf] 0
      %289 = vst [vmem:[#allocation5 + $0x4c] sm:$0xf] 0
      %v290 = vld [vmem:[%s244] sm:$0xf]
      %v291 = vld [vmem:[%s244 + $0x4] sm:$0xf]
      %v292 = vld [vmem:[%s244 + $0x8] sm:$0xf]
      %v293 = vld [vmem:[%s244 + $0xc] sm:$0xf]
      %v294 = vld [vmem:[%s244 + $0x10] sm:$0xf]
      %v295 = vld [vmem:[%s244 + $0x14] sm:$0xf]
      %v296 = vld [vmem:[%s244 + $0x18] sm:$0xf]
      %v297 = vld [vmem:[%s244 + $0x1c] sm:$0xf]
      %v298 = vld [vmem:[%s244 + $0x20] sm:$0xf]
      %v299 = vld [vmem:[%s244 + $0x24] sm:$0xf]
      %v300 = vld [vmem:[%s244 + $0x28] sm:$0xf]
      %v301 = vld [vmem:[%s244 + $0x2c] sm:$0xf]
      %v302 = vld [vmem:[%s244 + $0x30] sm:$0xf]
      %v303 = vld [vmem:[%s244 + $0x34] sm:$0xf]
      %v304 = vld [vmem:[%s244 + $0x38] sm:$0xf]
      %v305 = vld [vmem:[%s244 + $0x3c] sm:$0xf]
      %v306 = vld [vmem:[%s244 + $0x40] sm:$0xf]
      %v307 = vld [vmem:[%s244 + $0x44] sm:$0xf]
      %v308 = vld [vmem:[%s1] sm:$0xf]
      %v309 = vld [vmem:[%s1 + $0x4] sm:$0xf]
      %v310 = vld [vmem:[%s1 + $0x8] sm:$0xf]
      %v311 = vld [vmem:[%s1 + $0xc] sm:$0xf]
      %v312 = vld [vmem:[%s1 + $0x10] sm:$0xf]
      %v313 = vld [vmem:[%s1 + $0x14] sm:$0xf]
      %v314 = vld [vmem:[%s1 + $0x18] sm:$0xf]
      %v315 = vld [vmem:[%s1 + $0x1c] sm:$0xf]
      %v316 = vld [vmem:[%s1 + $0x20] sm:$0xf]
      %v317 = vld [vmem:[%s1 + $0x24] sm:$0xf]
      %v318 = vld [vmem:[%s1 + $0x28] sm:$0xf]
      %v319 = vld [vmem:[%s1 + $0x2c] sm:$0xf]
      %v320 = vld [vmem:[%s1 + $0x30] sm:$0xf]
      %v321 = vld [vmem:[%s1 + $0x34] sm:$0x3]
      %v340 = vunpack.c.l.b16 %v290
      %v341 = vunpack.c.l.b16 %v291
      %v342 = vunpack.c.l.b16 %v292
      %v343 = vunpack.c.l.b16 %v293
      %v344 = vunpack.c.l.b16 %v294
      %v345 = vunpack.c.l.b16 %v295
      %v346 = vunpack.c.l.b16 %v296
      %v347 = vunpack.c.l.b16 %v297
      %v348 = vunpack.c.l.b16 %v298
      %v349 = vunpack.c.l.b16 %v299
      %v350 = vunpack.c.l.b16 %v300
      %v351 = vunpack.c.l.b16 %v301
      %v352 = vunpack.c.l.b16 %v302
      %v353 = vunpack.c.l.b16 %v303
      %v354 = vunpack.c.l.b16 %v304
      %v355 = vunpack.c.l.b16 %v305
      %v356 = vunpack.c.l.b16 %v306
      %v357 = vunpack.c.l.b16 %v307
      %v358 = vpack.c.b16 %v341, %v340
      %v359 = vpack.c.b16 %v343, %v342
      %v360 = vpack.c.b16 %v345, %v344
      %v361 = vpack.c.b16 %v347, %v346
      %v362 = vpack.c.b16 %v349, %v348
      %v363 = vpack.c.b16 %v351, %v350
      %v364 = vpack.c.b16 %v353, %v352
      %v365 = vpack.c.b16 %v355, %v354
      %v366 = vpack.c.b16 %v357, %v356
      %v381 = vunpack.c.l.b16 %v308
      %v382 = vunpack.c.l.b16 %v309
      %v383 = vunpack.c.l.b16 %v310
      %v384 = vunpack.c.l.b16 %v311
      %v385 = vunpack.c.l.b16 %v312
      %v386 = vunpack.c.l.b16 %v313
      %v387 = vunpack.c.l.b16 %v314
      %v388 = vunpack.c.l.b16 %v315
      %v389 = vunpack.c.l.b16 %v316
      %v390 = vunpack.c.l.b16 %v317
      %v391 = vunpack.c.l.b16 %v318
      %v392 = vunpack.c.l.b16 %v319
      %v393 = vunpack.c.l.b16 %v320
      %v394 = vunpack.c.l.b16 %v321
      %v395 = vpack.c.b16 %v382, %v381
      %v396 = vpack.c.b16 %v384, %v383
      %v397 = vpack.c.b16 %v386, %v385
      %v398 = vpack.c.b16 %v388, %v387
      %v399 = vpack.c.b16 %v390, %v389
      %v400 = vpack.c.b16 %v392, %v391
      %v401 = vpack.c.b16 %v394, %v393
      %vm408 = vcmask 883712
      %v410 = vsel %vm408, %v358, 0
      %v413 = vsel %vm408, %v359, 0
      %v416 = vsel %vm408, %v360, 0
      %v419 = vsel %vm408, %v361, 0
      %v422 = vsel %vm408, %v362, 0
      %v425 = vsel %vm408, %v363, 0
      %v428 = vsel %vm408, %v364, 0
      %v431 = vsel %vm408, %v365, 0
      %v434 = vsel %vm408, %v366, 0
      %vm436 = vcmask 1045504
      %v438 = vsel %vm436, %v401, 0
      %440 = vmatpush.bf16.msra.mxu0 0
      %441 = vmatpush.bf16.msra.mxu0 %v438
      %442 = vmatpush.bf16.msra.mxu0 %v400
      %443 = vmatpush.bf16.msra.mxu0 %v399
      %444 = vmatpush.bf16.msra.mxu0 %v398
      %445 = vmatpush.bf16.msra.mxu0 %v397
      %446 = vmatpush.bf16.msra.mxu0 %v396
      %447 = vmatpush.bf16.msra.mxu0 %v395
      %448 = vmatmul.bf16.gmra.mxu0 %v410
      %v449 = vpop.f32.mrf.mxu0
      %v450 = vadd.f32 0.0, %v449
      %v451 = vpop.f32.mrf.mxu0
      %v452 = vadd.f32 0.0, %v451
      %453 = vmatmul.bf16.gmra.mxu0 %v413
      %v454 = vpop.f32.mrf.mxu0
      %v455 = vadd.f32 0.0, %v454
      %v456 = vpop.f32.mrf.mxu0
      %v457 = vadd.f32 0.0, %v456
      %458 = vmatmul.bf16.gmra.mxu0 %v416
      %v459 = vpop.f32.mrf.mxu0
      %v460 = vadd.f32 0.0, %v459
      %v461 = vpop.f32.mrf.mxu0
      %v462 = vadd.f32 0.0, %v461
      %463 = vmatmul.bf16.gmra.mxu0 %v419
      %v464 = vpop.f32.mrf.mxu0
      %v465 = vadd.f32 0.0, %v464
      %v466 = vpop.f32.mrf.mxu0
      %v467 = vadd.f32 0.0, %v466
      %468 = vmatmul.bf16.gmra.mxu0 %v422
      %v469 = vpop.f32.mrf.mxu0
      %v470 = vadd.f32 0.0, %v469
      %v471 = vpop.f32.mrf.mxu0
      %v472 = vadd.f32 0.0, %v471
      %473 = vmatmul.bf16.gmra.mxu0 %v425
      %v474 = vpop.f32.mrf.mxu0
      %v475 = vadd.f32 0.0, %v474
      %v476 = vpop.f32.mrf.mxu0
      %v477 = vadd.f32 0.0, %v476
      %478 = vmatmul.bf16.gmra.mxu0 %v428
      %v479 = vpop.f32.mrf.mxu0
      %v480 = vadd.f32 0.0, %v479
      %v481 = vpop.f32.mrf.mxu0
      %v482 = vadd.f32 0.0, %v481
      %483 = vmatmul.bf16.gmra.mxu0 %v431
      %v484 = vpop.f32.mrf.mxu0
      %v485 = vadd.f32 0.0, %v484
      %v486 = vpop.f32.mrf.mxu0
      %v487 = vadd.f32 0.0, %v486
      %488 = vmatmul.bf16.gmra.mxu0 %v434
      %v489 = vpop.f32.mrf.mxu0
      %v490 = vadd.f32 0.0, %v489
      %v491 = vpop.f32.mrf.mxu0
      %v492 = vadd.f32 0.0, %v491
      %493 = vdwg.mxu0
      %vm494 = vcmp.gt.f32.partialorder %v450, 0.0
      %vm495 = vcmp.gt.f32.partialorder %v452, 0.0
      %vm496 = vcmp.gt.f32.partialorder %v455, 0.0
      %vm497 = vcmp.gt.f32.partialorder %v457, 0.0
      %vm498 = vcmp.gt.f32.partialorder %v460, 0.0
      %vm499 = vcmp.gt.f32.partialorder %v462, 0.0
      %vm500 = vcmp.gt.f32.partialorder %v465, 0.0
      %vm501 = vcmp.gt.f32.partialorder %v467, 0.0
      %vm502 = vcmp.gt.f32.partialorder %v470, 0.0
      %vm503 = vcmp.gt.f32.partialorder %v472, 0.0
      %vm504 = vcmp.gt.f32.partialorder %v475, 0.0
      %vm505 = vcmp.gt.f32.partialorder %v477, 0.0
      %vm506 = vcmp.gt.f32.partialorder %v480, 0.0
      %vm507 = vcmp.gt.f32.partialorder %v482, 0.0
      %vm508 = vcmp.gt.f32.partialorder %v485, 0.0
      %vm509 = vcmp.gt.f32.partialorder %v487, 0.0
      %vm510 = vcmp.gt.f32.partialorder %v490, 0.0
      %vm511 = vcmp.gt.f32.partialorder %v492, 0.0
      %v512 = vmul.f32 %v450, 0.2
      %v513 = vmul.f32 %v452, 0.2
      %v514 = vmul.f32 %v455, 0.2
      %v515 = vmul.f32 %v457, 0.2
      %v516 = vmul.f32 %v460, 0.2
      %v517 = vmul.f32 %v462, 0.2
      %v518 = vmul.f32 %v465, 0.2
      %v519 = vmul.f32 %v467, 0.2
      %v520 = vmul.f32 %v470, 0.2
      %v521 = vmul.f32 %v472, 0.2
      %v522 = vmul.f32 %v475, 0.2
      %v523 = vmul.f32 %v477, 0.2
      %v524 = vmul.f32 %v480, 0.2
      %v525 = vmul.f32 %v482, 0.2
      %v526 = vmul.f32 %v485, 0.2
      %v527 = vmul.f32 %v487, 0.2
      %v528 = vmul.f32 %v490, 0.2
      %v529 = vmul.f32 %v492, 0.2
      %v530 = vsel %vm494, %v450, %v512
      %v531 = vsel %vm495, %v452, %v513
      %v532 = vsel %vm496, %v455, %v514
      %v533 = vsel %vm497, %v457, %v515
      %v534 = vsel %vm498, %v460, %v516
      %v535 = vsel %vm499, %v462, %v517
      %v536 = vsel %vm500, %v465, %v518
      %v537 = vsel %vm501, %v467, %v519
      %v538 = vsel %vm502, %v470, %v520
      %v539 = vsel %vm503, %v472, %v521
      %v540 = vsel %vm504, %v475, %v522
      %v541 = vsel %vm505, %v477, %v523
      %v542 = vsel %vm506, %v480, %v524
      %v543 = vsel %vm507, %v482, %v525
      %v544 = vsel %vm508, %v485, %v526
      %v545 = vsel %vm509, %v487, %v527
      %v546 = vsel %vm510, %v490, %v528
      %v547 = vsel %vm511, %v492, %v529
      %v548 = vpack.c.bf16 %v530, %v530
      %v549 = vpack.c.bf16 %v531, %v531
      %v550 = vpack.c.bf16 %v532, %v532
      %v551 = vpack.c.bf16 %v533, %v533
      %v552 = vpack.c.bf16 %v534, %v534
      %v553 = vpack.c.bf16 %v535, %v535
      %v554 = vpack.c.bf16 %v536, %v536
      %v555 = vpack.c.bf16 %v537, %v537
      %v556 = vpack.c.bf16 %v538, %v538
      %v557 = vpack.c.bf16 %v539, %v539
      %v558 = vpack.c.bf16 %v540, %v540
      %v559 = vpack.c.bf16 %v541, %v541
      %v560 = vpack.c.bf16 %v542, %v542
      %v561 = vpack.c.bf16 %v543, %v543
      %v562 = vpack.c.bf16 %v544, %v544
      %v563 = vpack.c.bf16 %v545, %v545
      %v564 = vpack.c.bf16 %v546, %v546
      %v565 = vpack.c.bf16 %v547, %v547
      %566 = vst [vmem:[#allocation2] sm:$0xf] %v548
      %567 = vst [vmem:[#allocation2 + $0x4] sm:$0xf] %v549
      %568 = vst [vmem:[#allocation2 + $0x8] sm:$0xf] %v550
      %569 = vst [vmem:[#allocation2 + $0xc] sm:$0xf] %v551
      %570 = vst [vmem:[#allocation2 + $0x10] sm:$0xf] %v552
      %571 = vst [vmem:[#allocation2 + $0x14] sm:$0xf] %v553
      %572 = vst [vmem:[#allocation2 + $0x18] sm:$0xf] %v554
      %573 = vst [vmem:[#allocation2 + $0x1c] sm:$0xf] %v555
      %574 = vst [vmem:[#allocation2 + $0x20] sm:$0xf] %v556
      %575 = vst [vmem:[#allocation2 + $0x24] sm:$0xf] %v557
      %576 = vst [vmem:[#allocation2 + $0x28] sm:$0xf] %v558
      %577 = vst [vmem:[#allocation2 + $0x2c] sm:$0xf] %v559
      %578 = vst [vmem:[#allocation2 + $0x30] sm:$0xf] %v560
      %579 = vst [vmem:[#allocation2 + $0x34] sm:$0xf] %v561
      %580 = vst [vmem:[#allocation2 + $0x38] sm:$0xf] %v562
      %581 = vst [vmem:[#allocation2 + $0x3c] sm:$0xf] %v563
      %582 = vst [vmem:[#allocation2 + $0x40] sm:$0xf] %v564
      %583 = vst [vmem:[#allocation2 + $0x44] sm:$0xf] %v565
      %v584 = vlaneseq
      %v585 = vshrl.u32 %v584, 7
      %v586 = vadd.s32 %v585, 8
      %v587 = vadd.s32 %v585, 16
      %v588 = vadd.s32 %v585, 24
      %v589 = vadd.s32 %v585, 32
      %v590 = vadd.s32 %v585, 40
      %v591 = vadd.s32 %v585, 48
      %v592 = vadd.s32 %v585, 56
      %v593 = vadd.s32 %v585, 64
      %v594 = vadd.s32 %v585, 72
      %v595 = vadd.s32 %v585, 80
      %v596 = vadd.s32 %v585, 88
      %v597 = vadd.s32 %v585, 96
      %v598 = vadd.s32 %v585, 104
      %v599 = vadd.s32 %v585, 112
      %vm600 = vcmp.lt.s32.totalorder %v585, 0
      %v601 = vsub.s32 0, %v585
      %v602 = vsel %vm600, %v601, %v585
      %v603 = vshrl.u32 %v602, 4
      %v604 = vand.u32 %v602, 15
      %v605 = vsub.s32 0, %v604
      %v606 = vsel %vm600, %v605, %v604
      %vm607 = vcmp.lt.s32.totalorder %v586, 0
      %v608 = vsub.s32 0, %v586
      %v609 = vsel %vm607, %v608, %v586
      %v610 = vshrl.u32 %v609, 4
      %v611 = vand.u32 %v609, 15
      %v612 = vsub.s32 0, %v611
      %v613 = vsel %vm607, %v612, %v611
      %vm614 = vcmp.lt.s32.totalorder %v587, 0
      %v615 = vsub.s32 0, %v587
      %v616 = vsel %vm614, %v615, %v587
      %v617 = vshrl.u32 %v616, 4
      %v618 = vand.u32 %v616, 15
      %v619 = vsub.s32 0, %v618
      %v620 = vsel %vm614, %v619, %v618
      %vm621 = vcmp.lt.s32.totalorder %v588, 0
      %v622 = vsub.s32 0, %v588
      %v623 = vsel %vm621, %v622, %v588
      %v624 = vshrl.u32 %v623, 4
      %v625 = vand.u32 %v623, 15
      %v626 = vsub.s32 0, %v625
      %v627 = vsel %vm621, %v626, %v625
      %vm628 = vcmp.lt.s32.totalorder %v589, 0
      %v629 = vsub.s32 0, %v589
      %v630 = vsel %vm628, %v629, %v589
      %v631 = vshrl.u32 %v630, 4
      %v632 = vand.u32 %v630, 15
      %v633 = vsub.s32 0, %v632
      %v634 = vsel %vm628, %v633, %v632
      %vm635 = vcmp.lt.s32.totalorder %v590, 0
      %v636 = vsub.s32 0, %v590
      %v637 = vsel %vm635, %v636, %v590
      %v638 = vshrl.u32 %v637, 4
      %v639 = vand.u32 %v637, 15
      %v640 = vsub.s32 0, %v639
      %v641 = vsel %vm635, %v640, %v639
      %vm642 = vcmp.lt.s32.totalorder %v591, 0
      %v643 = vsub.s32 0, %v591
      %v644 = vsel %vm642, %v643, %v591
      %v645 = vshrl.u32 %v644, 4
      %v646 = vand.u32 %v644, 15
      %v647 = vsub.s32 0, %v646
      %v648 = vsel %vm642, %v647, %v646
      %vm649 = vcmp.lt.s32.totalorder %v592, 0
      %v650 = vsub.s32 0, %v592
      %v651 = vsel %vm649, %v650, %v592
      %v652 = vshrl.u32 %v651, 4
      %v653 = vand.u32 %v651, 15
      %v654 = vsub.s32 0, %v653
      %v655 = vsel %vm649, %v654, %v653
      %vm656 = vcmp.lt.s32.totalorder %v593, 0
      %v657 = vsub.s32 0, %v593
      %v658 = vsel %vm656, %v657, %v593
      %v659 = vshrl.u32 %v658, 4
      %v660 = vand.u32 %v658, 15
      %v661 = vsub.s32 0, %v660
      %v662 = vsel %vm656, %v661, %v660
      %vm663 = vcmp.lt.s32.totalorder %v594, 0
      %v664 = vsub.s32 0, %v594
      %v665 = vsel %vm663, %v664, %v594
      %v666 = vshrl.u32 %v665, 4
      %v667 = vand.u32 %v665, 15
      %v668 = vsub.s32 0, %v667
      %v669 = vsel %vm663, %v668, %v667
      %vm670 = vcmp.lt.s32.totalorder %v595, 0
      %v671 = vsub.s32 0, %v595
      %v672 = vsel %vm670, %v671, %v595
      %v673 = vshrl.u32 %v672, 4
      %v674 = vand.u32 %v672, 15
      %v675 = vsub.s32 0, %v674
      %v676 = vsel %vm670, %v675, %v674
      %vm677 = vcmp.lt.s32.totalorder %v596, 0
      %v678 = vsub.s32 0, %v596
      %v679 = vsel %vm677, %v678, %v596
      %v680 = vshrl.u32 %v679, 4
      %v681 = vand.u32 %v679, 15
      %v682 = vsub.s32 0, %v681
      %v683 = vsel %vm677, %v682, %v681
      %vm684 = vcmp.lt.s32.totalorder %v597, 0
      %v685 = vsub.s32 0, %v597
      %v686 = vsel %vm684, %v685, %v597
      %v687 = vshrl.u32 %v686, 4
      %v688 = vand.u32 %v686, 15
      %v689 = vsub.s32 0, %v688
      %v690 = vsel %vm684, %v689, %v688
      %vm691 = vcmp.lt.s32.totalorder %v598, 0
      %v692 = vsub.s32 0, %v598
      %v693 = vsel %vm691, %v692, %v598
      %v694 = vshrl.u32 %v693, 4
      %v695 = vand.u32 %v693, 15
      %v696 = vsub.s32 0, %v695
      %v697 = vsel %vm691, %v696, %v695
      %vm698 = vcmp.lt.s32.totalorder %v599, 0
      %v699 = vsub.s32 0, %v599
      %v700 = vsel %vm698, %v699, %v599
      %v701 = vshrl.u32 %v700, 4
      %v702 = vand.u32 %v700, 15
      %v703 = vsub.s32 0, %v702
      %v704 = vsel %vm698, %v703, %v702
      %vm705 = vcmp.ne.s32.totalorder %v606, 0
      %vm706 = vcmp.ne.s32.totalorder %v613, 0
      %vm707 = vcmp.ne.s32.totalorder %v620, 0
      %vm708 = vcmp.ne.s32.totalorder %v627, 0
      %vm709 = vcmp.ne.s32.totalorder %v634, 0
      %vm710 = vcmp.ne.s32.totalorder %v641, 0
      %vm711 = vcmp.ne.s32.totalorder %v648, 0
      %vm712 = vcmp.ne.s32.totalorder %v655, 0
      %vm713 = vcmp.ne.s32.totalorder %v662, 0
      %vm714 = vcmp.ne.s32.totalorder %v669, 0
      %vm715 = vcmp.ne.s32.totalorder %v676, 0
      %vm716 = vcmp.ne.s32.totalorder %v683, 0
      %vm717 = vcmp.ne.s32.totalorder %v690, 0
      %vm718 = vcmp.ne.s32.totalorder %v697, 0
      %vm719 = vcmp.ne.s32.totalorder %v704, 0
      %vm720 = vcmp.lt.s32.totalorder %v606, 0
      %vm721 = vcmp.lt.s32.totalorder %v613, 0
      %vm722 = vcmp.lt.s32.totalorder %v620, 0
      %vm723 = vcmp.lt.s32.totalorder %v627, 0
      %vm724 = vcmp.lt.s32.totalorder %v634, 0
      %vm725 = vcmp.lt.s32.totalorder %v641, 0
      %vm726 = vcmp.lt.s32.totalorder %v648, 0
      %vm727 = vcmp.lt.s32.totalorder %v655, 0
      %vm728 = vcmp.lt.s32.totalorder %v662, 0
      %vm729 = vcmp.lt.s32.totalorder %v669, 0
      %vm730 = vcmp.lt.s32.totalorder %v676, 0
      %vm731 = vcmp.lt.s32.totalorder %v683, 0
      %vm732 = vcmp.lt.s32.totalorder %v690, 0
      %vm733 = vcmp.lt.s32.totalorder %v697, 0
      %vm734 = vcmp.lt.s32.totalorder %v704, 0
      %vm735 = vmand %vm720, %vm705
      %vm736 = vmand %vm721, %vm706
      %vm737 = vmand %vm722, %vm707
      %vm738 = vmand %vm723, %vm708
      %vm739 = vmand %vm724, %vm709
      %vm740 = vmand %vm725, %vm710
      %vm741 = vmand %vm726, %vm711
      %vm742 = vmand %vm727, %vm712
      %vm743 = vmand %vm728, %vm713
      %vm744 = vmand %vm729, %vm714
      %vm745 = vmand %vm730, %vm715
      %vm746 = vmand %vm731, %vm716
      %vm747 = vmand %vm732, %vm717
      %vm748 = vmand %vm733, %vm718
      %vm749 = vmand %vm734, %vm719
      %v750 = vadd.s32 %v606, 16
      %v751 = vadd.s32 %v613, 16
      %v752 = vadd.s32 %v620, 16
      %v753 = vadd.s32 %v627, 16
      %v754 = vadd.s32 %v634, 16
      %v755 = vadd.s32 %v641, 16
      %v756 = vadd.s32 %v648, 16
      %v757 = vadd.s32 %v655, 16
      %v758 = vadd.s32 %v662, 16
      %v759 = vadd.s32 %v669, 16
      %v760 = vadd.s32 %v676, 16
      %v761 = vadd.s32 %v683, 16
      %v762 = vadd.s32 %v690, 16
      %v763 = vadd.s32 %v697, 16
      %v764 = vadd.s32 %v704, 16
      %v765 = vsel %vm735, %v750, %v606
      %v766 = vsel %vm736, %v751, %v613
      %v767 = vsel %vm737, %v752, %v620
      %v768 = vsel %vm738, %v753, %v627
      %v769 = vsel %vm739, %v754, %v634
      %v770 = vsel %vm740, %v755, %v641
      %v771 = vsel %vm741, %v756, %v648
      %v772 = vsel %vm742, %v757, %v655
      %v773 = vsel %vm743, %v758, %v662
      %v774 = vsel %vm744, %v759, %v669
      %v775 = vsel %vm745, %v760, %v676
      %v776 = vsel %vm746, %v761, %v683
      %v777 = vsel %vm747, %v762, %v690
      %v778 = vsel %vm748, %v763, %v697
      %v779 = vsel %vm749, %v764, %v704
      %vm780 = vcmp.lt.s32.totalorder %v765, 8
      %vm781 = vcmp.lt.s32.totalorder %v766, 8
      %vm782 = vcmp.lt.s32.totalorder %v767, 8
      %vm783 = vcmp.lt.s32.totalorder %v768, 8
      %vm784 = vcmp.lt.s32.totalorder %v769, 8
      %vm785 = vcmp.lt.s32.totalorder %v770, 8
      %vm786 = vcmp.lt.s32.totalorder %v771, 8
      %vm787 = vcmp.lt.s32.totalorder %v772, 8
      %vm788 = vcmp.lt.s32.totalorder %v773, 8
      %vm789 = vcmp.lt.s32.totalorder %v774, 8
      %vm790 = vcmp.lt.s32.totalorder %v775, 8
      %vm791 = vcmp.lt.s32.totalorder %v776, 8
      %vm792 = vcmp.lt.s32.totalorder %v777, 8
      %vm793 = vcmp.lt.s32.totalorder %v778, 8
      %vm794 = vcmp.lt.s32.totalorder %v779, 8
      %v795 = vsel %vm780, 1, 0
      %v796 = vsel %vm781, 1, 0
      %v797 = vsel %vm782, 1, 0
      %v798 = vsel %vm783, 1, 0
      %v799 = vsel %vm784, 1, 0
      %v800 = vsel %vm785, 1, 0
      %v801 = vsel %vm786, 1, 0
      %v802 = vsel %vm787, 1, 0
      %v803 = vsel %vm788, 1, 0
      %v804 = vsel %vm789, 1, 0
      %v805 = vsel %vm790, 1, 0
      %v806 = vsel %vm791, 1, 0
      %v807 = vsel %vm792, 1, 0
      %v808 = vsel %vm793, 1, 0
      %v809 = vsel %vm794, 1, 0
      %v810 = vcvt.s32.f32 %v795
      %v811 = vcvt.s32.f32 %v796
      %v812 = vcvt.s32.f32 %v797
      %v813 = vcvt.s32.f32 %v798
      %v814 = vcvt.s32.f32 %v799
      %v815 = vcvt.s32.f32 %v800
      %v816 = vcvt.s32.f32 %v801
      %v817 = vcvt.s32.f32 %v802
      %v818 = vcvt.s32.f32 %v803
      %v819 = vcvt.s32.f32 %v804
      %v820 = vcvt.s32.f32 %v805
      %v821 = vcvt.s32.f32 %v806
      %v822 = vcvt.s32.f32 %v807
      %v823 = vcvt.s32.f32 %v808
      %v824 = vcvt.s32.f32 %v809
      %v825 = vld [vmem:[#allocation2] sm:$0xf]
      %v826 = vld [vmem:[#allocation2 + $0x4] sm:$0xf]
      %v827 = vld [vmem:[#allocation2 + $0x8] sm:$0xf]
      %v828 = vld [vmem:[#allocation2 + $0xc] sm:$0xf]
      %v829 = vld [vmem:[#allocation2 + $0x10] sm:$0xf]
      %v830 = vld [vmem:[#allocation2 + $0x14] sm:$0xf]
      %v831 = vld [vmem:[#allocation2 + $0x18] sm:$0xf]
      %v832 = vld [vmem:[#allocation2 + $0x1c] sm:$0xf]
      %v833 = vld [vmem:[#allocation2 + $0x20] sm:$0xf]
      %v834 = vld [vmem:[#allocation2 + $0x24] sm:$0xf]
      %v835 = vld [vmem:[#allocation2 + $0x28] sm:$0xf]
      %v836 = vld [vmem:[#allocation2 + $0x2c] sm:$0xf]
      %v837 = vld [vmem:[#allocation2 + $0x30] sm:$0xf]
      %v838 = vld [vmem:[#allocation2 + $0x34] sm:$0xf]
      %v839 = vld [vmem:[#allocation2 + $0x38] sm:$0xf]
      %v840 = vld [vmem:[%s2] sm:$0xf]
      %v841 = vld [vmem:[%s2 + $0x4] sm:$0xf]
      %v842 = vld [vmem:[%s2 + $0x8] sm:$0xf]
      %v843 = vld [vmem:[%s2 + $0xc] sm:$0xf]
      %v844 = vld [vmem:[%s2 + $0x10] sm:$0xf]
      %v845 = vld [vmem:[%s2 + $0x14] sm:$0xf]
      %v846 = vld [vmem:[%s2 + $0x18] sm:$0xf]
      %v847 = vld [vmem:[%s2 + $0x1c] sm:$0xf]
      %v848 = vld [vmem:[%s2 + $0x20] sm:$0xf]
      %v849 = vld [vmem:[%s2 + $0x24] sm:$0xf]
      %v850 = vld [vmem:[%s2 + $0x28] sm:$0xf]
      %v851 = vld [vmem:[%s2 + $0x2c] sm:$0xf]
      %v852 = vld [vmem:[%s2 + $0x30] sm:$0xf]
      %v853 = vld [vmem:[%s2 + $0x34] sm:$0xf]
      %v854 = vld [vmem:[%s2 + $0x38] sm:$0xf]
      %v855 = vld [vmem:[%s2 + $0x3c] sm:$0xf]
      %v856 = vld [vmem:[#allocation2 + $0x3c] sm:$0x1]
      %s857 = scalar_lea.vmem %s2, 64
      %v858 = vld [vmem:[%s857] sm:$0xf]
      %v859 = vld [vmem:[%s857 + $0x4] sm:$0xf]
      %v860 = vld [vmem:[%s857 + $0x8] sm:$0xf]
      %v861 = vld [vmem:[%s857 + $0xc] sm:$0xf]
      %v862 = vld [vmem:[%s857 + $0x10] sm:$0xf]
      %v863 = vld [vmem:[%s857 + $0x14] sm:$0xf]
      %v864 = vld [vmem:[%s857 + $0x18] sm:$0xf]
      %v865 = vld [vmem:[%s857 + $0x1c] sm:$0xf]
      %v866 = vld [vmem:[%s857 + $0x20] sm:$0xf]
      %v867 = vld [vmem:[%s857 + $0x24] sm:$0xf]
      %v868 = vld [vmem:[%s857 + $0x28] sm:$0xf]
      %v869 = vld [vmem:[%s857 + $0x2c] sm:$0xf]
      %v870 = vld [vmem:[%s857 + $0x30] sm:$0xf]
      %v871 = vld [vmem:[%s857 + $0x34] sm:$0xf]
      %v872 = vld [vmem:[%s857 + $0x38] sm:$0xf]
      %v873 = vld [vmem:[%s857 + $0x3c] sm:$0xf]
      %v890 = vunpack.c.l.b16 %v825
      %v891 = vunpack.c.l.b16 %v826
      %v892 = vunpack.c.l.b16 %v827
      %v893 = vunpack.c.l.b16 %v828
      %v894 = vunpack.c.l.b16 %v829
      %v895 = vunpack.c.l.b16 %v830
      %v896 = vunpack.c.l.b16 %v831
      %v897 = vunpack.c.l.b16 %v832
      %v898 = vunpack.c.l.b16 %v833
      %v899 = vunpack.c.l.b16 %v834
      %v900 = vunpack.c.l.b16 %v835
      %v901 = vunpack.c.l.b16 %v836
      %v902 = vunpack.c.l.b16 %v837
      %v903 = vunpack.c.l.b16 %v838
      %v904 = vunpack.c.l.b16 %v839
      %v905 = vunpack.c.l.b16 %v856
      %v906 = vpack.c.b16 %v891, %v890
      %v907 = vpack.c.b16 %v893, %v892
      %v908 = vpack.c.b16 %v895, %v894
      %v909 = vpack.c.b16 %v897, %v896
      %v910 = vpack.c.b16 %v899, %v898
      %v911 = vpack.c.b16 %v901, %v900
      %v912 = vpack.c.b16 %v903, %v902
      %v913 = vpack.c.b16 %v905, %v904
      %vm914 = vsmask.f32 7424
      %v916 = vshrl.u32 %v906, 16
      %v918 = vshll.u32 %v906, 16
      %v920 = vrot.slane %v918, 1
      %v921 = vor.u32 %v916, %v920
      %v923 = vshll.u32 %v907, 16
      %v925 = vrot.slane %v923, 1
      %v926 = vsel %vm914, %v921, %v925
      %v927 = vshrl.u32 %v907, 16
      %v929 = vor.u32 %v927, %v925
      %v931 = vshll.u32 %v908, 16
      %v933 = vrot.slane %v931, 1
      %v934 = vsel %vm914, %v929, %v933
      %v935 = vshrl.u32 %v908, 16
      %v937 = vor.u32 %v935, %v933
      %v939 = vshll.u32 %v909, 16
      %v941 = vrot.slane %v939, 1
      %v942 = vsel %vm914, %v937, %v941
      %v943 = vshrl.u32 %v909, 16
      %v945 = vor.u32 %v943, %v941
      %v947 = vshll.u32 %v910, 16
      %v949 = vrot.slane %v947, 1
      %v950 = vsel %vm914, %v945, %v949
      %v951 = vshrl.u32 %v910, 16
      %v953 = vor.u32 %v951, %v949
      %v955 = vshll.u32 %v911, 16
      %v957 = vrot.slane %v955, 1
      %v958 = vsel %vm914, %v953, %v957
      %v959 = vshrl.u32 %v911, 16
      %v961 = vor.u32 %v959, %v957
      %v963 = vshll.u32 %v912, 16
      %v965 = vrot.slane %v963, 1
      %v966 = vsel %vm914, %v961, %v965
      %v967 = vshrl.u32 %v912, 16
      %v969 = vor.u32 %v967, %v965
      %v971 = vshll.u32 %v913, 16
      %v973 = vrot.slane %v971, 1
      %v974 = vsel %vm914, %v969, %v973
      %v975 = vshrl.u32 %v913, 16
      %v977 = vor.u32 %v975, %v973
      %v1002 = vunpack.c.l.b16 %v858
      %v1003 = vunpack.c.l.b16 %v859
      %v1004 = vunpack.c.l.b16 %v860
      %v1005 = vunpack.c.l.b16 %v861
      %v1006 = vunpack.c.l.b16 %v862
      %v1007 = vunpack.c.l.b16 %v863
      %v1008 = vunpack.c.l.b16 %v864
      %v1009 = vunpack.c.l.b16 %v865
      %v1010 = vunpack.c.l.b16 %v866
      %v1011 = vunpack.c.l.b16 %v867
      %v1012 = vunpack.c.l.b16 %v868
      %v1013 = vunpack.c.l.b16 %v869
      %v1014 = vunpack.c.l.b16 %v870
      %v1015 = vunpack.c.l.b16 %v871
      %v1016 = vunpack.c.l.b16 %v872
      %v1017 = vunpack.c.l.b16 %v873
      %v1018 = vpack.c.b16 %v1003, %v1002
      %v1019 = vpack.c.b16 %v1005, %v1004
      %v1020 = vpack.c.b16 %v1007, %v1006
      %v1021 = vpack.c.b16 %v1009, %v1008
      %v1022 = vpack.c.b16 %v1011, %v1010
      %v1023 = vpack.c.b16 %v1013, %v1012
      %v1024 = vpack.c.b16 %v1015, %v1014
      %v1025 = vpack.c.b16 %v1017, %v1016
      %1034 = vmatpush.bf16.msra.mxu0 %v1025
      %1035 = vmatpush.bf16.msra.mxu0 %v1024
      %1036 = vmatpush.bf16.msra.mxu0 %v1023
      %1037 = vmatpush.bf16.msra.mxu0 %v1022
      %1038 = vmatpush.bf16.msra.mxu0 %v1021
      %1039 = vmatpush.bf16.msra.mxu0 %v1020
      %1040 = vmatpush.bf16.msra.mxu0 %v1019
      %1041 = vmatpush.bf16.msra.mxu0 %v1018
      %1042 = vmatmul.bf16.gmra.mxu0 %v926
      %v1043 = vpop.f32.mrf.mxu0
      %v1044 = vadd.f32 0.0, %v1043
      %v1045 = vpop.f32.mrf.mxu0
      %v1046 = vadd.f32 0.0, %v1045
      %1047 = vmatmul.bf16.gmra.mxu0 %v934
      %v1048 = vpop.f32.mrf.mxu0
      %v1049 = vadd.f32 0.0, %v1048
      %v1050 = vpop.f32.mrf.mxu0
      %v1051 = vadd.f32 0.0, %v1050
      %1052 = vmatmul.bf16.gmra.mxu0 %v942
      %v1053 = vpop.f32.mrf.mxu0
      %v1054 = vadd.f32 0.0, %v1053
      %v1055 = vpop.f32.mrf.mxu0
      %v1056 = vadd.f32 0.0, %v1055
      %1057 = vmatmul.bf16.gmra.mxu0 %v950
      %v1058 = vpop.f32.mrf.mxu0
      %v1059 = vadd.f32 0.0, %v1058
      %v1060 = vpop.f32.mrf.mxu0
      %v1061 = vadd.f32 0.0, %v1060
      %1062 = vmatmul.bf16.gmra.mxu0 %v958
      %v1063 = vpop.f32.mrf.mxu0
      %v1064 = vadd.f32 0.0, %v1063
      %v1065 = vpop.f32.mrf.mxu0
      %v1066 = vadd.f32 0.0, %v1065
      %1067 = vmatmul.bf16.gmra.mxu0 %v966
      %v1068 = vpop.f32.mrf.mxu0
      %v1069 = vadd.f32 0.0, %v1068
      %v1070 = vpop.f32.mrf.mxu0
      %v1071 = vadd.f32 0.0, %v1070
      %1072 = vmatmul.bf16.gmra.mxu0 %v974
      %v1073 = vpop.f32.mrf.mxu0
      %v1074 = vadd.f32 0.0, %v1073
      %v1075 = vpop.f32.mrf.mxu0
      %v1076 = vadd.f32 0.0, %v1075
      %1077 = vmatmul.bf16.gmra.mxu0 %v977
      %v1078 = vpop.f32.mrf.mxu0
      %v1079 = vadd.f32 0.0, %v1078
      %v1080 = vpop.f32.mrf.mxu0
      %1081 = vdwg.mxu0
      %v1082 = vpack.c.b16 %v904, %v904
      %v1107 = vunpack.c.l.b16 %v840
      %v1108 = vunpack.c.l.b16 %v841
      %v1109 = vunpack.c.l.b16 %v842
      %v1110 = vunpack.c.l.b16 %v843
      %v1111 = vunpack.c.l.b16 %v844
      %v1112 = vunpack.c.l.b16 %v845
      %v1113 = vunpack.c.l.b16 %v846
      %v1114 = vunpack.c.l.b16 %v847
      %v1115 = vunpack.c.l.b16 %v848
      %v1116 = vunpack.c.l.b16 %v849
      %v1117 = vunpack.c.l.b16 %v850
      %v1118 = vunpack.c.l.b16 %v851
      %v1119 = vunpack.c.l.b16 %v852
      %v1120 = vunpack.c.l.b16 %v853
      %v1121 = vunpack.c.l.b16 %v854
      %v1122 = vunpack.c.l.b16 %v855
      %v1123 = vpack.c.b16 %v1108, %v1107
      %v1124 = vpack.c.b16 %v1110, %v1109
      %v1125 = vpack.c.b16 %v1112, %v1111
      %v1126 = vpack.c.b16 %v1114, %v1113
      %v1127 = vpack.c.b16 %v1116, %v1115
      %v1128 = vpack.c.b16 %v1118, %v1117
      %v1129 = vpack.c.b16 %v1120, %v1119
      %v1130 = vpack.c.b16 %v1122, %v1121
      %1139 = vmatpush.bf16.msra.mxu0 %v1130
      %1140 = vmatpush.bf16.msra.mxu0 %v1129
      %1141 = vmatpush.bf16.msra.mxu0 %v1128
      %1142 = vmatpush.bf16.msra.mxu0 %v1127
      %1143 = vmatpush.bf16.msra.mxu0 %v1126
      %1144 = vmatpush.bf16.msra.mxu0 %v1125
      %1145 = vmatpush.bf16.msra.mxu0 %v1124
      %1146 = vmatpush.bf16.msra.mxu0 %v1123
      %1147 = vmatmul.bf16.gmra.mxu0 %v906
      %v1148 = vpop.f32.mrf.mxu0
      %v1149 = vadd.f32 %v1044, %v1148
      %v1150 = vpop.f32.mrf.mxu0
      %v1151 = vadd.f32 %v1046, %v1150
      %1152 = vmatmul.bf16.gmra.mxu0 %v907
      %v1153 = vpop.f32.mrf.mxu0
      %v1154 = vadd.f32 %v1049, %v1153
      %v1155 = vpop.f32.mrf.mxu0
      %v1156 = vadd.f32 %v1051, %v1155
      %1157 = vmatmul.bf16.gmra.mxu0 %v908
      %v1158 = vpop.f32.mrf.mxu0
      %v1159 = vadd.f32 %v1054, %v1158
      %v1160 = vpop.f32.mrf.mxu0
      %v1161 = vadd.f32 %v1056, %v1160
      %1162 = vmatmul.bf16.gmra.mxu0 %v909
      %v1163 = vpop.f32.mrf.mxu0
      %v1164 = vadd.f32 %v1059, %v1163
      %v1165 = vpop.f32.mrf.mxu0
      %v1166 = vadd.f32 %v1061, %v1165
      %1167 = vmatmul.bf16.gmra.mxu0 %v910
      %v1168 = vpop.f32.mrf.mxu0
      %v1169 = vadd.f32 %v1064, %v1168
      %v1170 = vpop.f32.mrf.mxu0
      %v1171 = vadd.f32 %v1066, %v1170
      %1172 = vmatmul.bf16.gmra.mxu0 %v911
      %v1173 = vpop.f32.mrf.mxu0
      %v1174 = vadd.f32 %v1069, %v1173
      %v1175 = vpop.f32.mrf.mxu0
      %v1176 = vadd.f32 %v1071, %v1175
      %1177 = vmatmul.bf16.gmra.mxu0 %v912
      %v1178 = vpop.f32.mrf.mxu0
      %v1179 = vadd.f32 %v1074, %v1178
      %v1180 = vpop.f32.mrf.mxu0
      %v1181 = vadd.f32 %v1076, %v1180
      %1182 = vmatmul.bf16.gmra.mxu0 %v1082
      %v1183 = vpop.f32.mrf.mxu0
      %v1184 = vadd.f32 %v1079, %v1183
      %v1185 = vpop.f32.mrf.mxu0
      %1186 = vdwg.mxu0
      %v1187 = vld [vmem:[#allocation2 + $0x8] sm:$0xf]
      %v1188 = vld [vmem:[#allocation2 + $0xc] sm:$0xf]
      %v1189 = vld [vmem:[#allocation2 + $0x10] sm:$0xf]
      %v1190 = vld [vmem:[#allocation2 + $0x14] sm:$0xf]
      %v1191 = vld [vmem:[#allocation2 + $0x18] sm:$0xf]
      %v1192 = vld [vmem:[#allocation2 + $0x1c] sm:$0xf]
      %v1193 = vld [vmem:[#allocation2 + $0x20] sm:$0xf]
      %v1194 = vld [vmem:[#allocation2 + $0x24] sm:$0xf]
      %v1195 = vld [vmem:[#allocation2 + $0x28] sm:$0xf]
      %v1196 = vld [vmem:[#allocation2 + $0x2c] sm:$0xf]
      %v1197 = vld [vmem:[#allocation2 + $0x30] sm:$0xf]
      %v1198 = vld [vmem:[#allocation2 + $0x34] sm:$0xf]
      %v1199 = vld [vmem:[#allocation2 + $0x38] sm:$0xf]
      %v1200 = vld [vmem:[#allocation2 + $0x3c] sm:$0xf]
      %v1201 = vld [vmem:[#allocation2 + $0x40] sm:$0xf]
      %s1202 = scalar_lea.vmem %s2, 128
      %v1203 = vld [vmem:[%s1202] sm:$0xf]
      %v1204 = vld [vmem:[%s1202 + $0x4] sm:$0xf]
      %v1205 = vld [vmem:[%s1202 + $0x8] sm:$0xf]
      %v1206 = vld [vmem:[%s1202 + $0xc] sm:$0xf]
      %v1207 = vld [vmem:[%s1202 + $0x10] sm:$0xf]
      %v1208 = vld [vmem:[%s1202 + $0x14] sm:$0xf]
      %v1209 = vld [vmem:[%s1202 + $0x18] sm:$0xf]
      %v1210 = vld [vmem:[%s1202 + $0x1c] sm:$0xf]
      %v1211 = vld [vmem:[%s1202 + $0x20] sm:$0xf]
      %v1212 = vld [vmem:[%s1202 + $0x24] sm:$0xf]
      %v1213 = vld [vmem:[%s1202 + $0x28] sm:$0xf]
      %v1214 = vld [vmem:[%s1202 + $0x2c] sm:$0xf]
      %v1215 = vld [vmem:[%s1202 + $0x30] sm:$0xf]
      %v1216 = vld [vmem:[%s1202 + $0x34] sm:$0xf]
      %v1217 = vld [vmem:[%s1202 + $0x38] sm:$0xf]
      %v1218 = vld [vmem:[%s1202 + $0x3c] sm:$0xf]
      %v1234 = vunpack.c.l.b16 %v1187
      %v1235 = vunpack.c.l.b16 %v1188
      %v1236 = vunpack.c.l.b16 %v1189
      %v1237 = vunpack.c.l.b16 %v1190
      %v1238 = vunpack.c.l.b16 %v1191
      %v1239 = vunpack.c.l.b16 %v1192
      %v1240 = vunpack.c.l.b16 %v1193
      %v1241 = vunpack.c.l.b16 %v1194
      %v1242 = vunpack.c.l.b16 %v1195
      %v1243 = vunpack.c.l.b16 %v1196
      %v1244 = vunpack.c.l.b16 %v1197
      %v1245 = vunpack.c.l.b16 %v1198
      %v1246 = vunpack.c.l.b16 %v1199
      %v1247 = vunpack.c.l.b16 %v1200
      %v1248 = vunpack.c.l.b16 %v1201
      %v1249 = vpack.c.b16 %v1235, %v1234
      %v1250 = vpack.c.b16 %v1237, %v1236
      %v1251 = vpack.c.b16 %v1239, %v1238
      %v1252 = vpack.c.b16 %v1241, %v1240
      %v1253 = vpack.c.b16 %v1243, %v1242
      %v1254 = vpack.c.b16 %v1245, %v1244
      %v1255 = vpack.c.b16 %v1247, %v1246
      %v1256 = vpack.c.b16 %v1248, %v1248
      %v1281 = vunpack.c.l.b16 %v1203
      %v1282 = vunpack.c.l.b16 %v1204
      %v1283 = vunpack.c.l.b16 %v1205
      %v1284 = vunpack.c.l.b16 %v1206
      %v1285 = vunpack.c.l.b16 %v1207
      %v1286 = vunpack.c.l.b16 %v1208
      %v1287 = vunpack.c.l.b16 %v1209
      %v1288 = vunpack.c.l.b16 %v1210
      %v1289 = vunpack.c.l.b16 %v1211
      %v1290 = vunpack.c.l.b16 %v1212
      %v1291 = vunpack.c.l.b16 %v1213
      %v1292 = vunpack.c.l.b16 %v1214
      %v1293 = vunpack.c.l.b16 %v1215
      %v1294 = vunpack.c.l.b16 %v1216
      %v1295 = vunpack.c.l.b16 %v1217
      %v1296 = vunpack.c.l.b16 %v1218
      %v1297 = vpack.c.b16 %v1282, %v1281
      %v1298 = vpack.c.b16 %v1284, %v1283
      %v1299 = vpack.c.b16 %v1286, %v1285
      %v1300 = vpack.c.b16 %v1288, %v1287
      %v1301 = vpack.c.b16 %v1290, %v1289
      %v1302 = vpack.c.b16 %v1292, %v1291
      %v1303 = vpack.c.b16 %v1294, %v1293
      %v1304 = vpack.c.b16 %v1296, %v1295
      %1313 = vmatpush.bf16.msra.mxu0 %v1304
      %1314 = vmatpush.bf16.msra.mxu0 %v1303
      %1315 = vmatpush.bf16.msra.mxu0 %v1302
      %1316 = vmatpush.bf16.msra.mxu0 %v1301
      %1317 = vmatpush.bf16.msra.mxu0 %v1300
      %1318 = vmatpush.bf16.msra.mxu0 %v1299
      %1319 = vmatpush.bf16.msra.mxu0 %v1298
      %1320 = vmatpush.bf16.msra.mxu0 %v1297
      %1321 = vmatmul.bf16.gmra.mxu0 %v1249
      %v1322 = vpop.f32.mrf.mxu0
      %v1323 = vadd.f32 0.0, %v1322
      %v1324 = vpop.f32.mrf.mxu0
      %v1325 = vadd.f32 0.0, %v1324
      %1326 = vmatmul.bf16.gmra.mxu0 %v1250
      %v1327 = vpop.f32.mrf.mxu0
      %v1328 = vadd.f32 0.0, %v1327
      %v1329 = vpop.f32.mrf.mxu0
      %v1330 = vadd.f32 0.0, %v1329
      %1331 = vmatmul.bf16.gmra.mxu0 %v1251
      %v1332 = vpop.f32.mrf.mxu0
      %v1333 = vadd.f32 0.0, %v1332
      %v1334 = vpop.f32.mrf.mxu0
      %v1335 = vadd.f32 0.0, %v1334
      %1336 = vmatmul.bf16.gmra.mxu0 %v1252
      %v1337 = vpop.f32.mrf.mxu0
      %v1338 = vadd.f32 0.0, %v1337
      %v1339 = vpop.f32.mrf.mxu0
      %v1340 = vadd.f32 0.0, %v1339
      %1341 = vmatmul.bf16.gmra.mxu0 %v1253
      %v1342 = vpop.f32.mrf.mxu0
      %v1343 = vadd.f32 0.0, %v1342
      %v1344 = vpop.f32.mrf.mxu0
      %v1345 = vadd.f32 0.0, %v1344
      %1346 = vmatmul.bf16.gmra.mxu0 %v1254
      %v1347 = vpop.f32.mrf.mxu0
      %v1348 = vadd.f32 0.0, %v1347
      %v1349 = vpop.f32.mrf.mxu0
      %v1350 = vadd.f32 0.0, %v1349
      %1351 = vmatmul.bf16.gmra.mxu0 %v1255
      %v1352 = vpop.f32.mrf.mxu0
      %v1353 = vadd.f32 0.0, %v1352
      %v1354 = vpop.f32.mrf.mxu0
      %v1355 = vadd.f32 0.0, %v1354
      %1356 = vmatmul.bf16.gmra.mxu0 %v1256
      %v1357 = vpop.f32.mrf.mxu0
      %v1358 = vadd.f32 0.0, %v1357
      %v1359 = vpop.f32.mrf.mxu0
      %1360 = vdwg.mxu0
      %v1361 = vadd.f32 %v1149, %v1323
      %v1362 = vadd.f32 %v1151, %v1325
      %v1363 = vadd.f32 %v1154, %v1328
      %v1364 = vadd.f32 %v1156, %v1330
      %v1365 = vadd.f32 %v1159, %v1333
      %v1366 = vadd.f32 %v1161, %v1335
      %v1367 = vadd.f32 %v1164, %v1338
      %v1368 = vadd.f32 %v1166, %v1340
      %v1369 = vadd.f32 %v1169, %v1343
      %v1370 = vadd.f32 %v1171, %v1345
      %v1371 = vadd.f32 %v1174, %v1348
      %v1372 = vadd.f32 %v1176, %v1350
      %v1373 = vadd.f32 %v1179, %v1353
      %v1374 = vadd.f32 %v1181, %v1355
      %v1375 = vadd.f32 %v1184, %v1358
      %v1376 = vld [vmem:[#allocation2 + $0x8] sm:$0xf]
      %v1377 = vld [vmem:[#allocation2 + $0xc] sm:$0xf]
      %v1378 = vld [vmem:[#allocation2 + $0x10] sm:$0xf]
      %v1379 = vld [vmem:[#allocation2 + $0x14] sm:$0xf]
      %v1380 = vld [vmem:[#allocation2 + $0x18] sm:$0xf]
      %v1381 = vld [vmem:[#allocation2 + $0x1c] sm:$0xf]
      %v1382 = vld [vmem:[#allocation2 + $0x20] sm:$0xf]
      %v1383 = vld [vmem:[#allocation2 + $0x24] sm:$0xf]
      %v1384 = vld [vmem:[#allocation2 + $0x28] sm:$0xf]
      %v1385 = vld [vmem:[#allocation2 + $0x2c] sm:$0xf]
      %v1386 = vld [vmem:[#allocation2 + $0x30] sm:$0xf]
      %v1387 = vld [vmem:[#allocation2 + $0x34] sm:$0xf]
      %v1388 = vld [vmem:[#allocation2 + $0x38] sm:$0xf]
      %v1389 = vld [vmem:[#allocation2 + $0x3c] sm:$0xf]
      %v1390 = vld [vmem:[#allocation2 + $0x40] sm:$0xf]
      %v1391 = vld [vmem:[#allocation2 + $0x44] sm:$0x1]
      %s1392 = scalar_lea.vmem %s2, 192
      %v1393 = vld [vmem:[%s1392] sm:$0xf]
      %v1394 = vld [vmem:[%s1392 + $0x4] sm:$0xf]
      %v1395 = vld [vmem:[%s1392 + $0x8] sm:$0xf]
      %v1396 = vld [vmem:[%s1392 + $0xc] sm:$0xf]
      %v1397 = vld [vmem:[%s1392 + $0x10] sm:$0xf]
      %v1398 = vld [vmem:[%s1392 + $0x14] sm:$0xf]
      %v1399 = vld [vmem:[%s1392 + $0x18] sm:$0xf]
      %v1400 = vld [vmem:[%s1392 + $0x1c] sm:$0xf]
      %v1401 = vld [vmem:[%s1392 + $0x20] sm:$0xf]
      %v1402 = vld [vmem:[%s1392 + $0x24] sm:$0xf]
      %v1403 = vld [vmem:[%s1392 + $0x28] sm:$0xf]
      %v1404 = vld [vmem:[%s1392 + $0x2c] sm:$0xf]
      %v1405 = vld [vmem:[%s1392 + $0x30] sm:$0xf]
      %v1406 = vld [vmem:[%s1392 + $0x34] sm:$0xf]
      %v1407 = vld [vmem:[%s1392 + $0x38] sm:$0xf]
      %v1408 = vld [vmem:[%s1392 + $0x3c] sm:$0xf]
      %v1425 = vunpack.c.l.b16 %v1376
      %v1426 = vunpack.c.l.b16 %v1377
      %v1427 = vunpack.c.l.b16 %v1378
      %v1428 = vunpack.c.l.b16 %v1379
      %v1429 = vunpack.c.l.b16 %v1380
      %v1430 = vunpack.c.l.b16 %v1381
      %v1431 = vunpack.c.l.b16 %v1382
      %v1432 = vunpack.c.l.b16 %v1383
      %v1433 = vunpack.c.l.b16 %v1384
      %v1434 = vunpack.c.l.b16 %v1385
      %v1435 = vunpack.c.l.b16 %v1386
      %v1436 = vunpack.c.l.b16 %v1387
      %v1437 = vunpack.c.l.b16 %v1388
      %v1438 = vunpack.c.l.b16 %v1389
      %v1439 = vunpack.c.l.b16 %v1390
      %v1440 = vunpack.c.l.b16 %v1391
      %v1441 = vpack.c.b16 %v1426, %v1425
      %v1442 = vpack.c.b16 %v1428, %v1427
      %v1443 = vpack.c.b16 %v1430, %v1429
      %v1444 = vpack.c.b16 %v1432, %v1431
      %v1445 = vpack.c.b16 %v1434, %v1433
      %v1446 = vpack.c.b16 %v1436, %v1435
      %v1447 = vpack.c.b16 %v1438, %v1437
      %v1448 = vpack.c.b16 %v1440, %v1439
      %v1450 = vshrl.u32 %v1441, 16
      %v1452 = vshll.u32 %v1441, 16
      %v1454 = vrot.slane %v1452, 1
      %v1455 = vor.u32 %v1450, %v1454
      %v1457 = vshll.u32 %v1442, 16
      %v1459 = vrot.slane %v1457, 1
      %v1460 = vsel %vm914, %v1455, %v1459
      %v1461 = vshrl.u32 %v1442, 16
      %v1463 = vor.u32 %v1461, %v1459
      %v1465 = vshll.u32 %v1443, 16
      %v1467 = vrot.slane %v1465, 1
      %v1468 = vsel %vm914, %v1463, %v1467
      %v1469 = vshrl.u32 %v1443, 16
      %v1471 = vor.u32 %v1469, %v1467
      %v1473 = vshll.u32 %v1444, 16
      %v1475 = vrot.slane %v1473, 1
      %v1476 = vsel %vm914, %v1471, %v1475
      %v1477 = vshrl.u32 %v1444, 16
      %v1479 = vor.u32 %v1477, %v1475
      %v1481 = vshll.u32 %v1445, 16
      %v1483 = vrot.slane %v1481, 1
      %v1484 = vsel %vm914, %v1479, %v1483
      %v1485 = vshrl.u32 %v1445, 16
      %v1487 = vor.u32 %v1485, %v1483
      %v1489 = vshll.u32 %v1446, 16
      %v1491 = vrot.slane %v1489, 1
      %v1492 = vsel %vm914, %v1487, %v1491
      %v1493 = vshrl.u32 %v1446, 16
      %v1495 = vor.u32 %v1493, %v1491
      %v1497 = vshll.u32 %v1447, 16
      %v1499 = vrot.slane %v1497, 1
      %v1500 = vsel %vm914, %v1495, %v1499
      %v1501 = vshrl.u32 %v1447, 16
      %v1503 = vor.u32 %v1501, %v1499
      %v1505 = vshll.u32 %v1448, 16
      %v1507 = vrot.slane %v1505, 1
      %v1508 = vsel %vm914, %v1503, %v1507
      %v1509 = vshrl.u32 %v1448, 16
      %v1511 = vor.u32 %v1509, %v1507
      %v1536 = vunpack.c.l.b16 %v1393
      %v1537 = vunpack.c.l.b16 %v1394
      %v1538 = vunpack.c.l.b16 %v1395
      %v1539 = vunpack.c.l.b16 %v1396
      %v1540 = vunpack.c.l.b16 %v1397
      %v1541 = vunpack.c.l.b16 %v1398
      %v1542 = vunpack.c.l.b16 %v1399
      %v1543 = vunpack.c.l.b16 %v1400
      %v1544 = vunpack.c.l.b16 %v1401
      %v1545 = vunpack.c.l.b16 %v1402
      %v1546 = vunpack.c.l.b16 %v1403
      %v1547 = vunpack.c.l.b16 %v1404
      %v1548 = vunpack.c.l.b16 %v1405
      %v1549 = vunpack.c.l.b16 %v1406
      %v1550 = vunpack.c.l.b16 %v1407
      %v1551 = vunpack.c.l.b16 %v1408
      %v1552 = vpack.c.b16 %v1537, %v1536
      %v1553 = vpack.c.b16 %v1539, %v1538
      %v1554 = vpack.c.b16 %v1541, %v1540
      %v1555 = vpack.c.b16 %v1543, %v1542
      %v1556 = vpack.c.b16 %v1545, %v1544
      %v1557 = vpack.c.b16 %v1547, %v1546
      %v1558 = vpack.c.b16 %v1549, %v1548
      %v1559 = vpack.c.b16 %v1551, %v1550
      %1568 = vmatpush.bf16.msra.mxu0 %v1559
      %1569 = vmatpush.bf16.msra.mxu0 %v1558
      %1570 = vmatpush.bf16.msra.mxu0 %v1557
      %1571 = vmatpush.bf16.msra.mxu0 %v1556
      %1572 = vmatpush.bf16.msra.mxu0 %v1555
      %1573 = vmatpush.bf16.msra.mxu0 %v1554
      %1574 = vmatpush.bf16.msra.mxu0 %v1553
      %1575 = vmatpush.bf16.msra.mxu0 %v1552
      %1576 = vmatmul.bf16.gmra.mxu0 %v1460
      %v1577 = vpop.f32.mrf.mxu0
      %v1578 = vadd.f32 0.0, %v1577
      %v1579 = vpop.f32.mrf.mxu0
      %v1580 = vadd.f32 0.0, %v1579
      %1581 = vmatmul.bf16.gmra.mxu0 %v1468
      %v1582 = vpop.f32.mrf.mxu0
      %v1583 = vadd.f32 0.0, %v1582
      %v1584 = vpop.f32.mrf.mxu0
      %v1585 = vadd.f32 0.0, %v1584
      %1586 = vmatmul.bf16.gmra.mxu0 %v1476
      %v1587 = vpop.f32.mrf.mxu0
      %v1588 = vadd.f32 0.0, %v1587
      %v1589 = vpop.f32.mrf.mxu0
      %v1590 = vadd.f32 0.0, %v1589
      %1591 = vmatmul.bf16.gmra.mxu0 %v1484
      %v1592 = vpop.f32.mrf.mxu0
      %v1593 = vadd.f32 0.0, %v1592
      %v1594 = vpop.f32.mrf.mxu0
      %v1595 = vadd.f32 0.0, %v1594
      %1596 = vmatmul.bf16.gmra.mxu0 %v1492
      %v1597 = vpop.f32.mrf.mxu0
      %v1598 = vadd.f32 0.0, %v1597
      %v1599 = vpop.f32.mrf.mxu0
      %v1600 = vadd.f32 0.0, %v1599
      %1601 = vmatmul.bf16.gmra.mxu0 %v1500
      %v1602 = vpop.f32.mrf.mxu0
      %v1603 = vadd.f32 0.0, %v1602
      %v1604 = vpop.f32.mrf.mxu0
      %v1605 = vadd.f32 0.0, %v1604
      %1606 = vmatmul.bf16.gmra.mxu0 %v1508
      %v1607 = vpop.f32.mrf.mxu0
      %v1608 = vadd.f32 0.0, %v1607
      %v1609 = vpop.f32.mrf.mxu0
      %v1610 = vadd.f32 0.0, %v1609
      %1611 = vmatmul.bf16.gmra.mxu0 %v1511
      %v1612 = vpop.f32.mrf.mxu0
      %v1613 = vadd.f32 0.0, %v1612
      %v1614 = vpop.f32.mrf.mxu0
      %1615 = vdwg.mxu0
      %v1616 = vadd.f32 %v1361, %v1578
      %v1617 = vadd.f32 %v1362, %v1580
      %v1618 = vadd.f32 %v1363, %v1583
      %v1619 = vadd.f32 %v1364, %v1585
      %v1620 = vadd.f32 %v1365, %v1588
      %v1621 = vadd.f32 %v1366, %v1590
      %v1622 = vadd.f32 %v1367, %v1593
      %v1623 = vadd.f32 %v1368, %v1595
      %v1624 = vadd.f32 %v1369, %v1598
      %v1625 = vadd.f32 %v1370, %v1600
      %v1626 = vadd.f32 %v1371, %v1603
      %v1627 = vadd.f32 %v1372, %v1605
      %v1628 = vadd.f32 %v1373, %v1608
      %v1629 = vadd.f32 %v1374, %v1610
      %v1630 = vadd.f32 %v1375, %v1613
      %vm1631 = vcmp.gt.f32.partialorder %v1616, 0.0
      %vm1632 = vcmp.gt.f32.partialorder %v1617, 0.0
      %vm1633 = vcmp.gt.f32.partialorder %v1618, 0.0
      %vm1634 = vcmp.gt.f32.partialorder %v1619, 0.0
      %vm1635 = vcmp.gt.f32.partialorder %v1620, 0.0
      %vm1636 = vcmp.gt.f32.partialorder %v1621, 0.0
      %vm1637 = vcmp.gt.f32.partialorder %v1622, 0.0
      %vm1638 = vcmp.gt.f32.partialorder %v1623, 0.0
      %vm1639 = vcmp.gt.f32.partialorder %v1624, 0.0
      %vm1640 = vcmp.gt.f32.partialorder %v1625, 0.0
      %vm1641 = vcmp.gt.f32.partialorder %v1626, 0.0
      %vm1642 = vcmp.gt.f32.partialorder %v1627, 0.0
      %vm1643 = vcmp.gt.f32.partialorder %v1628, 0.0
      %vm1644 = vcmp.gt.f32.partialorder %v1629, 0.0
      %vm1645 = vcmp.gt.f32.partialorder %v1630, 0.0
      %v1646 = vmul.f32 %v1616, 0.2
      %v1647 = vmul.f32 %v1617, 0.2
      %v1648 = vmul.f32 %v1618, 0.2
      %v1649 = vmul.f32 %v1619, 0.2
      %v1650 = vmul.f32 %v1620, 0.2
      %v1651 = vmul.f32 %v1621, 0.2
      %v1652 = vmul.f32 %v1622, 0.2
      %v1653 = vmul.f32 %v1623, 0.2
      %v1654 = vmul.f32 %v1624, 0.2
      %v1655 = vmul.f32 %v1625, 0.2
      %v1656 = vmul.f32 %v1626, 0.2
      %v1657 = vmul.f32 %v1627, 0.2
      %v1658 = vmul.f32 %v1628, 0.2
      %v1659 = vmul.f32 %v1629, 0.2
      %v1660 = vmul.f32 %v1630, 0.2
      %v1661 = vsel %vm1631, %v1616, %v1646
      %v1662 = vsel %vm1632, %v1617, %v1647
      %v1663 = vsel %vm1633, %v1618, %v1648
      %v1664 = vsel %vm1634, %v1619, %v1649
      %v1665 = vsel %vm1635, %v1620, %v1650
      %v1666 = vsel %vm1636, %v1621, %v1651
      %v1667 = vsel %vm1637, %v1622, %v1652
      %v1668 = vsel %vm1638, %v1623, %v1653
      %v1669 = vsel %vm1639, %v1624, %v1654
      %v1670 = vsel %vm1640, %v1625, %v1655
      %v1671 = vsel %vm1641, %v1626, %v1656
      %v1672 = vsel %vm1642, %v1627, %v1657
      %v1673 = vsel %vm1643, %v1628, %v1658
      %v1674 = vsel %vm1644, %v1629, %v1659
      %v1675 = vsel %vm1645, %v1630, %v1660
      %v1676 = vmul.f32 %v1661, %v810
      %v1677 = vmul.f32 %v1662, %v811
      %v1678 = vmul.f32 %v1663, %v812
      %v1679 = vmul.f32 %v1664, %v813
      %v1680 = vmul.f32 %v1665, %v814
      %v1681 = vmul.f32 %v1666, %v815
      %v1682 = vmul.f32 %v1667, %v816
      %v1683 = vmul.f32 %v1668, %v817
      %v1684 = vmul.f32 %v1669, %v818
      %v1685 = vmul.f32 %v1670, %v819
      %v1686 = vmul.f32 %v1671, %v820
      %v1687 = vmul.f32 %v1672, %v821
      %v1688 = vmul.f32 %v1673, %v822
      %v1689 = vmul.f32 %v1674, %v823
      %v1690 = vmul.f32 %v1675, %v824
      %v1691 = vpack.c.bf16 %v1676, %v1676
      %v1692 = vpack.c.bf16 %v1677, %v1677
      %v1693 = vpack.c.bf16 %v1678, %v1678
      %v1694 = vpack.c.bf16 %v1679, %v1679
      %v1695 = vpack.c.bf16 %v1680, %v1680
      %v1696 = vpack.c.bf16 %v1681, %v1681
      %v1697 = vpack.c.bf16 %v1682, %v1682
      %v1698 = vpack.c.bf16 %v1683, %v1683
      %v1699 = vpack.c.bf16 %v1684, %v1684
      %v1700 = vpack.c.bf16 %v1685, %v1685
      %v1701 = vpack.c.bf16 %v1686, %v1686
      %v1702 = vpack.c.bf16 %v1687, %v1687
      %v1703 = vpack.c.bf16 %v1688, %v1688
      %v1704 = vpack.c.bf16 %v1689, %v1689
      %v1705 = vpack.c.bf16 %v1690, %v1690
      %vm1706 = vsmask.f32 4368
      %vm1707 = vmor %vm253, %vm1706
      %v1709 = vshrl.u32 %v1691, 16
      %v1711 = vrot.slane %v1709, 7
      %v1712 = vshll.u32 %v1691, 16
      %v1714 = vor.u32 %v1711, %v1712
      %v1715 = vrot.slane %v1711, 4
      %v1717 = vshrl.u32 %v1692, 16
      %v1719 = vrot.slane %v1717, 7
      %v1720 = vshll.u32 %v1692, 16
      %v1722 = vor.u32 %v1719, %v1720
      %v1723 = vsel %vm1707, %v1715, %v1722
      %v1724 = vrot.slane %v1719, 4
      %v1726 = vshrl.u32 %v1693, 16
      %v1728 = vrot.slane %v1726, 7
      %v1729 = vshll.u32 %v1693, 16
      %v1731 = vor.u32 %v1728, %v1729
      %v1732 = vsel %vm1707, %v1724, %v1731
      %v1733 = vrot.slane %v1728, 4
      %v1735 = vshrl.u32 %v1694, 16
      %v1737 = vrot.slane %v1735, 7
      %v1738 = vshll.u32 %v1694, 16
      %v1740 = vor.u32 %v1737, %v1738
      %v1741 = vsel %vm1707, %v1733, %v1740
      %v1742 = vrot.slane %v1737, 4
      %v1744 = vshrl.u32 %v1695, 16
      %v1746 = vrot.slane %v1744, 7
      %v1747 = vshll.u32 %v1695, 16
      %v1749 = vor.u32 %v1746, %v1747
      %v1750 = vsel %vm1707, %v1742, %v1749
      %v1751 = vrot.slane %v1746, 4
      %v1753 = vshrl.u32 %v1696, 16
      %v1755 = vrot.slane %v1753, 7
      %v1756 = vshll.u32 %v1696, 16
      %v1758 = vor.u32 %v1755, %v1756
      %v1759 = vsel %vm1707, %v1751, %v1758
      %v1760 = vrot.slane %v1755, 4
      %v1762 = vshrl.u32 %v1697, 16
      %v1764 = vrot.slane %v1762, 7
      %v1765 = vshll.u32 %v1697, 16
      %v1767 = vor.u32 %v1764, %v1765
      %v1768 = vsel %vm1707, %v1760, %v1767
      %v1769 = vrot.slane %v1764, 4
      %v1771 = vshrl.u32 %v1698, 16
      %v1773 = vrot.slane %v1771, 7
      %v1774 = vshll.u32 %v1698, 16
      %v1776 = vor.u32 %v1773, %v1774
      %v1777 = vsel %vm1707, %v1769, %v1776
      %v1778 = vrot.slane %v1773, 4
      %v1780 = vshrl.u32 %v1699, 16
      %v1782 = vrot.slane %v1780, 7
      %v1783 = vshll.u32 %v1699, 16
      %v1785 = vor.u32 %v1782, %v1783
      %v1786 = vsel %vm1707, %v1778, %v1785
      %v1787 = vrot.slane %v1782, 4
      %v1789 = vshrl.u32 %v1700, 16
      %v1791 = vrot.slane %v1789, 7
      %v1792 = vshll.u32 %v1700, 16
      %v1794 = vor.u32 %v1791, %v1792
      %v1795 = vsel %vm1707, %v1787, %v1794
      %v1796 = vrot.slane %v1791, 4
      %v1798 = vshrl.u32 %v1701, 16
      %v1800 = vrot.slane %v1798, 7
      %v1801 = vshll.u32 %v1701, 16
      %v1803 = vor.u32 %v1800, %v1801
      %v1804 = vsel %vm1707, %v1796, %v1803
      %v1805 = vrot.slane %v1800, 4
      %v1807 = vshrl.u32 %v1702, 16
      %v1809 = vrot.slane %v1807, 7
      %v1810 = vshll.u32 %v1702, 16
      %v1812 = vor.u32 %v1809, %v1810
      %v1813 = vsel %vm1707, %v1805, %v1812
      %v1814 = vrot.slane %v1809, 4
      %v1816 = vshrl.u32 %v1703, 16
      %v1818 = vrot.slane %v1816, 7
      %v1819 = vshll.u32 %v1703, 16
      %v1821 = vor.u32 %v1818, %v1819
      %v1822 = vsel %vm1707, %v1814, %v1821
      %v1823 = vrot.slane %v1818, 4
      %v1825 = vshrl.u32 %v1704, 16
      %v1827 = vrot.slane %v1825, 7
      %v1828 = vshll.u32 %v1704, 16
      %v1830 = vor.u32 %v1827, %v1828
      %v1831 = vsel %vm1707, %v1823, %v1830
      %v1832 = vrot.slane %v1827, 4
      %v1834 = vshrl.u32 %v1705, 16
      %v1836 = vrot.slane %v1834, 7
      %v1837 = vshll.u32 %v1705, 16
      %v1839 = vor.u32 %v1836, %v1837
      %v1840 = vsel %vm1707, %v1832, %v1839
      %v1841 = vrot.slane %v1836, 4
      %v1858 = vld [vmem:[#allocation3 + $0x8] sm:$0xf]
      %v1859 = vsel %vm260, %v1714, %v1858
      %1860 = vst [vmem:[#allocation3 + $0x8] sm:$0xf] %v1859
      %1861 = vst.msk [vmem:[#allocation3 + $0xc] sm:$0xf] %vm249, %v1723
      %1862 = vst.msk [vmem:[#allocation3 + $0x10] sm:$0xf] %vm249, %v1732
      %1863 = vst.msk [vmem:[#allocation3 + $0x14] sm:$0xf] %vm249, %v1741
      %1864 = vst.msk [vmem:[#allocation3 + $0x18] sm:$0xf] %vm249, %v1750
      %1865 = vst.msk [vmem:[#allocation3 + $0x1c] sm:$0xf] %vm249, %v1759
      %1866 = vst.msk [vmem:[#allocation3 + $0x20] sm:$0xf] %vm249, %v1768
      %1867 = vst.msk [vmem:[#allocation3 + $0x24] sm:$0xf] %vm249, %v1777
      %1868 = vst.msk [vmem:[#allocation3 + $0x28] sm:$0xf] %vm249, %v1786
      %1869 = vst.msk [vmem:[#allocation3 + $0x2c] sm:$0xf] %vm249, %v1795
      %1870 = vst.msk [vmem:[#allocation3 + $0x30] sm:$0xf] %vm249, %v1804
      %1871 = vst.msk [vmem:[#allocation3 + $0x34] sm:$0xf] %vm249, %v1813
      %1872 = vst.msk [vmem:[#allocation3 + $0x38] sm:$0xf] %vm249, %v1822
      %1873 = vst.msk [vmem:[#allocation3 + $0x3c] sm:$0xf] %vm249, %v1831
      %1874 = vst.msk [vmem:[#allocation3 + $0x40] sm:$0xf] %vm249, %v1840
      %v1875 = vld [vmem:[#allocation3 + $0x44] sm:$0x1]
      %v1876 = vsel %vm254, %v1841, %v1875
      %1877 = vst [vmem:[#allocation3 + $0x44] sm:$0x1] %v1876
      %v1878 = vld [vmem:[#allocation3] sm:$0xf]
      %v1879 = vld [vmem:[#allocation3 + $0x4] sm:$0xf]
      %v1880 = vld [vmem:[#allocation3 + $0x8] sm:$0xf]
      %v1881 = vld [vmem:[#allocation3 + $0xc] sm:$0xf]
      %v1882 = vld [vmem:[#allocation3 + $0x10] sm:$0xf]
      %v1883 = vld [vmem:[#allocation3 + $0x14] sm:$0xf]
      %v1884 = vld [vmem:[#allocation3 + $0x18] sm:$0xf]
      %v1885 = vld [vmem:[#allocation3 + $0x1c] sm:$0xf]
      %v1886 = vld [vmem:[#allocation3 + $0x20] sm:$0xf]
      %v1887 = vld [vmem:[#allocation3 + $0x24] sm:$0xf]
      %v1888 = vld [vmem:[#allocation3 + $0x28] sm:$0xf]
      %v1889 = vld [vmem:[#allocation3 + $0x2c] sm:$0xf]
      %v1890 = vld [vmem:[#allocation3 + $0x30] sm:$0xf]
      %v1891 = vld [vmem:[#allocation3 + $0x34] sm:$0xf]
      %v1892 = vld [vmem:[#allocation3 + $0x38] sm:$0xf]
      %v1893 = vld [vmem:[%s3] sm:$0xf]
      %v1894 = vld [vmem:[%s3 + $0x4] sm:$0xf]
      %v1895 = vld [vmem:[%s3 + $0x8] sm:$0xf]
      %v1896 = vld [vmem:[%s3 + $0xc] sm:$0xf]
      %v1897 = vld [vmem:[%s3 + $0x10] sm:$0xf]
      %v1898 = vld [vmem:[%s3 + $0x14] sm:$0xf]
      %v1899 = vld [vmem:[%s3 + $0x18] sm:$0xf]
      %v1900 = vld [vmem:[%s3 + $0x1c] sm:$0xf]
      %v1901 = vld [vmem:[#allocation3 + $0x3c] sm:$0x1]
      %v1902 = vld [vmem:[%s3 + $0x20] sm:$0xf]
      %v1903 = vld [vmem:[%s3 + $0x24] sm:$0xf]
      %v1904 = vld [vmem:[%s3 + $0x28] sm:$0xf]
      %v1905 = vld [vmem:[%s3 + $0x2c] sm:$0xf]
      %v1906 = vld [vmem:[%s3 + $0x30] sm:$0xf]
      %v1907 = vld [vmem:[%s3 + $0x34] sm:$0xf]
      %v1908 = vld [vmem:[%s3 + $0x38] sm:$0xf]
      %v1909 = vld [vmem:[%s3 + $0x3c] sm:$0xf]
      %v1926 = vunpack.c.l.b16 %v1878
      %v1927 = vunpack.c.l.b16 %v1879
      %v1928 = vunpack.c.l.b16 %v1880
      %v1929 = vunpack.c.l.b16 %v1881
      %v1930 = vunpack.c.l.b16 %v1882
      %v1931 = vunpack.c.l.b16 %v1883
      %v1932 = vunpack.c.l.b16 %v1884
      %v1933 = vunpack.c.l.b16 %v1885
      %v1934 = vunpack.c.l.b16 %v1886
      %v1935 = vunpack.c.l.b16 %v1887
      %v1936 = vunpack.c.l.b16 %v1888
      %v1937 = vunpack.c.l.b16 %v1889
      %v1938 = vunpack.c.l.b16 %v1890
      %v1939 = vunpack.c.l.b16 %v1891
      %v1940 = vunpack.c.l.b16 %v1892
      %v1941 = vunpack.c.l.b16 %v1901
      %v1942 = vpack.c.b16 %v1927, %v1926
      %v1943 = vpack.c.b16 %v1929, %v1928
      %v1944 = vpack.c.b16 %v1931, %v1930
      %v1945 = vpack.c.b16 %v1933, %v1932
      %v1946 = vpack.c.b16 %v1935, %v1934
      %v1947 = vpack.c.b16 %v1937, %v1936
      %v1948 = vpack.c.b16 %v1939, %v1938
      %v1949 = vpack.c.b16 %v1941, %v1940
      %v1951 = vshrl.u32 %v1942, 16
      %v1953 = vshll.u32 %v1942, 16
      %v1955 = vrot.slane %v1953, 1
      %v1956 = vor.u32 %v1951, %v1955
      %v1958 = vshll.u32 %v1943, 16
      %v1960 = vrot.slane %v1958, 1
      %v1961 = vsel %vm914, %v1956, %v1960
      %v1962 = vshrl.u32 %v1943, 16
      %v1964 = vor.u32 %v1962, %v1960
      %v1966 = vshll.u32 %v1944, 16
      %v1968 = vrot.slane %v1966, 1
      %v1969 = vsel %vm914, %v1964, %v1968
      %v1970 = vshrl.u32 %v1944, 16
      %v1972 = vor.u32 %v1970, %v1968
      %v1974 = vshll.u32 %v1945, 16
      %v1976 = vrot.slane %v1974, 1
      %v1977 = vsel %vm914, %v1972, %v1976
      %v1978 = vshrl.u32 %v1945, 16
      %v1980 = vor.u32 %v1978, %v1976
      %v1982 = vshll.u32 %v1946, 16
      %v1984 = vrot.slane %v1982, 1
      %v1985 = vsel %vm914, %v1980, %v1984
      %v1986 = vshrl.u32 %v1946, 16
      %v1988 = vor.u32 %v1986, %v1984
      %v1990 = vshll.u32 %v1947, 16
      %v1992 = vrot.slane %v1990, 1
      %v1993 = vsel %vm914, %v1988, %v1992
      %v1994 = vshrl.u32 %v1947, 16
      %v1996 = vor.u32 %v1994, %v1992
      %v1998 = vshll.u32 %v1948, 16
      %v2000 = vrot.slane %v1998, 1
      %v2001 = vsel %vm914, %v1996, %v2000
      %v2002 = vshrl.u32 %v1948, 16
      %v2004 = vor.u32 %v2002, %v2000
      %v2006 = vshll.u32 %v1949, 16
      %v2008 = vrot.slane %v2006, 1
      %v2009 = vsel %vm914, %v2004, %v2008
      %v2010 = vshrl.u32 %v1949, 16
      %v2012 = vor.u32 %v2010, %v2008
      %v2021 = vunpack.c.l.b16 %v1902
      %v2022 = vunpack.c.l.b16 %v1903
      %v2023 = vunpack.c.l.b16 %v1904
      %v2024 = vunpack.c.l.b16 %v1905
      %v2025 = vunpack.c.l.b16 %v1906
      %v2026 = vunpack.c.l.b16 %v1907
      %v2027 = vunpack.c.l.b16 %v1908
      %v2028 = vunpack.c.l.b16 %v1909
      %v2029 = vpack.c.b16 %v2022, %v2021
      %v2030 = vpack.c.b16 %v2024, %v2023
      %v2031 = vpack.c.b16 %v2026, %v2025
      %v2032 = vpack.c.b16 %v2028, %v2027
      %vm2037 = vcmask 523264
      %v2039 = vsel %vm2037, %v1961, 0
      %v2042 = vsel %vm2037, %v1969, 0
      %v2045 = vsel %vm2037, %v1977, 0
      %v2048 = vsel %vm2037, %v1985, 0
      %v2051 = vsel %vm2037, %v1993, 0
      %v2054 = vsel %vm2037, %v2001, 0
      %v2057 = vsel %vm2037, %v2009, 0
      %v2060 = vsel %vm2037, %v2012, 0
      %2062 = vmatpush.bf16.msra.mxu0 0
      %2063 = vmatpush.bf16.msra.mxu0 0
      %2064 = vmatpush.bf16.msra.mxu0 0
      %2065 = vmatpush.bf16.msra.mxu0 0
      %2066 = vmatpush.bf16.msra.mxu0 %v2032
      %2067 = vmatpush.bf16.msra.mxu0 %v2031
      %2068 = vmatpush.bf16.msra.mxu0 %v2030
      %2069 = vmatpush.bf16.msra.mxu0 %v2029
      %2070 = vmatmul.bf16.gmra.mxu0 %v2039
      %v2071 = vpop.f32.mrf.mxu0
      %v2072 = vadd.f32 0.0, %v2071
      %v2073 = vpop.f32.mrf.mxu0
      %v2074 = vadd.f32 0.0, %v2073
      %2075 = vmatmul.bf16.gmra.mxu0 %v2042
      %v2076 = vpop.f32.mrf.mxu0
      %v2077 = vadd.f32 0.0, %v2076
      %v2078 = vpop.f32.mrf.mxu0
      %v2079 = vadd.f32 0.0, %v2078
      %2080 = vmatmul.bf16.gmra.mxu0 %v2045
      %v2081 = vpop.f32.mrf.mxu0
      %v2082 = vadd.f32 0.0, %v2081
      %v2083 = vpop.f32.mrf.mxu0
      %v2084 = vadd.f32 0.0, %v2083
      %2085 = vmatmul.bf16.gmra.mxu0 %v2048
      %v2086 = vpop.f32.mrf.mxu0
      %v2087 = vadd.f32 0.0, %v2086
      %v2088 = vpop.f32.mrf.mxu0
      %v2089 = vadd.f32 0.0, %v2088
      %2090 = vmatmul.bf16.gmra.mxu0 %v2051
      %v2091 = vpop.f32.mrf.mxu0
      %v2092 = vadd.f32 0.0, %v2091
      %v2093 = vpop.f32.mrf.mxu0
      %v2094 = vadd.f32 0.0, %v2093
      %2095 = vmatmul.bf16.gmra.mxu0 %v2054
      %v2096 = vpop.f32.mrf.mxu0
      %v2097 = vadd.f32 0.0, %v2096
      %v2098 = vpop.f32.mrf.mxu0
      %v2099 = vadd.f32 0.0, %v2098
      %2100 = vmatmul.bf16.gmra.mxu0 %v2057
      %v2101 = vpop.f32.mrf.mxu0
      %v2102 = vadd.f32 0.0, %v2101
      %v2103 = vpop.f32.mrf.mxu0
      %v2104 = vadd.f32 0.0, %v2103
      %2105 = vmatmul.bf16.gmra.mxu0 %v2060
      %v2106 = vpop.f32.mrf.mxu0
      %v2107 = vadd.f32 0.0, %v2106
      %v2108 = vpop.f32.mrf.mxu0
      %2109 = vdwg.mxu0
      %v2110 = vpack.c.b16 %v1940, %v1940
      %v2119 = vunpack.c.l.b16 %v1893
      %v2120 = vunpack.c.l.b16 %v1894
      %v2121 = vunpack.c.l.b16 %v1895
      %v2122 = vunpack.c.l.b16 %v1896
      %v2123 = vunpack.c.l.b16 %v1897
      %v2124 = vunpack.c.l.b16 %v1898
      %v2125 = vunpack.c.l.b16 %v1899
      %v2126 = vunpack.c.l.b16 %v1900
      %v2127 = vpack.c.b16 %v2120, %v2119
      %v2128 = vpack.c.b16 %v2122, %v2121
      %v2129 = vpack.c.b16 %v2124, %v2123
      %v2130 = vpack.c.b16 %v2126, %v2125
      %v2135 = vsel %vm2037, %v1942, 0
      %v2137 = vsel %vm2037, %v1943, 0
      %v2139 = vsel %vm2037, %v1944, 0
      %v2141 = vsel %vm2037, %v1945, 0
      %v2143 = vsel %vm2037, %v1946, 0
      %v2145 = vsel %vm2037, %v1947, 0
      %v2147 = vsel %vm2037, %v1948, 0
      %v2150 = vsel %vm2037, %v2110, 0
      %2152 = vmatpush.bf16.msra.mxu0 0
      %2153 = vmatpush.bf16.msra.mxu0 0
      %2154 = vmatpush.bf16.msra.mxu0 0
      %2155 = vmatpush.bf16.msra.mxu0 0
      %2156 = vmatpush.bf16.msra.mxu0 %v2130
      %2157 = vmatpush.bf16.msra.mxu0 %v2129
      %2158 = vmatpush.bf16.msra.mxu0 %v2128
      %2159 = vmatpush.bf16.msra.mxu0 %v2127
      %2160 = vmatmul.bf16.gmra.mxu0 %v2135
      %v2161 = vpop.f32.mrf.mxu0
      %v2162 = vadd.f32 %v2072, %v2161
      %v2163 = vpop.f32.mrf.mxu0
      %v2164 = vadd.f32 %v2074, %v2163
      %2165 = vmatmul.bf16.gmra.mxu0 %v2137
      %v2166 = vpop.f32.mrf.mxu0
      %v2167 = vadd.f32 %v2077, %v2166
      %v2168 = vpop.f32.mrf.mxu0
      %v2169 = vadd.f32 %v2079, %v2168
      %2170 = vmatmul.bf16.gmra.mxu0 %v2139
      %v2171 = vpop.f32.mrf.mxu0
      %v2172 = vadd.f32 %v2082, %v2171
      %v2173 = vpop.f32.mrf.mxu0
      %v2174 = vadd.f32 %v2084, %v2173
      %2175 = vmatmul.bf16.gmra.mxu0 %v2141
      %v2176 = vpop.f32.mrf.mxu0
      %v2177 = vadd.f32 %v2087, %v2176
      %v2178 = vpop.f32.mrf.mxu0
      %v2179 = vadd.f32 %v2089, %v2178
      %2180 = vmatmul.bf16.gmra.mxu0 %v2143
      %v2181 = vpop.f32.mrf.mxu0
      %v2182 = vadd.f32 %v2092, %v2181
      %v2183 = vpop.f32.mrf.mxu0
      %v2184 = vadd.f32 %v2094, %v2183
      %2185 = vmatmul.bf16.gmra.mxu0 %v2145
      %v2186 = vpop.f32.mrf.mxu0
      %v2187 = vadd.f32 %v2097, %v2186
      %v2188 = vpop.f32.mrf.mxu0
      %v2189 = vadd.f32 %v2099, %v2188
      %2190 = vmatmul.bf16.gmra.mxu0 %v2147
      %v2191 = vpop.f32.mrf.mxu0
      %v2192 = vadd.f32 %v2102, %v2191
      %v2193 = vpop.f32.mrf.mxu0
      %v2194 = vadd.f32 %v2104, %v2193
      %2195 = vmatmul.bf16.gmra.mxu0 %v2150
      %v2196 = vpop.f32.mrf.mxu0
      %v2197 = vadd.f32 %v2107, %v2196
      %v2198 = vpop.f32.mrf.mxu0
      %2199 = vdwg.mxu0
      %v2200 = vld [vmem:[#allocation3] sm:$0xe]
      %v2201 = vld [vmem:[%s3 + $0x40] sm:$0xf]
      %v2202 = vld [vmem:[%s3 + $0x44] sm:$0xf]
      %v2203 = vld [vmem:[%s3 + $0x48] sm:$0xf]
      %v2204 = vld [vmem:[%s3 + $0x4c] sm:$0xf]
      %v2205 = vld [vmem:[%s3 + $0x50] sm:$0xf]
      %v2206 = vld [vmem:[%s3 + $0x54] sm:$0xf]
      %v2207 = vld [vmem:[%s3 + $0x58] sm:$0xf]
      %v2208 = vld [vmem:[%s3 + $0x5c] sm:$0xf]
      %v2210 = vunpack.c.l.b16 %v2200
      %v2211 = vpack.c.b16 %v1927, %v2210
      %vm2212 = vcmask 1046528
      %v2213 = vrot.slane %v2211, 1
      %v2214 = vrot.slane %v1943, 1
      %v2215 = vsel %vm2212, %v2213, %v2214
      %v2216 = vrot.slane %v1944, 1
      %v2217 = vsel %vm2212, %v2214, %v2216
      %v2218 = vrot.slane %v1945, 1
      %v2219 = vsel %vm2212, %v2216, %v2218
      %v2220 = vrot.slane %v1946, 1
      %v2221 = vsel %vm2212, %v2218, %v2220
      %v2222 = vrot.slane %v1947, 1
      %v2223 = vsel %vm2212, %v2220, %v2222
      %v2224 = vrot.slane %v1948, 1
      %v2225 = vsel %vm2212, %v2222, %v2224
      %v2226 = vrot.slane %v1949, 1
      %v2227 = vsel %vm2212, %v2224, %v2226
      %v2236 = vunpack.c.l.b16 %v2201
      %v2237 = vunpack.c.l.b16 %v2202
      %v2238 = vunpack.c.l.b16 %v2203
      %v2239 = vunpack.c.l.b16 %v2204
      %v2240 = vunpack.c.l.b16 %v2205
      %v2241 = vunpack.c.l.b16 %v2206
      %v2242 = vunpack.c.l.b16 %v2207
      %v2243 = vunpack.c.l.b16 %v2208
      %v2244 = vpack.c.b16 %v2237, %v2236
      %v2245 = vpack.c.b16 %v2239, %v2238
      %v2246 = vpack.c.b16 %v2241, %v2240
      %v2247 = vpack.c.b16 %v2243, %v2242
      %v2253 = vsel %vm2037, %v2215, 0
      %v2256 = vsel %vm2037, %v2217, 0
      %v2259 = vsel %vm2037, %v2219, 0
      %v2262 = vsel %vm2037, %v2221, 0
      %v2265 = vsel %vm2037, %v2223, 0
      %v2268 = vsel %vm2037, %v2225, 0
      %v2271 = vsel %vm2037, %v2227, 0
      %v2274 = vsel %vm2037, %v2226, 0
      %2276 = vmatpush.bf16.msra.mxu0 0
      %2277 = vmatpush.bf16.msra.mxu0 0
      %2278 = vmatpush.bf16.msra.mxu0 0
      %2279 = vmatpush.bf16.msra.mxu0 0
      %2280 = vmatpush.bf16.msra.mxu0 %v2247
      %2281 = vmatpush.bf16.msra.mxu0 %v2246
      %2282 = vmatpush.bf16.msra.mxu0 %v2245
      %2283 = vmatpush.bf16.msra.mxu0 %v2244
      %2284 = vmatmul.bf16.gmra.mxu0 %v2253
      %v2285 = vpop.f32.mrf.mxu0
      %v2286 = vadd.f32 0.0, %v2285
      %v2287 = vpop.f32.mrf.mxu0
      %v2288 = vadd.f32 0.0, %v2287
      %2289 = vmatmul.bf16.gmra.mxu0 %v2256
      %v2290 = vpop.f32.mrf.mxu0
      %v2291 = vadd.f32 0.0, %v2290
      %v2292 = vpop.f32.mrf.mxu0
      %v2293 = vadd.f32 0.0, %v2292
      %2294 = vmatmul.bf16.gmra.mxu0 %v2259
      %v2295 = vpop.f32.mrf.mxu0
      %v2296 = vadd.f32 0.0, %v2295
      %v2297 = vpop.f32.mrf.mxu0
      %v2298 = vadd.f32 0.0, %v2297
      %2299 = vmatmul.bf16.gmra.mxu0 %v2262
      %v2300 = vpop.f32.mrf.mxu0
      %v2301 = vadd.f32 0.0, %v2300
      %v2302 = vpop.f32.mrf.mxu0
      %v2303 = vadd.f32 0.0, %v2302
      %2304 = vmatmul.bf16.gmra.mxu0 %v2265
      %v2305 = vpop.f32.mrf.mxu0
      %v2306 = vadd.f32 0.0, %v2305
      %v2307 = vpop.f32.mrf.mxu0
      %v2308 = vadd.f32 0.0, %v2307
      %2309 = vmatmul.bf16.gmra.mxu0 %v2268
      %v2310 = vpop.f32.mrf.mxu0
      %v2311 = vadd.f32 0.0, %v2310
      %v2312 = vpop.f32.mrf.mxu0
      %v2313 = vadd.f32 0.0, %v2312
      %2314 = vmatmul.bf16.gmra.mxu0 %v2271
      %v2315 = vpop.f32.mrf.mxu0
      %v2316 = vadd.f32 0.0, %v2315
      %v2317 = vpop.f32.mrf.mxu0
      %v2318 = vadd.f32 0.0, %v2317
      %2319 = vmatmul.bf16.gmra.mxu0 %v2274
      %v2320 = vpop.f32.mrf.mxu0
      %v2321 = vadd.f32 0.0, %v2320
      %v2322 = vpop.f32.mrf.mxu0
      %2323 = vdwg.mxu0
      %v2324 = vadd.f32 %v2162, %v2286
      %v2325 = vadd.f32 %v2164, %v2288
      %v2326 = vadd.f32 %v2167, %v2291
      %v2327 = vadd.f32 %v2169, %v2293
      %v2328 = vadd.f32 %v2172, %v2296
      %v2329 = vadd.f32 %v2174, %v2298
      %v2330 = vadd.f32 %v2177, %v2301
      %v2331 = vadd.f32 %v2179, %v2303
      %v2332 = vadd.f32 %v2182, %v2306
      %v2333 = vadd.f32 %v2184, %v2308
      %v2334 = vadd.f32 %v2187, %v2311
      %v2335 = vadd.f32 %v2189, %v2313
      %v2336 = vadd.f32 %v2192, %v2316
      %v2337 = vadd.f32 %v2194, %v2318
      %v2338 = vadd.f32 %v2197, %v2321
      %v2339 = vld [vmem:[#allocation3 + $0x8] sm:$0xf]
      %v2340 = vld [vmem:[#allocation3 + $0xc] sm:$0xf]
      %v2341 = vld [vmem:[#allocation3 + $0x10] sm:$0xf]
      %v2342 = vld [vmem:[#allocation3 + $0x14] sm:$0xf]
      %v2343 = vld [vmem:[#allocation3 + $0x18] sm:$0xf]
      %v2344 = vld [vmem:[#allocation3 + $0x1c] sm:$0xf]
      %v2345 = vld [vmem:[#allocation3 + $0x20] sm:$0xf]
      %v2346 = vld [vmem:[#allocation3 + $0x24] sm:$0xf]
      %v2347 = vld [vmem:[#allocation3 + $0x28] sm:$0xf]
      %v2348 = vld [vmem:[#allocation3 + $0x2c] sm:$0xf]
      %v2349 = vld [vmem:[#allocation3 + $0x30] sm:$0xf]
      %v2350 = vld [vmem:[#allocation3 + $0x34] sm:$0xf]
      %v2351 = vld [vmem:[#allocation3 + $0x38] sm:$0xf]
      %v2352 = vld [vmem:[#allocation3 + $0x3c] sm:$0xf]
      %v2353 = vld [vmem:[#allocation3 + $0x40] sm:$0xf]
      %v2354 = vld [vmem:[%s3 + $0x60] sm:$0xf]
      %v2355 = vld [vmem:[%s3 + $0x64] sm:$0xf]
      %v2356 = vld [vmem:[%s3 + $0x68] sm:$0xf]
      %v2357 = vld [vmem:[%s3 + $0x6c] sm:$0xf]
      %v2358 = vld [vmem:[%s3 + $0x70] sm:$0xf]
      %v2359 = vld [vmem:[%s3 + $0x74] sm:$0xf]
      %v2360 = vld [vmem:[%s3 + $0x78] sm:$0xf]
      %v2361 = vld [vmem:[%s3 + $0x7c] sm:$0xf]
      %v2377 = vunpack.c.l.b16 %v2339
      %v2378 = vunpack.c.l.b16 %v2340
      %v2379 = vunpack.c.l.b16 %v2341
      %v2380 = vunpack.c.l.b16 %v2342
      %v2381 = vunpack.c.l.b16 %v2343
      %v2382 = vunpack.c.l.b16 %v2344
      %v2383 = vunpack.c.l.b16 %v2345
      %v2384 = vunpack.c.l.b16 %v2346
      %v2385 = vunpack.c.l.b16 %v2347
      %v2386 = vunpack.c.l.b16 %v2348
      %v2387 = vunpack.c.l.b16 %v2349
      %v2388 = vunpack.c.l.b16 %v2350
      %v2389 = vunpack.c.l.b16 %v2351
      %v2390 = vunpack.c.l.b16 %v2352
      %v2391 = vunpack.c.l.b16 %v2353
      %v2392 = vpack.c.b16 %v2378, %v2377
      %v2393 = vpack.c.b16 %v2380, %v2379
      %v2394 = vpack.c.b16 %v2382, %v2381
      %v2395 = vpack.c.b16 %v2384, %v2383
      %v2396 = vpack.c.b16 %v2386, %v2385
      %v2397 = vpack.c.b16 %v2388, %v2387
      %v2398 = vpack.c.b16 %v2390, %v2389
      %v2399 = vpack.c.b16 %v2391, %v2391
      %v2408 = vunpack.c.l.b16 %v2354
      %v2409 = vunpack.c.l.b16 %v2355
      %v2410 = vunpack.c.l.b16 %v2356
      %v2411 = vunpack.c.l.b16 %v2357
      %v2412 = vunpack.c.l.b16 %v2358
      %v2413 = vunpack.c.l.b16 %v2359
      %v2414 = vunpack.c.l.b16 %v2360
      %v2415 = vunpack.c.l.b16 %v2361
      %v2416 = vpack.c.b16 %v2409, %v2408
      %v2417 = vpack.c.b16 %v2411, %v2410
      %v2418 = vpack.c.b16 %v2413, %v2412
      %v2419 = vpack.c.b16 %v2415, %v2414
      %v2425 = vsel %vm2037, %v2392, 0
      %v2428 = vsel %vm2037, %v2393, 0
      %v2431 = vsel %vm2037, %v2394, 0
      %v2434 = vsel %vm2037, %v2395, 0
      %v2437 = vsel %vm2037, %v2396, 0
      %v2440 = vsel %vm2037, %v2397, 0
      %v2443 = vsel %vm2037, %v2398, 0
      %v2446 = vsel %vm2037, %v2399, 0
      %2448 = vmatpush.bf16.msra.mxu0 0
      %2449 = vmatpush.bf16.msra.mxu0 0
      %2450 = vmatpush.bf16.msra.mxu0 0
      %2451 = vmatpush.bf16.msra.mxu0 0
      %2452 = vmatpush.bf16.msra.mxu0 %v2419
      %2453 = vmatpush.bf16.msra.mxu0 %v2418
      %2454 = vmatpush.bf16.msra.mxu0 %v2417
      %2455 = vmatpush.bf16.msra.mxu0 %v2416
      %2456 = vmatmul.bf16.gmra.mxu0 %v2425
      %v2457 = vpop.f32.mrf.mxu0
      %v2458 = vadd.f32 0.0, %v2457
      %v2459 = vpop.f32.mrf.mxu0
      %v2460 = vadd.f32 0.0, %v2459
      %2461 = vmatmul.bf16.gmra.mxu0 %v2428
      %v2462 = vpop.f32.mrf.mxu0
      %v2463 = vadd.f32 0.0, %v2462
      %v2464 = vpop.f32.mrf.mxu0
      %v2465 = vadd.f32 0.0, %v2464
      %2466 = vmatmul.bf16.gmra.mxu0 %v2431
      %v2467 = vpop.f32.mrf.mxu0
      %v2468 = vadd.f32 0.0, %v2467
      %v2469 = vpop.f32.mrf.mxu0
      %v2470 = vadd.f32 0.0, %v2469
      %2471 = vmatmul.bf16.gmra.mxu0 %v2434
      %v2472 = vpop.f32.mrf.mxu0
      %v2473 = vadd.f32 0.0, %v2472
      %v2474 = vpop.f32.mrf.mxu0
      %v2475 = vadd.f32 0.0, %v2474
      %2476 = vmatmul.bf16.gmra.mxu0 %v2437
      %v2477 = vpop.f32.mrf.mxu0
      %v2478 = vadd.f32 0.0, %v2477
      %v2479 = vpop.f32.mrf.mxu0
      %v2480 = vadd.f32 0.0, %v2479
      %2481 = vmatmul.bf16.gmra.mxu0 %v2440
      %v2482 = vpop.f32.mrf.mxu0
      %v2483 = vadd.f32 0.0, %v2482
      %v2484 = vpop.f32.mrf.mxu0
      %v2485 = vadd.f32 0.0, %v2484
      %2486 = vmatmul.bf16.gmra.mxu0 %v2443
      %v2487 = vpop.f32.mrf.mxu0
      %v2488 = vadd.f32 0.0, %v2487
      %v2489 = vpop.f32.mrf.mxu0
      %v2490 = vadd.f32 0.0, %v2489
      %2491 = vmatmul.bf16.gmra.mxu0 %v2446
      %v2492 = vpop.f32.mrf.mxu0
      %v2493 = vadd.f32 0.0, %v2492
      %v2494 = vpop.f32.mrf.mxu0
      %2495 = vdwg.mxu0
      %v2496 = vadd.f32 %v2324, %v2458
      %v2497 = vadd.f32 %v2325, %v2460
      %v2498 = vadd.f32 %v2326, %v2463
      %v2499 = vadd.f32 %v2327, %v2465
      %v2500 = vadd.f32 %v2328, %v2468
      %v2501 = vadd.f32 %v2329, %v2470
      %v2502 = vadd.f32 %v2330, %v2473
      %v2503 = vadd.f32 %v2331, %v2475
      %v2504 = vadd.f32 %v2332, %v2478
      %v2505 = vadd.f32 %v2333, %v2480
      %v2506 = vadd.f32 %v2334, %v2483
      %v2507 = vadd.f32 %v2335, %v2485
      %v2508 = vadd.f32 %v2336, %v2488
      %v2509 = vadd.f32 %v2337, %v2490
      %v2510 = vadd.f32 %v2338, %v2493
      %v2511 = vld [vmem:[#allocation3 + $0x8] sm:$0xf]
      %v2512 = vld [vmem:[#allocation3 + $0xc] sm:$0xf]
      %v2513 = vld [vmem:[#allocation3 + $0x10] sm:$0xf]
      %v2514 = vld [vmem:[#allocation3 + $0x14] sm:$0xf]
      %v2515 = vld [vmem:[#allocation3 + $0x18] sm:$0xf]
      %v2516 = vld [vmem:[#allocation3 + $0x1c] sm:$0xf]
      %v2517 = vld [vmem:[#allocation3 + $0x20] sm:$0xf]
      %v2518 = vld [vmem:[#allocation3 + $0x24] sm:$0xf]
      %v2519 = vld [vmem:[#allocation3 + $0x28] sm:$0xf]
      %v2520 = vld [vmem:[#allocation3 + $0x2c] sm:$0xf]
      %v2521 = vld [vmem:[#allocation3 + $0x30] sm:$0xf]
      %v2522 = vld [vmem:[#allocation3 + $0x34] sm:$0xf]
      %v2523 = vld [vmem:[#allocation3 + $0x38] sm:$0xf]
      %v2524 = vld [vmem:[#allocation3 + $0x3c] sm:$0xf]
      %v2525 = vld [vmem:[#allocation3 + $0x40] sm:$0xf]
      %v2526 = vld [vmem:[#allocation3 + $0x44] sm:$0x1]
      %v2527 = vld [vmem:[%s3 + $0x80] sm:$0xf]
      %v2528 = vld [vmem:[%s3 + $0x84] sm:$0xf]
      %v2529 = vld [vmem:[%s3 + $0x88] sm:$0xf]
      %v2530 = vld [vmem:[%s3 + $0x8c] sm:$0xf]
      %v2531 = vld [vmem:[%s3 + $0x90] sm:$0xf]
      %v2532 = vld [vmem:[%s3 + $0x94] sm:$0xf]
      %v2533 = vld [vmem:[%s3 + $0x98] sm:$0xf]
      %v2534 = vld [vmem:[%s3 + $0x9c] sm:$0xf]
      %v2551 = vunpack.c.l.b16 %v2511
      %v2552 = vunpack.c.l.b16 %v2512
      %v2553 = vunpack.c.l.b16 %v2513
      %v2554 = vunpack.c.l.b16 %v2514
      %v2555 = vunpack.c.l.b16 %v2515
      %v2556 = vunpack.c.l.b16 %v2516
      %v2557 = vunpack.c.l.b16 %v2517
      %v2558 = vunpack.c.l.b16 %v2518
      %v2559 = vunpack.c.l.b16 %v2519
      %v2560 = vunpack.c.l.b16 %v2520
      %v2561 = vunpack.c.l.b16 %v2521
      %v2562 = vunpack.c.l.b16 %v2522
      %v2563 = vunpack.c.l.b16 %v2523
      %v2564 = vunpack.c.l.b16 %v2524
      %v2565 = vunpack.c.l.b16 %v2525
      %v2566 = vunpack.c.l.b16 %v2526
      %v2567 = vpack.c.b16 %v2552, %v2551
      %v2568 = vpack.c.b16 %v2554, %v2553
      %v2569 = vpack.c.b16 %v2556, %v2555
      %v2570 = vpack.c.b16 %v2558, %v2557
      %v2571 = vpack.c.b16 %v2560, %v2559
      %v2572 = vpack.c.b16 %v2562, %v2561
      %v2573 = vpack.c.b16 %v2564, %v2563
      %v2574 = vpack.c.b16 %v2566, %v2565
      %v2576 = vshrl.u32 %v2567, 16
      %v2578 = vshll.u32 %v2567, 16
      %v2580 = vrot.slane %v2578, 1
      %v2581 = vor.u32 %v2576, %v2580
      %v2583 = vshll.u32 %v2568, 16
      %v2585 = vrot.slane %v2583, 1
      %v2586 = vsel %vm914, %v2581, %v2585
      %v2587 = vshrl.u32 %v2568, 16
      %v2589 = vor.u32 %v2587, %v2585
      %v2591 = vshll.u32 %v2569, 16
      %v2593 = vrot.slane %v2591, 1
      %v2594 = vsel %vm914, %v2589, %v2593
      %v2595 = vshrl.u32 %v2569, 16
      %v2597 = vor.u32 %v2595, %v2593
      %v2599 = vshll.u32 %v2570, 16
      %v2601 = vrot.slane %v2599, 1
      %v2602 = vsel %vm914, %v2597, %v2601
      %v2603 = vshrl.u32 %v2570, 16
      %v2605 = vor.u32 %v2603, %v2601
      %v2607 = vshll.u32 %v2571, 16
      %v2609 = vrot.slane %v2607, 1
      %v2610 = vsel %vm914, %v2605, %v2609
      %v2611 = vshrl.u32 %v2571, 16
      %v2613 = vor.u32 %v2611, %v2609
      %v2615 = vshll.u32 %v2572, 16
      %v2617 = vrot.slane %v2615, 1
      %v2618 = vsel %vm914, %v2613, %v2617
      %v2619 = vshrl.u32 %v2572, 16
      %v2621 = vor.u32 %v2619, %v2617
      %v2623 = vshll.u32 %v2573, 16
      %v2625 = vrot.slane %v2623, 1
      %v2626 = vsel %vm914, %v2621, %v2625
      %v2627 = vshrl.u32 %v2573, 16
      %v2629 = vor.u32 %v2627, %v2625
      %v2631 = vshll.u32 %v2574, 16
      %v2633 = vrot.slane %v2631, 1
      %v2634 = vsel %vm914, %v2629, %v2633
      %v2635 = vshrl.u32 %v2574, 16
      %v2637 = vor.u32 %v2635, %v2633
      %v2646 = vunpack.c.l.b16 %v2527
      %v2647 = vunpack.c.l.b16 %v2528
      %v2648 = vunpack.c.l.b16 %v2529
      %v2649 = vunpack.c.l.b16 %v2530
      %v2650 = vunpack.c.l.b16 %v2531
      %v2651 = vunpack.c.l.b16 %v2532
      %v2652 = vunpack.c.l.b16 %v2533
      %v2653 = vunpack.c.l.b16 %v2534
      %v2654 = vpack.c.b16 %v2647, %v2646
      %v2655 = vpack.c.b16 %v2649, %v2648
      %v2656 = vpack.c.b16 %v2651, %v2650
      %v2657 = vpack.c.b16 %v2653, %v2652
      %v2663 = vsel %vm2037, %v2586, 0
      %v2666 = vsel %vm2037, %v2594, 0
      %v2669 = vsel %vm2037, %v2602, 0
      %v2672 = vsel %vm2037, %v2610, 0
      %v2675 = vsel %vm2037, %v2618, 0
      %v2678 = vsel %vm2037, %v2626, 0
      %v2681 = vsel %vm2037, %v2634, 0
      %v2684 = vsel %vm2037, %v2637, 0
      %2686 = vmatpush.bf16.msra.mxu0 0
      %2687 = vmatpush.bf16.msra.mxu0 0
      %2688 = vmatpush.bf16.msra.mxu0 0
      %2689 = vmatpush.bf16.msra.mxu0 0
      %2690 = vmatpush.bf16.msra.mxu0 %v2657
      %2691 = vmatpush.bf16.msra.mxu0 %v2656
      %2692 = vmatpush.bf16.msra.mxu0 %v2655
      %2693 = vmatpush.bf16.msra.mxu0 %v2654
      %2694 = vmatmul.bf16.gmra.mxu0 %v2663
      %v2695 = vpop.f32.mrf.mxu0
      %v2696 = vadd.f32 0.0, %v2695
      %v2697 = vpop.f32.mrf.mxu0
      %v2698 = vadd.f32 0.0, %v2697
      %2699 = vmatmul.bf16.gmra.mxu0 %v2666
      %v2700 = vpop.f32.mrf.mxu0
      %v2701 = vadd.f32 0.0, %v2700
      %v2702 = vpop.f32.mrf.mxu0
      %v2703 = vadd.f32 0.0, %v2702
      %2704 = vmatmul.bf16.gmra.mxu0 %v2669
      %v2705 = vpop.f32.mrf.mxu0
      %v2706 = vadd.f32 0.0, %v2705
      %v2707 = vpop.f32.mrf.mxu0
      %v2708 = vadd.f32 0.0, %v2707
      %2709 = vmatmul.bf16.gmra.mxu0 %v2672
      %v2710 = vpop.f32.mrf.mxu0
      %v2711 = vadd.f32 0.0, %v2710
      %v2712 = vpop.f32.mrf.mxu0
      %v2713 = vadd.f32 0.0, %v2712
      %2714 = vmatmul.bf16.gmra.mxu0 %v2675
      %v2715 = vpop.f32.mrf.mxu0
      %v2716 = vadd.f32 0.0, %v2715
      %v2717 = vpop.f32.mrf.mxu0
      %v2718 = vadd.f32 0.0, %v2717
      %2719 = vmatmul.bf16.gmra.mxu0 %v2678
      %v2720 = vpop.f32.mrf.mxu0
      %v2721 = vadd.f32 0.0, %v2720
      %v2722 = vpop.f32.mrf.mxu0
      %v2723 = vadd.f32 0.0, %v2722
      %2724 = vmatmul.bf16.gmra.mxu0 %v2681
      %v2725 = vpop.f32.mrf.mxu0
      %v2726 = vadd.f32 0.0, %v2725
      %v2727 = vpop.f32.mrf.mxu0
      %v2728 = vadd.f32 0.0, %v2727
      %2729 = vmatmul.bf16.gmra.mxu0 %v2684
      %v2730 = vpop.f32.mrf.mxu0
      %v2731 = vadd.f32 0.0, %v2730
      %v2732 = vpop.f32.mrf.mxu0
      %2733 = vdwg.mxu0
      %v2734 = vadd.f32 %v2496, %v2696
      %v2735 = vadd.f32 %v2497, %v2698
      %v2736 = vadd.f32 %v2498, %v2701
      %v2737 = vadd.f32 %v2499, %v2703
      %v2738 = vadd.f32 %v2500, %v2706
      %v2739 = vadd.f32 %v2501, %v2708
      %v2740 = vadd.f32 %v2502, %v2711
      %v2741 = vadd.f32 %v2503, %v2713
      %v2742 = vadd.f32 %v2504, %v2716
      %v2743 = vadd.f32 %v2505, %v2718
      %v2744 = vadd.f32 %v2506, %v2721
      %v2745 = vadd.f32 %v2507, %v2723
      %v2746 = vadd.f32 %v2508, %v2726
      %v2747 = vadd.f32 %v2509, %v2728
      %v2748 = vadd.f32 %v2510, %v2731
      %v2749 = vld [vmem:[#allocation3 + $0x8] sm:$0xe]
      %v2750 = vld [vmem:[%s3 + $0xa0] sm:$0xf]
      %v2751 = vld [vmem:[%s3 + $0xa4] sm:$0xf]
      %v2752 = vld [vmem:[%s3 + $0xa8] sm:$0xf]
      %v2753 = vld [vmem:[%s3 + $0xac] sm:$0xf]
      %v2754 = vld [vmem:[%s3 + $0xb0] sm:$0xf]
      %v2755 = vld [vmem:[%s3 + $0xb4] sm:$0xf]
      %v2756 = vld [vmem:[%s3 + $0xb8] sm:$0xf]
      %v2757 = vld [vmem:[%s3 + $0xbc] sm:$0xf]
      %v2759 = vunpack.c.l.b16 %v2749
      %v2760 = vpack.c.b16 %v2552, %v2759
      %v2761 = vrot.slane %v2760, 1
      %v2762 = vrot.slane %v2568, 1
      %v2763 = vsel %vm2212, %v2761, %v2762
      %v2764 = vrot.slane %v2569, 1
      %v2765 = vsel %vm2212, %v2762, %v2764
      %v2766 = vrot.slane %v2570, 1
      %v2767 = vsel %vm2212, %v2764, %v2766
      %v2768 = vrot.slane %v2571, 1
      %v2769 = vsel %vm2212, %v2766, %v2768
      %v2770 = vrot.slane %v2572, 1
      %v2771 = vsel %vm2212, %v2768, %v2770
      %v2772 = vrot.slane %v2573, 1
      %v2773 = vsel %vm2212, %v2770, %v2772
      %v2774 = vrot.slane %v2574, 1
      %v2775 = vsel %vm2212, %v2772, %v2774
      %v2784 = vunpack.c.l.b16 %v2750
      %v2785 = vunpack.c.l.b16 %v2751
      %v2786 = vunpack.c.l.b16 %v2752
      %v2787 = vunpack.c.l.b16 %v2753
      %v2788 = vunpack.c.l.b16 %v2754
      %v2789 = vunpack.c.l.b16 %v2755
      %v2790 = vunpack.c.l.b16 %v2756
      %v2791 = vunpack.c.l.b16 %v2757
      %v2792 = vpack.c.b16 %v2785, %v2784
      %v2793 = vpack.c.b16 %v2787, %v2786
      %v2794 = vpack.c.b16 %v2789, %v2788
      %v2795 = vpack.c.b16 %v2791, %v2790
      %v2801 = vsel %vm2037, %v2763, 0
      %v2804 = vsel %vm2037, %v2765, 0
      %v2807 = vsel %vm2037, %v2767, 0
      %v2810 = vsel %vm2037, %v2769, 0
      %v2813 = vsel %vm2037, %v2771, 0
      %v2816 = vsel %vm2037, %v2773, 0
      %v2819 = vsel %vm2037, %v2775, 0
      %v2822 = vsel %vm2037, %v2774, 0
      %2824 = vmatpush.bf16.msra.mxu0 0
      %2825 = vmatpush.bf16.msra.mxu0 0
      %2826 = vmatpush.bf16.msra.mxu0 0
      %2827 = vmatpush.bf16.msra.mxu0 0
      %2828 = vmatpush.bf16.msra.mxu0 %v2795
      %2829 = vmatpush.bf16.msra.mxu0 %v2794
      %2830 = vmatpush.bf16.msra.mxu0 %v2793
      %2831 = vmatpush.bf16.msra.mxu0 %v2792
      %2832 = vmatmul.bf16.gmra.mxu0 %v2801
      %v2833 = vpop.f32.mrf.mxu0
      %v2834 = vadd.f32 0.0, %v2833
      %v2835 = vpop.f32.mrf.mxu0
      %v2836 = vadd.f32 0.0, %v2835
      %2837 = vmatmul.bf16.gmra.mxu0 %v2804
      %v2838 = vpop.f32.mrf.mxu0
      %v2839 = vadd.f32 0.0, %v2838
      %v2840 = vpop.f32.mrf.mxu0
      %v2841 = vadd.f32 0.0, %v2840
      %2842 = vmatmul.bf16.gmra.mxu0 %v2807
      %v2843 = vpop.f32.mrf.mxu0
      %v2844 = vadd.f32 0.0, %v2843
      %v2845 = vpop.f32.mrf.mxu0
      %v2846 = vadd.f32 0.0, %v2845
      %2847 = vmatmul.bf16.gmra.mxu0 %v2810
      %v2848 = vpop.f32.mrf.mxu0
      %v2849 = vadd.f32 0.0, %v2848
      %v2850 = vpop.f32.mrf.mxu0
      %v2851 = vadd.f32 0.0, %v2850
      %2852 = vmatmul.bf16.gmra.mxu0 %v2813
      %v2853 = vpop.f32.mrf.mxu0
      %v2854 = vadd.f32 0.0, %v2853
      %v2855 = vpop.f32.mrf.mxu0
      %v2856 = vadd.f32 0.0, %v2855
      %2857 = vmatmul.bf16.gmra.mxu0 %v2816
      %v2858 = vpop.f32.mrf.mxu0
      %v2859 = vadd.f32 0.0, %v2858
      %v2860 = vpop.f32.mrf.mxu0
      %v2861 = vadd.f32 0.0, %v2860
      %2862 = vmatmul.bf16.gmra.mxu0 %v2819
      %v2863 = vpop.f32.mrf.mxu0
      %v2864 = vadd.f32 0.0, %v2863
      %v2865 = vpop.f32.mrf.mxu0
      %v2866 = vadd.f32 0.0, %v2865
      %2867 = vmatmul.bf16.gmra.mxu0 %v2822
      %v2868 = vpop.f32.mrf.mxu0
      %v2869 = vadd.f32 0.0, %v2868
      %v2870 = vpop.f32.mrf.mxu0
      %2871 = vdwg.mxu0
      %v2872 = vadd.f32 %v2734, %v2834
      %v2873 = vadd.f32 %v2735, %v2836
      %v2874 = vadd.f32 %v2736, %v2839
      %v2875 = vadd.f32 %v2737, %v2841
      %v2876 = vadd.f32 %v2738, %v2844
      %v2877 = vadd.f32 %v2739, %v2846
      %v2878 = vadd.f32 %v2740, %v2849
      %v2879 = vadd.f32 %v2741, %v2851
      %v2880 = vadd.f32 %v2742, %v2854
      %v2881 = vadd.f32 %v2743, %v2856
      %v2882 = vadd.f32 %v2744, %v2859
      %v2883 = vadd.f32 %v2745, %v2861
      %v2884 = vadd.f32 %v2746, %v2864
      %v2885 = vadd.f32 %v2747, %v2866
      %v2886 = vadd.f32 %v2748, %v2869
      %v2887 = vld [vmem:[#allocation3 + $0x10] sm:$0xf]
      %v2888 = vld [vmem:[#allocation3 + $0x14] sm:$0xf]
      %v2889 = vld [vmem:[#allocation3 + $0x18] sm:$0xf]
      %v2890 = vld [vmem:[#allocation3 + $0x1c] sm:$0xf]
      %v2891 = vld [vmem:[#allocation3 + $0x20] sm:$0xf]
      %v2892 = vld [vmem:[#allocation3 + $0x24] sm:$0xf]
      %v2893 = vld [vmem:[#allocation3 + $0x28] sm:$0xf]
      %v2894 = vld [vmem:[#allocation3 + $0x2c] sm:$0xf]
      %v2895 = vld [vmem:[#allocation3 + $0x30] sm:$0xf]
      %v2896 = vld [vmem:[#allocation3 + $0x34] sm:$0xf]
      %v2897 = vld [vmem:[#allocation3 + $0x38] sm:$0xf]
      %v2898 = vld [vmem:[#allocation3 + $0x3c] sm:$0xf]
      %v2899 = vld [vmem:[#allocation3 + $0x40] sm:$0xf]
      %v2900 = vld [vmem:[#allocation3 + $0x44] sm:$0xf]
      %v2901 = vld [vmem:[#allocation3 + $0x48] sm:$0xf]
      %v2902 = vld [vmem:[%s3 + $0xc0] sm:$0xf]
      %v2903 = vld [vmem:[%s3 + $0xc4] sm:$0xf]
      %v2904 = vld [vmem:[%s3 + $0xc8] sm:$0xf]
      %v2905 = vld [vmem:[%s3 + $0xcc] sm:$0xf]
      %v2906 = vld [vmem:[%s3 + $0xd0] sm:$0xf]
      %v2907 = vld [vmem:[%s3 + $0xd4] sm:$0xf]
      %v2908 = vld [vmem:[%s3 + $0xd8] sm:$0xf]
      %v2909 = vld [vmem:[%s3 + $0xdc] sm:$0xf]
      %v2925 = vunpack.c.l.b16 %v2887
      %v2926 = vunpack.c.l.b16 %v2888
      %v2927 = vunpack.c.l.b16 %v2889
      %v2928 = vunpack.c.l.b16 %v2890
      %v2929 = vunpack.c.l.b16 %v2891
      %v2930 = vunpack.c.l.b16 %v2892
      %v2931 = vunpack.c.l.b16 %v2893
      %v2932 = vunpack.c.l.b16 %v2894
      %v2933 = vunpack.c.l.b16 %v2895
      %v2934 = vunpack.c.l.b16 %v2896
      %v2935 = vunpack.c.l.b16 %v2897
      %v2936 = vunpack.c.l.b16 %v2898
      %v2937 = vunpack.c.l.b16 %v2899
      %v2938 = vunpack.c.l.b16 %v2900
      %v2939 = vunpack.c.l.b16 %v2901
      %v2940 = vpack.c.b16 %v2926, %v2925
      %v2941 = vpack.c.b16 %v2928, %v2927
      %v2942 = vpack.c.b16 %v2930, %v2929
      %v2943 = vpack.c.b16 %v2932, %v2931
      %v2944 = vpack.c.b16 %v2934, %v2933
      %v2945 = vpack.c.b16 %v2936, %v2935
      %v2946 = vpack.c.b16 %v2938, %v2937
      %v2947 = vpack.c.b16 %v2939, %v2939
      %v2956 = vunpack.c.l.b16 %v2902
      %v2957 = vunpack.c.l.b16 %v2903
      %v2958 = vunpack.c.l.b16 %v2904
      %v2959 = vunpack.c.l.b16 %v2905
      %v2960 = vunpack.c.l.b16 %v2906
      %v2961 = vunpack.c.l.b16 %v2907
      %v2962 = vunpack.c.l.b16 %v2908
      %v2963 = vunpack.c.l.b16 %v2909
      %v2964 = vpack.c.b16 %v2957, %v2956
      %v2965 = vpack.c.b16 %v2959, %v2958
      %v2966 = vpack.c.b16 %v2961, %v2960
      %v2967 = vpack.c.b16 %v2963, %v2962
      %v2973 = vsel %vm2037, %v2940, 0
      %v2976 = vsel %vm2037, %v2941, 0
      %v2979 = vsel %vm2037, %v2942, 0
      %v2982 = vsel %vm2037, %v2943, 0
      %v2985 = vsel %vm2037, %v2944, 0
      %v2988 = vsel %vm2037, %v2945, 0
      %v2991 = vsel %vm2037, %v2946, 0
      %v2994 = vsel %vm2037, %v2947, 0
      %2996 = vmatpush.bf16.msra.mxu0 0
      %2997 = vmatpush.bf16.msra.mxu0 0
      %2998 = vmatpush.bf16.msra.mxu0 0
      %2999 = vmatpush.bf16.msra.mxu0 0
      %3000 = vmatpush.bf16.msra.mxu0 %v2967
      %3001 = vmatpush.bf16.msra.mxu0 %v2966
      %3002 = vmatpush.bf16.msra.mxu0 %v2965
      %3003 = vmatpush.bf16.msra.mxu0 %v2964
      %3004 = vmatmul.bf16.gmra.mxu0 %v2973
      %v3005 = vpop.f32.mrf.mxu0
      %v3006 = vadd.f32 0.0, %v3005
      %v3007 = vpop.f32.mrf.mxu0
      %v3008 = vadd.f32 0.0, %v3007
      %3009 = vmatmul.bf16.gmra.mxu0 %v2976
      %v3010 = vpop.f32.mrf.mxu0
      %v3011 = vadd.f32 0.0, %v3010
      %v3012 = vpop.f32.mrf.mxu0
      %v3013 = vadd.f32 0.0, %v3012
      %3014 = vmatmul.bf16.gmra.mxu0 %v2979
      %v3015 = vpop.f32.mrf.mxu0
      %v3016 = vadd.f32 0.0, %v3015
      %v3017 = vpop.f32.mrf.mxu0
      %v3018 = vadd.f32 0.0, %v3017
      %3019 = vmatmul.bf16.gmra.mxu0 %v2982
      %v3020 = vpop.f32.mrf.mxu0
      %v3021 = vadd.f32 0.0, %v3020
      %v3022 = vpop.f32.mrf.mxu0
      %v3023 = vadd.f32 0.0, %v3022
      %3024 = vmatmul.bf16.gmra.mxu0 %v2985
      %v3025 = vpop.f32.mrf.mxu0
      %v3026 = vadd.f32 0.0, %v3025
      %v3027 = vpop.f32.mrf.mxu0
      %v3028 = vadd.f32 0.0, %v3027
      %3029 = vmatmul.bf16.gmra.mxu0 %v2988
      %v3030 = vpop.f32.mrf.mxu0
      %v3031 = vadd.f32 0.0, %v3030
      %v3032 = vpop.f32.mrf.mxu0
      %v3033 = vadd.f32 0.0, %v3032
      %3034 = vmatmul.bf16.gmra.mxu0 %v2991
      %v3035 = vpop.f32.mrf.mxu0
      %v3036 = vadd.f32 0.0, %v3035
      %v3037 = vpop.f32.mrf.mxu0
      %v3038 = vadd.f32 0.0, %v3037
      %3039 = vmatmul.bf16.gmra.mxu0 %v2994
      %v3040 = vpop.f32.mrf.mxu0
      %v3041 = vadd.f32 0.0, %v3040
      %v3042 = vpop.f32.mrf.mxu0
      %3043 = vdwg.mxu0
      %v3044 = vadd.f32 %v2872, %v3006
      %v3045 = vadd.f32 %v2873, %v3008
      %v3046 = vadd.f32 %v2874, %v3011
      %v3047 = vadd.f32 %v2875, %v3013
      %v3048 = vadd.f32 %v2876, %v3016
      %v3049 = vadd.f32 %v2877, %v3018
      %v3050 = vadd.f32 %v2878, %v3021
      %v3051 = vadd.f32 %v2879, %v3023
      %v3052 = vadd.f32 %v2880, %v3026
      %v3053 = vadd.f32 %v2881, %v3028
      %v3054 = vadd.f32 %v2882, %v3031
      %v3055 = vadd.f32 %v2883, %v3033
      %v3056 = vadd.f32 %v2884, %v3036
      %v3057 = vadd.f32 %v2885, %v3038
      %v3058 = vadd.f32 %v2886, %v3041
      %v3059 = vld [vmem:[#allocation3 + $0x10] sm:$0xf]
      %v3060 = vld [vmem:[#allocation3 + $0x14] sm:$0xf]
      %v3061 = vld [vmem:[#allocation3 + $0x18] sm:$0xf]
      %v3062 = vld [vmem:[#allocation3 + $0x1c] sm:$0xf]
      %v3063 = vld [vmem:[#allocation3 + $0x20] sm:$0xf]
      %v3064 = vld [vmem:[#allocation3 + $0x24] sm:$0xf]
      %v3065 = vld [vmem:[#allocation3 + $0x28] sm:$0xf]
      %v3066 = vld [vmem:[#allocation3 + $0x2c] sm:$0xf]
      %v3067 = vld [vmem:[#allocation3 + $0x30] sm:$0xf]
      %v3068 = vld [vmem:[#allocation3 + $0x34] sm:$0xf]
      %v3069 = vld [vmem:[#allocation3 + $0x38] sm:$0xf]
      %v3070 = vld [vmem:[#allocation3 + $0x3c] sm:$0xf]
      %v3071 = vld [vmem:[#allocation3 + $0x40] sm:$0xf]
      %v3072 = vld [vmem:[#allocation3 + $0x44] sm:$0xf]
      %v3073 = vld [vmem:[#allocation3 + $0x48] sm:$0xf]
      %v3074 = vld [vmem:[#allocation3 + $0x4c] sm:$0x1]
      %v3075 = vld [vmem:[%s3 + $0xe0] sm:$0xf]
      %v3076 = vld [vmem:[%s3 + $0xe4] sm:$0xf]
      %v3077 = vld [vmem:[%s3 + $0xe8] sm:$0xf]
      %v3078 = vld [vmem:[%s3 + $0xec] sm:$0xf]
      %v3079 = vld [vmem:[%s3 + $0xf0] sm:$0xf]
      %v3080 = vld [vmem:[%s3 + $0xf4] sm:$0xf]
      %v3081 = vld [vmem:[%s3 + $0xf8] sm:$0xf]
      %v3082 = vld [vmem:[%s3 + $0xfc] sm:$0xf]
      %v3099 = vunpack.c.l.b16 %v3059
      %v3100 = vunpack.c.l.b16 %v3060
      %v3101 = vunpack.c.l.b16 %v3061
      %v3102 = vunpack.c.l.b16 %v3062
      %v3103 = vunpack.c.l.b16 %v3063
      %v3104 = vunpack.c.l.b16 %v3064
      %v3105 = vunpack.c.l.b16 %v3065
      %v3106 = vunpack.c.l.b16 %v3066
      %v3107 = vunpack.c.l.b16 %v3067
      %v3108 = vunpack.c.l.b16 %v3068
      %v3109 = vunpack.c.l.b16 %v3069
      %v3110 = vunpack.c.l.b16 %v3070
      %v3111 = vunpack.c.l.b16 %v3071
      %v3112 = vunpack.c.l.b16 %v3072
      %v3113 = vunpack.c.l.b16 %v3073
      %v3114 = vunpack.c.l.b16 %v3074
      %v3115 = vpack.c.b16 %v3100, %v3099
      %v3116 = vpack.c.b16 %v3102, %v3101
      %v3117 = vpack.c.b16 %v3104, %v3103
      %v3118 = vpack.c.b16 %v3106, %v3105
      %v3119 = vpack.c.b16 %v3108, %v3107
      %v3120 = vpack.c.b16 %v3110, %v3109
      %v3121 = vpack.c.b16 %v3112, %v3111
      %v3122 = vpack.c.b16 %v3114, %v3113
      %v3124 = vshrl.u32 %v3115, 16
      %v3126 = vshll.u32 %v3115, 16
      %v3128 = vrot.slane %v3126, 1
      %v3129 = vor.u32 %v3124, %v3128
      %v3131 = vshll.u32 %v3116, 16
      %v3133 = vrot.slane %v3131, 1
      %v3134 = vsel %vm914, %v3129, %v3133
      %v3135 = vshrl.u32 %v3116, 16
      %v3137 = vor.u32 %v3135, %v3133
      %v3139 = vshll.u32 %v3117, 16
      %v3141 = vrot.slane %v3139, 1
      %v3142 = vsel %vm914, %v3137, %v3141
      %v3143 = vshrl.u32 %v3117, 16
      %v3145 = vor.u32 %v3143, %v3141
      %v3147 = vshll.u32 %v3118, 16
      %v3149 = vrot.slane %v3147, 1
      %v3150 = vsel %vm914, %v3145, %v3149
      %v3151 = vshrl.u32 %v3118, 16
      %v3153 = vor.u32 %v3151, %v3149
      %v3155 = vshll.u32 %v3119, 16
      %v3157 = vrot.slane %v3155, 1
      %v3158 = vsel %vm914, %v3153, %v3157
      %v3159 = vshrl.u32 %v3119, 16
      %v3161 = vor.u32 %v3159, %v3157
      %v3163 = vshll.u32 %v3120, 16
      %v3165 = vrot.slane %v3163, 1
      %v3166 = vsel %vm914, %v3161, %v3165
      %v3167 = vshrl.u32 %v3120, 16
      %v3169 = vor.u32 %v3167, %v3165
      %v3171 = vshll.u32 %v3121, 16
      %v3173 = vrot.slane %v3171, 1
      %v3174 = vsel %vm914, %v3169, %v3173
      %v3175 = vshrl.u32 %v3121, 16
      %v3177 = vor.u32 %v3175, %v3173
      %v3179 = vshll.u32 %v3122, 16
      %v3181 = vrot.slane %v3179, 1
      %v3182 = vsel %vm914, %v3177, %v3181
      %v3183 = vshrl.u32 %v3122, 16
      %v3185 = vor.u32 %v3183, %v3181
      %v3194 = vunpack.c.l.b16 %v3075
      %v3195 = vunpack.c.l.b16 %v3076
      %v3196 = vunpack.c.l.b16 %v3077
      %v3197 = vunpack.c.l.b16 %v3078
      %v3198 = vunpack.c.l.b16 %v3079
      %v3199 = vunpack.c.l.b16 %v3080
      %v3200 = vunpack.c.l.b16 %v3081
      %v3201 = vunpack.c.l.b16 %v3082
      %v3202 = vpack.c.b16 %v3195, %v3194
      %v3203 = vpack.c.b16 %v3197, %v3196
      %v3204 = vpack.c.b16 %v3199, %v3198
      %v3205 = vpack.c.b16 %v3201, %v3200
      %v3211 = vsel %vm2037, %v3134, 0
      %v3214 = vsel %vm2037, %v3142, 0
      %v3217 = vsel %vm2037, %v3150, 0
      %v3220 = vsel %vm2037, %v3158, 0
      %v3223 = vsel %vm2037, %v3166, 0
      %v3226 = vsel %vm2037, %v3174, 0
      %v3229 = vsel %vm2037, %v3182, 0
      %v3232 = vsel %vm2037, %v3185, 0
      %3234 = vmatpush.bf16.msra.mxu0 0
      %3235 = vmatpush.bf16.msra.mxu0 0
      %3236 = vmatpush.bf16.msra.mxu0 0
      %3237 = vmatpush.bf16.msra.mxu0 0
      %3238 = vmatpush.bf16.msra.mxu0 %v3205
      %3239 = vmatpush.bf16.msra.mxu0 %v3204
      %3240 = vmatpush.bf16.msra.mxu0 %v3203
      %3241 = vmatpush.bf16.msra.mxu0 %v3202
      %3242 = vmatmul.bf16.gmra.mxu0 %v3211
      %v3243 = vpop.f32.mrf.mxu0
      %v3244 = vadd.f32 0.0, %v3243
      %v3245 = vpop.f32.mrf.mxu0
      %v3246 = vadd.f32 0.0, %v3245
      %3247 = vmatmul.bf16.gmra.mxu0 %v3214
      %v3248 = vpop.f32.mrf.mxu0
      %v3249 = vadd.f32 0.0, %v3248
      %v3250 = vpop.f32.mrf.mxu0
      %v3251 = vadd.f32 0.0, %v3250
      %3252 = vmatmul.bf16.gmra.mxu0 %v3217
      %v3253 = vpop.f32.mrf.mxu0
      %v3254 = vadd.f32 0.0, %v3253
      %v3255 = vpop.f32.mrf.mxu0
      %v3256 = vadd.f32 0.0, %v3255
      %3257 = vmatmul.bf16.gmra.mxu0 %v3220
      %v3258 = vpop.f32.mrf.mxu0
      %v3259 = vadd.f32 0.0, %v3258
      %v3260 = vpop.f32.mrf.mxu0
      %v3261 = vadd.f32 0.0, %v3260
      %3262 = vmatmul.bf16.gmra.mxu0 %v3223
      %v3263 = vpop.f32.mrf.mxu0
      %v3264 = vadd.f32 0.0, %v3263
      %v3265 = vpop.f32.mrf.mxu0
      %v3266 = vadd.f32 0.0, %v3265
      %3267 = vmatmul.bf16.gmra.mxu0 %v3226
      %v3268 = vpop.f32.mrf.mxu0
      %v3269 = vadd.f32 0.0, %v3268
      %v3270 = vpop.f32.mrf.mxu0
      %v3271 = vadd.f32 0.0, %v3270
      %3272 = vmatmul.bf16.gmra.mxu0 %v3229
      %v3273 = vpop.f32.mrf.mxu0
      %v3274 = vadd.f32 0.0, %v3273
      %v3275 = vpop.f32.mrf.mxu0
      %v3276 = vadd.f32 0.0, %v3275
      %3277 = vmatmul.bf16.gmra.mxu0 %v3232
      %v3278 = vpop.f32.mrf.mxu0
      %v3279 = vadd.f32 0.0, %v3278
      %v3280 = vpop.f32.mrf.mxu0
      %3281 = vdwg.mxu0
      %v3282 = vadd.f32 %v3044, %v3244
      %v3283 = vadd.f32 %v3045, %v3246
      %v3284 = vadd.f32 %v3046, %v3249
      %v3285 = vadd.f32 %v3047, %v3251
      %v3286 = vadd.f32 %v3048, %v3254
      %v3287 = vadd.f32 %v3049, %v3256
      %v3288 = vadd.f32 %v3050, %v3259
      %v3289 = vadd.f32 %v3051, %v3261
      %v3290 = vadd.f32 %v3052, %v3264
      %v3291 = vadd.f32 %v3053, %v3266
      %v3292 = vadd.f32 %v3054, %v3269
      %v3293 = vadd.f32 %v3055, %v3271
      %v3294 = vadd.f32 %v3056, %v3274
      %v3295 = vadd.f32 %v3057, %v3276
      %v3296 = vadd.f32 %v3058, %v3279
      %v3297 = vld [vmem:[#allocation3 + $0x10] sm:$0xe]
      %v3298 = vld [vmem:[%s3 + $0x100] sm:$0xf]
      %v3299 = vld [vmem:[%s3 + $0x104] sm:$0xf]
      %v3300 = vld [vmem:[%s3 + $0x108] sm:$0xf]
      %v3301 = vld [vmem:[%s3 + $0x10c] sm:$0xf]
      %v3302 = vld [vmem:[%s3 + $0x110] sm:$0xf]
      %v3303 = vld [vmem:[%s3 + $0x114] sm:$0xf]
      %v3304 = vld [vmem:[%s3 + $0x118] sm:$0xf]
      %v3305 = vld [vmem:[%s3 + $0x11c] sm:$0xf]
      %v3307 = vunpack.c.l.b16 %v3297
      %v3308 = vpack.c.b16 %v3100, %v3307
      %v3309 = vrot.slane %v3308, 1
      %v3310 = vrot.slane %v3116, 1
      %v3311 = vsel %vm2212, %v3309, %v3310
      %v3312 = vrot.slane %v3117, 1
      %v3313 = vsel %vm2212, %v3310, %v3312
      %v3314 = vrot.slane %v3118, 1
      %v3315 = vsel %vm2212, %v3312, %v3314
      %v3316 = vrot.slane %v3119, 1
      %v3317 = vsel %vm2212, %v3314, %v3316
      %v3318 = vrot.slane %v3120, 1
      %v3319 = vsel %vm2212, %v3316, %v3318
      %v3320 = vrot.slane %v3121, 1
      %v3321 = vsel %vm2212, %v3318, %v3320
      %v3322 = vrot.slane %v3122, 1
      %v3323 = vsel %vm2212, %v3320, %v3322
      %v3332 = vunpack.c.l.b16 %v3298
      %v3333 = vunpack.c.l.b16 %v3299
      %v3334 = vunpack.c.l.b16 %v3300
      %v3335 = vunpack.c.l.b16 %v3301
      %v3336 = vunpack.c.l.b16 %v3302
      %v3337 = vunpack.c.l.b16 %v3303
      %v3338 = vunpack.c.l.b16 %v3304
      %v3339 = vunpack.c.l.b16 %v3305
      %v3340 = vpack.c.b16 %v3333, %v3332
      %v3341 = vpack.c.b16 %v3335, %v3334
      %v3342 = vpack.c.b16 %v3337, %v3336
      %v3343 = vpack.c.b16 %v3339, %v3338
      %v3349 = vsel %vm2037, %v3311, 0
      %v3352 = vsel %vm2037, %v3313, 0
      %v3355 = vsel %vm2037, %v3315, 0
      %v3358 = vsel %vm2037, %v3317, 0
      %v3361 = vsel %vm2037, %v3319, 0
      %v3364 = vsel %vm2037, %v3321, 0
      %v3367 = vsel %vm2037, %v3323, 0
      %v3370 = vsel %vm2037, %v3322, 0
      %3372 = vmatpush.bf16.msra.mxu0 0
      %3373 = vmatpush.bf16.msra.mxu0 0
      %3374 = vmatpush.bf16.msra.mxu0 0
      %3375 = vmatpush.bf16.msra.mxu0 0
      %3376 = vmatpush.bf16.msra.mxu0 %v3343
      %3377 = vmatpush.bf16.msra.mxu0 %v3342
      %3378 = vmatpush.bf16.msra.mxu0 %v3341
      %3379 = vmatpush.bf16.msra.mxu0 %v3340
      %3380 = vmatmul.bf16.gmra.mxu0 %v3349
      %v3381 = vpop.f32.mrf.mxu0
      %v3382 = vadd.f32 0.0, %v3381
      %v3383 = vpop.f32.mrf.mxu0
      %v3384 = vadd.f32 0.0, %v3383
      %3385 = vmatmul.bf16.gmra.mxu0 %v3352
      %v3386 = vpop.f32.mrf.mxu0
      %v3387 = vadd.f32 0.0, %v3386
      %v3388 = vpop.f32.mrf.mxu0
      %v3389 = vadd.f32 0.0, %v3388
      %3390 = vmatmul.bf16.gmra.mxu0 %v3355
      %v3391 = vpop.f32.mrf.mxu0
      %v3392 = vadd.f32 0.0, %v3391
      %v3393 = vpop.f32.mrf.mxu0
      %v3394 = vadd.f32 0.0, %v3393
      %3395 = vmatmul.bf16.gmra.mxu0 %v3358
      %v3396 = vpop.f32.mrf.mxu0
      %v3397 = vadd.f32 0.0, %v3396
      %v3398 = vpop.f32.mrf.mxu0
      %v3399 = vadd.f32 0.0, %v3398
      %3400 = vmatmul.bf16.gmra.mxu0 %v3361
      %v3401 = vpop.f32.mrf.mxu0
      %v3402 = vadd.f32 0.0, %v3401
      %v3403 = vpop.f32.mrf.mxu0
      %v3404 = vadd.f32 0.0, %v3403
      %3405 = vmatmul.bf16.gmra.mxu0 %v3364
      %v3406 = vpop.f32.mrf.mxu0
      %v3407 = vadd.f32 0.0, %v3406
      %v3408 = vpop.f32.mrf.mxu0
      %v3409 = vadd.f32 0.0, %v3408
      %3410 = vmatmul.bf16.gmra.mxu0 %v3367
      %v3411 = vpop.f32.mrf.mxu0
      %v3412 = vadd.f32 0.0, %v3411
      %v3413 = vpop.f32.mrf.mxu0
      %v3414 = vadd.f32 0.0, %v3413
      %3415 = vmatmul.bf16.gmra.mxu0 %v3370
      %v3416 = vpop.f32.mrf.mxu0
      %v3417 = vadd.f32 0.0, %v3416
      %v3418 = vpop.f32.mrf.mxu0
      %3419 = vdwg.mxu0
      %v3420 = vadd.f32 %v3282, %v3382
      %v3421 = vadd.f32 %v3283, %v3384
      %v3422 = vadd.f32 %v3284, %v3387
      %v3423 = vadd.f32 %v3285, %v3389
      %v3424 = vadd.f32 %v3286, %v3392
      %v3425 = vadd.f32 %v3287, %v3394
      %v3426 = vadd.f32 %v3288, %v3397
      %v3427 = vadd.f32 %v3289, %v3399
      %v3428 = vadd.f32 %v3290, %v3402
      %v3429 = vadd.f32 %v3291, %v3404
      %v3430 = vadd.f32 %v3292, %v3407
      %v3431 = vadd.f32 %v3293, %v3409
      %v3432 = vadd.f32 %v3294, %v3412
      %v3433 = vadd.f32 %v3295, %v3414
      %v3434 = vadd.f32 %v3296, %v3417
      %v3435 = vmul.f32 %v3420, %v810
      %v3436 = vmul.f32 %v3421, %v811
      %v3437 = vmul.f32 %v3422, %v812
      %v3438 = vmul.f32 %v3423, %v813
      %v3439 = vmul.f32 %v3424, %v814
      %v3440 = vmul.f32 %v3425, %v815
      %v3441 = vmul.f32 %v3426, %v816
      %v3442 = vmul.f32 %v3427, %v817
      %v3443 = vmul.f32 %v3428, %v818
      %v3444 = vmul.f32 %v3429, %v819
      %v3445 = vmul.f32 %v3430, %v820
      %v3446 = vmul.f32 %v3431, %v821
      %v3447 = vmul.f32 %v3432, %v822
      %v3448 = vmul.f32 %v3433, %v823
      %v3449 = vmul.f32 %v3434, %v824
      %v3450 = vadd.f32 %v3435, %v3436
      %v3451 = vadd.f32 %v3450, %v3437
      %v3452 = vadd.f32 %v3451, %v3438
      %v3453 = vadd.f32 %v3452, %v3439
      %v3454 = vadd.f32 %v3453, %v3440
      %v3455 = vadd.f32 %v3454, %v3441
      %v3456 = vadd.f32 %v3455, %v3442
      %v3457 = vadd.f32 %v3456, %v3443
      %v3458 = vadd.f32 %v3457, %v3444
      %v3459 = vadd.f32 %v3458, %v3445
      %v3460 = vadd.f32 %v3459, %v3446
      %v3461 = vadd.f32 %v3460, %v3447
      %v3462 = vadd.f32 %v3461, %v3448
      %v3463 = vadd.f32 %v3462, %v3449
      %v3464 = vrot.slane %v3463, 4
      %v3465 = vadd.f32 %v3463, %v3464
      %v3466 = vrot.slane %v3465, 2
      %v3467 = vadd.f32 %v3465, %v3466
      %v3468 = vrot.slane %v3467, 1
      %v3469 = vadd.f32 %v3467, %v3468
      %v3470 = vadd.f32 %v3469, 0.0
      %v3471 = vmul.f32 %v3435, %v3420
      %v3472 = vmul.f32 %v3436, %v3421
      %v3473 = vmul.f32 %v3437, %v3422
      %v3474 = vmul.f32 %v3438, %v3423
      %v3475 = vmul.f32 %v3439, %v3424
      %v3476 = vmul.f32 %v3440, %v3425
      %v3477 = vmul.f32 %v3441, %v3426
      %v3478 = vmul.f32 %v3442, %v3427
      %v3479 = vmul.f32 %v3443, %v3428
      %v3480 = vmul.f32 %v3444, %v3429
      %v3481 = vmul.f32 %v3445, %v3430
      %v3482 = vmul.f32 %v3446, %v3431
      %v3483 = vmul.f32 %v3447, %v3432
      %v3484 = vmul.f32 %v3448, %v3433
      %v3485 = vmul.f32 %v3449, %v3434
      %v3486 = vadd.f32 %v3471, %v3472
      %v3487 = vadd.f32 %v3486, %v3473
      %v3488 = vadd.f32 %v3487, %v3474
      %v3489 = vadd.f32 %v3488, %v3475
      %v3490 = vadd.f32 %v3489, %v3476
      %v3491 = vadd.f32 %v3490, %v3477
      %v3492 = vadd.f32 %v3491, %v3478
      %v3493 = vadd.f32 %v3492, %v3479
      %v3494 = vadd.f32 %v3493, %v3480
      %v3495 = vadd.f32 %v3494, %v3481
      %v3496 = vadd.f32 %v3495, %v3482
      %v3497 = vadd.f32 %v3496, %v3483
      %v3498 = vadd.f32 %v3497, %v3484
      %v3499 = vadd.f32 %v3498, %v3485
      %v3500 = vrot.slane %v3499, 4
      %v3501 = vadd.f32 %v3499, %v3500
      %v3502 = vrot.slane %v3501, 2
      %v3503 = vadd.f32 %v3501, %v3502
      %v3504 = vrot.slane %v3503, 1
      %v3505 = vadd.f32 %v3503, %v3504
      %v3506 = vadd.f32 %v3505, 0.0
      %v3507 = vpack.c.bf16 %v3420, %v3420
      %v3508 = vpack.c.bf16 %v3421, %v3421
      %v3509 = vpack.c.bf16 %v3422, %v3422
      %v3510 = vpack.c.bf16 %v3423, %v3423
      %v3511 = vpack.c.bf16 %v3424, %v3424
      %v3512 = vpack.c.bf16 %v3425, %v3425
      %v3513 = vpack.c.bf16 %v3426, %v3426
      %v3514 = vpack.c.bf16 %v3427, %v3427
      %v3515 = vpack.c.bf16 %v3428, %v3428
      %v3516 = vpack.c.bf16 %v3429, %v3429
      %v3517 = vpack.c.bf16 %v3430, %v3430
      %v3518 = vpack.c.bf16 %v3431, %v3431
      %v3519 = vpack.c.bf16 %v3432, %v3432
      %v3520 = vpack.c.bf16 %v3433, %v3433
      %v3521 = vpack.c.bf16 %v3434, %v3434
      %v3523 = vshrl.u32 %v3507, 16
      %v3525 = vrot.slane %v3523, 7
      %v3526 = vshll.u32 %v3507, 16
      %v3528 = vor.u32 %v3525, %v3526
      %v3529 = vrot.slane %v3525, 4
      %v3531 = vshrl.u32 %v3508, 16
      %v3533 = vrot.slane %v3531, 7
      %v3534 = vshll.u32 %v3508, 16
      %v3536 = vor.u32 %v3533, %v3534
      %v3537 = vsel %vm1707, %v3529, %v3536
      %v3538 = vrot.slane %v3533, 4
      %v3540 = vshrl.u32 %v3509, 16
      %v3542 = vrot.slane %v3540, 7
      %v3543 = vshll.u32 %v3509, 16
      %v3545 = vor.u32 %v3542, %v3543
      %v3546 = vsel %vm1707, %v3538, %v3545
      %v3547 = vrot.slane %v3542, 4
      %v3549 = vshrl.u32 %v3510, 16
      %v3551 = vrot.slane %v3549, 7
      %v3552 = vshll.u32 %v3510, 16
      %v3554 = vor.u32 %v3551, %v3552
      %v3555 = vsel %vm1707, %v3547, %v3554
      %v3556 = vrot.slane %v3551, 4
      %v3558 = vshrl.u32 %v3511, 16
      %v3560 = vrot.slane %v3558, 7
      %v3561 = vshll.u32 %v3511, 16
      %v3563 = vor.u32 %v3560, %v3561
      %v3564 = vsel %vm1707, %v3556, %v3563
      %v3565 = vrot.slane %v3560, 4
      %v3567 = vshrl.u32 %v3512, 16
      %v3569 = vrot.slane %v3567, 7
      %v3570 = vshll.u32 %v3512, 16
      %v3572 = vor.u32 %v3569, %v3570
      %v3573 = vsel %vm1707, %v3565, %v3572
      %v3574 = vrot.slane %v3569, 4
      %v3576 = vshrl.u32 %v3513, 16
      %v3578 = vrot.slane %v3576, 7
      %v3579 = vshll.u32 %v3513, 16
      %v3581 = vor.u32 %v3578, %v3579
      %v3582 = vsel %vm1707, %v3574, %v3581
      %v3583 = vrot.slane %v3578, 4
      %v3585 = vshrl.u32 %v3514, 16
      %v3587 = vrot.slane %v3585, 7
      %v3588 = vshll.u32 %v3514, 16
      %v3590 = vor.u32 %v3587, %v3588
      %v3591 = vsel %vm1707, %v3583, %v3590
      %v3592 = vrot.slane %v3587, 4
      %v3594 = vshrl.u32 %v3515, 16
      %v3596 = vrot.slane %v3594, 7
      %v3597 = vshll.u32 %v3515, 16
      %v3599 = vor.u32 %v3596, %v3597
      %v3600 = vsel %vm1707, %v3592, %v3599
      %v3601 = vrot.slane %v3596, 4
      %v3603 = vshrl.u32 %v3516, 16
      %v3605 = vrot.slane %v3603, 7
      %v3606 = vshll.u32 %v3516, 16
      %v3608 = vor.u32 %v3605, %v3606
      %v3609 = vsel %vm1707, %v3601, %v3608
      %v3610 = vrot.slane %v3605, 4
      %v3612 = vshrl.u32 %v3517, 16
      %v3614 = vrot.slane %v3612, 7
      %v3615 = vshll.u32 %v3517, 16
      %v3617 = vor.u32 %v3614, %v3615
      %v3618 = vsel %vm1707, %v3610, %v3617
      %v3619 = vrot.slane %v3614, 4
      %v3621 = vshrl.u32 %v3518, 16
      %v3623 = vrot.slane %v3621, 7
      %v3624 = vshll.u32 %v3518, 16
      %v3626 = vor.u32 %v3623, %v3624
      %v3627 = vsel %vm1707, %v3619, %v3626
      %v3628 = vrot.slane %v3623, 4
      %v3630 = vshrl.u32 %v3519, 16
      %v3632 = vrot.slane %v3630, 7
      %v3633 = vshll.u32 %v3519, 16
      %v3635 = vor.u32 %v3632, %v3633
      %v3636 = vsel %vm1707, %v3628, %v3635
      %v3637 = vrot.slane %v3632, 4
      %v3639 = vshrl.u32 %v3520, 16
      %v3641 = vrot.slane %v3639, 7
      %v3642 = vshll.u32 %v3520, 16
      %v3644 = vor.u32 %v3641, %v3642
      %v3645 = vsel %vm1707, %v3637, %v3644
      %v3646 = vrot.slane %v3641, 4
      %v3648 = vshrl.u32 %v3521, 16
      %v3650 = vrot.slane %v3648, 7
      %v3651 = vshll.u32 %v3521, 16
      %v3653 = vor.u32 %v3650, %v3651
      %v3654 = vsel %vm1707, %v3646, %v3653
      %v3655 = vrot.slane %v3650, 4
      %v3672 = vld [vmem:[#allocation4 + $0x8] sm:$0xf]
      %v3673 = vsel %vm274, %v3528, %v3672
      %3674 = vst [vmem:[#allocation4 + $0x8] sm:$0xf] %v3673
      %3675 = vst [vmem:[#allocation4 + $0xc] sm:$0xf] %v3537
      %3676 = vst [vmem:[#allocation4 + $0x10] sm:$0xf] %v3546
      %3677 = vst [vmem:[#allocation4 + $0x14] sm:$0xf] %v3555
      %3678 = vst [vmem:[#allocation4 + $0x18] sm:$0xf] %v3564
      %3679 = vst [vmem:[#allocation4 + $0x1c] sm:$0xf] %v3573
      %3680 = vst [vmem:[#allocation4 + $0x20] sm:$0xf] %v3582
      %3681 = vst [vmem:[#allocation4 + $0x24] sm:$0xf] %v3591
      %3682 = vst [vmem:[#allocation4 + $0x28] sm:$0xf] %v3600
      %3683 = vst [vmem:[#allocation4 + $0x2c] sm:$0xf] %v3609
      %3684 = vst [vmem:[#allocation4 + $0x30] sm:$0xf] %v3618
      %3685 = vst [vmem:[#allocation4 + $0x34] sm:$0xf] %v3627
      %3686 = vst [vmem:[#allocation4 + $0x38] sm:$0xf] %v3636
      %3687 = vst [vmem:[#allocation4 + $0x3c] sm:$0xf] %v3645
      %3688 = vst [vmem:[#allocation4 + $0x40] sm:$0xf] %v3654
      %v3689 = vld [vmem:[#allocation4 + $0x44] sm:$0x1]
      %v3690 = vsel %vm269, %v3655, %v3689
      %3691 = vst [vmem:[#allocation4 + $0x44] sm:$0x1] %v3690
      %v3692 = vmul.f32 %v3470, 0.015625
      %v3693 = vmul.f32 %v3506, 0.015625
      %v3694 = vmul.f32 %v3692, %v3692
      %v3695 = vsub.f32 %v3693, %v3694
      %v3696 = vmax.f32 %v3695, 0.0
      %v3697 = vadd.f32 %v3696, 1e-05
      %v3698 = vrsqrt.pop %v3697
      %v3699 = vmul.f32 %v3698, %v3697
      %v3700 = vmul.f32 %v3699, %v3698
      %v3701 = vmul.f32 0.5, %v3700
      %v3702 = vsub.f32 1.5, %v3701
      %v3703 = vmul.f32 %v3698, %v3702
      %vm3704 = vweird.f32 %v3697
      %vm3705 = vweird.f32 %v3698
      %vm3706 = vmor %vm3704, %vm3705
      %v3707 = vsel %vm3706, %v3698, %v3703
      %v3708 = vld [vmem:[#allocation4 + $0x8] sm:$0xf]
      %v3709 = vld [vmem:[#allocation4 + $0xc] sm:$0xf]
      %v3710 = vld [vmem:[#allocation4 + $0x10] sm:$0xf]
      %v3711 = vld [vmem:[#allocation4 + $0x14] sm:$0xf]
      %v3712 = vld [vmem:[#allocation4 + $0x18] sm:$0xf]
      %v3713 = vld [vmem:[#allocation4 + $0x1c] sm:$0xf]
      %v3714 = vld [vmem:[#allocation4 + $0x20] sm:$0xf]
      %v3715 = vld [vmem:[#allocation4 + $0x24] sm:$0xf]
      %v3716 = vld [vmem:[#allocation4 + $0x28] sm:$0xf]
      %v3717 = vld [vmem:[#allocation4 + $0x2c] sm:$0xf]
      %v3718 = vld [vmem:[#allocation4 + $0x30] sm:$0xf]
      %v3719 = vld [vmem:[#allocation4 + $0x34] sm:$0xf]
      %v3720 = vld [vmem:[#allocation4 + $0x38] sm:$0xf]
      %v3721 = vld [vmem:[#allocation4 + $0x3c] sm:$0xf]
      %v3722 = vld [vmem:[#allocation4 + $0x40] sm:$0xf]
      %v3723 = vld [vmem:[#allocation4 + $0x44] sm:$0x1]
      %v3724 = vunpack.c.l.bf16 %v3708
      %v3725 = vunpack.c.l.bf16 %v3709
      %v3726 = vunpack.c.l.bf16 %v3710
      %v3727 = vunpack.c.l.bf16 %v3711
      %v3728 = vunpack.c.l.bf16 %v3712
      %v3729 = vunpack.c.l.bf16 %v3713
      %v3730 = vunpack.c.l.bf16 %v3714
      %v3731 = vunpack.c.l.bf16 %v3715
      %v3732 = vunpack.c.l.bf16 %v3716
      %v3733 = vunpack.c.l.bf16 %v3717
      %v3734 = vunpack.c.l.bf16 %v3718
      %v3735 = vunpack.c.l.bf16 %v3719
      %v3736 = vunpack.c.l.bf16 %v3720
      %v3737 = vunpack.c.l.bf16 %v3721
      %v3738 = vunpack.c.l.bf16 %v3722
      %v3739 = vunpack.c.l.bf16 %v3723
      %v3740 = vsub.f32 %v3724, %v3692
      %v3741 = vsub.f32 %v3725, %v3692
      %v3742 = vsub.f32 %v3726, %v3692
      %v3743 = vsub.f32 %v3727, %v3692
      %v3744 = vsub.f32 %v3728, %v3692
      %v3745 = vsub.f32 %v3729, %v3692
      %v3746 = vsub.f32 %v3730, %v3692
      %v3747 = vsub.f32 %v3731, %v3692
      %v3748 = vsub.f32 %v3732, %v3692
      %v3749 = vsub.f32 %v3733, %v3692
      %v3750 = vsub.f32 %v3734, %v3692
      %v3751 = vsub.f32 %v3735, %v3692
      %v3752 = vsub.f32 %v3736, %v3692
      %v3753 = vsub.f32 %v3737, %v3692
      %v3754 = vsub.f32 %v3738, %v3692
      %v3755 = vsub.f32 %v3739, %v3692
      %v3756 = vmul.f32 %v3740, %v3707
      %v3757 = vmul.f32 %v3741, %v3707
      %v3758 = vmul.f32 %v3742, %v3707
      %v3759 = vmul.f32 %v3743, %v3707
      %v3760 = vmul.f32 %v3744, %v3707
      %v3761 = vmul.f32 %v3745, %v3707
      %v3762 = vmul.f32 %v3746, %v3707
      %v3763 = vmul.f32 %v3747, %v3707
      %v3764 = vmul.f32 %v3748, %v3707
      %v3765 = vmul.f32 %v3749, %v3707
      %v3766 = vmul.f32 %v3750, %v3707
      %v3767 = vmul.f32 %v3751, %v3707
      %v3768 = vmul.f32 %v3752, %v3707
      %v3769 = vmul.f32 %v3753, %v3707
      %v3770 = vmul.f32 %v3754, %v3707
      %v3771 = vmul.f32 %v3755, %v3707
      %vm3772 = vcmp.gt.f32.partialorder %v3756, 0.0
      %vm3773 = vcmp.gt.f32.partialorder %v3757, 0.0
      %vm3774 = vcmp.gt.f32.partialorder %v3758, 0.0
      %vm3775 = vcmp.gt.f32.partialorder %v3759, 0.0
      %vm3776 = vcmp.gt.f32.partialorder %v3760, 0.0
      %vm3777 = vcmp.gt.f32.partialorder %v3761, 0.0
      %vm3778 = vcmp.gt.f32.partialorder %v3762, 0.0
      %vm3779 = vcmp.gt.f32.partialorder %v3763, 0.0
      %vm3780 = vcmp.gt.f32.partialorder %v3764, 0.0
      %vm3781 = vcmp.gt.f32.partialorder %v3765, 0.0
      %vm3782 = vcmp.gt.f32.partialorder %v3766, 0.0
      %vm3783 = vcmp.gt.f32.partialorder %v3767, 0.0
      %vm3784 = vcmp.gt.f32.partialorder %v3768, 0.0
      %vm3785 = vcmp.gt.f32.partialorder %v3769, 0.0
      %vm3786 = vcmp.gt.f32.partialorder %v3770, 0.0
      %vm3787 = vcmp.gt.f32.partialorder %v3771, 0.0
      %v3788 = vmul.f32 %v3756, 0.2
      %v3789 = vmul.f32 %v3757, 0.2
      %v3790 = vmul.f32 %v3758, 0.2
      %v3791 = vmul.f32 %v3759, 0.2
      %v3792 = vmul.f32 %v3760, 0.2
      %v3793 = vmul.f32 %v3761, 0.2
      %v3794 = vmul.f32 %v3762, 0.2
      %v3795 = vmul.f32 %v3763, 0.2
      %v3796 = vmul.f32 %v3764, 0.2
      %v3797 = vmul.f32 %v3765, 0.2
      %v3798 = vmul.f32 %v3766, 0.2
      %v3799 = vmul.f32 %v3767, 0.2
      %v3800 = vmul.f32 %v3768, 0.2
      %v3801 = vmul.f32 %v3769, 0.2
      %v3802 = vmul.f32 %v3770, 0.2
      %v3803 = vmul.f32 %v3771, 0.2
      %v3804 = vsel %vm3772, %v3756, %v3788
      %v3805 = vsel %vm3773, %v3757, %v3789
      %v3806 = vsel %vm3774, %v3758, %v3790
      %v3807 = vsel %vm3775, %v3759, %v3791
      %v3808 = vsel %vm3776, %v3760, %v3792
      %v3809 = vsel %vm3777, %v3761, %v3793
      %v3810 = vsel %vm3778, %v3762, %v3794
      %v3811 = vsel %vm3779, %v3763, %v3795
      %v3812 = vsel %vm3780, %v3764, %v3796
      %v3813 = vsel %vm3781, %v3765, %v3797
      %v3814 = vsel %vm3782, %v3766, %v3798
      %v3815 = vsel %vm3783, %v3767, %v3799
      %v3816 = vsel %vm3784, %v3768, %v3800
      %v3817 = vsel %vm3785, %v3769, %v3801
      %v3818 = vsel %vm3786, %v3770, %v3802
      %v3819 = vsel %vm3787, %v3771, %v3803
      %vm3835 = vcmask 1040384
      %v3836 = vrot.slane %v810, 7
      %v3837 = vrot.slane %v811, 7
      %v3838 = vsel %vm3835, %v3836, %v3837
      %v3839 = vrot.slane %v812, 7
      %v3840 = vsel %vm3835, %v3837, %v3839
      %v3841 = vrot.slane %v813, 7
      %v3842 = vsel %vm3835, %v3839, %v3841
      %v3843 = vrot.slane %v814, 7
      %v3844 = vsel %vm3835, %v3841, %v3843
      %v3845 = vrot.slane %v815, 7
      %v3846 = vsel %vm3835, %v3843, %v3845
      %v3847 = vrot.slane %v816, 7
      %v3848 = vsel %vm3835, %v3845, %v3847
      %v3849 = vrot.slane %v817, 7
      %v3850 = vsel %vm3835, %v3847, %v3849
      %v3851 = vrot.slane %v818, 7
      %v3852 = vsel %vm3835, %v3849, %v3851
      %v3853 = vrot.slane %v819, 7
      %v3854 = vsel %vm3835, %v3851, %v3853
      %v3855 = vrot.slane %v820, 7
      %v3856 = vsel %vm3835, %v3853, %v3855
      %v3857 = vrot.slane %v821, 7
      %v3858 = vsel %vm3835, %v3855, %v3857
      %v3859 = vrot.slane %v822, 7
      %v3860 = vsel %vm3835, %v3857, %v3859
      %v3861 = vrot.slane %v823, 7
      %v3862 = vsel %vm3835, %v3859, %v3861
      %v3863 = vrot.slane %v824, 7
      %v3864 = vsel %vm3835, %v3861, %v3863
      %v3881 = vmul.f32 %v3804, %v3836
      %v3882 = vmul.f32 %v3805, %v3838
      %v3883 = vmul.f32 %v3806, %v3840
      %v3884 = vmul.f32 %v3807, %v3842
      %v3885 = vmul.f32 %v3808, %v3844
      %v3886 = vmul.f32 %v3809, %v3846
      %v3887 = vmul.f32 %v3810, %v3848
      %v3888 = vmul.f32 %v3811, %v3850
      %v3889 = vmul.f32 %v3812, %v3852
      %v3890 = vmul.f32 %v3813, %v3854
      %v3891 = vmul.f32 %v3814, %v3856
      %v3892 = vmul.f32 %v3815, %v3858
      %v3893 = vmul.f32 %v3816, %v3860
      %v3894 = vmul.f32 %v3817, %v3862
      %v3895 = vmul.f32 %v3818, %v3864
      %v3896 = vmul.f32 %v3819, %v3863
      %v3897 = vpack.c.bf16 %v3881, %v3881
      %v3898 = vpack.c.bf16 %v3882, %v3882
      %v3899 = vpack.c.bf16 %v3883, %v3883
      %v3900 = vpack.c.bf16 %v3884, %v3884
      %v3901 = vpack.c.bf16 %v3885, %v3885
      %v3902 = vpack.c.bf16 %v3886, %v3886
      %v3903 = vpack.c.bf16 %v3887, %v3887
      %v3904 = vpack.c.bf16 %v3888, %v3888
      %v3905 = vpack.c.bf16 %v3889, %v3889
      %v3906 = vpack.c.bf16 %v3890, %v3890
      %v3907 = vpack.c.bf16 %v3891, %v3891
      %v3908 = vpack.c.bf16 %v3892, %v3892
      %v3909 = vpack.c.bf16 %v3893, %v3893
      %v3910 = vpack.c.bf16 %v3894, %v3894
      %v3911 = vpack.c.bf16 %v3895, %v3895
      %v3912 = vpack.c.bf16 %v3896, %v3896
      %v3913 = vsel %vm274, %v3897, %v3708
      %3914 = vst [vmem:[#allocation4 + $0x8] sm:$0xf] %v3913
      %3915 = vst [vmem:[#allocation4 + $0xc] sm:$0xf] %v3898
      %3916 = vst [vmem:[#allocation4 + $0x10] sm:$0xf] %v3899
      %3917 = vst [vmem:[#allocation4 + $0x14] sm:$0xf] %v3900
      %3918 = vst [vmem:[#allocation4 + $0x18] sm:$0xf] %v3901
      %3919 = vst [vmem:[#allocation4 + $0x1c] sm:$0xf] %v3902
      %3920 = vst [vmem:[#allocation4 + $0x20] sm:$0xf] %v3903
      %3921 = vst [vmem:[#allocation4 + $0x24] sm:$0xf] %v3904
      %3922 = vst [vmem:[#allocation4 + $0x28] sm:$0xf] %v3905
      %3923 = vst [vmem:[#allocation4 + $0x2c] sm:$0xf] %v3906
      %3924 = vst [vmem:[#allocation4 + $0x30] sm:$0xf] %v3907
      %3925 = vst [vmem:[#allocation4 + $0x34] sm:$0xf] %v3908
      %3926 = vst [vmem:[#allocation4 + $0x38] sm:$0xf] %v3909
      %3927 = vst [vmem:[#allocation4 + $0x3c] sm:$0xf] %v3910
      %3928 = vst [vmem:[#allocation4 + $0x40] sm:$0xf] %v3911
      %v3929 = vld [vmem:[#allocation4 + $0x44] sm:$0x1]
      %v3930 = vsel %vm269, %v3912, %v3929
      %3931 = vst [vmem:[#allocation4 + $0x44] sm:$0x1] %v3930
      %v3932 = vld [vmem:[#allocation4] sm:$0xf]
      %v3933 = vld [vmem:[#allocation4 + $0x4] sm:$0xf]
      %v3934 = vld [vmem:[#allocation4 + $0x8] sm:$0xf]
      %v3935 = vld [vmem:[#allocation4 + $0xc] sm:$0xf]
      %v3936 = vld [vmem:[#allocation4 + $0x10] sm:$0xf]
      %v3937 = vld [vmem:[#allocation4 + $0x14] sm:$0xf]
      %v3938 = vld [vmem:[#allocation4 + $0x18] sm:$0xf]
      %v3939 = vld [vmem:[#allocation4 + $0x1c] sm:$0xf]
      %v3940 = vld [vmem:[#allocation4 + $0x20] sm:$0xf]
      %v3941 = vld [vmem:[#allocation4 + $0x24] sm:$0xf]
      %v3942 = vld [vmem:[#allocation4 + $0x28] sm:$0xf]
      %v3943 = vld [vmem:[#allocation4 + $0x2c] sm:$0xf]
      %v3944 = vld [vmem:[#allocation4 + $0x30] sm:$0xf]
      %v3945 = vld [vmem:[#allocation4 + $0x34] sm:$0xf]
      %v3946 = vld [vmem:[#allocation4 + $0x38] sm:$0xf]
      %v3947 = vld [vmem:[%s4] sm:$0xf]
      %v3948 = vld [vmem:[%s4 + $0x4] sm:$0xf]
      %v3949 = vld [vmem:[%s4 + $0x8] sm:$0xf]
      %v3950 = vld [vmem:[%s4 + $0xc] sm:$0xf]
      %v3951 = vld [vmem:[%s4 + $0x10] sm:$0xf]
      %v3952 = vld [vmem:[%s4 + $0x14] sm:$0xf]
      %v3953 = vld [vmem:[%s4 + $0x18] sm:$0xf]
      %v3954 = vld [vmem:[%s4 + $0x1c] sm:$0xf]
      %v3955 = vld [vmem:[%s4 + $0x20] sm:$0xf]
      %v3956 = vld [vmem:[%s4 + $0x24] sm:$0xf]
      %v3957 = vld [vmem:[%s4 + $0x28] sm:$0xf]
      %v3958 = vld [vmem:[%s4 + $0x2c] sm:$0xf]
      %v3959 = vld [vmem:[%s4 + $0x30] sm:$0xf]
      %v3960 = vld [vmem:[%s4 + $0x34] sm:$0xf]
      %v3961 = vld [vmem:[%s4 + $0x38] sm:$0xf]
      %v3962 = vld [vmem:[%s4 + $0x3c] sm:$0xf]
      %v3963 = vld [vmem:[#allocation4 + $0x3c] sm:$0x1]
      %v3964 = vld [vmem:[%s4 + $0x40] sm:$0xf]
      %v3965 = vld [vmem:[%s4 + $0x44] sm:$0xf]
      %v3966 = vld [vmem:[%s4 + $0x48] sm:$0xf]
      %v3967 = vld [vmem:[%s4 + $0x4c] sm:$0xf]
      %v3968 = vld [vmem:[%s4 + $0x50] sm:$0xf]
      %v3969 = vld [vmem:[%s4 + $0x54] sm:$0xf]
      %v3970 = vld [vmem:[%s4 + $0x58] sm:$0xf]
      %v3971 = vld [vmem:[%s4 + $0x5c] sm:$0xf]
      %v3972 = vld [vmem:[%s4 + $0x60] sm:$0xf]
      %v3973 = vld [vmem:[%s4 + $0x64] sm:$0xf]
      %v3974 = vld [vmem:[%s4 + $0x68] sm:$0xf]
      %v3975 = vld [vmem:[%s4 + $0x6c] sm:$0xf]
      %v3976 = vld [vmem:[%s4 + $0x70] sm:$0xf]
      %v3977 = vld [vmem:[%s4 + $0x74] sm:$0xf]
      %v3978 = vld [vmem:[%s4 + $0x78] sm:$0xf]
      %v3979 = vld [vmem:[%s4 + $0x7c] sm:$0xf]
      %v3996 = vunpack.c.l.b16 %v3932
      %v3997 = vunpack.c.l.b16 %v3933
      %v3998 = vunpack.c.l.b16 %v3934
      %v3999 = vunpack.c.l.b16 %v3935
      %v4000 = vunpack.c.l.b16 %v3936
      %v4001 = vunpack.c.l.b16 %v3937
      %v4002 = vunpack.c.l.b16 %v3938
      %v4003 = vunpack.c.l.b16 %v3939
      %v4004 = vunpack.c.l.b16 %v3940
      %v4005 = vunpack.c.l.b16 %v3941
      %v4006 = vunpack.c.l.b16 %v3942
      %v4007 = vunpack.c.l.b16 %v3943
      %v4008 = vunpack.c.l.b16 %v3944
      %v4009 = vunpack.c.l.b16 %v3945
      %v4010 = vunpack.c.l.b16 %v3946
      %v4011 = vunpack.c.l.b16 %v3963
      %v4012 = vpack.c.b16 %v3997, %v3996
      %v4013 = vpack.c.b16 %v3999, %v3998
      %v4014 = vpack.c.b16 %v4001, %v4000
      %v4015 = vpack.c.b16 %v4003, %v4002
      %v4016 = vpack.c.b16 %v4005, %v4004
      %v4017 = vpack.c.b16 %v4007, %v4006
      %v4018 = vpack.c.b16 %v4009, %v4008
      %v4019 = vpack.c.b16 %v4011, %v4010
      %v4021 = vshrl.u32 %v4012, 16
      %v4023 = vshll.u32 %v4012, 16
      %v4025 = vrot.slane %v4023, 1
      %v4026 = vor.u32 %v4021, %v4025
      %v4028 = vshll.u32 %v4013, 16
      %v4030 = vrot.slane %v4028, 1
      %v4031 = vsel %vm914, %v4026, %v4030
      %v4032 = vshrl.u32 %v4013, 16
      %v4034 = vor.u32 %v4032, %v4030
      %v4036 = vshll.u32 %v4014, 16
      %v4038 = vrot.slane %v4036, 1
      %v4039 = vsel %vm914, %v4034, %v4038
      %v4040 = vshrl.u32 %v4014, 16
      %v4042 = vor.u32 %v4040, %v4038
      %v4044 = vshll.u32 %v4015, 16
      %v4046 = vrot.slane %v4044, 1
      %v4047 = vsel %vm914, %v4042, %v4046
      %v4048 = vshrl.u32 %v4015, 16
      %v4050 = vor.u32 %v4048, %v4046
      %v4052 = vshll.u32 %v4016, 16
      %v4054 = vrot.slane %v4052, 1
      %v4055 = vsel %vm914, %v4050, %v4054
      %v4056 = vshrl.u32 %v4016, 16
      %v4058 = vor.u32 %v4056, %v4054
      %v4060 = vshll.u32 %v4017, 16
      %v4062 = vrot.slane %v4060, 1
      %v4063 = vsel %vm914, %v4058, %v4062
      %v4064 = vshrl.u32 %v4017, 16
      %v4066 = vor.u32 %v4064, %v4062
      %v4068 = vshll.u32 %v4018, 16
      %v4070 = vrot.slane %v4068, 1
      %v4071 = vsel %vm914, %v4066, %v4070
      %v4072 = vshrl.u32 %v4018, 16
      %v4074 = vor.u32 %v4072, %v4070
      %v4076 = vshll.u32 %v4019, 16
      %v4078 = vrot.slane %v4076, 1
      %v4079 = vsel %vm914, %v4074, %v4078
      %v4080 = vshrl.u32 %v4019, 16
      %v4082 = vor.u32 %v4080, %v4078
      %v4107 = vunpack.c.l.b16 %v3964
      %v4108 = vunpack.c.l.b16 %v3965
      %v4109 = vunpack.c.l.b16 %v3966
      %v4110 = vunpack.c.l.b16 %v3967
      %v4111 = vunpack.c.l.b16 %v3968
      %v4112 = vunpack.c.l.b16 %v3969
      %v4113 = vunpack.c.l.b16 %v3970
      %v4114 = vunpack.c.l.b16 %v3971
      %v4115 = vunpack.c.l.b16 %v3972
      %v4116 = vunpack.c.l.b16 %v3973
      %v4117 = vunpack.c.l.b16 %v3974
      %v4118 = vunpack.c.l.b16 %v3975
      %v4119 = vunpack.c.l.b16 %v3976
      %v4120 = vunpack.c.l.b16 %v3977
      %v4121 = vunpack.c.l.b16 %v3978
      %v4122 = vunpack.c.l.b16 %v3979
      %v4123 = vpack.c.b16 %v4108, %v4107
      %v4124 = vpack.c.b16 %v4110, %v4109
      %v4125 = vpack.c.b16 %v4112, %v4111
      %v4126 = vpack.c.b16 %v4114, %v4113
      %v4127 = vpack.c.b16 %v4116, %v4115
      %v4128 = vpack.c.b16 %v4118, %v4117
      %v4129 = vpack.c.b16 %v4120, %v4119
      %v4130 = vpack.c.b16 %v4122, %v4121
      %4139 = vmatpush.bf16.msra.mxu0 %v4130
      %4140 = vmatpush.bf16.msra.mxu0 %v4129
      %4141 = vmatpush.bf16.msra.mxu0 %v4128
      %4142 = vmatpush.bf16.msra.mxu0 %v4127
      %4143 = vmatpush.bf16.msra.mxu0 %v4126
      %4144 = vmatpush.bf16.msra.mxu0 %v4125
      %4145 = vmatpush.bf16.msra.mxu0 %v4124
      %4146 = vmatpush.bf16.msra.mxu0 %v4123
      %4147 = vmatmul.bf16.gmra.mxu0 %v4031
      %v4148 = vpop.f32.mrf.mxu0
      %v4149 = vadd.f32 0.0, %v4148
      %v4150 = vpop.f32.mrf.mxu0
      %v4151 = vadd.f32 0.0, %v4150
      %4152 = vmatmul.bf16.gmra.mxu0 %v4039
      %v4153 = vpop.f32.mrf.mxu0
      %v4154 = vadd.f32 0.0, %v4153
      %v4155 = vpop.f32.mrf.mxu0
      %v4156 = vadd.f32 0.0, %v4155
      %4157 = vmatmul.bf16.gmra.mxu0 %v4047
      %v4158 = vpop.f32.mrf.mxu0
      %v4159 = vadd.f32 0.0, %v4158
      %v4160 = vpop.f32.mrf.mxu0
      %v4161 = vadd.f32 0.0, %v4160
      %4162 = vmatmul.bf16.gmra.mxu0 %v4055
      %v4163 = vpop.f32.mrf.mxu0
      %v4164 = vadd.f32 0.0, %v4163
      %v4165 = vpop.f32.mrf.mxu0
      %v4166 = vadd.f32 0.0, %v4165
      %4167 = vmatmul.bf16.gmra.mxu0 %v4063
      %v4168 = vpop.f32.mrf.mxu0
      %v4169 = vadd.f32 0.0, %v4168
      %v4170 = vpop.f32.mrf.mxu0
      %v4171 = vadd.f32 0.0, %v4170
      %4172 = vmatmul.bf16.gmra.mxu0 %v4071
      %v4173 = vpop.f32.mrf.mxu0
      %v4174 = vadd.f32 0.0, %v4173
      %v4175 = vpop.f32.mrf.mxu0
      %v4176 = vadd.f32 0.0, %v4175
      %4177 = vmatmul.bf16.gmra.mxu0 %v4079
      %v4178 = vpop.f32.mrf.mxu0
      %v4179 = vadd.f32 0.0, %v4178
      %v4180 = vpop.f32.mrf.mxu0
      %v4181 = vadd.f32 0.0, %v4180
      %4182 = vmatmul.bf16.gmra.mxu0 %v4082
      %v4183 = vpop.f32.mrf.mxu0
      %v4184 = vadd.f32 0.0, %v4183
      %v4185 = vpop.f32.mrf.mxu0
      %4186 = vdwg.mxu0
      %v4187 = vpack.c.b16 %v4010, %v4010
      %v4212 = vunpack.c.l.b16 %v3947
      %v4213 = vunpack.c.l.b16 %v3948
      %v4214 = vunpack.c.l.b16 %v3949
      %v4215 = vunpack.c.l.b16 %v3950
      %v4216 = vunpack.c.l.b16 %v3951
      %v4217 = vunpack.c.l.b16 %v3952
      %v4218 = vunpack.c.l.b16 %v3953
      %v4219 = vunpack.c.l.b16 %v3954
      %v4220 = vunpack.c.l.b16 %v3955
      %v4221 = vunpack.c.l.b16 %v3956
      %v4222 = vunpack.c.l.b16 %v3957
      %v4223 = vunpack.c.l.b16 %v3958
      %v4224 = vunpack.c.l.b16 %v3959
      %v4225 = vunpack.c.l.b16 %v3960
      %v4226 = vunpack.c.l.b16 %v3961
      %v4227 = vunpack.c.l.b16 %v3962
      %v4228 = vpack.c.b16 %v4213, %v4212
      %v4229 = vpack.c.b16 %v4215, %v4214
      %v4230 = vpack.c.b16 %v4217, %v4216
      %v4231 = vpack.c.b16 %v4219, %v4218
      %v4232 = vpack.c.b16 %v4221, %v4220
      %v4233 = vpack.c.b16 %v4223, %v4222
      %v4234 = vpack.c.b16 %v4225, %v4224
      %v4235 = vpack.c.b16 %v4227, %v4226
      %4244 = vmatpush.bf16.msra.mxu0 %v4235
      %4245 = vmatpush.bf16.msra.mxu0 %v4234
      %4246 = vmatpush.bf16.msra.mxu0 %v4233
      %4247 = vmatpush.bf16.msra.mxu0 %v4232
      %4248 = vmatpush.bf16.msra.mxu0 %v4231
      %4249 = vmatpush.bf16.msra.mxu0 %v4230
      %4250 = vmatpush.bf16.msra.mxu0 %v4229
      %4251 = vmatpush.bf16.msra.mxu0 %v4228
      %4252 = vmatmul.bf16.gmra.mxu0 %v4012
      %v4253 = vpop.f32.mrf.mxu0
      %v4254 = vadd.f32 %v4149, %v4253
      %v4255 = vpop.f32.mrf.mxu0
      %v4256 = vadd.f32 %v4151, %v4255
      %4257 = vmatmul.bf16.gmra.mxu0 %v4013
      %v4258 = vpop.f32.mrf.mxu0
      %v4259 = vadd.f32 %v4154, %v4258
      %v4260 = vpop.f32.mrf.mxu0
      %v4261 = vadd.f32 %v4156, %v4260
      %4262 = vmatmul.bf16.gmra.mxu0 %v4014
      %v4263 = vpop.f32.mrf.mxu0
      %v4264 = vadd.f32 %v4159, %v4263
      %v4265 = vpop.f32.mrf.mxu0
      %v4266 = vadd.f32 %v4161, %v4265
      %4267 = vmatmul.bf16.gmra.mxu0 %v4015
      %v4268 = vpop.f32.mrf.mxu0
      %v4269 = vadd.f32 %v4164, %v4268
      %v4270 = vpop.f32.mrf.mxu0
      %v4271 = vadd.f32 %v4166, %v4270
      %4272 = vmatmul.bf16.gmra.mxu0 %v4016
      %v4273 = vpop.f32.mrf.mxu0
      %v4274 = vadd.f32 %v4169, %v4273
      %v4275 = vpop.f32.mrf.mxu0
      %v4276 = vadd.f32 %v4171, %v4275
      %4277 = vmatmul.bf16.gmra.mxu0 %v4017
      %v4278 = vpop.f32.mrf.mxu0
      %v4279 = vadd.f32 %v4174, %v4278
      %v4280 = vpop.f32.mrf.mxu0
      %v4281 = vadd.f32 %v4176, %v4280
      %4282 = vmatmul.bf16.gmra.mxu0 %v4018
      %v4283 = vpop.f32.mrf.mxu0
      %v4284 = vadd.f32 %v4179, %v4283
      %v4285 = vpop.f32.mrf.mxu0
      %v4286 = vadd.f32 %v4181, %v4285
      %4287 = vmatmul.bf16.gmra.mxu0 %v4187
      %v4288 = vpop.f32.mrf.mxu0
      %v4289 = vadd.f32 %v4184, %v4288
      %v4290 = vpop.f32.mrf.mxu0
      %4291 = vdwg.mxu0
      %v4292 = vld [vmem:[#allocation4] sm:$0xe]
      %v4293 = vld [vmem:[%s4 + $0x80] sm:$0xf]
      %v4294 = vld [vmem:[%s4 + $0x84] sm:$0xf]
      %v4295 = vld [vmem:[%s4 + $0x88] sm:$0xf]
      %v4296 = vld [vmem:[%s4 + $0x8c] sm:$0xf]
      %v4297 = vld [vmem:[%s4 + $0x90] sm:$0xf]
      %v4298 = vld [vmem:[%s4 + $0x94] sm:$0xf]
      %v4299 = vld [vmem:[%s4 + $0x98] sm:$0xf]
      %v4300 = vld [vmem:[%s4 + $0x9c] sm:$0xf]
      %v4301 = vld [vmem:[%s4 + $0xa0] sm:$0xf]
      %v4302 = vld [vmem:[%s4 + $0xa4] sm:$0xf]
      %v4303 = vld [vmem:[%s4 + $0xa8] sm:$0xf]
      %v4304 = vld [vmem:[%s4 + $0xac] sm:$0xf]
      %v4305 = vld [vmem:[%s4 + $0xb0] sm:$0xf]
      %v4306 = vld [vmem:[%s4 + $0xb4] sm:$0xf]
      %v4307 = vld [vmem:[%s4 + $0xb8] sm:$0xf]
      %v4308 = vld [vmem:[%s4 + $0xbc] sm:$0xf]
      %v4310 = vunpack.c.l.b16 %v4292
      %v4311 = vpack.c.b16 %v3997, %v4310
      %v4312 = vrot.slane %v4311, 1
      %v4313 = vrot.slane %v4013, 1
      %v4314 = vsel %vm2212, %v4312, %v4313
      %v4315 = vrot.slane %v4014, 1
      %v4316 = vsel %vm2212, %v4313, %v4315
      %v4317 = vrot.slane %v4015, 1
      %v4318 = vsel %vm2212, %v4315, %v4317
      %v4319 = vrot.slane %v4016, 1
      %v4320 = vsel %vm2212, %v4317, %v4319
      %v4321 = vrot.slane %v4017, 1
      %v4322 = vsel %vm2212, %v4319, %v4321
      %v4323 = vrot.slane %v4018, 1
      %v4324 = vsel %vm2212, %v4321, %v4323
      %v4325 = vrot.slane %v4019, 1
      %v4326 = vsel %vm2212, %v4323, %v4325
      %v4351 = vunpack.c.l.b16 %v4293
      %v4352 = vunpack.c.l.b16 %v4294
      %v4353 = vunpack.c.l.b16 %v4295
      %v4354 = vunpack.c.l.b16 %v4296
      %v4355 = vunpack.c.l.b16 %v4297
      %v4356 = vunpack.c.l.b16 %v4298
      %v4357 = vunpack.c.l.b16 %v4299
      %v4358 = vunpack.c.l.b16 %v4300
      %v4359 = vunpack.c.l.b16 %v4301
      %v4360 = vunpack.c.l.b16 %v4302
      %v4361 = vunpack.c.l.b16 %v4303
      %v4362 = vunpack.c.l.b16 %v4304
      %v4363 = vunpack.c.l.b16 %v4305
      %v4364 = vunpack.c.l.b16 %v4306
      %v4365 = vunpack.c.l.b16 %v4307
      %v4366 = vunpack.c.l.b16 %v4308
      %v4367 = vpack.c.b16 %v4352, %v4351
      %v4368 = vpack.c.b16 %v4354, %v4353
      %v4369 = vpack.c.b16 %v4356, %v4355
      %v4370 = vpack.c.b16 %v4358, %v4357
      %v4371 = vpack.c.b16 %v4360, %v4359
      %v4372 = vpack.c.b16 %v4362, %v4361
      %v4373 = vpack.c.b16 %v4364, %v4363
      %v4374 = vpack.c.b16 %v4366, %v4365
      %4383 = vmatpush.bf16.msra.mxu0 %v4374
      %4384 = vmatpush.bf16.msra.mxu0 %v4373
      %4385 = vmatpush.bf16.msra.mxu0 %v4372
      %4386 = vmatpush.bf16.msra.mxu0 %v4371
      %4387 = vmatpush.bf16.msra.mxu0 %v4370
      %4388 = vmatpush.bf16.msra.mxu0 %v4369
      %4389 = vmatpush.bf16.msra.mxu0 %v4368
      %4390 = vmatpush.bf16.msra.mxu0 %v4367
      %4391 = vmatmul.bf16.gmra.mxu0 %v4314
      %v4392 = vpop.f32.mrf.mxu0
      %v4393 = vadd.f32 0.0, %v4392
      %v4394 = vpop.f32.mrf.mxu0
      %v4395 = vadd.f32 0.0, %v4394
      %4396 = vmatmul.bf16.gmra.mxu0 %v4316
      %v4397 = vpop.f32.mrf.mxu0
      %v4398 = vadd.f32 0.0, %v4397
      %v4399 = vpop.f32.mrf.mxu0
      %v4400 = vadd.f32 0.0, %v4399
      %4401 = vmatmul.bf16.gmra.mxu0 %v4318
      %v4402 = vpop.f32.mrf.mxu0
      %v4403 = vadd.f32 0.0, %v4402
      %v4404 = vpop.f32.mrf.mxu0
      %v4405 = vadd.f32 0.0, %v4404
      %4406 = vmatmul.bf16.gmra.mxu0 %v4320
      %v4407 = vpop.f32.mrf.mxu0
      %v4408 = vadd.f32 0.0, %v4407
      %v4409 = vpop.f32.mrf.mxu0
      %v4410 = vadd.f32 0.0, %v4409
      %4411 = vmatmul.bf16.gmra.mxu0 %v4322
      %v4412 = vpop.f32.mrf.mxu0
      %v4413 = vadd.f32 0.0, %v4412
      %v4414 = vpop.f32.mrf.mxu0
      %v4415 = vadd.f32 0.0, %v4414
      %4416 = vmatmul.bf16.gmra.mxu0 %v4324
      %v4417 = vpop.f32.mrf.mxu0
      %v4418 = vadd.f32 0.0, %v4417
      %v4419 = vpop.f32.mrf.mxu0
      %v4420 = vadd.f32 0.0, %v4419
      %4421 = vmatmul.bf16.gmra.mxu0 %v4326
      %v4422 = vpop.f32.mrf.mxu0
      %v4423 = vadd.f32 0.0, %v4422
      %v4424 = vpop.f32.mrf.mxu0
      %v4425 = vadd.f32 0.0, %v4424
      %4426 = vmatmul.bf16.gmra.mxu0 %v4325
      %v4427 = vpop.f32.mrf.mxu0
      %v4428 = vadd.f32 0.0, %v4427
      %v4429 = vpop.f32.mrf.mxu0
      %4430 = vdwg.mxu0
      %v4431 = vadd.f32 %v4254, %v4393
      %v4432 = vadd.f32 %v4256, %v4395
      %v4433 = vadd.f32 %v4259, %v4398
      %v4434 = vadd.f32 %v4261, %v4400
      %v4435 = vadd.f32 %v4264, %v4403
      %v4436 = vadd.f32 %v4266, %v4405
      %v4437 = vadd.f32 %v4269, %v4408
      %v4438 = vadd.f32 %v4271, %v4410
      %v4439 = vadd.f32 %v4274, %v4413
      %v4440 = vadd.f32 %v4276, %v4415
      %v4441 = vadd.f32 %v4279, %v4418
      %v4442 = vadd.f32 %v4281, %v4420
      %v4443 = vadd.f32 %v4284, %v4423
      %v4444 = vadd.f32 %v4286, %v4425
      %v4445 = vadd.f32 %v4289, %v4428
      %v4446 = vld [vmem:[#allocation4 + $0x8] sm:$0xf]
      %v4447 = vld [vmem:[#allocation4 + $0xc] sm:$0xf]
      %v4448 = vld [vmem:[#allocation4 + $0x10] sm:$0xf]
      %v4449 = vld [vmem:[#allocation4 + $0x14] sm:$0xf]
      %v4450 = vld [vmem:[#allocation4 + $0x18] sm:$0xf]
      %v4451 = vld [vmem:[#allocation4 + $0x1c] sm:$0xf]
      %v4452 = vld [vmem:[#allocation4 + $0x20] sm:$0xf]
      %v4453 = vld [vmem:[#allocation4 + $0x24] sm:$0xf]
      %v4454 = vld [vmem:[#allocation4 + $0x28] sm:$0xf]
      %v4455 = vld [vmem:[#allocation4 + $0x2c] sm:$0xf]
      %v4456 = vld [vmem:[#allocation4 + $0x30] sm:$0xf]
      %v4457 = vld [vmem:[#allocation4 + $0x34] sm:$0xf]
      %v4458 = vld [vmem:[#allocation4 + $0x38] sm:$0xf]
      %v4459 = vld [vmem:[#allocation4 + $0x3c] sm:$0xf]
      %v4460 = vld [vmem:[#allocation4 + $0x40] sm:$0xf]
      %v4461 = vld [vmem:[%s4 + $0xc0] sm:$0xf]
      %v4462 = vld [vmem:[%s4 + $0xc4] sm:$0xf]
      %v4463 = vld [vmem:[%s4 + $0xc8] sm:$0xf]
      %v4464 = vld [vmem:[%s4 + $0xcc] sm:$0xf]
      %v4465 = vld [vmem:[%s4 + $0xd0] sm:$0xf]
      %v4466 = vld [vmem:[%s4 + $0xd4] sm:$0xf]
      %v4467 = vld [vmem:[%s4 + $0xd8] sm:$0xf]
      %v4468 = vld [vmem:[%s4 + $0xdc] sm:$0xf]
      %v4469 = vld [vmem:[%s4 + $0xe0] sm:$0xf]
      %v4470 = vld [vmem:[%s4 + $0xe4] sm:$0xf]
      %v4471 = vld [vmem:[%s4 + $0xe8] sm:$0xf]
      %v4472 = vld [vmem:[%s4 + $0xec] sm:$0xf]
      %v4473 = vld [vmem:[%s4 + $0xf0] sm:$0xf]
      %v4474 = vld [vmem:[%s4 + $0xf4] sm:$0xf]
      %v4475 = vld [vmem:[%s4 + $0xf8] sm:$0xf]
      %v4476 = vld [vmem:[%s4 + $0xfc] sm:$0xf]
      %v4492 = vunpack.c.l.b16 %v4446
      %v4493 = vunpack.c.l.b16 %v4447
      %v4494 = vunpack.c.l.b16 %v4448
      %v4495 = vunpack.c.l.b16 %v4449
      %v4496 = vunpack.c.l.b16 %v4450
      %v4497 = vunpack.c.l.b16 %v4451
      %v4498 = vunpack.c.l.b16 %v4452
      %v4499 = vunpack.c.l.b16 %v4453
      %v4500 = vunpack.c.l.b16 %v4454
      %v4501 = vunpack.c.l.b16 %v4455
      %v4502 = vunpack.c.l.b16 %v4456
      %v4503 = vunpack.c.l.b16 %v4457
      %v4504 = vunpack.c.l.b16 %v4458
      %v4505 = vunpack.c.l.b16 %v4459
      %v4506 = vunpack.c.l.b16 %v4460
      %v4507 = vpack.c.b16 %v4493, %v4492
      %v4508 = vpack.c.b16 %v4495, %v4494
      %v4509 = vpack.c.b16 %v4497, %v4496
      %v4510 = vpack.c.b16 %v4499, %v4498
      %v4511 = vpack.c.b16 %v4501, %v4500
      %v4512 = vpack.c.b16 %v4503, %v4502
      %v4513 = vpack.c.b16 %v4505, %v4504
      %v4514 = vpack.c.b16 %v4506, %v4506
      %v4539 = vunpack.c.l.b16 %v4461
      %v4540 = vunpack.c.l.b16 %v4462
      %v4541 = vunpack.c.l.b16 %v4463
      %v4542 = vunpack.c.l.b16 %v4464
      %v4543 = vunpack.c.l.b16 %v4465
      %v4544 = vunpack.c.l.b16 %v4466
      %v4545 = vunpack.c.l.b16 %v4467
      %v4546 = vunpack.c.l.b16 %v4468
      %v4547 = vunpack.c.l.b16 %v4469
      %v4548 = vunpack.c.l.b16 %v4470
      %v4549 = vunpack.c.l.b16 %v4471
      %v4550 = vunpack.c.l.b16 %v4472
      %v4551 = vunpack.c.l.b16 %v4473
      %v4552 = vunpack.c.l.b16 %v4474
      %v4553 = vunpack.c.l.b16 %v4475
      %v4554 = vunpack.c.l.b16 %v4476
      %v4555 = vpack.c.b16 %v4540, %v4539
      %v4556 = vpack.c.b16 %v4542, %v4541
      %v4557 = vpack.c.b16 %v4544, %v4543
      %v4558 = vpack.c.b16 %v4546, %v4545
      %v4559 = vpack.c.b16 %v4548, %v4547
      %v4560 = vpack.c.b16 %v4550, %v4549
      %v4561 = vpack.c.b16 %v4552, %v4551
      %v4562 = vpack.c.b16 %v4554, %v4553
      %4571 = vmatpush.bf16.msra.mxu0 %v4562
      %4572 = vmatpush.bf16.msra.mxu0 %v4561
      %4573 = vmatpush.bf16.msra.mxu0 %v4560
      %4574 = vmatpush.bf16.msra.mxu0 %v4559
      %4575 = vmatpush.bf16.msra.mxu0 %v4558
      %4576 = vmatpush.bf16.msra.mxu0 %v4557
      %4577 = vmatpush.bf16.msra.mxu0 %v4556
      %4578 = vmatpush.bf16.msra.mxu0 %v4555
      %4579 = vmatmul.bf16.gmra.mxu0 %v4507
      %v4580 = vpop.f32.mrf.mxu0
      %v4581 = vadd.f32 0.0, %v4580
      %v4582 = vpop.f32.mrf.mxu0
      %v4583 = vadd.f32 0.0, %v4582
      %4584 = vmatmul.bf16.gmra.mxu0 %v4508
      %v4585 = vpop.f32.mrf.mxu0
      %v4586 = vadd.f32 0.0, %v4585
      %v4587 = vpop.f32.mrf.mxu0
      %v4588 = vadd.f32 0.0, %v4587
      %4589 = vmatmul.bf16.gmra.mxu0 %v4509
      %v4590 = vpop.f32.mrf.mxu0
      %v4591 = vadd.f32 0.0, %v4590
      %v4592 = vpop.f32.mrf.mxu0
      %v4593 = vadd.f32 0.0, %v4592
      %4594 = vmatmul.bf16.gmra.mxu0 %v4510
      %v4595 = vpop.f32.mrf.mxu0
      %v4596 = vadd.f32 0.0, %v4595
      %v4597 = vpop.f32.mrf.mxu0
      %v4598 = vadd.f32 0.0, %v4597
      %4599 = vmatmul.bf16.gmra.mxu0 %v4511
      %v4600 = vpop.f32.mrf.mxu0
      %v4601 = vadd.f32 0.0, %v4600
      %v4602 = vpop.f32.mrf.mxu0
      %v4603 = vadd.f32 0.0, %v4602
      %4604 = vmatmul.bf16.gmra.mxu0 %v4512
      %v4605 = vpop.f32.mrf.mxu0
      %v4606 = vadd.f32 0.0, %v4605
      %v4607 = vpop.f32.mrf.mxu0
      %v4608 = vadd.f32 0.0, %v4607
      %4609 = vmatmul.bf16.gmra.mxu0 %v4513
      %v4610 = vpop.f32.mrf.mxu0
      %v4611 = vadd.f32 0.0, %v4610
      %v4612 = vpop.f32.mrf.mxu0
      %v4613 = vadd.f32 0.0, %v4612
      %4614 = vmatmul.bf16.gmra.mxu0 %v4514
      %v4615 = vpop.f32.mrf.mxu0
      %v4616 = vadd.f32 0.0, %v4615
      %v4617 = vpop.f32.mrf.mxu0
      %4618 = vdwg.mxu0
      %v4619 = vadd.f32 %v4431, %v4581
      %v4620 = vadd.f32 %v4432, %v4583
      %v4621 = vadd.f32 %v4433, %v4586
      %v4622 = vadd.f32 %v4434, %v4588
      %v4623 = vadd.f32 %v4435, %v4591
      %v4624 = vadd.f32 %v4436, %v4593
      %v4625 = vadd.f32 %v4437, %v4596
      %v4626 = vadd.f32 %v4438, %v4598
      %v4627 = vadd.f32 %v4439, %v4601
      %v4628 = vadd.f32 %v4440, %v4603
      %v4629 = vadd.f32 %v4441, %v4606
      %v4630 = vadd.f32 %v4442, %v4608
      %v4631 = vadd.f32 %v4443, %v4611
      %v4632 = vadd.f32 %v4444, %v4613
      %v4633 = vadd.f32 %v4445, %v4616
      %v4634 = vld [vmem:[#allocation4 + $0x8] sm:$0xf]
      %v4635 = vld [vmem:[#allocation4 + $0xc] sm:$0xf]
      %v4636 = vld [vmem:[#allocation4 + $0x10] sm:$0xf]
      %v4637 = vld [vmem:[#allocation4 + $0x14] sm:$0xf]
      %v4638 = vld [vmem:[#allocation4 + $0x18] sm:$0xf]
      %v4639 = vld [vmem:[#allocation4 + $0x1c] sm:$0xf]
      %v4640 = vld [vmem:[#allocation4 + $0x20] sm:$0xf]
      %v4641 = vld [vmem:[#allocation4 + $0x24] sm:$0xf]
      %v4642 = vld [vmem:[#allocation4 + $0x28] sm:$0xf]
      %v4643 = vld [vmem:[#allocation4 + $0x2c] sm:$0xf]
      %v4644 = vld [vmem:[#allocation4 + $0x30] sm:$0xf]
      %v4645 = vld [vmem:[#allocation4 + $0x34] sm:$0xf]
      %v4646 = vld [vmem:[#allocation4 + $0x38] sm:$0xf]
      %v4647 = vld [vmem:[#allocation4 + $0x3c] sm:$0xf]
      %v4648 = vld [vmem:[#allocation4 + $0x40] sm:$0xf]
      %v4649 = vld [vmem:[#allocation4 + $0x44] sm:$0x1]
      %v4650 = vld [vmem:[%s4 + $0x100] sm:$0xf]
      %v4651 = vld [vmem:[%s4 + $0x104] sm:$0xf]
      %v4652 = vld [vmem:[%s4 + $0x108] sm:$0xf]
      %v4653 = vld [vmem:[%s4 + $0x10c] sm:$0xf]
      %v4654 = vld [vmem:[%s4 + $0x110] sm:$0xf]
      %v4655 = vld [vmem:[%s4 + $0x114] sm:$0xf]
      %v4656 = vld [vmem:[%s4 + $0x118] sm:$0xf]
      %v4657 = vld [vmem:[%s4 + $0x11c] sm:$0xf]
      %v4658 = vld [vmem:[%s4 + $0x120] sm:$0xf]
      %v4659 = vld [vmem:[%s4 + $0x124] sm:$0xf]
      %v4660 = vld [vmem:[%s4 + $0x128] sm:$0xf]
      %v4661 = vld [vmem:[%s4 + $0x12c] sm:$0xf]
      %v4662 = vld [vmem:[%s4 + $0x130] sm:$0xf]
      %v4663 = vld [vmem:[%s4 + $0x134] sm:$0xf]
      %v4664 = vld [vmem:[%s4 + $0x138] sm:$0xf]
      %v4665 = vld [vmem:[%s4 + $0x13c] sm:$0xf]
      %v4682 = vunpack.c.l.b16 %v4634
      %v4683 = vunpack.c.l.b16 %v4635
      %v4684 = vunpack.c.l.b16 %v4636
      %v4685 = vunpack.c.l.b16 %v4637
      %v4686 = vunpack.c.l.b16 %v4638
      %v4687 = vunpack.c.l.b16 %v4639
      %v4688 = vunpack.c.l.b16 %v4640
      %v4689 = vunpack.c.l.b16 %v4641
      %v4690 = vunpack.c.l.b16 %v4642
      %v4691 = vunpack.c.l.b16 %v4643
      %v4692 = vunpack.c.l.b16 %v4644
      %v4693 = vunpack.c.l.b16 %v4645
      %v4694 = vunpack.c.l.b16 %v4646
      %v4695 = vunpack.c.l.b16 %v4647
      %v4696 = vunpack.c.l.b16 %v4648
      %v4697 = vunpack.c.l.b16 %v4649
      %v4698 = vpack.c.b16 %v4683, %v4682
      %v4699 = vpack.c.b16 %v4685, %v4684
      %v4700 = vpack.c.b16 %v4687, %v4686
      %v4701 = vpack.c.b16 %v4689, %v4688
      %v4702 = vpack.c.b16 %v4691, %v4690
      %v4703 = vpack.c.b16 %v4693, %v4692
      %v4704 = vpack.c.b16 %v4695, %v4694
      %v4705 = vpack.c.b16 %v4697, %v4696
      %v4707 = vshrl.u32 %v4698, 16
      %v4709 = vshll.u32 %v4698, 16
      %v4711 = vrot.slane %v4709, 1
      %v4712 = vor.u32 %v4707, %v4711
      %v4714 = vshll.u32 %v4699, 16
      %v4716 = vrot.slane %v4714, 1
      %v4717 = vsel %vm914, %v4712, %v4716
      %v4718 = vshrl.u32 %v4699, 16
      %v4720 = vor.u32 %v4718, %v4716
      %v4722 = vshll.u32 %v4700, 16
      %v4724 = vrot.slane %v4722, 1
      %v4725 = vsel %vm914, %v4720, %v4724
      %v4726 = vshrl.u32 %v4700, 16
      %v4728 = vor.u32 %v4726, %v4724
      %v4730 = vshll.u32 %v4701, 16
      %v4732 = vrot.slane %v4730, 1
      %v4733 = vsel %vm914, %v4728, %v4732
      %v4734 = vshrl.u32 %v4701, 16
      %v4736 = vor.u32 %v4734, %v4732
      %v4738 = vshll.u32 %v4702, 16
      %v4740 = vrot.slane %v4738, 1
      %v4741 = vsel %vm914, %v4736, %v4740
      %v4742 = vshrl.u32 %v4702, 16
      %v4744 = vor.u32 %v4742, %v4740
      %v4746 = vshll.u32 %v4703, 16
      %v4748 = vrot.slane %v4746, 1
      %v4749 = vsel %vm914, %v4744, %v4748
      %v4750 = vshrl.u32 %v4703, 16
      %v4752 = vor.u32 %v4750, %v4748
      %v4754 = vshll.u32 %v4704, 16
      %v4756 = vrot.slane %v4754, 1
      %v4757 = vsel %vm914, %v4752, %v4756
      %v4758 = vshrl.u32 %v4704, 16
      %v4760 = vor.u32 %v4758, %v4756
      %v4762 = vshll.u32 %v4705, 16
      %v4764 = vrot.slane %v4762, 1
      %v4765 = vsel %vm914, %v4760, %v4764
      %v4766 = vshrl.u32 %v4705, 16
      %v4768 = vor.u32 %v4766, %v4764
      %v4793 = vunpack.c.l.b16 %v4650
      %v4794 = vunpack.c.l.b16 %v4651
      %v4795 = vunpack.c.l.b16 %v4652
      %v4796 = vunpack.c.l.b16 %v4653
      %v4797 = vunpack.c.l.b16 %v4654
      %v4798 = vunpack.c.l.b16 %v4655
      %v4799 = vunpack.c.l.b16 %v4656
      %v4800 = vunpack.c.l.b16 %v4657
      %v4801 = vunpack.c.l.b16 %v4658
      %v4802 = vunpack.c.l.b16 %v4659
      %v4803 = vunpack.c.l.b16 %v4660
      %v4804 = vunpack.c.l.b16 %v4661
      %v4805 = vunpack.c.l.b16 %v4662
      %v4806 = vunpack.c.l.b16 %v4663
      %v4807 = vunpack.c.l.b16 %v4664
      %v4808 = vunpack.c.l.b16 %v4665
      %v4809 = vpack.c.b16 %v4794, %v4793
      %v4810 = vpack.c.b16 %v4796, %v4795
      %v4811 = vpack.c.b16 %v4798, %v4797
      %v4812 = vpack.c.b16 %v4800, %v4799
      %v4813 = vpack.c.b16 %v4802, %v4801
      %v4814 = vpack.c.b16 %v4804, %v4803
      %v4815 = vpack.c.b16 %v4806, %v4805
      %v4816 = vpack.c.b16 %v4808, %v4807
      %4825 = vmatpush.bf16.msra.mxu0 %v4816
      %4826 = vmatpush.bf16.msra.mxu0 %v4815
      %4827 = vmatpush.bf16.msra.mxu0 %v4814
      %4828 = vmatpush.bf16.msra.mxu0 %v4813
      %4829 = vmatpush.bf16.msra.mxu0 %v4812
      %4830 = vmatpush.bf16.msra.mxu0 %v4811
      %4831 = vmatpush.bf16.msra.mxu0 %v4810
      %4832 = vmatpush.bf16.msra.mxu0 %v4809
      %4833 = vmatmul.bf16.gmra.mxu0 %v4717
      %v4834 = vpop.f32.mrf.mxu0
      %v4835 = vadd.f32 0.0, %v4834
      %v4836 = vpop.f32.mrf.mxu0
      %v4837 = vadd.f32 0.0, %v4836
      %4838 = vmatmul.bf16.gmra.mxu0 %v4725
      %v4839 = vpop.f32.mrf.mxu0
      %v4840 = vadd.f32 0.0, %v4839
      %v4841 = vpop.f32.mrf.mxu0
      %v4842 = vadd.f32 0.0, %v4841
      %4843 = vmatmul.bf16.gmra.mxu0 %v4733
      %v4844 = vpop.f32.mrf.mxu0
      %v4845 = vadd.f32 0.0, %v4844
      %v4846 = vpop.f32.mrf.mxu0
      %v4847 = vadd.f32 0.0, %v4846
      %4848 = vmatmul.bf16.gmra.mxu0 %v4741
      %v4849 = vpop.f32.mrf.mxu0
      %v4850 = vadd.f32 0.0, %v4849
      %v4851 = vpop.f32.mrf.mxu0
      %v4852 = vadd.f32 0.0, %v4851
      %4853 = vmatmul.bf16.gmra.mxu0 %v4749
      %v4854 = vpop.f32.mrf.mxu0
      %v4855 = vadd.f32 0.0, %v4854
      %v4856 = vpop.f32.mrf.mxu0
      %v4857 = vadd.f32 0.0, %v4856
      %4858 = vmatmul.bf16.gmra.mxu0 %v4757
      %v4859 = vpop.f32.mrf.mxu0
      %v4860 = vadd.f32 0.0, %v4859
      %v4861 = vpop.f32.mrf.mxu0
      %v4862 = vadd.f32 0.0, %v4861
      %4863 = vmatmul.bf16.gmra.mxu0 %v4765
      %v4864 = vpop.f32.mrf.mxu0
      %v4865 = vadd.f32 0.0, %v4864
      %v4866 = vpop.f32.mrf.mxu0
      %v4867 = vadd.f32 0.0, %v4866
      %4868 = vmatmul.bf16.gmra.mxu0 %v4768
      %v4869 = vpop.f32.mrf.mxu0
      %v4870 = vadd.f32 0.0, %v4869
      %v4871 = vpop.f32.mrf.mxu0
      %4872 = vdwg.mxu0
      %v4873 = vadd.f32 %v4619, %v4835
      %v4874 = vadd.f32 %v4620, %v4837
      %v4875 = vadd.f32 %v4621, %v4840
      %v4876 = vadd.f32 %v4622, %v4842
      %v4877 = vadd.f32 %v4623, %v4845
      %v4878 = vadd.f32 %v4624, %v4847
      %v4879 = vadd.f32 %v4625, %v4850
      %v4880 = vadd.f32 %v4626, %v4852
      %v4881 = vadd.f32 %v4627, %v4855
      %v4882 = vadd.f32 %v4628, %v4857
      %v4883 = vadd.f32 %v4629, %v4860
      %v4884 = vadd.f32 %v4630, %v4862
      %v4885 = vadd.f32 %v4631, %v4865
      %v4886 = vadd.f32 %v4632, %v4867
      %v4887 = vadd.f32 %v4633, %v4870
      %v4888 = vld [vmem:[#allocation4 + $0x8] sm:$0xe]
      %v4889 = vld [vmem:[%s4 + $0x140] sm:$0xf]
      %v4890 = vld [vmem:[%s4 + $0x144] sm:$0xf]
      %v4891 = vld [vmem:[%s4 + $0x148] sm:$0xf]
      %v4892 = vld [vmem:[%s4 + $0x14c] sm:$0xf]
      %v4893 = vld [vmem:[%s4 + $0x150] sm:$0xf]
      %v4894 = vld [vmem:[%s4 + $0x154] sm:$0xf]
      %v4895 = vld [vmem:[%s4 + $0x158] sm:$0xf]
      %v4896 = vld [vmem:[%s4 + $0x15c] sm:$0xf]
      %v4897 = vld [vmem:[%s4 + $0x160] sm:$0xf]
      %v4898 = vld [vmem:[%s4 + $0x164] sm:$0xf]
      %v4899 = vld [vmem:[%s4 + $0x168] sm:$0xf]
      %v4900 = vld [vmem:[%s4 + $0x16c] sm:$0xf]
      %v4901 = vld [vmem:[%s4 + $0x170] sm:$0xf]
      %v4902 = vld [vmem:[%s4 + $0x174] sm:$0xf]
      %v4903 = vld [vmem:[%s4 + $0x178] sm:$0xf]
      %v4904 = vld [vmem:[%s4 + $0x17c] sm:$0xf]
      %v4906 = vunpack.c.l.b16 %v4888
      %v4907 = vpack.c.b16 %v4683, %v4906
      %v4908 = vrot.slane %v4907, 1
      %v4909 = vrot.slane %v4699, 1
      %v4910 = vsel %vm2212, %v4908, %v4909
      %v4911 = vrot.slane %v4700, 1
      %v4912 = vsel %vm2212, %v4909, %v4911
      %v4913 = vrot.slane %v4701, 1
      %v4914 = vsel %vm2212, %v4911, %v4913
      %v4915 = vrot.slane %v4702, 1
      %v4916 = vsel %vm2212, %v4913, %v4915
      %v4917 = vrot.slane %v4703, 1
      %v4918 = vsel %vm2212, %v4915, %v4917
      %v4919 = vrot.slane %v4704, 1
      %v4920 = vsel %vm2212, %v4917, %v4919
      %v4921 = vrot.slane %v4705, 1
      %v4922 = vsel %vm2212, %v4919, %v4921
      %v4947 = vunpack.c.l.b16 %v4889
      %v4948 = vunpack.c.l.b16 %v4890
      %v4949 = vunpack.c.l.b16 %v4891
      %v4950 = vunpack.c.l.b16 %v4892
      %v4951 = vunpack.c.l.b16 %v4893
      %v4952 = vunpack.c.l.b16 %v4894
      %v4953 = vunpack.c.l.b16 %v4895
      %v4954 = vunpack.c.l.b16 %v4896
      %v4955 = vunpack.c.l.b16 %v4897
      %v4956 = vunpack.c.l.b16 %v4898
      %v4957 = vunpack.c.l.b16 %v4899
      %v4958 = vunpack.c.l.b16 %v4900
      %v4959 = vunpack.c.l.b16 %v4901
      %v4960 = vunpack.c.l.b16 %v4902
      %v4961 = vunpack.c.l.b16 %v4903
      %v4962 = vunpack.c.l.b16 %v4904
      %v4963 = vpack.c.b16 %v4948, %v4947
      %v4964 = vpack.c.b16 %v4950, %v4949
      %v4965 = vpack.c.b16 %v4952, %v4951
      %v4966 = vpack.c.b16 %v4954, %v4953
      %v4967 = vpack.c.b16 %v4956, %v4955
      %v4968 = vpack.c.b16 %v4958, %v4957
      %v4969 = vpack.c.b16 %v4960, %v4959
      %v4970 = vpack.c.b16 %v4962, %v4961
      %4979 = vmatpush.bf16.msra.mxu0 %v4970
      %4980 = vmatpush.bf16.msra.mxu0 %v4969
      %4981 = vmatpush.bf16.msra.mxu0 %v4968
      %4982 = vmatpush.bf16.msra.mxu0 %v4967
      %4983 = vmatpush.bf16.msra.mxu0 %v4966
      %4984 = vmatpush.bf16.msra.mxu0 %v4965
      %4985 = vmatpush.bf16.msra.mxu0 %v4964
      %4986 = vmatpush.bf16.msra.mxu0 %v4963
      %4987 = vmatmul.bf16.gmra.mxu0 %v4910
      %v4988 = vpop.f32.mrf.mxu0
      %v4989 = vadd.f32 0.0, %v4988
      %v4990 = vpop.f32.mrf.mxu0
      %v4991 = vadd.f32 0.0, %v4990
      %4992 = vmatmul.bf16.gmra.mxu0 %v4912
      %v4993 = vpop.f32.mrf.mxu0
      %v4994 = vadd.f32 0.0, %v4993
      %v4995 = vpop.f32.mrf.mxu0
      %v4996 = vadd.f32 0.0, %v4995
      %4997 = vmatmul.bf16.gmra.mxu0 %v4914
      %v4998 = vpop.f32.mrf.mxu0
      %v4999 = vadd.f32 0.0, %v4998
      %v5000 = vpop.f32.mrf.mxu0
      %v5001 = vadd.f32 0.0, %v5000
      %5002 = vmatmul.bf16.gmra.mxu0 %v4916
      %v5003 = vpop.f32.mrf.mxu0
      %v5004 = vadd.f32 0.0, %v5003
      %v5005 = vpop.f32.mrf.mxu0
      %v5006 = vadd.f32 0.0, %v5005
      %5007 = vmatmul.bf16.gmra.mxu0 %v4918
      %v5008 = vpop.f32.mrf.mxu0
      %v5009 = vadd.f32 0.0, %v5008
      %v5010 = vpop.f32.mrf.mxu0
      %v5011 = vadd.f32 0.0, %v5010
      %5012 = vmatmul.bf16.gmra.mxu0 %v4920
      %v5013 = vpop.f32.mrf.mxu0
      %v5014 = vadd.f32 0.0, %v5013
      %v5015 = vpop.f32.mrf.mxu0
      %v5016 = vadd.f32 0.0, %v5015
      %5017 = vmatmul.bf16.gmra.mxu0 %v4922
      %v5018 = vpop.f32.mrf.mxu0
      %v5019 = vadd.f32 0.0, %v5018
      %v5020 = vpop.f32.mrf.mxu0
      %v5021 = vadd.f32 0.0, %v5020
      %5022 = vmatmul.bf16.gmra.mxu0 %v4921
      %v5023 = vpop.f32.mrf.mxu0
      %v5024 = vadd.f32 0.0, %v5023
      %v5025 = vpop.f32.mrf.mxu0
      %5026 = vdwg.mxu0
      %v5027 = vadd.f32 %v4873, %v4989
      %v5028 = vadd.f32 %v4874, %v4991
      %v5029 = vadd.f32 %v4875, %v4994
      %v5030 = vadd.f32 %v4876, %v4996
      %v5031 = vadd.f32 %v4877, %v4999
      %v5032 = vadd.f32 %v4878, %v5001
      %v5033 = vadd.f32 %v4879, %v5004
      %v5034 = vadd.f32 %v4880, %v5006
      %v5035 = vadd.f32 %v4881, %v5009
      %v5036 = vadd.f32 %v4882, %v5011
      %v5037 = vadd.f32 %v4883, %v5014
      %v5038 = vadd.f32 %v4884, %v5016
      %v5039 = vadd.f32 %v4885, %v5019
      %v5040 = vadd.f32 %v4886, %v5021
      %v5041 = vadd.f32 %v4887, %v5024
      %v5042 = vld [vmem:[#allocation4 + $0x10] sm:$0xf]
      %v5043 = vld [vmem:[#allocation4 + $0x14] sm:$0xf]
      %v5044 = vld [vmem:[#allocation4 + $0x18] sm:$0xf]
      %v5045 = vld [vmem:[#allocation4 + $0x1c] sm:$0xf]
      %v5046 = vld [vmem:[#allocation4 + $0x20] sm:$0xf]
      %v5047 = vld [vmem:[#allocation4 + $0x24] sm:$0xf]
      %v5048 = vld [vmem:[#allocation4 + $0x28] sm:$0xf]
      %v5049 = vld [vmem:[#allocation4 + $0x2c] sm:$0xf]
      %v5050 = vld [vmem:[#allocation4 + $0x30] sm:$0xf]
      %v5051 = vld [vmem:[#allocation4 + $0x34] sm:$0xf]
      %v5052 = vld [vmem:[#allocation4 + $0x38] sm:$0xf]
      %v5053 = vld [vmem:[#allocation4 + $0x3c] sm:$0xf]
      %v5054 = vld [vmem:[#allocation4 + $0x40] sm:$0xf]
      %v5055 = vld [vmem:[#allocation4 + $0x44] sm:$0xf]
      %v5056 = vld [vmem:[#allocation4 + $0x48] sm:$0xf]
      %v5057 = vld [vmem:[%s4 + $0x180] sm:$0xf]
      %v5058 = vld [vmem:[%s4 + $0x184] sm:$0xf]
      %v5059 = vld [vmem:[%s4 + $0x188] sm:$0xf]
      %v5060 = vld [vmem:[%s4 + $0x18c] sm:$0xf]
      %v5061 = vld [vmem:[%s4 + $0x190] sm:$0xf]
      %v5062 = vld [vmem:[%s4 + $0x194] sm:$0xf]
      %v5063 = vld [vmem:[%s4 + $0x198] sm:$0xf]
      %v5064 = vld [vmem:[%s4 + $0x19c] sm:$0xf]
      %v5065 = vld [vmem:[%s4 + $0x1a0] sm:$0xf]
      %v5066 = vld [vmem:[%s4 + $0x1a4] sm:$0xf]
      %v5067 = vld [vmem:[%s4 + $0x1a8] sm:$0xf]
      %v5068 = vld [vmem:[%s4 + $0x1ac] sm:$0xf]
      %v5069 = vld [vmem:[%s4 + $0x1b0] sm:$0xf]
      %v5070 = vld [vmem:[%s4 + $0x1b4] sm:$0xf]
      %v5071 = vld [vmem:[%s4 + $0x1b8] sm:$0xf]
      %v5072 = vld [vmem:[%s4 + $0x1bc] sm:$0xf]
      %v5088 = vunpack.c.l.b16 %v5042
      %v5089 = vunpack.c.l.b16 %v5043
      %v5090 = vunpack.c.l.b16 %v5044
      %v5091 = vunpack.c.l.b16 %v5045
      %v5092 = vunpack.c.l.b16 %v5046
      %v5093 = vunpack.c.l.b16 %v5047
      %v5094 = vunpack.c.l.b16 %v5048
      %v5095 = vunpack.c.l.b16 %v5049
      %v5096 = vunpack.c.l.b16 %v5050
      %v5097 = vunpack.c.l.b16 %v5051
      %v5098 = vunpack.c.l.b16 %v5052
      %v5099 = vunpack.c.l.b16 %v5053
      %v5100 = vunpack.c.l.b16 %v5054
      %v5101 = vunpack.c.l.b16 %v5055
      %v5102 = vunpack.c.l.b16 %v5056
      %v5103 = vpack.c.b16 %v5089, %v5088
      %v5104 = vpack.c.b16 %v5091, %v5090
      %v5105 = vpack.c.b16 %v5093, %v5092
      %v5106 = vpack.c.b16 %v5095, %v5094
      %v5107 = vpack.c.b16 %v5097, %v5096
      %v5108 = vpack.c.b16 %v5099, %v5098
      %v5109 = vpack.c.b16 %v5101, %v5100
      %v5110 = vpack.c.b16 %v5102, %v5102
      %v5135 = vunpack.c.l.b16 %v5057
      %v5136 = vunpack.c.l.b16 %v5058
      %v5137 = vunpack.c.l.b16 %v5059
      %v5138 = vunpack.c.l.b16 %v5060
      %v5139 = vunpack.c.l.b16 %v5061
      %v5140 = vunpack.c.l.b16 %v5062
      %v5141 = vunpack.c.l.b16 %v5063
      %v5142 = vunpack.c.l.b16 %v5064
      %v5143 = vunpack.c.l.b16 %v5065
      %v5144 = vunpack.c.l.b16 %v5066
      %v5145 = vunpack.c.l.b16 %v5067
      %v5146 = vunpack.c.l.b16 %v5068
      %v5147 = vunpack.c.l.b16 %v5069
      %v5148 = vunpack.c.l.b16 %v5070
      %v5149 = vunpack.c.l.b16 %v5071
      %v5150 = vunpack.c.l.b16 %v5072
      %v5151 = vpack.c.b16 %v5136, %v5135
      %v5152 = vpack.c.b16 %v5138, %v5137
      %v5153 = vpack.c.b16 %v5140, %v5139
      %v5154 = vpack.c.b16 %v5142, %v5141
      %v5155 = vpack.c.b16 %v5144, %v5143
      %v5156 = vpack.c.b16 %v5146, %v5145
      %v5157 = vpack.c.b16 %v5148, %v5147
      %v5158 = vpack.c.b16 %v5150, %v5149
      %5167 = vmatpush.bf16.msra.mxu0 %v5158
      %5168 = vmatpush.bf16.msra.mxu0 %v5157
      %5169 = vmatpush.bf16.msra.mxu0 %v5156
      %5170 = vmatpush.bf16.msra.mxu0 %v5155
      %5171 = vmatpush.bf16.msra.mxu0 %v5154
      %5172 = vmatpush.bf16.msra.mxu0 %v5153
      %5173 = vmatpush.bf16.msra.mxu0 %v5152
      %5174 = vmatpush.bf16.msra.mxu0 %v5151
      %5175 = vmatmul.bf16.gmra.mxu0 %v5103
      %v5176 = vpop.f32.mrf.mxu0
      %v5177 = vadd.f32 0.0, %v5176
      %v5178 = vpop.f32.mrf.mxu0
      %v5179 = vadd.f32 0.0, %v5178
      %5180 = vmatmul.bf16.gmra.mxu0 %v5104
      %v5181 = vpop.f32.mrf.mxu0
      %v5182 = vadd.f32 0.0, %v5181
      %v5183 = vpop.f32.mrf.mxu0
      %v5184 = vadd.f32 0.0, %v5183
      %5185 = vmatmul.bf16.gmra.mxu0 %v5105
      %v5186 = vpop.f32.mrf.mxu0
      %v5187 = vadd.f32 0.0, %v5186
      %v5188 = vpop.f32.mrf.mxu0
      %v5189 = vadd.f32 0.0, %v5188
      %5190 = vmatmul.bf16.gmra.mxu0 %v5106
      %v5191 = vpop.f32.mrf.mxu0
      %v5192 = vadd.f32 0.0, %v5191
      %v5193 = vpop.f32.mrf.mxu0
      %v5194 = vadd.f32 0.0, %v5193
      %5195 = vmatmul.bf16.gmra.mxu0 %v5107
      %v5196 = vpop.f32.mrf.mxu0
      %v5197 = vadd.f32 0.0, %v5196
      %v5198 = vpop.f32.mrf.mxu0
      %v5199 = vadd.f32 0.0, %v5198
      %5200 = vmatmul.bf16.gmra.mxu0 %v5108
      %v5201 = vpop.f32.mrf.mxu0
      %v5202 = vadd.f32 0.0, %v5201
      %v5203 = vpop.f32.mrf.mxu0
      %v5204 = vadd.f32 0.0, %v5203
      %5205 = vmatmul.bf16.gmra.mxu0 %v5109
      %v5206 = vpop.f32.mrf.mxu0
      %v5207 = vadd.f32 0.0, %v5206
      %v5208 = vpop.f32.mrf.mxu0
      %v5209 = vadd.f32 0.0, %v5208
      %5210 = vmatmul.bf16.gmra.mxu0 %v5110
      %v5211 = vpop.f32.mrf.mxu0
      %v5212 = vadd.f32 0.0, %v5211
      %v5213 = vpop.f32.mrf.mxu0
      %5214 = vdwg.mxu0
      %v5215 = vadd.f32 %v5027, %v5177
      %v5216 = vadd.f32 %v5028, %v5179
      %v5217 = vadd.f32 %v5029, %v5182
      %v5218 = vadd.f32 %v5030, %v5184
      %v5219 = vadd.f32 %v5031, %v5187
      %v5220 = vadd.f32 %v5032, %v5189
      %v5221 = vadd.f32 %v5033, %v5192
      %v5222 = vadd.f32 %v5034, %v5194
      %v5223 = vadd.f32 %v5035, %v5197
      %v5224 = vadd.f32 %v5036, %v5199
      %v5225 = vadd.f32 %v5037, %v5202
      %v5226 = vadd.f32 %v5038, %v5204
      %v5227 = vadd.f32 %v5039, %v5207
      %v5228 = vadd.f32 %v5040, %v5209
      %v5229 = vadd.f32 %v5041, %v5212
      %v5230 = vld [vmem:[#allocation4 + $0x10] sm:$0xf]
      %v5231 = vld [vmem:[#allocation4 + $0x14] sm:$0xf]
      %v5232 = vld [vmem:[#allocation4 + $0x18] sm:$0xf]
      %v5233 = vld [vmem:[#allocation4 + $0x1c] sm:$0xf]
      %v5234 = vld [vmem:[#allocation4 + $0x20] sm:$0xf]
      %v5235 = vld [vmem:[#allocation4 + $0x24] sm:$0xf]
      %v5236 = vld [vmem:[#allocation4 + $0x28] sm:$0xf]
      %v5237 = vld [vmem:[#allocation4 + $0x2c] sm:$0xf]
      %v5238 = vld [vmem:[#allocation4 + $0x30] sm:$0xf]
      %v5239 = vld [vmem:[#allocation4 + $0x34] sm:$0xf]
      %v5240 = vld [vmem:[#allocation4 + $0x38] sm:$0xf]
      %v5241 = vld [vmem:[#allocation4 + $0x3c] sm:$0xf]
      %v5242 = vld [vmem:[#allocation4 + $0x40] sm:$0xf]
      %v5243 = vld [vmem:[#allocation4 + $0x44] sm:$0xf]
      %v5244 = vld [vmem:[#allocation4 + $0x48] sm:$0xf]
      %v5245 = vld [vmem:[#allocation4 + $0x4c] sm:$0x1]
      %v5246 = vld [vmem:[%s4 + $0x1c0] sm:$0xf]
      %v5247 = vld [vmem:[%s4 + $0x1c4] sm:$0xf]
      %v5248 = vld [vmem:[%s4 + $0x1c8] sm:$0xf]
      %v5249 = vld [vmem:[%s4 + $0x1cc] sm:$0xf]
      %v5250 = vld [vmem:[%s4 + $0x1d0] sm:$0xf]
      %v5251 = vld [vmem:[%s4 + $0x1d4] sm:$0xf]
      %v5252 = vld [vmem:[%s4 + $0x1d8] sm:$0xf]
      %v5253 = vld [vmem:[%s4 + $0x1dc] sm:$0xf]
      %v5254 = vld [vmem:[%s4 + $0x1e0] sm:$0xf]
      %v5255 = vld [vmem:[%s4 + $0x1e4] sm:$0xf]
      %v5256 = vld [vmem:[%s4 + $0x1e8] sm:$0xf]
      %v5257 = vld [vmem:[%s4 + $0x1ec] sm:$0xf]
      %v5258 = vld [vmem:[%s4 + $0x1f0] sm:$0xf]
      %v5259 = vld [vmem:[%s4 + $0x1f4] sm:$0xf]
      %v5260 = vld [vmem:[%s4 + $0x1f8] sm:$0xf]
      %v5261 = vld [vmem:[%s4 + $0x1fc] sm:$0xf]
      %v5278 = vunpack.c.l.b16 %v5230
      %v5279 = vunpack.c.l.b16 %v5231
      %v5280 = vunpack.c.l.b16 %v5232
      %v5281 = vunpack.c.l.b16 %v5233
      %v5282 = vunpack.c.l.b16 %v5234
      %v5283 = vunpack.c.l.b16 %v5235
      %v5284 = vunpack.c.l.b16 %v5236
      %v5285 = vunpack.c.l.b16 %v5237
      %v5286 = vunpack.c.l.b16 %v5238
      %v5287 = vunpack.c.l.b16 %v5239
      %v5288 = vunpack.c.l.b16 %v5240
      %v5289 = vunpack.c.l.b16 %v5241
      %v5290 = vunpack.c.l.b16 %v5242
      %v5291 = vunpack.c.l.b16 %v5243
      %v5292 = vunpack.c.l.b16 %v5244
      %v5293 = vunpack.c.l.b16 %v5245
      %v5294 = vpack.c.b16 %v5279, %v5278
      %v5295 = vpack.c.b16 %v5281, %v5280
      %v5296 = vpack.c.b16 %v5283, %v5282
      %v5297 = vpack.c.b16 %v5285, %v5284
      %v5298 = vpack.c.b16 %v5287, %v5286
      %v5299 = vpack.c.b16 %v5289, %v5288
      %v5300 = vpack.c.b16 %v5291, %v5290
      %v5301 = vpack.c.b16 %v5293, %v5292
      %v5303 = vshrl.u32 %v5294, 16
      %v5305 = vshll.u32 %v5294, 16
      %v5307 = vrot.slane %v5305, 1
      %v5308 = vor.u32 %v5303, %v5307
      %v5310 = vshll.u32 %v5295, 16
      %v5312 = vrot.slane %v5310, 1
      %v5313 = vsel %vm914, %v5308, %v5312
      %v5314 = vshrl.u32 %v5295, 16
      %v5316 = vor.u32 %v5314, %v5312
      %v5318 = vshll.u32 %v5296, 16
      %v5320 = vrot.slane %v5318, 1
      %v5321 = vsel %vm914, %v5316, %v5320
      %v5322 = vshrl.u32 %v5296, 16
      %v5324 = vor.u32 %v5322, %v5320
      %v5326 = vshll.u32 %v5297, 16
      %v5328 = vrot.slane %v5326, 1
      %v5329 = vsel %vm914, %v5324, %v5328
      %v5330 = vshrl.u32 %v5297, 16
      %v5332 = vor.u32 %v5330, %v5328
      %v5334 = vshll.u32 %v5298, 16
      %v5336 = vrot.slane %v5334, 1
      %v5337 = vsel %vm914, %v5332, %v5336
      %v5338 = vshrl.u32 %v5298, 16
      %v5340 = vor.u32 %v5338, %v5336
      %v5342 = vshll.u32 %v5299, 16
      %v5344 = vrot.slane %v5342, 1
      %v5345 = vsel %vm914, %v5340, %v5344
      %v5346 = vshrl.u32 %v5299, 16
      %v5348 = vor.u32 %v5346, %v5344
      %v5350 = vshll.u32 %v5300, 16
      %v5352 = vrot.slane %v5350, 1
      %v5353 = vsel %vm914, %v5348, %v5352
      %v5354 = vshrl.u32 %v5300, 16
      %v5356 = vor.u32 %v5354, %v5352
      %v5358 = vshll.u32 %v5301, 16
      %v5360 = vrot.slane %v5358, 1
      %v5361 = vsel %vm914, %v5356, %v5360
      %v5362 = vshrl.u32 %v5301, 16
      %v5364 = vor.u32 %v5362, %v5360
      %v5389 = vunpack.c.l.b16 %v5246
      %v5390 = vunpack.c.l.b16 %v5247
      %v5391 = vunpack.c.l.b16 %v5248
      %v5392 = vunpack.c.l.b16 %v5249
      %v5393 = vunpack.c.l.b16 %v5250
      %v5394 = vunpack.c.l.b16 %v5251
      %v5395 = vunpack.c.l.b16 %v5252
      %v5396 = vunpack.c.l.b16 %v5253
      %v5397 = vunpack.c.l.b16 %v5254
      %v5398 = vunpack.c.l.b16 %v5255
      %v5399 = vunpack.c.l.b16 %v5256
      %v5400 = vunpack.c.l.b16 %v5257
      %v5401 = vunpack.c.l.b16 %v5258
      %v5402 = vunpack.c.l.b16 %v5259
      %v5403 = vunpack.c.l.b16 %v5260
      %v5404 = vunpack.c.l.b16 %v5261
      %v5405 = vpack.c.b16 %v5390, %v5389
      %v5406 = vpack.c.b16 %v5392, %v5391
      %v5407 = vpack.c.b16 %v5394, %v5393
      %v5408 = vpack.c.b16 %v5396, %v5395
      %v5409 = vpack.c.b16 %v5398, %v5397
      %v5410 = vpack.c.b16 %v5400, %v5399
      %v5411 = vpack.c.b16 %v5402, %v5401
      %v5412 = vpack.c.b16 %v5404, %v5403
      %5421 = vmatpush.bf16.msra.mxu0 %v5412
      %5422 = vmatpush.bf16.msra.mxu0 %v5411
      %5423 = vmatpush.bf16.msra.mxu0 %v5410
      %5424 = vmatpush.bf16.msra.mxu0 %v5409
      %5425 = vmatpush.bf16.msra.mxu0 %v5408
      %5426 = vmatpush.bf16.msra.mxu0 %v5407
      %5427 = vmatpush.bf16.msra.mxu0 %v5406
      %5428 = vmatpush.bf16.msra.mxu0 %v5405
      %5429 = vmatmul.bf16.gmra.mxu0 %v5313
      %v5430 = vpop.f32.mrf.mxu0
      %v5431 = vadd.f32 0.0, %v5430
      %v5432 = vpop.f32.mrf.mxu0
      %v5433 = vadd.f32 0.0, %v5432
      %5434 = vmatmul.bf16.gmra.mxu0 %v5321
      %v5435 = vpop.f32.mrf.mxu0
      %v5436 = vadd.f32 0.0, %v5435
      %v5437 = vpop.f32.mrf.mxu0
      %v5438 = vadd.f32 0.0, %v5437
      %5439 = vmatmul.bf16.gmra.mxu0 %v5329
      %v5440 = vpop.f32.mrf.mxu0
      %v5441 = vadd.f32 0.0, %v5440
      %v5442 = vpop.f32.mrf.mxu0
      %v5443 = vadd.f32 0.0, %v5442
      %5444 = vmatmul.bf16.gmra.mxu0 %v5337
      %v5445 = vpop.f32.mrf.mxu0
      %v5446 = vadd.f32 0.0, %v5445
      %v5447 = vpop.f32.mrf.mxu0
      %v5448 = vadd.f32 0.0, %v5447
      %5449 = vmatmul.bf16.gmra.mxu0 %v5345
      %v5450 = vpop.f32.mrf.mxu0
      %v5451 = vadd.f32 0.0, %v5450
      %v5452 = vpop.f32.mrf.mxu0
      %v5453 = vadd.f32 0.0, %v5452
      %5454 = vmatmul.bf16.gmra.mxu0 %v5353
      %v5455 = vpop.f32.mrf.mxu0
      %v5456 = vadd.f32 0.0, %v5455
      %v5457 = vpop.f32.mrf.mxu0
      %v5458 = vadd.f32 0.0, %v5457
      %5459 = vmatmul.bf16.gmra.mxu0 %v5361
      %v5460 = vpop.f32.mrf.mxu0
      %v5461 = vadd.f32 0.0, %v5460
      %v5462 = vpop.f32.mrf.mxu0
      %v5463 = vadd.f32 0.0, %v5462
      %5464 = vmatmul.bf16.gmra.mxu0 %v5364
      %v5465 = vpop.f32.mrf.mxu0
      %v5466 = vadd.f32 0.0, %v5465
      %v5467 = vpop.f32.mrf.mxu0
      %5468 = vdwg.mxu0
      %v5469 = vadd.f32 %v5215, %v5431
      %v5470 = vadd.f32 %v5216, %v5433
      %v5471 = vadd.f32 %v5217, %v5436
      %v5472 = vadd.f32 %v5218, %v5438
      %v5473 = vadd.f32 %v5219, %v5441
      %v5474 = vadd.f32 %v5220, %v5443
      %v5475 = vadd.f32 %v5221, %v5446
      %v5476 = vadd.f32 %v5222, %v5448
      %v5477 = vadd.f32 %v5223, %v5451
      %v5478 = vadd.f32 %v5224, %v5453
      %v5479 = vadd.f32 %v5225, %v5456
      %v5480 = vadd.f32 %v5226, %v5458
      %v5481 = vadd.f32 %v5227, %v5461
      %v5482 = vadd.f32 %v5228, %v5463
      %v5483 = vadd.f32 %v5229, %v5466
      %v5484 = vld [vmem:[#allocation4 + $0x10] sm:$0xe]
      %v5485 = vld [vmem:[%s4 + $0x200] sm:$0xf]
      %v5486 = vld [vmem:[%s4 + $0x204] sm:$0xf]
      %v5487 = vld [vmem:[%s4 + $0x208] sm:$0xf]
      %v5488 = vld [vmem:[%s4 + $0x20c] sm:$0xf]
      %v5489 = vld [vmem:[%s4 + $0x210] sm:$0xf]
      %v5490 = vld [vmem:[%s4 + $0x214] sm:$0xf]
      %v5491 = vld [vmem:[%s4 + $0x218] sm:$0xf]
      %v5492 = vld [vmem:[%s4 + $0x21c] sm:$0xf]
      %v5493 = vld [vmem:[%s4 + $0x220] sm:$0xf]
      %v5494 = vld [vmem:[%s4 + $0x224] sm:$0xf]
      %v5495 = vld [vmem:[%s4 + $0x228] sm:$0xf]
      %v5496 = vld [vmem:[%s4 + $0x22c] sm:$0xf]
      %v5497 = vld [vmem:[%s4 + $0x230] sm:$0xf]
      %v5498 = vld [vmem:[%s4 + $0x234] sm:$0xf]
      %v5499 = vld [vmem:[%s4 + $0x238] sm:$0xf]
      %v5500 = vld [vmem:[%s4 + $0x23c] sm:$0xf]
      %v5502 = vunpack.c.l.b16 %v5484
      %v5503 = vpack.c.b16 %v5279, %v5502
      %v5504 = vrot.slane %v5503, 1
      %v5505 = vrot.slane %v5295, 1
      %v5506 = vsel %vm2212, %v5504, %v5505
      %v5507 = vrot.slane %v5296, 1
      %v5508 = vsel %vm2212, %v5505, %v5507
      %v5509 = vrot.slane %v5297, 1
      %v5510 = vsel %vm2212, %v5507, %v5509
      %v5511 = vrot.slane %v5298, 1
      %v5512 = vsel %vm2212, %v5509, %v5511
      %v5513 = vrot.slane %v5299, 1
      %v5514 = vsel %vm2212, %v5511, %v5513
      %v5515 = vrot.slane %v5300, 1
      %v5516 = vsel %vm2212, %v5513, %v5515
      %v5517 = vrot.slane %v5301, 1
      %v5518 = vsel %vm2212, %v5515, %v5517
      %v5543 = vunpack.c.l.b16 %v5485
      %v5544 = vunpack.c.l.b16 %v5486
      %v5545 = vunpack.c.l.b16 %v5487
      %v5546 = vunpack.c.l.b16 %v5488
      %v5547 = vunpack.c.l.b16 %v5489
      %v5548 = vunpack.c.l.b16 %v5490
      %v5549 = vunpack.c.l.b16 %v5491
      %v5550 = vunpack.c.l.b16 %v5492
      %v5551 = vunpack.c.l.b16 %v5493
      %v5552 = vunpack.c.l.b16 %v5494
      %v5553 = vunpack.c.l.b16 %v5495
      %v5554 = vunpack.c.l.b16 %v5496
      %v5555 = vunpack.c.l.b16 %v5497
      %v5556 = vunpack.c.l.b16 %v5498
      %v5557 = vunpack.c.l.b16 %v5499
      %v5558 = vunpack.c.l.b16 %v5500
      %v5559 = vpack.c.b16 %v5544, %v5543
      %v5560 = vpack.c.b16 %v5546, %v5545
      %v5561 = vpack.c.b16 %v5548, %v5547
      %v5562 = vpack.c.b16 %v5550, %v5549
      %v5563 = vpack.c.b16 %v5552, %v5551
      %v5564 = vpack.c.b16 %v5554, %v5553
      %v5565 = vpack.c.b16 %v5556, %v5555
      %v5566 = vpack.c.b16 %v5558, %v5557
      %5575 = vmatpush.bf16.msra.mxu0 %v5566
      %5576 = vmatpush.bf16.msra.mxu0 %v5565
      %5577 = vmatpush.bf16.msra.mxu0 %v5564
      %5578 = vmatpush.bf16.msra.mxu0 %v5563
      %5579 = vmatpush.bf16.msra.mxu0 %v5562
      %5580 = vmatpush.bf16.msra.mxu0 %v5561
      %5581 = vmatpush.bf16.msra.mxu0 %v5560
      %5582 = vmatpush.bf16.msra.mxu0 %v5559
      %5583 = vmatmul.bf16.gmra.mxu0 %v5506
      %v5584 = vpop.f32.mrf.mxu0
      %v5585 = vadd.f32 0.0, %v5584
      %v5586 = vpop.f32.mrf.mxu0
      %v5587 = vadd.f32 0.0, %v5586
      %5588 = vmatmul.bf16.gmra.mxu0 %v5508
      %v5589 = vpop.f32.mrf.mxu0
      %v5590 = vadd.f32 0.0, %v5589
      %v5591 = vpop.f32.mrf.mxu0
      %v5592 = vadd.f32 0.0, %v5591
      %5593 = vmatmul.bf16.gmra.mxu0 %v5510
      %v5594 = vpop.f32.mrf.mxu0
      %v5595 = vadd.f32 0.0, %v5594
      %v5596 = vpop.f32.mrf.mxu0
      %v5597 = vadd.f32 0.0, %v5596
      %5598 = vmatmul.bf16.gmra.mxu0 %v5512
      %v5599 = vpop.f32.mrf.mxu0
      %v5600 = vadd.f32 0.0, %v5599
      %v5601 = vpop.f32.mrf.mxu0
      %v5602 = vadd.f32 0.0, %v5601
      %5603 = vmatmul.bf16.gmra.mxu0 %v5514
      %v5604 = vpop.f32.mrf.mxu0
      %v5605 = vadd.f32 0.0, %v5604
      %v5606 = vpop.f32.mrf.mxu0
      %v5607 = vadd.f32 0.0, %v5606
      %5608 = vmatmul.bf16.gmra.mxu0 %v5516
      %v5609 = vpop.f32.mrf.mxu0
      %v5610 = vadd.f32 0.0, %v5609
      %v5611 = vpop.f32.mrf.mxu0
      %v5612 = vadd.f32 0.0, %v5611
      %5613 = vmatmul.bf16.gmra.mxu0 %v5518
      %v5614 = vpop.f32.mrf.mxu0
      %v5615 = vadd.f32 0.0, %v5614
      %v5616 = vpop.f32.mrf.mxu0
      %v5617 = vadd.f32 0.0, %v5616
      %5618 = vmatmul.bf16.gmra.mxu0 %v5517
      %v5619 = vpop.f32.mrf.mxu0
      %v5620 = vadd.f32 0.0, %v5619
      %v5621 = vpop.f32.mrf.mxu0
      %5622 = vdwg.mxu0
      %v5623 = vadd.f32 %v5469, %v5585
      %v5624 = vadd.f32 %v5470, %v5587
      %v5625 = vadd.f32 %v5471, %v5590
      %v5626 = vadd.f32 %v5472, %v5592
      %v5627 = vadd.f32 %v5473, %v5595
      %v5628 = vadd.f32 %v5474, %v5597
      %v5629 = vadd.f32 %v5475, %v5600
      %v5630 = vadd.f32 %v5476, %v5602
      %v5631 = vadd.f32 %v5477, %v5605
      %v5632 = vadd.f32 %v5478, %v5607
      %v5633 = vadd.f32 %v5479, %v5610
      %v5634 = vadd.f32 %v5480, %v5612
      %v5635 = vadd.f32 %v5481, %v5615
      %v5636 = vadd.f32 %v5482, %v5617
      %v5637 = vadd.f32 %v5483, %v5620
      %v5638 = vmul.f32 %v5623, %v810
      %v5639 = vmul.f32 %v5624, %v811
      %v5640 = vmul.f32 %v5625, %v812
      %v5641 = vmul.f32 %v5626, %v813
      %v5642 = vmul.f32 %v5627, %v814
      %v5643 = vmul.f32 %v5628, %v815
      %v5644 = vmul.f32 %v5629, %v816
      %v5645 = vmul.f32 %v5630, %v817
      %v5646 = vmul.f32 %v5631, %v818
      %v5647 = vmul.f32 %v5632, %v819
      %v5648 = vmul.f32 %v5633, %v820
      %v5649 = vmul.f32 %v5634, %v821
      %v5650 = vmul.f32 %v5635, %v822
      %v5651 = vmul.f32 %v5636, %v823
      %v5652 = vmul.f32 %v5637, %v824
      %v5653 = vadd.f32 %v5638, %v5639
      %v5654 = vadd.f32 %v5653, %v5640
      %v5655 = vadd.f32 %v5654, %v5641
      %v5656 = vadd.f32 %v5655, %v5642
      %v5657 = vadd.f32 %v5656, %v5643
      %v5658 = vadd.f32 %v5657, %v5644
      %v5659 = vadd.f32 %v5658, %v5645
      %v5660 = vadd.f32 %v5659, %v5646
      %v5661 = vadd.f32 %v5660, %v5647
      %v5662 = vadd.f32 %v5661, %v5648
      %v5663 = vadd.f32 %v5662, %v5649
      %v5664 = vadd.f32 %v5663, %v5650
      %v5665 = vadd.f32 %v5664, %v5651
      %v5666 = vadd.f32 %v5665, %v5652
      %v5667 = vrot.slane %v5666, 4
      %v5668 = vadd.f32 %v5666, %v5667
      %v5669 = vrot.slane %v5668, 2
      %v5670 = vadd.f32 %v5668, %v5669
      %v5671 = vrot.slane %v5670, 1
      %v5672 = vadd.f32 %v5670, %v5671
      %v5673 = vadd.f32 %v5672, 0.0
      %v5674 = vmul.f32 %v5638, %v5623
      %v5675 = vmul.f32 %v5639, %v5624
      %v5676 = vmul.f32 %v5640, %v5625
      %v5677 = vmul.f32 %v5641, %v5626
      %v5678 = vmul.f32 %v5642, %v5627
      %v5679 = vmul.f32 %v5643, %v5628
      %v5680 = vmul.f32 %v5644, %v5629
      %v5681 = vmul.f32 %v5645, %v5630
      %v5682 = vmul.f32 %v5646, %v5631
      %v5683 = vmul.f32 %v5647, %v5632
      %v5684 = vmul.f32 %v5648, %v5633
      %v5685 = vmul.f32 %v5649, %v5634
      %v5686 = vmul.f32 %v5650, %v5635
      %v5687 = vmul.f32 %v5651, %v5636
      %v5688 = vmul.f32 %v5652, %v5637
      %v5689 = vadd.f32 %v5674, %v5675
      %v5690 = vadd.f32 %v5689, %v5676
      %v5691 = vadd.f32 %v5690, %v5677
      %v5692 = vadd.f32 %v5691, %v5678
      %v5693 = vadd.f32 %v5692, %v5679
      %v5694 = vadd.f32 %v5693, %v5680
      %v5695 = vadd.f32 %v5694, %v5681
      %v5696 = vadd.f32 %v5695, %v5682
      %v5697 = vadd.f32 %v5696, %v5683
      %v5698 = vadd.f32 %v5697, %v5684
      %v5699 = vadd.f32 %v5698, %v5685
      %v5700 = vadd.f32 %v5699, %v5686
      %v5701 = vadd.f32 %v5700, %v5687
      %v5702 = vadd.f32 %v5701, %v5688
      %v5703 = vrot.slane %v5702, 4
      %v5704 = vadd.f32 %v5702, %v5703
      %v5705 = vrot.slane %v5704, 2
      %v5706 = vadd.f32 %v5704, %v5705
      %v5707 = vrot.slane %v5706, 1
      %v5708 = vadd.f32 %v5706, %v5707
      %v5709 = vadd.f32 %v5708, 0.0
      %v5710 = vpack.c.bf16 %v5623, %v5623
      %v5711 = vpack.c.bf16 %v5624, %v5624
      %v5712 = vpack.c.bf16 %v5625, %v5625
      %v5713 = vpack.c.bf16 %v5626, %v5626
      %v5714 = vpack.c.bf16 %v5627, %v5627
      %v5715 = vpack.c.bf16 %v5628, %v5628
      %v5716 = vpack.c.bf16 %v5629, %v5629
      %v5717 = vpack.c.bf16 %v5630, %v5630
      %v5718 = vpack.c.bf16 %v5631, %v5631
      %v5719 = vpack.c.bf16 %v5632, %v5632
      %v5720 = vpack.c.bf16 %v5633, %v5633
      %v5721 = vpack.c.bf16 %v5634, %v5634
      %v5722 = vpack.c.bf16 %v5635, %v5635
      %v5723 = vpack.c.bf16 %v5636, %v5636
      %v5724 = vpack.c.bf16 %v5637, %v5637
      %v5726 = vshrl.u32 %v5710, 16
      %v5728 = vrot.slane %v5726, 7
      %v5729 = vshll.u32 %v5710, 16
      %v5731 = vor.u32 %v5728, %v5729
      %v5732 = vrot.slane %v5728, 4
      %v5734 = vshrl.u32 %v5711, 16
      %v5736 = vrot.slane %v5734, 7
      %v5737 = vshll.u32 %v5711, 16
      %v5739 = vor.u32 %v5736, %v5737
      %v5740 = vsel %vm1707, %v5732, %v5739
      %v5741 = vrot.slane %v5736, 4
      %v5743 = vshrl.u32 %v5712, 16
      %v5745 = vrot.slane %v5743, 7
      %v5746 = vshll.u32 %v5712, 16
      %v5748 = vor.u32 %v5745, %v5746
      %v5749 = vsel %vm1707, %v5741, %v5748
      %v5750 = vrot.slane %v5745, 4
      %v5752 = vshrl.u32 %v5713, 16
      %v5754 = vrot.slane %v5752, 7
      %v5755 = vshll.u32 %v5713, 16
      %v5757 = vor.u32 %v5754, %v5755
      %v5758 = vsel %vm1707, %v5750, %v5757
      %v5759 = vrot.slane %v5754, 4
      %v5761 = vshrl.u32 %v5714, 16
      %v5763 = vrot.slane %v5761, 7
      %v5764 = vshll.u32 %v5714, 16
      %v5766 = vor.u32 %v5763, %v5764
      %v5767 = vsel %vm1707, %v5759, %v5766
      %v5768 = vrot.slane %v5763, 4
      %v5770 = vshrl.u32 %v5715, 16
      %v5772 = vrot.slane %v5770, 7
      %v5773 = vshll.u32 %v5715, 16
      %v5775 = vor.u32 %v5772, %v5773
      %v5776 = vsel %vm1707, %v5768, %v5775
      %v5777 = vrot.slane %v5772, 4
      %v5779 = vshrl.u32 %v5716, 16
      %v5781 = vrot.slane %v5779, 7
      %v5782 = vshll.u32 %v5716, 16
      %v5784 = vor.u32 %v5781, %v5782
      %v5785 = vsel %vm1707, %v5777, %v5784
      %v5786 = vrot.slane %v5781, 4
      %v5788 = vshrl.u32 %v5717, 16
      %v5790 = vrot.slane %v5788, 7
      %v5791 = vshll.u32 %v5717, 16
      %v5793 = vor.u32 %v5790, %v5791
      %v5794 = vsel %vm1707, %v5786, %v5793
      %v5795 = vrot.slane %v5790, 4
      %v5797 = vshrl.u32 %v5718, 16
      %v5799 = vrot.slane %v5797, 7
      %v5800 = vshll.u32 %v5718, 16
      %v5802 = vor.u32 %v5799, %v5800
      %v5803 = vsel %vm1707, %v5795, %v5802
      %v5804 = vrot.slane %v5799, 4
      %v5806 = vshrl.u32 %v5719, 16
      %v5808 = vrot.slane %v5806, 7
      %v5809 = vshll.u32 %v5719, 16
      %v5811 = vor.u32 %v5808, %v5809
      %v5812 = vsel %vm1707, %v5804, %v5811
      %v5813 = vrot.slane %v5808, 4
      %v5815 = vshrl.u32 %v5720, 16
      %v5817 = vrot.slane %v5815, 7
      %v5818 = vshll.u32 %v5720, 16
      %v5820 = vor.u32 %v5817, %v5818
      %v5821 = vsel %vm1707, %v5813, %v5820
      %v5822 = vrot.slane %v5817, 4
      %v5824 = vshrl.u32 %v5721, 16
      %v5826 = vrot.slane %v5824, 7
      %v5827 = vshll.u32 %v5721, 16
      %v5829 = vor.u32 %v5826, %v5827
      %v5830 = vsel %vm1707, %v5822, %v5829
      %v5831 = vrot.slane %v5826, 4
      %v5833 = vshrl.u32 %v5722, 16
      %v5835 = vrot.slane %v5833, 7
      %v5836 = vshll.u32 %v5722, 16
      %v5838 = vor.u32 %v5835, %v5836
      %v5839 = vsel %vm1707, %v5831, %v5838
      %v5840 = vrot.slane %v5835, 4
      %v5842 = vshrl.u32 %v5723, 16
      %v5844 = vrot.slane %v5842, 7
      %v5845 = vshll.u32 %v5723, 16
      %v5847 = vor.u32 %v5844, %v5845
      %v5848 = vsel %vm1707, %v5840, %v5847
      %v5849 = vrot.slane %v5844, 4
      %v5851 = vshrl.u32 %v5724, 16
      %v5853 = vrot.slane %v5851, 7
      %v5854 = vshll.u32 %v5724, 16
      %v5856 = vor.u32 %v5853, %v5854
      %v5857 = vsel %vm1707, %v5849, %v5856
      %v5858 = vrot.slane %v5853, 4
      %v5875 = vld [vmem:[#allocation5 + $0x8] sm:$0xf]
      %v5876 = vsel %vm274, %v5731, %v5875
      %5877 = vst [vmem:[#allocation5 + $0x8] sm:$0xf] %v5876
      %5878 = vst [vmem:[#allocation5 + $0xc] sm:$0xf] %v5740
      %5879 = vst [vmem:[#allocation5 + $0x10] sm:$0xf] %v5749
      %5880 = vst [vmem:[#allocation5 + $0x14] sm:$0xf] %v5758
      %5881 = vst [vmem:[#allocation5 + $0x18] sm:$0xf] %v5767
      %5882 = vst [vmem:[#allocation5 + $0x1c] sm:$0xf] %v5776
      %5883 = vst [vmem:[#allocation5 + $0x20] sm:$0xf] %v5785
      %5884 = vst [vmem:[#allocation5 + $0x24] sm:$0xf] %v5794
      %5885 = vst [vmem:[#allocation5 + $0x28] sm:$0xf] %v5803
      %5886 = vst [vmem:[#allocation5 + $0x2c] sm:$0xf] %v5812
      %5887 = vst [vmem:[#allocation5 + $0x30] sm:$0xf] %v5821
      %5888 = vst [vmem:[#allocation5 + $0x34] sm:$0xf] %v5830
      %5889 = vst [vmem:[#allocation5 + $0x38] sm:$0xf] %v5839
      %5890 = vst [vmem:[#allocation5 + $0x3c] sm:$0xf] %v5848
      %5891 = vst [vmem:[#allocation5 + $0x40] sm:$0xf] %v5857
      %v5892 = vld [vmem:[#allocation5 + $0x44] sm:$0x1]
      %v5893 = vsel %vm269, %v5858, %v5892
      %5894 = vst [vmem:[#allocation5 + $0x44] sm:$0x1] %v5893
      %v5895 = vmul.f32 %v5673, 0.015625
      %v5896 = vmul.f32 %v5709, 0.015625
      %v5897 = vmul.f32 %v5895, %v5895
      %v5898 = vsub.f32 %v5896, %v5897
      %v5899 = vmax.f32 %v5898, 0.0
      %v5900 = vadd.f32 %v5899, 1e-05
      %v5901 = vrsqrt.pop %v5900
      %v5902 = vmul.f32 %v5901, %v5900
      %v5903 = vmul.f32 %v5902, %v5901
      %v5904 = vmul.f32 0.5, %v5903
      %v5905 = vsub.f32 1.5, %v5904
      %v5906 = vmul.f32 %v5901, %v5905
      %vm5907 = vweird.f32 %v5900
      %vm5908 = vweird.f32 %v5901
      %vm5909 = vmor %vm5907, %vm5908
      %v5910 = vsel %vm5909, %v5901, %v5906
      %v5911 = vld [vmem:[#allocation5 + $0x8] sm:$0xf]
      %v5912 = vld [vmem:[#allocation5 + $0xc] sm:$0xf]
      %v5913 = vld [vmem:[#allocation5 + $0x10] sm:$0xf]
      %v5914 = vld [vmem:[#allocation5 + $0x14] sm:$0xf]
      %v5915 = vld [vmem:[#allocation5 + $0x18] sm:$0xf]
      %v5916 = vld [vmem:[#allocation5 + $0x1c] sm:$0xf]
      %v5917 = vld [vmem:[#allocation5 + $0x20] sm:$0xf]
      %v5918 = vld [vmem:[#allocation5 + $0x24] sm:$0xf]
      %v5919 = vld [vmem:[#allocation5 + $0x28] sm:$0xf]
      %v5920 = vld [vmem:[#allocation5 + $0x2c] sm:$0xf]
      %v5921 = vld [vmem:[#allocation5 + $0x30] sm:$0xf]
      %v5922 = vld [vmem:[#allocation5 + $0x34] sm:$0xf]
      %v5923 = vld [vmem:[#allocation5 + $0x38] sm:$0xf]
      %v5924 = vld [vmem:[#allocation5 + $0x3c] sm:$0xf]
      %v5925 = vld [vmem:[#allocation5 + $0x40] sm:$0xf]
      %v5926 = vld [vmem:[#allocation5 + $0x44] sm:$0x1]
      %v5927 = vunpack.c.l.bf16 %v5911
      %v5928 = vunpack.c.l.bf16 %v5912
      %v5929 = vunpack.c.l.bf16 %v5913
      %v5930 = vunpack.c.l.bf16 %v5914
      %v5931 = vunpack.c.l.bf16 %v5915
      %v5932 = vunpack.c.l.bf16 %v5916
      %v5933 = vunpack.c.l.bf16 %v5917
      %v5934 = vunpack.c.l.bf16 %v5918
      %v5935 = vunpack.c.l.bf16 %v5919
      %v5936 = vunpack.c.l.bf16 %v5920
      %v5937 = vunpack.c.l.bf16 %v5921
      %v5938 = vunpack.c.l.bf16 %v5922
      %v5939 = vunpack.c.l.bf16 %v5923
      %v5940 = vunpack.c.l.bf16 %v5924
      %v5941 = vunpack.c.l.bf16 %v5925
      %v5942 = vunpack.c.l.bf16 %v5926
      %v5943 = vsub.f32 %v5927, %v5895
      %v5944 = vsub.f32 %v5928, %v5895
      %v5945 = vsub.f32 %v5929, %v5895
      %v5946 = vsub.f32 %v5930, %v5895
      %v5947 = vsub.f32 %v5931, %v5895
      %v5948 = vsub.f32 %v5932, %v5895
      %v5949 = vsub.f32 %v5933, %v5895
      %v5950 = vsub.f32 %v5934, %v5895
      %v5951 = vsub.f32 %v5935, %v5895
      %v5952 = vsub.f32 %v5936, %v5895
      %v5953 = vsub.f32 %v5937, %v5895
      %v5954 = vsub.f32 %v5938, %v5895
      %v5955 = vsub.f32 %v5939, %v5895
      %v5956 = vsub.f32 %v5940, %v5895
      %v5957 = vsub.f32 %v5941, %v5895
      %v5958 = vsub.f32 %v5942, %v5895
      %v5959 = vmul.f32 %v5943, %v5910
      %v5960 = vmul.f32 %v5944, %v5910
      %v5961 = vmul.f32 %v5945, %v5910
      %v5962 = vmul.f32 %v5946, %v5910
      %v5963 = vmul.f32 %v5947, %v5910
      %v5964 = vmul.f32 %v5948, %v5910
      %v5965 = vmul.f32 %v5949, %v5910
      %v5966 = vmul.f32 %v5950, %v5910
      %v5967 = vmul.f32 %v5951, %v5910
      %v5968 = vmul.f32 %v5952, %v5910
      %v5969 = vmul.f32 %v5953, %v5910
      %v5970 = vmul.f32 %v5954, %v5910
      %v5971 = vmul.f32 %v5955, %v5910
      %v5972 = vmul.f32 %v5956, %v5910
      %v5973 = vmul.f32 %v5957, %v5910
      %v5974 = vmul.f32 %v5958, %v5910
      %vm5975 = vcmp.gt.f32.partialorder %v5959, 0.0
      %vm5976 = vcmp.gt.f32.partialorder %v5960, 0.0
      %vm5977 = vcmp.gt.f32.partialorder %v5961, 0.0
      %vm5978 = vcmp.gt.f32.partialorder %v5962, 0.0
      %vm5979 = vcmp.gt.f32.partialorder %v5963, 0.0
      %vm5980 = vcmp.gt.f32.partialorder %v5964, 0.0
      %vm5981 = vcmp.gt.f32.partialorder %v5965, 0.0
      %vm5982 = vcmp.gt.f32.partialorder %v5966, 0.0
      %vm5983 = vcmp.gt.f32.partialorder %v5967, 0.0
      %vm5984 = vcmp.gt.f32.partialorder %v5968, 0.0
      %vm5985 = vcmp.gt.f32.partialorder %v5969, 0.0
      %vm5986 = vcmp.gt.f32.partialorder %v5970, 0.0
      %vm5987 = vcmp.gt.f32.partialorder %v5971, 0.0
      %vm5988 = vcmp.gt.f32.partialorder %v5972, 0.0
      %vm5989 = vcmp.gt.f32.partialorder %v5973, 0.0
      %vm5990 = vcmp.gt.f32.partialorder %v5974, 0.0
      %v5991 = vmul.f32 %v5959, 0.2
      %v5992 = vmul.f32 %v5960, 0.2
      %v5993 = vmul.f32 %v5961, 0.2
      %v5994 = vmul.f32 %v5962, 0.2
      %v5995 = vmul.f32 %v5963, 0.2
      %v5996 = vmul.f32 %v5964, 0.2
      %v5997 = vmul.f32 %v5965, 0.2
      %v5998 = vmul.f32 %v5966, 0.2
      %v5999 = vmul.f32 %v5967, 0.2
      %v6000 = vmul.f32 %v5968, 0.2
      %v6001 = vmul.f32 %v5969, 0.2
      %v6002 = vmul.f32 %v5970, 0.2
      %v6003 = vmul.f32 %v5971, 0.2
      %v6004 = vmul.f32 %v5972, 0.2
      %v6005 = vmul.f32 %v5973, 0.2
      %v6006 = vmul.f32 %v5974, 0.2
      %v6007 = vsel %vm5975, %v5959, %v5991
      %v6008 = vsel %vm5976, %v5960, %v5992
      %v6009 = vsel %vm5977, %v5961, %v5993
      %v6010 = vsel %vm5978, %v5962, %v5994
      %v6011 = vsel %vm5979, %v5963, %v5995
      %v6012 = vsel %vm5980, %v5964, %v5996
      %v6013 = vsel %vm5981, %v5965, %v5997
      %v6014 = vsel %vm5982, %v5966, %v5998
      %v6015 = vsel %vm5983, %v5967, %v5999
      %v6016 = vsel %vm5984, %v5968, %v6000
      %v6017 = vsel %vm5985, %v5969, %v6001
      %v6018 = vsel %vm5986, %v5970, %v6002
      %v6019 = vsel %vm5987, %v5971, %v6003
      %v6020 = vsel %vm5988, %v5972, %v6004
      %v6021 = vsel %vm5989, %v5973, %v6005
      %v6022 = vsel %vm5990, %v5974, %v6006
      %v6023 = vmul.f32 %v6007, %v3836
      %v6024 = vmul.f32 %v6008, %v3838
      %v6025 = vmul.f32 %v6009, %v3840
      %v6026 = vmul.f32 %v6010, %v3842
      %v6027 = vmul.f32 %v6011, %v3844
      %v6028 = vmul.f32 %v6012, %v3846
      %v6029 = vmul.f32 %v6013, %v3848
      %v6030 = vmul.f32 %v6014, %v3850
      %v6031 = vmul.f32 %v6015, %v3852
      %v6032 = vmul.f32 %v6016, %v3854
      %v6033 = vmul.f32 %v6017, %v3856
      %v6034 = vmul.f32 %v6018, %v3858
      %v6035 = vmul.f32 %v6019, %v3860
      %v6036 = vmul.f32 %v6020, %v3862
      %v6037 = vmul.f32 %v6021, %v3864
      %v6038 = vmul.f32 %v6022, %v3863
      %v6039 = vpack.c.bf16 %v6023, %v6023
      %v6040 = vpack.c.bf16 %v6024, %v6024
      %v6041 = vpack.c.bf16 %v6025, %v6025
      %v6042 = vpack.c.bf16 %v6026, %v6026
      %v6043 = vpack.c.bf16 %v6027, %v6027
      %v6044 = vpack.c.bf16 %v6028, %v6028
      %v6045 = vpack.c.bf16 %v6029, %v6029
      %v6046 = vpack.c.bf16 %v6030, %v6030
      %v6047 = vpack.c.bf16 %v6031, %v6031
      %v6048 = vpack.c.bf16 %v6032, %v6032
      %v6049 = vpack.c.bf16 %v6033, %v6033
      %v6050 = vpack.c.bf16 %v6034, %v6034
      %v6051 = vpack.c.bf16 %v6035, %v6035
      %v6052 = vpack.c.bf16 %v6036, %v6036
      %v6053 = vpack.c.bf16 %v6037, %v6037
      %v6054 = vpack.c.bf16 %v6038, %v6038
      %v6055 = vsel %vm274, %v6039, %v5911
      %6056 = vst [vmem:[#allocation5 + $0x8] sm:$0xf] %v6055
      %6057 = vst [vmem:[#allocation5 + $0xc] sm:$0xf] %v6040
      %6058 = vst [vmem:[#allocation5 + $0x10] sm:$0xf] %v6041
      %6059 = vst [vmem:[#allocation5 + $0x14] sm:$0xf] %v6042
      %6060 = vst [vmem:[#allocation5 + $0x18] sm:$0xf] %v6043
      %6061 = vst [vmem:[#allocation5 + $0x1c] sm:$0xf] %v6044
      %6062 = vst [vmem:[#allocation5 + $0x20] sm:$0xf] %v6045
      %6063 = vst [vmem:[#allocation5 + $0x24] sm:$0xf] %v6046
      %6064 = vst [vmem:[#allocation5 + $0x28] sm:$0xf] %v6047
      %6065 = vst [vmem:[#allocation5 + $0x2c] sm:$0xf] %v6048
      %6066 = vst [vmem:[#allocation5 + $0x30] sm:$0xf] %v6049
      %6067 = vst [vmem:[#allocation5 + $0x34] sm:$0xf] %v6050
      %6068 = vst [vmem:[#allocation5 + $0x38] sm:$0xf] %v6051
      %6069 = vst [vmem:[#allocation5 + $0x3c] sm:$0xf] %v6052
      %6070 = vst [vmem:[#allocation5 + $0x40] sm:$0xf] %v6053
      %v6071 = vld [vmem:[#allocation5 + $0x44] sm:$0x1]
      %v6072 = vsel %vm269, %v6054, %v6071
      %6073 = vst [vmem:[#allocation5 + $0x44] sm:$0x1] %v6072
      %v6074 = vld [vmem:[%s5] sm:$0xff]
      %v6075 = vld [vmem:[%s5 + $0x8] sm:$0x1]
      %v6076 = vld [vmem:[#allocation5] sm:$0xf]
      %v6077 = vld [vmem:[#allocation5 + $0x4] sm:$0xf]
      %v6078 = vld [vmem:[#allocation5 + $0x8] sm:$0xf]
      %v6079 = vld [vmem:[#allocation5 + $0xc] sm:$0xf]
      %v6080 = vld [vmem:[#allocation5 + $0x10] sm:$0xf]
      %v6081 = vld [vmem:[#allocation5 + $0x14] sm:$0xf]
      %v6082 = vld [vmem:[#allocation5 + $0x18] sm:$0xf]
      %v6083 = vld [vmem:[#allocation5 + $0x1c] sm:$0xf]
      %v6084 = vld [vmem:[#allocation5 + $0x20] sm:$0xf]
      %v6085 = vld [vmem:[#allocation5 + $0x24] sm:$0xf]
      %v6086 = vld [vmem:[#allocation5 + $0x28] sm:$0xf]
      %v6087 = vld [vmem:[#allocation5 + $0x2c] sm:$0xf]
      %v6088 = vld [vmem:[#allocation5 + $0x30] sm:$0xf]
      %v6089 = vld [vmem:[#allocation5 + $0x34] sm:$0xf]
      %v6090 = vld [vmem:[#allocation5 + $0x38] sm:$0xf]
      %v6091 = vunpack.c.l.bf16 %v6076
      %v6092 = vunpack.c.l.bf16 %v6077
      %v6093 = vunpack.c.l.bf16 %v6078
      %v6094 = vunpack.c.l.bf16 %v6079
      %v6095 = vunpack.c.l.bf16 %v6080
      %v6096 = vunpack.c.l.bf16 %v6081
      %v6097 = vunpack.c.l.bf16 %v6082
      %v6098 = vunpack.c.l.bf16 %v6083
      %v6099 = vunpack.c.l.bf16 %v6084
      %v6100 = vunpack.c.l.bf16 %v6085
      %v6101 = vunpack.c.l.bf16 %v6086
      %v6102 = vunpack.c.l.bf16 %v6087
      %v6103 = vunpack.c.l.bf16 %v6088
      %v6104 = vunpack.c.l.bf16 %v6089
      %v6105 = vunpack.c.l.bf16 %v6090
      %v6106 = vperm.slane %v6074, 0
      %v6107 = vmul.f32 %v6091, %v6106
      %v6108 = vmul.f32 %v6092, %v6106
      %v6109 = vmul.f32 %v6093, %v6106
      %v6110 = vmul.f32 %v6094, %v6106
      %v6111 = vmul.f32 %v6095, %v6106
      %v6112 = vmul.f32 %v6096, %v6106
      %v6113 = vmul.f32 %v6097, %v6106
      %v6114 = vmul.f32 %v6098, %v6106
      %v6115 = vmul.f32 %v6099, %v6106
      %v6116 = vmul.f32 %v6100, %v6106
      %v6117 = vmul.f32 %v6101, %v6106
      %v6118 = vmul.f32 %v6102, %v6106
      %v6119 = vmul.f32 %v6103, %v6106
      %v6120 = vmul.f32 %v6104, %v6106
      %v6121 = vmul.f32 %v6105, %v6106
      %v6122 = vld [vmem:[#allocation5 + $0x3c] sm:$0x1]
      %v6123 = vunpack.c.l.bf16 %v6122
      %v6124 = vperm.slane %v6074, 1
      %v6125 = vmul.f32 %v6091, %v6124
      %v6126 = vmul.f32 %v6092, %v6124
      %v6127 = vmul.f32 %v6093, %v6124
      %v6128 = vmul.f32 %v6094, %v6124
      %v6129 = vmul.f32 %v6095, %v6124
      %v6130 = vmul.f32 %v6096, %v6124
      %v6131 = vmul.f32 %v6097, %v6124
      %v6132 = vmul.f32 %v6098, %v6124
      %v6133 = vmul.f32 %v6099, %v6124
      %v6134 = vmul.f32 %v6100, %v6124
      %v6135 = vmul.f32 %v6101, %v6124
      %v6136 = vmul.f32 %v6102, %v6124
      %v6137 = vmul.f32 %v6103, %v6124
      %v6138 = vmul.f32 %v6104, %v6124
      %v6139 = vmul.f32 %v6105, %v6124
      %v6140 = vmul.f32 %v6123, %v6124
      %vm6157 = vcmask 1046528
      %v6158 = vrot.slane %v6125, 1
      %v6159 = vrot.slane %v6126, 1
      %v6160 = vsel %vm6157, %v6158, %v6159
      %v6161 = vrot.slane %v6127, 1
      %v6162 = vsel %vm6157, %v6159, %v6161
      %v6163 = vrot.slane %v6128, 1
      %v6164 = vsel %vm6157, %v6161, %v6163
      %v6165 = vrot.slane %v6129, 1
      %v6166 = vsel %vm6157, %v6163, %v6165
      %v6167 = vrot.slane %v6130, 1
      %v6168 = vsel %vm6157, %v6165, %v6167
      %v6169 = vrot.slane %v6131, 1
      %v6170 = vsel %vm6157, %v6167, %v6169
      %v6171 = vrot.slane %v6132, 1
      %v6172 = vsel %vm6157, %v6169, %v6171
      %v6173 = vrot.slane %v6133, 1
      %v6174 = vsel %vm6157, %v6171, %v6173
      %v6175 = vrot.slane %v6134, 1
      %v6176 = vsel %vm6157, %v6173, %v6175
      %v6177 = vrot.slane %v6135, 1
      %v6178 = vsel %vm6157, %v6175, %v6177
      %v6179 = vrot.slane %v6136, 1
      %v6180 = vsel %vm6157, %v6177, %v6179
      %v6181 = vrot.slane %v6137, 1
      %v6182 = vsel %vm6157, %v6179, %v6181
      %v6183 = vrot.slane %v6138, 1
      %v6184 = vsel %vm6157, %v6181, %v6183
      %v6185 = vrot.slane %v6139, 1
      %v6186 = vsel %vm6157, %v6183, %v6185
      %v6187 = vrot.slane %v6140, 1
      %v6188 = vsel %vm6157, %v6185, %v6187
      %v6204 = vadd.f32 %v6107, %v6160
      %v6205 = vadd.f32 %v6108, %v6162
      %v6206 = vadd.f32 %v6109, %v6164
      %v6207 = vadd.f32 %v6110, %v6166
      %v6208 = vadd.f32 %v6111, %v6168
      %v6209 = vadd.f32 %v6112, %v6170
      %v6210 = vadd.f32 %v6113, %v6172
      %v6211 = vadd.f32 %v6114, %v6174
      %v6212 = vadd.f32 %v6115, %v6176
      %v6213 = vadd.f32 %v6116, %v6178
      %v6214 = vadd.f32 %v6117, %v6180
      %v6215 = vadd.f32 %v6118, %v6182
      %v6216 = vadd.f32 %v6119, %v6184
      %v6217 = vadd.f32 %v6120, %v6186
      %v6218 = vadd.f32 %v6121, %v6188
      %v6219 = vld [vmem:[#allocation5] sm:$0xe]
      %v6220 = vunpack.c.l.bf16 %v6219
      %v6221 = vperm.slane %v6074, 2
      %v6222 = vmul.f32 %v6220, %v6221
      %v6223 = vmul.f32 %v6092, %v6221
      %v6224 = vmul.f32 %v6093, %v6221
      %v6225 = vmul.f32 %v6094, %v6221
      %v6226 = vmul.f32 %v6095, %v6221
      %v6227 = vmul.f32 %v6096, %v6221
      %v6228 = vmul.f32 %v6097, %v6221
      %v6229 = vmul.f32 %v6098, %v6221
      %v6230 = vmul.f32 %v6099, %v6221
      %v6231 = vmul.f32 %v6100, %v6221
      %v6232 = vmul.f32 %v6101, %v6221
      %v6233 = vmul.f32 %v6102, %v6221
      %v6234 = vmul.f32 %v6103, %v6221
      %v6235 = vmul.f32 %v6104, %v6221
      %v6236 = vmul.f32 %v6105, %v6221
      %v6237 = vmul.f32 %v6123, %v6221
      %v6254 = vrot.slane %v6222, 2
      %v6255 = vrot.slane %v6223, 2
      %v6256 = vsel %vm436, %v6254, %v6255
      %v6257 = vrot.slane %v6224, 2
      %v6258 = vsel %vm436, %v6255, %v6257
      %v6259 = vrot.slane %v6225, 2
      %v6260 = vsel %vm436, %v6257, %v6259
      %v6261 = vrot.slane %v6226, 2
      %v6262 = vsel %vm436, %v6259, %v6261
      %v6263 = vrot.slane %v6227, 2
      %v6264 = vsel %vm436, %v6261, %v6263
      %v6265 = vrot.slane %v6228, 2
      %v6266 = vsel %vm436, %v6263, %v6265
      %v6267 = vrot.slane %v6229, 2
      %v6268 = vsel %vm436, %v6265, %v6267
      %v6269 = vrot.slane %v6230, 2
      %v6270 = vsel %vm436, %v6267, %v6269
      %v6271 = vrot.slane %v6231, 2
      %v6272 = vsel %vm436, %v6269, %v6271
      %v6273 = vrot.slane %v6232, 2
      %v6274 = vsel %vm436, %v6271, %v6273
      %v6275 = vrot.slane %v6233, 2
      %v6276 = vsel %vm436, %v6273, %v6275
      %v6277 = vrot.slane %v6234, 2
      %v6278 = vsel %vm436, %v6275, %v6277
      %v6279 = vrot.slane %v6235, 2
      %v6280 = vsel %vm436, %v6277, %v6279
      %v6281 = vrot.slane %v6236, 2
      %v6282 = vsel %vm436, %v6279, %v6281
      %v6283 = vrot.slane %v6237, 2
      %v6284 = vsel %vm436, %v6281, %v6283
      %v6300 = vadd.f32 %v6204, %v6256
      %v6301 = vadd.f32 %v6205, %v6258
      %v6302 = vadd.f32 %v6206, %v6260
      %v6303 = vadd.f32 %v6207, %v6262
      %v6304 = vadd.f32 %v6208, %v6264
      %v6305 = vadd.f32 %v6209, %v6266
      %v6306 = vadd.f32 %v6210, %v6268
      %v6307 = vadd.f32 %v6211, %v6270
      %v6308 = vadd.f32 %v6212, %v6272
      %v6309 = vadd.f32 %v6213, %v6274
      %v6310 = vadd.f32 %v6214, %v6276
      %v6311 = vadd.f32 %v6215, %v6278
      %v6312 = vadd.f32 %v6216, %v6280
      %v6313 = vadd.f32 %v6217, %v6282
      %v6314 = vadd.f32 %v6218, %v6284
      %v6315 = vld [vmem:[#allocation5 + $0x3c] sm:$0xf]
      %v6316 = vld [vmem:[#allocation5 + $0x40] sm:$0xf]
      %v6317 = vunpack.c.l.bf16 %v6315
      %v6318 = vunpack.c.l.bf16 %v6316
      %v6319 = vperm.slane %v6074, 3
      %v6320 = vmul.f32 %v6093, %v6319
      %v6321 = vmul.f32 %v6094, %v6319
      %v6322 = vmul.f32 %v6095, %v6319
      %v6323 = vmul.f32 %v6096, %v6319
      %v6324 = vmul.f32 %v6097, %v6319
      %v6325 = vmul.f32 %v6098, %v6319
      %v6326 = vmul.f32 %v6099, %v6319
      %v6327 = vmul.f32 %v6100, %v6319
      %v6328 = vmul.f32 %v6101, %v6319
      %v6329 = vmul.f32 %v6102, %v6319
      %v6330 = vmul.f32 %v6103, %v6319
      %v6331 = vmul.f32 %v6104, %v6319
      %v6332 = vmul.f32 %v6105, %v6319
      %v6333 = vmul.f32 %v6317, %v6319
      %v6334 = vmul.f32 %v6318, %v6319
      %v6335 = vadd.f32 %v6300, %v6320
      %v6336 = vadd.f32 %v6301, %v6321
      %v6337 = vadd.f32 %v6302, %v6322
      %v6338 = vadd.f32 %v6303, %v6323
      %v6339 = vadd.f32 %v6304, %v6324
      %v6340 = vadd.f32 %v6305, %v6325
      %v6341 = vadd.f32 %v6306, %v6326
      %v6342 = vadd.f32 %v6307, %v6327
      %v6343 = vadd.f32 %v6308, %v6328
      %v6344 = vadd.f32 %v6309, %v6329
      %v6345 = vadd.f32 %v6310, %v6330
      %v6346 = vadd.f32 %v6311, %v6331
      %v6347 = vadd.f32 %v6312, %v6332
      %v6348 = vadd.f32 %v6313, %v6333
      %v6349 = vadd.f32 %v6314, %v6334
      %v6350 = vld [vmem:[#allocation5 + $0x44] sm:$0x1]
      %v6351 = vunpack.c.l.bf16 %v6350
      %v6352 = vperm.slane %v6074, 4
      %v6353 = vmul.f32 %v6093, %v6352
      %v6354 = vmul.f32 %v6094, %v6352
      %v6355 = vmul.f32 %v6095, %v6352
      %v6356 = vmul.f32 %v6096, %v6352
      %v6357 = vmul.f32 %v6097, %v6352
      %v6358 = vmul.f32 %v6098, %v6352
      %v6359 = vmul.f32 %v6099, %v6352
      %v6360 = vmul.f32 %v6100, %v6352
      %v6361 = vmul.f32 %v6101, %v6352
      %v6362 = vmul.f32 %v6102, %v6352
      %v6363 = vmul.f32 %v6103, %v6352
      %v6364 = vmul.f32 %v6104, %v6352
      %v6365 = vmul.f32 %v6105, %v6352
      %v6366 = vmul.f32 %v6317, %v6352
      %v6367 = vmul.f32 %v6318, %v6352
      %v6368 = vmul.f32 %v6351, %v6352
      %v6385 = vrot.slane %v6353, 1
      %v6386 = vrot.slane %v6354, 1
      %v6387 = vsel %vm6157, %v6385, %v6386
      %v6388 = vrot.slane %v6355, 1
      %v6389 = vsel %vm6157, %v6386, %v6388
      %v6390 = vrot.slane %v6356, 1
      %v6391 = vsel %vm6157, %v6388, %v6390
      %v6392 = vrot.slane %v6357, 1
      %v6393 = vsel %vm6157, %v6390, %v6392
      %v6394 = vrot.slane %v6358, 1
      %v6395 = vsel %vm6157, %v6392, %v6394
      %v6396 = vrot.slane %v6359, 1
      %v6397 = vsel %vm6157, %v6394, %v6396
      %v6398 = vrot.slane %v6360, 1
      %v6399 = vsel %vm6157, %v6396, %v6398
      %v6400 = vrot.slane %v6361, 1
      %v6401 = vsel %vm6157, %v6398, %v6400
      %v6402 = vrot.slane %v6362, 1
      %v6403 = vsel %vm6157, %v6400, %v6402
      %v6404 = vrot.slane %v6363, 1
      %v6405 = vsel %vm6157, %v6402, %v6404
      %v6406 = vrot.slane %v6364, 1
      %v6407 = vsel %vm6157, %v6404, %v6406
      %v6408 = vrot.slane %v6365, 1
      %v6409 = vsel %vm6157, %v6406, %v6408
      %v6410 = vrot.slane %v6366, 1
      %v6411 = vsel %vm6157, %v6408, %v6410
      %v6412 = vrot.slane %v6367, 1
      %v6413 = vsel %vm6157, %v6410, %v6412
      %v6414 = vrot.slane %v6368, 1
      %v6415 = vsel %vm6157, %v6412, %v6414
      %v6431 = vadd.f32 %v6335, %v6387
      %v6432 = vadd.f32 %v6336, %v6389
      %v6433 = vadd.f32 %v6337, %v6391
      %v6434 = vadd.f32 %v6338, %v6393
      %v6435 = vadd.f32 %v6339, %v6395
      %v6436 = vadd.f32 %v6340, %v6397
      %v6437 = vadd.f32 %v6341, %v6399
      %v6438 = vadd.f32 %v6342, %v6401
      %v6439 = vadd.f32 %v6343, %v6403
      %v6440 = vadd.f32 %v6344, %v6405
      %v6441 = vadd.f32 %v6345, %v6407
      %v6442 = vadd.f32 %v6346, %v6409
      %v6443 = vadd.f32 %v6347, %v6411
      %v6444 = vadd.f32 %v6348, %v6413
      %v6445 = vadd.f32 %v6349, %v6415
      %v6446 = vld [vmem:[#allocation5 + $0x8] sm:$0xe]
      %v6447 = vunpack.c.l.bf16 %v6446
      %v6448 = vperm.slane %v6074, 5
      %v6449 = vmul.f32 %v6447, %v6448
      %v6450 = vmul.f32 %v6094, %v6448
      %v6451 = vmul.f32 %v6095, %v6448
      %v6452 = vmul.f32 %v6096, %v6448
      %v6453 = vmul.f32 %v6097, %v6448
      %v6454 = vmul.f32 %v6098, %v6448
      %v6455 = vmul.f32 %v6099, %v6448
      %v6456 = vmul.f32 %v6100, %v6448
      %v6457 = vmul.f32 %v6101, %v6448
      %v6458 = vmul.f32 %v6102, %v6448
      %v6459 = vmul.f32 %v6103, %v6448
      %v6460 = vmul.f32 %v6104, %v6448
      %v6461 = vmul.f32 %v6105, %v6448
      %v6462 = vmul.f32 %v6317, %v6448
      %v6463 = vmul.f32 %v6318, %v6448
      %v6464 = vmul.f32 %v6351, %v6448
      %v6481 = vrot.slane %v6449, 2
      %v6482 = vrot.slane %v6450, 2
      %v6483 = vsel %vm436, %v6481, %v6482
      %v6484 = vrot.slane %v6451, 2
      %v6485 = vsel %vm436, %v6482, %v6484
      %v6486 = vrot.slane %v6452, 2
      %v6487 = vsel %vm436, %v6484, %v6486
      %v6488 = vrot.slane %v6453, 2
      %v6489 = vsel %vm436, %v6486, %v6488
      %v6490 = vrot.slane %v6454, 2
      %v6491 = vsel %vm436, %v6488, %v6490
      %v6492 = vrot.slane %v6455, 2
      %v6493 = vsel %vm436, %v6490, %v6492
      %v6494 = vrot.slane %v6456, 2
      %v6495 = vsel %vm436, %v6492, %v6494
      %v6496 = vrot.slane %v6457, 2
      %v6497 = vsel %vm436, %v6494, %v6496
      %v6498 = vrot.slane %v6458, 2
      %v6499 = vsel %vm436, %v6496, %v6498
      %v6500 = vrot.slane %v6459, 2
      %v6501 = vsel %vm436, %v6498, %v6500
      %v6502 = vrot.slane %v6460, 2
      %v6503 = vsel %vm436, %v6500, %v6502
      %v6504 = vrot.slane %v6461, 2
      %v6505 = vsel %vm436, %v6502, %v6504
      %v6506 = vrot.slane %v6462, 2
      %v6507 = vsel %vm436, %v6504, %v6506
      %v6508 = vrot.slane %v6463, 2
      %v6509 = vsel %vm436, %v6506, %v6508
      %v6510 = vrot.slane %v6464, 2
      %v6511 = vsel %vm436, %v6508, %v6510
      %v6527 = vadd.f32 %v6431, %v6483
      %v6528 = vadd.f32 %v6432, %v6485
      %v6529 = vadd.f32 %v6433, %v6487
      %v6530 = vadd.f32 %v6434, %v6489
      %v6531 = vadd.f32 %v6435, %v6491
      %v6532 = vadd.f32 %v6436, %v6493
      %v6533 = vadd.f32 %v6437, %v6495
      %v6534 = vadd.f32 %v6438, %v6497
      %v6535 = vadd.f32 %v6439, %v6499
      %v6536 = vadd.f32 %v6440, %v6501
      %v6537 = vadd.f32 %v6441, %v6503
      %v6538 = vadd.f32 %v6442, %v6505
      %v6539 = vadd.f32 %v6443, %v6507
      %v6540 = vadd.f32 %v6444, %v6509
      %v6541 = vadd.f32 %v6445, %v6511
      %v6542 = vld [vmem:[#allocation5 + $0x44] sm:$0xf]
      %v6543 = vld [vmem:[#allocation5 + $0x48] sm:$0xf]
      %v6544 = vunpack.c.l.bf16 %v6542
      %v6545 = vunpack.c.l.bf16 %v6543
      %v6546 = vperm.slane %v6074, 6
      %v6547 = vmul.f32 %v6095, %v6546
      %v6548 = vmul.f32 %v6096, %v6546
      %v6549 = vmul.f32 %v6097, %v6546
      %v6550 = vmul.f32 %v6098, %v6546
      %v6551 = vmul.f32 %v6099, %v6546
      %v6552 = vmul.f32 %v6100, %v6546
      %v6553 = vmul.f32 %v6101, %v6546
      %v6554 = vmul.f32 %v6102, %v6546
      %v6555 = vmul.f32 %v6103, %v6546
      %v6556 = vmul.f32 %v6104, %v6546
      %v6557 = vmul.f32 %v6105, %v6546
      %v6558 = vmul.f32 %v6317, %v6546
      %v6559 = vmul.f32 %v6318, %v6546
      %v6560 = vmul.f32 %v6544, %v6546
      %v6561 = vmul.f32 %v6545, %v6546
      %v6562 = vadd.f32 %v6527, %v6547
      %v6563 = vadd.f32 %v6528, %v6548
      %v6564 = vadd.f32 %v6529, %v6549
      %v6565 = vadd.f32 %v6530, %v6550
      %v6566 = vadd.f32 %v6531, %v6551
      %v6567 = vadd.f32 %v6532, %v6552
      %v6568 = vadd.f32 %v6533, %v6553
      %v6569 = vadd.f32 %v6534, %v6554
      %v6570 = vadd.f32 %v6535, %v6555
      %v6571 = vadd.f32 %v6536, %v6556
      %v6572 = vadd.f32 %v6537, %v6557
      %v6573 = vadd.f32 %v6538, %v6558
      %v6574 = vadd.f32 %v6539, %v6559
      %v6575 = vadd.f32 %v6540, %v6560
      %v6576 = vadd.f32 %v6541, %v6561
      %v6577 = vld [vmem:[#allocation5 + $0x10] sm:$0xf]
      %v6578 = vld [vmem:[#allocation5 + $0x14] sm:$0xf]
      %v6579 = vld [vmem:[#allocation5 + $0x18] sm:$0xf]
      %v6580 = vld [vmem:[#allocation5 + $0x1c] sm:$0xf]
      %v6581 = vld [vmem:[#allocation5 + $0x20] sm:$0xf]
      %v6582 = vld [vmem:[#allocation5 + $0x24] sm:$0xf]
      %v6583 = vld [vmem:[#allocation5 + $0x28] sm:$0xf]
      %v6584 = vld [vmem:[#allocation5 + $0x2c] sm:$0xf]
      %v6585 = vld [vmem:[#allocation5 + $0x30] sm:$0xf]
      %v6586 = vld [vmem:[#allocation5 + $0x34] sm:$0xf]
      %v6587 = vld [vmem:[#allocation5 + $0x38] sm:$0xf]
      %v6588 = vld [vmem:[#allocation5 + $0x3c] sm:$0xf]
      %v6589 = vld [vmem:[#allocation5 + $0x40] sm:$0xf]
      %v6590 = vld [vmem:[#allocation5 + $0x44] sm:$0xf]
      %v6591 = vld [vmem:[#allocation5 + $0x48] sm:$0xf]
      %v6592 = vld [vmem:[#allocation5 + $0x4c] sm:$0x1]
      %v6593 = vunpack.c.l.bf16 %v6577
      %v6594 = vunpack.c.l.bf16 %v6578
      %v6595 = vunpack.c.l.bf16 %v6579
      %v6596 = vunpack.c.l.bf16 %v6580
      %v6597 = vunpack.c.l.bf16 %v6581
      %v6598 = vunpack.c.l.bf16 %v6582
      %v6599 = vunpack.c.l.bf16 %v6583
      %v6600 = vunpack.c.l.bf16 %v6584
      %v6601 = vunpack.c.l.bf16 %v6585
      %v6602 = vunpack.c.l.bf16 %v6586
      %v6603 = vunpack.c.l.bf16 %v6587
      %v6604 = vunpack.c.l.bf16 %v6588
      %v6605 = vunpack.c.l.bf16 %v6589
      %v6606 = vunpack.c.l.bf16 %v6590
      %v6607 = vunpack.c.l.bf16 %v6591
      %v6608 = vunpack.c.l.bf16 %v6592
      %v6609 = vperm.slane %v6074, 7
      %v6610 = vmul.f32 %v6593, %v6609
      %v6611 = vmul.f32 %v6594, %v6609
      %v6612 = vmul.f32 %v6595, %v6609
      %v6613 = vmul.f32 %v6596, %v6609
      %v6614 = vmul.f32 %v6597, %v6609
      %v6615 = vmul.f32 %v6598, %v6609
      %v6616 = vmul.f32 %v6599, %v6609
      %v6617 = vmul.f32 %v6600, %v6609
      %v6618 = vmul.f32 %v6601, %v6609
      %v6619 = vmul.f32 %v6602, %v6609
      %v6620 = vmul.f32 %v6603, %v6609
      %v6621 = vmul.f32 %v6604, %v6609
      %v6622 = vmul.f32 %v6605, %v6609
      %v6623 = vmul.f32 %v6606, %v6609
      %v6624 = vmul.f32 %v6607, %v6609
      %v6625 = vmul.f32 %v6608, %v6609
      %v6642 = vrot.slane %v6610, 1
      %v6643 = vrot.slane %v6611, 1
      %v6644 = vsel %vm6157, %v6642, %v6643
      %v6645 = vrot.slane %v6612, 1
      %v6646 = vsel %vm6157, %v6643, %v6645
      %v6647 = vrot.slane %v6613, 1
      %v6648 = vsel %vm6157, %v6645, %v6647
      %v6649 = vrot.slane %v6614, 1
      %v6650 = vsel %vm6157, %v6647, %v6649
      %v6651 = vrot.slane %v6615, 1
      %v6652 = vsel %vm6157, %v6649, %v6651
      %v6653 = vrot.slane %v6616, 1
      %v6654 = vsel %vm6157, %v6651, %v6653
      %v6655 = vrot.slane %v6617, 1
      %v6656 = vsel %vm6157, %v6653, %v6655
      %v6657 = vrot.slane %v6618, 1
      %v6658 = vsel %vm6157, %v6655, %v6657
      %v6659 = vrot.slane %v6619, 1
      %v6660 = vsel %vm6157, %v6657, %v6659
      %v6661 = vrot.slane %v6620, 1
      %v6662 = vsel %vm6157, %v6659, %v6661
      %v6663 = vrot.slane %v6621, 1
      %v6664 = vsel %vm6157, %v6661, %v6663
      %v6665 = vrot.slane %v6622, 1
      %v6666 = vsel %vm6157, %v6663, %v6665
      %v6667 = vrot.slane %v6623, 1
      %v6668 = vsel %vm6157, %v6665, %v6667
      %v6669 = vrot.slane %v6624, 1
      %v6670 = vsel %vm6157, %v6667, %v6669
      %v6671 = vrot.slane %v6625, 1
      %v6672 = vsel %vm6157, %v6669, %v6671
      %v6688 = vadd.f32 %v6562, %v6644
      %v6689 = vadd.f32 %v6563, %v6646
      %v6690 = vadd.f32 %v6564, %v6648
      %v6691 = vadd.f32 %v6565, %v6650
      %v6692 = vadd.f32 %v6566, %v6652
      %v6693 = vadd.f32 %v6567, %v6654
      %v6694 = vadd.f32 %v6568, %v6656
      %v6695 = vadd.f32 %v6569, %v6658
      %v6696 = vadd.f32 %v6570, %v6660
      %v6697 = vadd.f32 %v6571, %v6662
      %v6698 = vadd.f32 %v6572, %v6664
      %v6699 = vadd.f32 %v6573, %v6666
      %v6700 = vadd.f32 %v6574, %v6668
      %v6701 = vadd.f32 %v6575, %v6670
      %v6702 = vadd.f32 %v6576, %v6672
      %v6703 = vld [vmem:[#allocation5 + $0x10] sm:$0xe]
      %v6704 = vunpack.c.l.bf16 %v6703
      %v6705 = vperm.slane %v6075, 0
      %v6706 = vmul.f32 %v6704, %v6705
      %v6707 = vmul.f32 %v6594, %v6705
      %v6708 = vmul.f32 %v6595, %v6705
      %v6709 = vmul.f32 %v6596, %v6705
      %v6710 = vmul.f32 %v6597, %v6705
      %v6711 = vmul.f32 %v6598, %v6705
      %v6712 = vmul.f32 %v6599, %v6705
      %v6713 = vmul.f32 %v6600, %v6705
      %v6714 = vmul.f32 %v6601, %v6705
      %v6715 = vmul.f32 %v6602, %v6705
      %v6716 = vmul.f32 %v6603, %v6705
      %v6717 = vmul.f32 %v6604, %v6705
      %v6718 = vmul.f32 %v6605, %v6705
      %v6719 = vmul.f32 %v6606, %v6705
      %v6720 = vmul.f32 %v6607, %v6705
      %v6721 = vmul.f32 %v6608, %v6705
      %v6738 = vrot.slane %v6706, 2
      %v6739 = vrot.slane %v6707, 2
      %v6740 = vsel %vm436, %v6738, %v6739
      %v6741 = vrot.slane %v6708, 2
      %v6742 = vsel %vm436, %v6739, %v6741
      %v6743 = vrot.slane %v6709, 2
      %v6744 = vsel %vm436, %v6741, %v6743
      %v6745 = vrot.slane %v6710, 2
      %v6746 = vsel %vm436, %v6743, %v6745
      %v6747 = vrot.slane %v6711, 2
      %v6748 = vsel %vm436, %v6745, %v6747
      %v6749 = vrot.slane %v6712, 2
      %v6750 = vsel %vm436, %v6747, %v6749
      %v6751 = vrot.slane %v6713, 2
      %v6752 = vsel %vm436, %v6749, %v6751
      %v6753 = vrot.slane %v6714, 2
      %v6754 = vsel %vm436, %v6751, %v6753
      %v6755 = vrot.slane %v6715, 2
      %v6756 = vsel %vm436, %v6753, %v6755
      %v6757 = vrot.slane %v6716, 2
      %v6758 = vsel %vm436, %v6755, %v6757
      %v6759 = vrot.slane %v6717, 2
      %v6760 = vsel %vm436, %v6757, %v6759
      %v6761 = vrot.slane %v6718, 2
      %v6762 = vsel %vm436, %v6759, %v6761
      %v6763 = vrot.slane %v6719, 2
      %v6764 = vsel %vm436, %v6761, %v6763
      %v6765 = vrot.slane %v6720, 2
      %v6766 = vsel %vm436, %v6763, %v6765
      %v6767 = vrot.slane %v6721, 2
      %v6768 = vsel %vm436, %v6765, %v6767
      %v6784 = vadd.f32 %v6688, %v6740
      %v6785 = vadd.f32 %v6689, %v6742
      %v6786 = vadd.f32 %v6690, %v6744
      %v6787 = vadd.f32 %v6691, %v6746
      %v6788 = vadd.f32 %v6692, %v6748
      %v6789 = vadd.f32 %v6693, %v6750
      %v6790 = vadd.f32 %v6694, %v6752
      %v6791 = vadd.f32 %v6695, %v6754
      %v6792 = vadd.f32 %v6696, %v6756
      %v6793 = vadd.f32 %v6697, %v6758
      %v6794 = vadd.f32 %v6698, %v6760
      %v6795 = vadd.f32 %v6699, %v6762
      %v6796 = vadd.f32 %v6700, %v6764
      %v6797 = vadd.f32 %v6701, %v6766
      %v6798 = vadd.f32 %v6702, %v6768
      %6799 = vadd.xlane.f32.xlu0 %v6784
      %v6800 = vpop.xlane.xlu0 %6799
      %6801 = vadd.xlane.f32.xlu0 %v6785
      %v6802 = vpop.xlane.xlu0 %6801
      %6803 = vadd.xlane.f32.xlu0 %v6786
      %v6804 = vpop.xlane.xlu0 %6803
      %6805 = vadd.xlane.f32.xlu0 %v6787
      %v6806 = vpop.xlane.xlu0 %6805
      %6807 = vadd.xlane.f32.xlu0 %v6788
      %v6808 = vpop.xlane.xlu0 %6807
      %6809 = vadd.xlane.f32.xlu0 %v6789
      %v6810 = vpop.xlane.xlu0 %6809
      %6811 = vadd.xlane.f32.xlu0 %v6790
      %v6812 = vpop.xlane.xlu0 %6811
      %6813 = vadd.xlane.f32.xlu0 %v6791
      %v6814 = vpop.xlane.xlu0 %6813
      %6815 = vadd.xlane.f32.xlu0 %v6792
      %v6816 = vpop.xlane.xlu0 %6815
      %6817 = vadd.xlane.f32.xlu0 %v6793
      %v6818 = vpop.xlane.xlu0 %6817
      %6819 = vadd.xlane.f32.xlu0 %v6794
      %v6820 = vpop.xlane.xlu0 %6819
      %6821 = vadd.xlane.f32.xlu0 %v6795
      %v6822 = vpop.xlane.xlu0 %6821
      %6823 = vadd.xlane.f32.xlu0 %v6796
      %v6824 = vpop.xlane.xlu0 %6823
      %6825 = vadd.xlane.f32.xlu0 %v6797
      %v6826 = vpop.xlane.xlu0 %6825
      %6827 = vadd.xlane.f32.xlu0 %v6798
      %v6828 = vpop.xlane.xlu0 %6827
      %v6844 = vlaneseq
      %v6845 = vand.u32 %v6844, 127
      %v6846 = vperm.slane %v6800, %v6845
      %v6847 = vadd.s32 %v6845, 4294967288
      %v6848 = vperm.slane %v6802, %v6847
      %vm6849 = vcmask 130112
      %v6850 = vsel %vm6849, %v6848, %v6846
      %v6851 = vadd.s32 %v6845, 4294967280
      %v6852 = vperm.slane %v6804, %v6851
      %vm6853 = vcmask 195712
      %v6854 = vsel %vm6853, %v6852, %v6850
      %v6855 = vadd.s32 %v6845, 4294967272
      %v6856 = vperm.slane %v6806, %v6855
      %vm6857 = vcmask 261312
      %v6858 = vsel %vm6857, %v6856, %v6854
      %v6859 = vadd.s32 %v6845, 4294967264
      %v6860 = vperm.slane %v6808, %v6859
      %vm6861 = vcmask 326912
      %v6862 = vsel %vm6861, %v6860, %v6858
      %v6863 = vadd.s32 %v6845, 4294967256
      %v6864 = vperm.slane %v6810, %v6863
      %vm6865 = vcmask 392512
      %v6866 = vsel %vm6865, %v6864, %v6862
      %v6867 = vadd.s32 %v6845, 4294967248
      %v6868 = vperm.slane %v6812, %v6867
      %vm6869 = vcmask 458112
      %v6870 = vsel %vm6869, %v6868, %v6866
      %v6871 = vadd.s32 %v6845, 4294967240
      %v6872 = vperm.slane %v6814, %v6871
      %vm6873 = vcmask 523712
      %v6874 = vsel %vm6873, %v6872, %v6870
      %v6875 = vadd.s32 %v6845, 4294967232
      %v6876 = vperm.slane %v6816, %v6875
      %vm6877 = vcmask 589312
      %v6878 = vsel %vm6877, %v6876, %v6874
      %v6879 = vadd.s32 %v6845, 4294967224
      %v6880 = vperm.slane %v6818, %v6879
      %vm6881 = vcmask 654912
      %v6882 = vsel %vm6881, %v6880, %v6878
      %v6883 = vadd.s32 %v6845, 4294967216
      %v6884 = vperm.slane %v6820, %v6883
      %vm6885 = vcmask 720512
      %v6886 = vsel %vm6885, %v6884, %v6882
      %v6887 = vadd.s32 %v6845, 4294967208
      %v6888 = vperm.slane %v6822, %v6887
      %vm6889 = vcmask 786112
      %v6890 = vsel %vm6889, %v6888, %v6886
      %v6891 = vadd.s32 %v6845, 4294967200
      %v6892 = vperm.slane %v6824, %v6891
      %vm6893 = vcmask 851712
      %v6894 = vsel %vm6893, %v6892, %v6890
      %v6895 = vadd.s32 %v6845, 4294967192
      %v6896 = vperm.slane %v6826, %v6895
      %vm6897 = vcmask 917312
      %v6898 = vsel %vm6897, %v6896, %v6894
      %v6899 = vadd.s32 %v6845, 4294967184
      %v6900 = vperm.slane %v6828, %v6899
      %vm6901 = vcmask 982912
      %v6902 = vsel %vm6901, %v6900, %v6898
      %vm6904 = vcmask 974848
      %6905 = vst.msk [vmem:[%s247] sm:$0x1] %vm6904, %v6902
      %vm6906 = vcmask 1041344
      %6907 = vst.msk [vmem:[%s247] sm:$0x1] %vm6906, 0.0
      %p6908 = scmp.lt.s32.totalorder %s17, 1
      %s6909 = scalar_select %p6908, %s17, 1
      %s6910 = scalar_lea.vmem %s6, %s6909
      // Predicated region
      $region45: #{discriminator_forward.1} parent=43 // pred_check
        %p6911 = pneg %p166
      $region46: #{discriminator_forward.1} parent=43 // pred_check_branch
        %6913 = sbr.rel (%p6911) target = $region48
      $region47: #{discriminator_forward.1} parent=43 // pred_region
        _
      $region48: #{discriminator_forward.1} parent=43 // pred_fallthru
        _
    $region44: #{discriminator_forward.1} parent=5 // pred_fallthru
      _
    %p6914 = scmp.le.s32.totalorder 2, %s12
    // Predicated region
    $region49: #{discriminator_forward.1} parent=5 // pred_check
      %p6915 = pneg %p6914
    $region50: #{discriminator_forward.1} parent=5 // pred_check_branch
      %6917 = sbr.rel (%p6915) target = $region52
    $region51: #{discriminator_forward.1} parent=5 // pred_region
      %s6918 = ssub.s32 %s12, 2
      // Predicated region
      $region53: #{discriminator_forward.1} parent=51 // pred_check
        %p6919 = pneg %p172
      $region54: #{discriminator_forward.1} parent=51 // pred_check_branch
        %6921 = sbr.rel (%p6919) target = $region56
      $region55: #{discriminator_forward.1} parent=51 // pred_region
        %p6922 = scmp.lt.s32.totalorder %s18, 1
        %s6923 = scalar_select %p6922, %s18, 1
        %s6924 = scalar_lea.vmem %s6, %s6923
      $region56: #{discriminator_forward.1} parent=51 // pred_fallthru
        _
    $region52: #{discriminator_forward.1} parent=5 // pred_fallthru
      _
  $region6: #{discriminator_forward.1} parent=0 // loop_footer
    %s16 = sadd.s32 1, %s12
  $region7: #{discriminator_forward.1} parent=0 // loop_footer_branch
    %11 = sbr.rel target = $region3
  $region8: #{discriminator_forward.1} parent=0 // loop_exit
    _

</llo_original>
